<compile_context>
chip_gen: v7x
topology: tpu7x:2x2x1
jax: 0.10.0
libtpu: 0.0.40
codegen_flags: <defaults>
</compile_context>

<pallas_src>
import math
from functools import partial

import jax
import jax.numpy as jnp
from jax import lax
from jax.experimental import pallas as pl
from jax.experimental.pallas import tpu as pltpu


def _layernorm(x, w, b, eps=1e-5):
    # x: (T, D) fp32, w/b: (1, D) fp32 (CLIP's LayerNorm subclass computes in fp32)
    mu = jnp.mean(x, axis=-1, keepdims=True)
    var = jnp.mean((x - mu) ** 2, axis=-1, keepdims=True)
    return (x - mu) * lax.rsqrt(var + eps) * w + b


# Batched matmul dimension numbers (leading batch dim = batch_tile * heads).
_BATCHED_NN = (((2,), (1,)), ((0,), (0,)))   # (B,M,K) x (B,K,N) -> (B,M,N)
_BATCHED_NT = (((2,), (2,)), ((0,), (0,)))   # (B,M,K) x (B,N,K) -> (B,M,N)


def _block_kernel(x_ref,
                  ln1w_ref, ln1b_ref,
                  wqkv_ref, bqkv_ref, wo_ref, bo_ref,
                  ln2w_ref, ln2b_ref,
                  wfc_ref, bfc_ref, wpr_ref, bpr_ref,
                  o_ref,
                  *, n_head, l_valid):
    l_pad, b_tile, d_model = x_ref.shape
    hd = d_model // n_head
    ntok = l_pad * b_tile

    # Tokens ordered (l, b) — matches the native (L, N, D) layout, no transpose needed.
    x = x_ref[...].astype(jnp.float32).reshape(ntok, d_model)

    # ---- ln_1 (fp32) + fused QKV projection: one (T,D)x(D,3D) bf16 matmul ----
    h = _layernorm(x, ln1w_ref[...], ln1b_ref[...]).astype(jnp.bfloat16)
    qkv = jnp.dot(h, wqkv_ref[...], preferred_element_type=jnp.float32) + bqkv_ref[...]

    def to_heads(t):            # (ntok, D) -> (b_tile*n_head, l_pad, hd), bf16
        t = t.astype(jnp.bfloat16).reshape(l_pad, b_tile, n_head, hd)
        t = jnp.transpose(t, (1, 2, 0, 3))
        return t.reshape(b_tile * n_head, l_pad, hd)

    q = to_heads(qkv[:, :d_model])            # 1/sqrt(hd) already folded into wqkv/bqkv
    k = to_heads(qkv[:, d_model:2 * d_model])
    v = to_heads(qkv[:, 2 * d_model:])

    # ---- attention: batch tile and heads share the dot_general batch dim ----
    s = lax.dot_general(q, k, _BATCHED_NT, preferred_element_type=jnp.float32)  # (bH,L,L)
    if l_valid < l_pad:         # mask keys introduced by the wrapper's seq padding
        key_id = lax.broadcasted_iota(jnp.int32, (1, 1, l_pad), 2)
        s = jnp.where(key_id < l_valid, s, -1e30)
    s = s - jnp.max(s, axis=-1, keepdims=True)
    p = jnp.exp(s)
    p = p * pl.reciprocal(jnp.sum(p, axis=-1, keepdims=True), approx=True)
    o = lax.dot_general(p.astype(jnp.bfloat16), v, _BATCHED_NN,
                        preferred_element_type=jnp.float32)                     # (bH,L,hd)

    # Re-concatenate heads on the lane axis -> (T, D); single out-projection matmul.
    o = o.reshape(b_tile, n_head, l_pad, hd)
    o = jnp.transpose(o, (2, 0, 1, 3)).reshape(ntok, d_model).astype(jnp.bfloat16)
    attn = jnp.dot(o, wo_ref[...], preferred_element_type=jnp.float32) + bo_ref[...]

    x2 = x + attn                                        # first residual

    # ---- ln_2 + MLP (c_fc -> QuickGELU -> c_proj), chunked over the hidden dim ----
    h2 = _layernorm(x2, ln2w_ref[...], ln2b_ref[...]).astype(jnp.bfloat16)
    n_chunks = wfc_ref.shape[0]

    def mlp_chunk(ci):
        f = jnp.dot(h2, wfc_ref[ci], preferred_element_type=jnp.float32) + bfc_ref[ci]
        g = (f * jax.nn.sigmoid(1.702 * f)).astype(jnp.bfloat16)     # QuickGELU, fp32
        return jnp.dot(g, wpr_ref[ci], preferred_element_type=jnp.float32)

    if n_chunks == 1:
        m = mlp_chunk(0)
    else:
        m = lax.fori_loop(0, n_chunks, lambda ci, acc: acc + mlp_chunk(ci),
                          jnp.zeros((ntok, d_model), jnp.float32))
    m = m + bpr_ref[...]

    o_ref[...] = (x2 + m).reshape(l_pad, b_tile, d_model).astype(o_ref.dtype)


def _round_up(x, m):
    return ((x + m - 1) // m) * m


def _prep_params(params, d_model, n_head, mlp_chunk):
    """Pre-transpose / fuse / scale-fold / chunk / bf16-cast all weights (trace time)."""
    hd = d_model // n_head
    scale = 1.0 / math.sqrt(hd)
    f32, bf16 = jnp.float32, jnp.bfloat16
    hidden = 4 * d_model
    n_chunks = hidden // mlp_chunk

    # Fused QKV: out = x @ Wqkv.T + bqkv, with 1/sqrt(hd) folded into the Q third.
    wqkv = jnp.transpose(jnp.asarray(params["wqkv"], f32))            # (D, 3D)
    bqkv = jnp.asarray(params["bqkv"], f32)                           # (3D,)
    colscale = jnp.concatenate([jnp.full((d_model,), scale, f32),
                                jnp.ones((2 * d_model,), f32)])
    wqkv = (wqkv * colscale[None, :]).astype(bf16)
    bqkv = (bqkv * colscale).reshape(1, 3 * d_model)

    # out_proj: out = concat_heads @ Wo.T + bo  (single un-split (D, D) weight).
    wo = jnp.transpose(jnp.asarray(params["wo"], f32)).astype(bf16)   # (D, D)
    bo = jnp.asarray(params["bo"], f32).reshape(1, d_model)

    ln1w = jnp.asarray(params["ln1_w"], f32).reshape(1, d_model)
    ln1b = jnp.asarray(params["ln1_b"], f32).reshape(1, d_model)
    ln2w = jnp.asarray(params["ln2_w"], f32).reshape(1, d_model)
    ln2b = jnp.asarray(params["ln2_b"], f32).reshape(1, d_model)

    # MLP weights split into hidden-dim chunks: wfc[c] = Wfc.T[:, c*C:(c+1)*C], etc.
    # TODO(synk): on v7x, storing wfc/wpr/wqkv as fp8 with per-channel scales would
    # halve resident weight VMEM and ~double MXU throughput on the weight-heavy matmuls.
    wfc = jnp.transpose(jnp.asarray(params["wfc"], f32))              # (D, 4D)
    wfc = jnp.transpose(wfc.reshape(d_model, n_chunks, mlp_chunk), (1, 0, 2)).astype(bf16)
    bfc = jnp.asarray(params["bfc"], f32).reshape(n_chunks, 1, mlp_chunk)
    wpr = jnp.transpose(jnp.asarray(params["wpr"], f32))              # (4D, D)
    wpr = wpr.reshape(n_chunks, mlp_chunk, d_model).astype(bf16)
    bpr = jnp.asarray(params["bpr"], f32).reshape(1, d_model)

    return [ln1w, ln1b, wqkv, bqkv, wo, bo, ln2w, ln2b, wfc, bfc, wpr, bpr]


def _vmem_capacity_bytes():
    try:
        return int(pltpu.get_tpu_info().vmem_capacity_bytes)
    except Exception:
        return 64 << 20          # conservative (v7x-like) fallback


def _pick_batch_tile(n_batch, l_pad, *, prefer_multi_step, ntok_cap):
    # The (batch) block dim sits second-to-last in the (L, N, D) block: it must be a
    # multiple of 8 or cover the full batch (sublane tiling rule).
    valid = [b for b in range(1, n_batch + 1)
             if n_batch % b == 0 and (b == n_batch or b % 8 == 0)]
    fitting = [b for b in valid if b * l_pad <= ntok_cap] or [min(valid)]
    if prefer_multi_step:        # v7x: shard the parallel batch axis across 2 TCs
        multi = [b for b in fitting if n_batch // b >= 2] or fitting
        even = [b for b in multi if (n_batch // b) % 2 == 0] or multi
        return max(even)
    return max(fitting)          # single TC: biggest tile, even if a single grid step


def _pick_mlp_chunk(hidden):
    for c in (1024, 512, 256, 128):
        if hidden % c == 0:
            return c
    return hidden


def residual_attention_block(x_lnd, params, *, d_model, n_head,
                             batch_tile=None, mlp_chunk=None):
    """Forward pass of CLIP's ResidualAttentionBlock.

    x_lnd: (L, N, D) — the PyTorch nn.MultiheadAttention layout.  Returns (L, N, D).
    drop_path = 0.0 (Identity), attn_mask = None.
    """
    L, N, D = x_lnd.shape
    assert D == d_model and d_model % n_head == 0
    hidden = 4 * d_model

    if mlp_chunk is None:
        mlp_chunk = _pick_mlp_chunk(hidden)
    assert hidden % mlp_chunk == 0

    # Pad the sequence once to a sublane multiple; padded keys are masked in-kernel.
    # TODO(synk): for large unaligned L, padding to a multiple of 128 instead keeps the
    # (L, L) score tiles fully lane-dense at the cost of extra score FLOPs.
    l_pad = _round_up(L, 8)
    x_p = x_lnd if l_pad == L else jnp.pad(x_lnd, ((0, l_pad - L), (0, 0), (0, 0)))

    vmem_cap = _vmem_capacity_bytes()
    small_vmem = vmem_cap < (100 << 20)           # v7x-like: 64 MiB VMEM, 2 TCs/chip
    if batch_tile is None:
        batch_tile = _pick_batch_tile(N, l_pad, prefer_multi_step=small_vmem,
                                      ntok_cap=1024 if small_vmem else 2048)
    assert N % batch_tile == 0
    assert batch_tile == N or batch_tile % 8 == 0, "batch tile must be N or a multiple of 8"
    grid = (N // batch_tile,)

    weight_args = _prep_params(params, d_model, n_head, mlp_chunk)

    def full_spec(a):
        return pl.BlockSpec(a.shape, lambda n, _nd=a.ndim: (0,) * _nd)

    # TODO(synk): the weight blocks never re-DMA (constant index_map); single-buffering
    # them (pipeline_mode=pl.Buffered(1)) would halve their resident VMEM on v7x.
    in_specs = [pl.BlockSpec((l_pad, batch_tile, D), lambda n: (0, n, 0))] + \
               [full_spec(a) for a in weight_args]
    out_spec = pl.BlockSpec((l_pad, batch_tile, D), lambda n: (0, n, 0))

    # VMEM budget: double-buffered weights + IO, fp32/bf16 working set (including the
    # chunked MLP hidden activations), plus margin; capped per generation.
    hd = d_model // n_head
    ntok = batch_tile * l_pad
    bh = batch_tile * n_head
    weight_bytes = sum(int(a.size) * a.dtype.itemsize for a in weight_args)
    io_bytes = 2 * ntok * D * x_lnd.dtype.itemsize
    work_bytes = 4 * (10 * ntok * D               # (T, D) fp32 temporaries
                      + 4 * ntok * D              # fused QKV (T, 3D) + slack
                      + 2 * bh * l_pad * l_pad    # scores + probs
                      + 4 * bh * l_pad * hd       # q / k / v / attn-out heads
                      + 3 * ntok * mlp_chunk)     # MLP hidden chunk (f, g)
    need = 2 * weight_bytes + 2 * io_bytes + work_bytes + (4 << 20)
    cap = min((vmem_cap * 7) // 8, 112 << 20)
    vmem_limit = int(min(max(need, min(32 << 20, cap)), cap))

    out = pl.pallas_call(
        partial(_block_kernel, n_head=n_head, l_valid=L),
        out_shape=jax.ShapeDtypeStruct((l_pad, N, D), x_lnd.dtype),
        grid_spec=pltpu.PrefetchScalarGridSpec(
            num_scalar_prefetch=0,
            grid=grid,
            in_specs=in_specs,
            out_specs=out_spec,
        ),
        compiler_params=pltpu.CompilerParams(
            dimension_semantics=("parallel",),
            vmem_limit_bytes=vmem_limit,
        ),
    )(x_p, *weight_args)

    return out if l_pad == L else out[:L]


# ---------------- pure-JAX fp32 reference (for correctness check) ----------------
def reference(x_lnd, params, *, d_model, n_head):
    L, N, D = x_lnd.shape
    hd = D // n_head
    x = x_lnd.astype(jnp.float32)

    def ln(v, w, b):
        mu = jnp.mean(v, -1, keepdims=True)
        var = jnp.mean((v - mu) ** 2, -1, keepdims=True)
        return (v - mu) / jnp.sqrt(var + 1e-5) * w + b

    h = ln(x, params["ln1_w"], params["ln1_b"])
    qkv = jnp.einsum("lnd,ed->lne", h, params["wqkv"]) + params["bqkv"]
    q, k, v = jnp.split(qkv, 3, axis=-1)
    q = q.reshape(L, N, n_head, hd).transpose(1, 2, 0, 3) / math.sqrt(hd)
    k = k.reshape(L, N, n_head, hd).transpose(1, 2, 0, 3)
    v = v.reshape(L, N, n_head, hd).transpose(1, 2, 0, 3)
    s = jnp.einsum("bhld,bhmd->bhlm", q, k)
    p = jax.nn.softmax(s, axis=-1)
    o = jnp.einsum("bhlm,bhmd->bhld", p, v).transpose(2, 0, 1, 3).reshape(L, N, D)
    o = jnp.einsum("lnd,ed->lne", o, params["wo"]) + params["bo"]
    x = x + o
    h2 = ln(x, params["ln2_w"], params["ln2_b"])
    f = jnp.einsum("lnd,ed->lne", h2, params["wfc"]) + params["bfc"]
    g = f * jax.nn.sigmoid(1.702 * f)
    m = jnp.einsum("lne,de->lnd", g, params["wpr"]) + params["bpr"]
    return x + m


if __name__ == "__main__":
    D, H = 32, 4                                    # d_model, heads
    ks = jax.random.split(jax.random.PRNGKey(0), 8)
    params = {
        "ln1_w": jnp.ones((D,), jnp.float32),
        "ln1_b": jnp.zeros((D,), jnp.float32),
        "wqkv": 0.1 * jax.random.normal(ks[0], (3 * D, D), jnp.float32),
        "bqkv": 0.1 * jax.random.normal(ks[1], (3 * D,), jnp.float32),
        "wo":   0.1 * jax.random.normal(ks[2], (D, D), jnp.float32),
        "bo":   0.1 * jax.random.normal(ks[3], (D,), jnp.float32),
        "ln2_w": jnp.ones((D,), jnp.float32),
        "ln2_b": jnp.zeros((D,), jnp.float32),
        "wfc":  0.1 * jax.random.normal(ks[4], (4 * D, D), jnp.float32),
        "bfc":  0.1 * jax.random.normal(ks[5], (4 * D,), jnp.float32),
        "wpr":  0.1 * jax.random.normal(ks[6], (D, 4 * D), jnp.float32),
        "bpr":  0.1 * jax.random.normal(ks[7], (D,), jnp.float32),
    }

    # Test 1: aligned sequence, automatic tile / chunk selection.
    L, N = 8, 8
    x = jax.random.normal(jax.random.PRNGKey(42), (L, N, D), jnp.float32)
    out = jax.block_until_ready(residual_attention_block(x, params, d_model=D, n_head=H))
    ref = reference(x, params, d_model=D, n_head=H)
    assert out.shape == (L, N, D)
    assert jnp.allclose(out, ref, atol=3e-2, rtol=3e-2), "mismatch vs reference (test 1)"

    # Test 2: unaligned sequence (pad + key mask), explicit batch tile (2 grid steps)
    # and chunked MLP (2 hidden chunks -> fori_loop path).
    L2, N2 = 7, 16
    x2 = jax.random.normal(jax.random.PRNGKey(7), (L2, N2, D), jnp.float32)
    out2 = jax.block_until_ready(
        residual_attention_block(x2, params, d_model=D, n_head=H,
                                 batch_tile=8, mlp_chunk=64))
    ref2 = reference(x2, params, d_model=D, n_head=H)
    assert out2.shape == (L2, N2, D)
    assert jnp.allclose(out2, ref2, atol=3e-2, rtol=3e-2), "mismatch vs reference (test 2)"

    print("KERNEL_OK")
</pallas_src>

<mosaic_0001>
module attributes {stable_mosaic.version = 11 : i64} {
  func.func @_block_kernel(%arg0: i32, %arg1: memref<8x8x32xf32, #tpu.memory_space<vmem>>, %arg2: memref<1x32xf32, #tpu.memory_space<vmem>>, %arg3: memref<1x32xf32, #tpu.memory_space<vmem>>, %arg4: memref<32x96xbf16, #tpu.memory_space<vmem>>, %arg5: memref<1x96xf32, #tpu.memory_space<vmem>>, %arg6: memref<32x32xbf16, #tpu.memory_space<vmem>>, %arg7: memref<1x32xf32, #tpu.memory_space<vmem>>, %arg8: memref<1x32xf32, #tpu.memory_space<vmem>>, %arg9: memref<1x32xf32, #tpu.memory_space<vmem>>, %arg10: memref<1x32x128xbf16, #tpu.memory_space<vmem>>, %arg11: memref<1x1x128xf32, #tpu.memory_space<vmem>>, %arg12: memref<1x128x32xbf16, #tpu.memory_space<vmem>>, %arg13: memref<1x32xf32, #tpu.memory_space<vmem>>, %arg14: memref<8x8x32xf32, #tpu.memory_space<vmem>>) attributes {dimension_semantics = [#tpu.dimension_semantics<parallel>], iteration_bounds = array<i64: 1>, scalar_prefetch = 0 : i64, scratch_operands = 0 : i64, tpu.core_type = #tpu.core_type<tc>, window_params = [{transform_indices = @transform_0, window_bounds = array<i64: 8, 8, 32>}, {pipeline_mode = #tpu.pipeline_mode<synchronous>, transform_indices = @transform_1, window_bounds = array<i64: 1, 32>}, {pipeline_mode = #tpu.pipeline_mode<synchronous>, transform_indices = @transform_2, window_bounds = array<i64: 1, 32>}, {pipeline_mode = #tpu.pipeline_mode<synchronous>, transform_indices = @transform_3, window_bounds = array<i64: 32, 96>}, {pipeline_mode = #tpu.pipeline_mode<synchronous>, transform_indices = @transform_4, window_bounds = array<i64: 1, 96>}, {pipeline_mode = #tpu.pipeline_mode<synchronous>, transform_indices = @transform_5, window_bounds = array<i64: 32, 32>}, {pipeline_mode = #tpu.pipeline_mode<synchronous>, transform_indices = @transform_6, window_bounds = array<i64: 1, 32>}, {pipeline_mode = #tpu.pipeline_mode<synchronous>, transform_indices = @transform_7, window_bounds = array<i64: 1, 32>}, {pipeline_mode = #tpu.pipeline_mode<synchronous>, transform_indices = @transform_8, window_bounds = array<i64: 1, 32>}, {pipeline_mode = #tpu.pipeline_mode<synchronous>, transform_indices = @transform_9, window_bounds = array<i64: 1, 32, 128>}, {pipeline_mode = #tpu.pipeline_mode<synchronous>, transform_indices = @transform_10, window_bounds = array<i64: 1, 1, 128>}, {pipeline_mode = #tpu.pipeline_mode<synchronous>, transform_indices = @transform_11, window_bounds = array<i64: 1, 128, 32>}, {pipeline_mode = #tpu.pipeline_mode<synchronous>, transform_indices = @transform_12, window_bounds = array<i64: 1, 32>}, {transform_indices = @transform_13, window_bounds = array<i64: 8, 8, 32>}]} {
    %c0 = arith.constant 0 : index
    %c0_0 = arith.constant 0 : index
    %c0_1 = arith.constant 0 : index
    %0 = vector.load %arg1[%c0, %c0_0, %c0_1] : memref<8x8x32xf32, #tpu.memory_space<vmem>>, vector<8x8x32xf32>
    %1 = vector.shape_cast %0 : vector<8x8x32xf32> to vector<64x32xf32>
    %c0_2 = arith.constant 0 : index
    %c0_3 = arith.constant 0 : index
    %2 = vector.load %arg2[%c0_2, %c0_3] : memref<1x32xf32, #tpu.memory_space<vmem>>, vector<1x32xf32>
    %c0_4 = arith.constant 0 : index
    %c0_5 = arith.constant 0 : index
    %3 = vector.load %arg3[%c0_4, %c0_5] : memref<1x32xf32, #tpu.memory_space<vmem>>, vector<1x32xf32>
    %cst = arith.constant dense<0.000000e+00> : vector<64xf32>
    %4 = vector.multi_reduction <add>, %1, %cst [1] : vector<64x32xf32> to vector<64xf32>
    %5 = vector.shape_cast %4 : vector<64xf32> to vector<64x1xf32>
    %cst_6 = arith.constant 3.200000e+01 : f32
    %6 = vector.broadcast %cst_6 : f32 to vector<64x1xf32>
    %7 = arith.divf %5, %6 : vector<64x1xf32>
    %8 = vector.broadcast %7 : vector<64x1xf32> to vector<64x32xf32>
    %9 = arith.subf %1, %8 : vector<64x32xf32>
    %10 = arith.mulf %9, %9 : vector<64x32xf32>
    %cst_7 = arith.constant dense<0.000000e+00> : vector<64xf32>
    %11 = vector.multi_reduction <add>, %10, %cst_7 [1] : vector<64x32xf32> to vector<64xf32>
    %12 = vector.shape_cast %11 : vector<64xf32> to vector<64x1xf32>
    %cst_8 = arith.constant 3.200000e+01 : f32
    %13 = vector.broadcast %cst_8 : f32 to vector<64x1xf32>
    %14 = arith.divf %12, %13 : vector<64x1xf32>
    %15 = vector.broadcast %7 : vector<64x1xf32> to vector<64x32xf32>
    %16 = arith.subf %1, %15 : vector<64x32xf32>
    %cst_9 = arith.constant 9.99999974E-6 : f32
    %17 = vector.broadcast %cst_9 : f32 to vector<64x1xf32>
    %18 = arith.addf %14, %17 : vector<64x1xf32>
    %19 = math.rsqrt %18 : vector<64x1xf32>
    %20 = vector.broadcast %19 : vector<64x1xf32> to vector<64x32xf32>
    %21 = arith.mulf %16, %20 : vector<64x32xf32>
    %22 = vector.broadcast %2 : vector<1x32xf32> to vector<64x32xf32>
    %23 = arith.mulf %21, %22 : vector<64x32xf32>
    %24 = vector.broadcast %3 : vector<1x32xf32> to vector<64x32xf32>
    %25 = arith.addf %23, %24 : vector<64x32xf32>
    %26 = arith.truncf %25 : vector<64x32xf32> to vector<64x32xbf16>
    %c0_10 = arith.constant 0 : index
    %c0_11 = arith.constant 0 : index
    %27 = vector.load %arg4[%c0_10, %c0_11] : memref<32x96xbf16, #tpu.memory_space<vmem>>, vector<32x96xbf16>
    %cst_12 = arith.constant dense<0.000000e+00> : vector<64x96xf32>
    %28 = tpu.matmul %26, %27, %cst_12 {dimension_numbers = #tpu.dot_dimension_numbers<[1], [0], [0], [1], [0, 0, 1, 1], [], []>} : vector<64x32xbf16>, vector<32x96xbf16>, vector<64x96xf32> -> vector<64x96xf32>
    %c0_13 = arith.constant 0 : index
    %c0_14 = arith.constant 0 : index
    %29 = vector.load %arg5[%c0_13, %c0_14] : memref<1x96xf32, #tpu.memory_space<vmem>>, vector<1x96xf32>
    %30 = vector.broadcast %29 : vector<1x96xf32> to vector<64x96xf32>
    %31 = arith.addf %28, %30 : vector<64x96xf32>
    %32 = vector.extract_strided_slice %31 {offsets = [0, 0], sizes = [64, 32], strides = [1, 1]} : vector<64x96xf32> to vector<64x32xf32>
    %33 = arith.truncf %32 : vector<64x32xf32> to vector<64x32xbf16>
    %34 = vector.shape_cast %33 : vector<64x32xbf16> to vector<8x8x4x8xbf16>
    %35 = tpu.transpose %34, [1, 2, 0, 3] : vector<8x8x4x8xbf16> -> vector<8x4x8x8xbf16>
    %36 = vector.shape_cast %35 : vector<8x4x8x8xbf16> to vector<32x8x8xbf16>
    %37 = vector.extract_strided_slice %31 {offsets = [0, 32], sizes = [64, 32], strides = [1, 1]} : vector<64x96xf32> to vector<64x32xf32>
    %38 = arith.truncf %37 : vector<64x32xf32> to vector<64x32xbf16>
    %39 = vector.shape_cast %38 : vector<64x32xbf16> to vector<8x8x4x8xbf16>
    %40 = tpu.transpose %39, [1, 2, 0, 3] : vector<8x8x4x8xbf16> -> vector<8x4x8x8xbf16>
    %41 = vector.shape_cast %40 : vector<8x4x8x8xbf16> to vector<32x8x8xbf16>
    %42 = vector.extract_strided_slice %31 {offsets = [0, 64], sizes = [64, 32], strides = [1, 1]} : vector<64x96xf32> to vector<64x32xf32>
    %43 = arith.truncf %42 : vector<64x32xf32> to vector<64x32xbf16>
    %44 = vector.shape_cast %43 : vector<64x32xbf16> to vector<8x8x4x8xbf16>
    %45 = tpu.transpose %44, [1, 2, 0, 3] : vector<8x8x4x8xbf16> -> vector<8x4x8x8xbf16>
    %46 = vector.shape_cast %45 : vector<8x4x8x8xbf16> to vector<32x8x8xbf16>
    %cst_15 = arith.constant dense<0.000000e+00> : vector<32x8x8xf32>
    %47 = tpu.matmul %36, %41, %cst_15 {dimension_numbers = #tpu.dot_dimension_numbers<[2], [2], [1], [1], [0, 0, 0, 1, 1, 1], [0], [0]>} : vector<32x8x8xbf16>, vector<32x8x8xbf16>, vector<32x8x8xf32> -> vector<32x8x8xf32>
    %cst_16 = arith.constant dense<0xFF800000> : vector<32x8xf32>
    %48 = vector.multi_reduction <maximumf>, %47, %cst_16 [2] : vector<32x8x8xf32> to vector<32x8xf32>
    %49 = vector.shape_cast %48 : vector<32x8xf32> to vector<32x8x1xf32>
    %50 = vector.broadcast %49 : vector<32x8x1xf32> to vector<32x8x8xf32>
    %51 = arith.subf %47, %50 : vector<32x8x8xf32>
    %52 = math.exp %51 : vector<32x8x8xf32>
    %cst_17 = arith.constant dense<0.000000e+00> : vector<32x8xf32>
    %53 = vector.multi_reduction <add>, %52, %cst_17 [2] : vector<32x8x8xf32> to vector<32x8xf32>
    %54 = vector.shape_cast %53 : vector<32x8xf32> to vector<32x8x1xf32>
    %55 = tpu.reciprocal %54 {approx = true} : vector<32x8x1xf32> -> vector<32x8x1xf32>
    %56 = vector.broadcast %55 : vector<32x8x1xf32> to vector<32x8x8xf32>
    %57 = arith.mulf %52, %56 : vector<32x8x8xf32>
    %58 = arith.truncf %57 : vector<32x8x8xf32> to vector<32x8x8xbf16>
    %cst_18 = arith.constant dense<0.000000e+00> : vector<32x8x8xf32>
    %59 = tpu.matmul %58, %46, %cst_18 {dimension_numbers = #tpu.dot_dimension_numbers<[2], [1], [1], [2], [0, 0, 0, 1, 1, 2], [0], [0]>} : vector<32x8x8xbf16>, vector<32x8x8xbf16>, vector<32x8x8xf32> -> vector<32x8x8xf32>
    %60 = vector.shape_cast %59 : vector<32x8x8xf32> to vector<8x4x8x8xf32>
    %61 = tpu.transpose %60, [2, 0, 1, 3] : vector<8x4x8x8xf32> -> vector<8x8x4x8xf32>
    %62 = vector.shape_cast %61 : vector<8x8x4x8xf32> to vector<64x32xf32>
    %63 = arith.truncf %62 : vector<64x32xf32> to vector<64x32xbf16>
    %c0_19 = arith.constant 0 : index
    %c0_20 = arith.constant 0 : index
    %64 = vector.load %arg6[%c0_19, %c0_20] : memref<32x32xbf16, #tpu.memory_space<vmem>>, vector<32x32xbf16>
    %cst_21 = arith.constant dense<0.000000e+00> : vector<64x32xf32>
    %65 = tpu.matmul %63, %64, %cst_21 {dimension_numbers = #tpu.dot_dimension_numbers<[1], [0], [0], [1], [0, 0, 1, 1], [], []>} : vector<64x32xbf16>, vector<32x32xbf16>, vector<64x32xf32> -> vector<64x32xf32>
    %c0_22 = arith.constant 0 : index
    %c0_23 = arith.constant 0 : index
    %66 = vector.load %arg7[%c0_22, %c0_23] : memref<1x32xf32, #tpu.memory_space<vmem>>, vector<1x32xf32>
    %67 = vector.broadcast %66 : vector<1x32xf32> to vector<64x32xf32>
    %68 = arith.addf %65, %67 : vector<64x32xf32>
    %69 = arith.addf %1, %68 : vector<64x32xf32>
    %c0_24 = arith.constant 0 : index
    %c0_25 = arith.constant 0 : index
    %70 = vector.load %arg8[%c0_24, %c0_25] : memref<1x32xf32, #tpu.memory_space<vmem>>, vector<1x32xf32>
    %c0_26 = arith.constant 0 : index
    %c0_27 = arith.constant 0 : index
    %71 = vector.load %arg9[%c0_26, %c0_27] : memref<1x32xf32, #tpu.memory_space<vmem>>, vector<1x32xf32>
    %cst_28 = arith.constant dense<0.000000e+00> : vector<64xf32>
    %72 = vector.multi_reduction <add>, %69, %cst_28 [1] : vector<64x32xf32> to vector<64xf32>
    %73 = vector.shape_cast %72 : vector<64xf32> to vector<64x1xf32>
    %cst_29 = arith.constant 3.200000e+01 : f32
    %74 = vector.broadcast %cst_29 : f32 to vector<64x1xf32>
    %75 = arith.divf %73, %74 : vector<64x1xf32>
    %76 = vector.broadcast %75 : vector<64x1xf32> to vector<64x32xf32>
    %77 = arith.subf %69, %76 : vector<64x32xf32>
    %78 = arith.mulf %77, %77 : vector<64x32xf32>
    %cst_30 = arith.constant dense<0.000000e+00> : vector<64xf32>
    %79 = vector.multi_reduction <add>, %78, %cst_30 [1] : vector<64x32xf32> to vector<64xf32>
    %80 = vector.shape_cast %79 : vector<64xf32> to vector<64x1xf32>
    %cst_31 = arith.constant 3.200000e+01 : f32
    %81 = vector.broadcast %cst_31 : f32 to vector<64x1xf32>
    %82 = arith.divf %80, %81 : vector<64x1xf32>
    %83 = vector.broadcast %75 : vector<64x1xf32> to vector<64x32xf32>
    %84 = arith.subf %69, %83 : vector<64x32xf32>
    %cst_32 = arith.constant 9.99999974E-6 : f32
    %85 = vector.broadcast %cst_32 : f32 to vector<64x1xf32>
    %86 = arith.addf %82, %85 : vector<64x1xf32>
    %87 = math.rsqrt %86 : vector<64x1xf32>
    %88 = vector.broadcast %87 : vector<64x1xf32> to vector<64x32xf32>
    %89 = arith.mulf %84, %88 : vector<64x32xf32>
    %90 = vector.broadcast %70 : vector<1x32xf32> to vector<64x32xf32>
    %91 = arith.mulf %89, %90 : vector<64x32xf32>
    %92 = vector.broadcast %71 : vector<1x32xf32> to vector<64x32xf32>
    %93 = arith.addf %91, %92 : vector<64x32xf32>
    %94 = arith.truncf %93 : vector<64x32xf32> to vector<64x32xbf16>
    %c0_33 = arith.constant 0 : index
    %c0_34 = arith.constant 0 : index
    %c0_35 = arith.constant 0 : index
    %95 = vector.load %arg10[%c0_33, %c0_34, %c0_35] : memref<1x32x128xbf16, #tpu.memory_space<vmem>>, vector<1x32x128xbf16>
    %96 = vector.shape_cast %95 : vector<1x32x128xbf16> to vector<32x128xbf16>
    %cst_36 = arith.constant dense<0.000000e+00> : vector<64x128xf32>
    %97 = tpu.matmul %94, %96, %cst_36 {dimension_numbers = #tpu.dot_dimension_numbers<[1], [0], [0], [1], [0, 0, 1, 1], [], []>} : vector<64x32xbf16>, vector<32x128xbf16>, vector<64x128xf32> -> vector<64x128xf32>
    %c0_37 = arith.constant 0 : index
    %c0_38 = arith.constant 0 : index
    %c0_39 = arith.constant 0 : index
    %98 = vector.load %arg11[%c0_37, %c0_38, %c0_39] : memref<1x1x128xf32, #tpu.memory_space<vmem>>, vector<1x1x128xf32>
    %99 = vector.shape_cast %98 : vector<1x1x128xf32> to vector<1x128xf32>
    %100 = vector.broadcast %99 : vector<1x128xf32> to vector<64x128xf32>
    %101 = arith.addf %97, %100 : vector<64x128xf32>
    %cst_40 = arith.constant 1.702000e+00 : f32
    %102 = vector.broadcast %cst_40 : f32 to vector<64x128xf32>
    %103 = arith.mulf %102, %101 : vector<64x128xf32>
    %104 = arith.negf %103 : vector<64x128xf32>
    %105 = math.exp %104 : vector<64x128xf32>
    %cst_41 = arith.constant 1.000000e+00 : f32
    %106 = vector.broadcast %cst_41 : f32 to vector<64x128xf32>
    %107 = arith.addf %106, %105 : vector<64x128xf32>
    %108 = arith.divf %106, %107 : vector<64x128xf32>
    %109 = arith.mulf %101, %108 : vector<64x128xf32>
    %110 = arith.truncf %109 : vector<64x128xf32> to vector<64x128xbf16>
    %c0_42 = arith.constant 0 : index
    %c0_43 = arith.constant 0 : index
    %c0_44 = arith.constant 0 : index
    %111 = vector.load %arg12[%c0_42, %c0_43, %c0_44] : memref<1x128x32xbf16, #tpu.memory_space<vmem>>, vector<1x128x32xbf16>
    %112 = vector.shape_cast %111 : vector<1x128x32xbf16> to vector<128x32xbf16>
    %cst_45 = arith.constant dense<0.000000e+00> : vector<64x32xf32>
    %113 = tpu.matmul %110, %112, %cst_45 {dimension_numbers = #tpu.dot_dimension_numbers<[1], [0], [0], [1], [0, 0, 1, 1], [], []>} : vector<64x128xbf16>, vector<128x32xbf16>, vector<64x32xf32> -> vector<64x32xf32>
    %c0_46 = arith.constant 0 : index
    %c0_47 = arith.constant 0 : index
    %114 = vector.load %arg13[%c0_46, %c0_47] : memref<1x32xf32, #tpu.memory_space<vmem>>, vector<1x32xf32>
    %115 = vector.broadcast %114 : vector<1x32xf32> to vector<64x32xf32>
    %116 = arith.addf %113, %115 : vector<64x32xf32>
    %117 = arith.addf %69, %116 : vector<64x32xf32>
    %118 = vector.shape_cast %117 : vector<64x32xf32> to vector<8x8x32xf32>
    %c0_48 = arith.constant 0 : index
    %c0_49 = arith.constant 0 : index
    %c0_50 = arith.constant 0 : index
    %119 = vector.load %arg14[%c0_48, %c0_49, %c0_50] : memref<8x8x32xf32, #tpu.memory_space<vmem>>, vector<8x8x32xf32>
    tpu.vector_store %arg14[%c0_48, %c0_49, %c0_50], %118 {strides = array<i32>} : memref<8x8x32xf32, #tpu.memory_space<vmem>>, vector<8x8x32xf32>,
    return
  }
  func.func @transform_0(%arg0: i32) -> (i32, i32, i32) {
    %c0_i32 = arith.constant 0 : i32
    %c0_i32_0 = arith.constant 0 : i32
    %c0_i32_1 = arith.constant 0 : i32
    return %c0_i32, %arg0, %c0_i32_0 : i32, i32, i32
  }
  func.func @transform_1(%arg0: i32) -> (i32, i32) {
    %c0_i32 = arith.constant 0 : i32
    %c0_i32_0 = arith.constant 0 : i32
    %c0_i32_1 = arith.constant 0 : i32
    return %c0_i32, %c0_i32_0 : i32, i32
  }
  func.func @transform_2(%arg0: i32) -> (i32, i32) {
    %c0_i32 = arith.constant 0 : i32
    %c0_i32_0 = arith.constant 0 : i32
    %c0_i32_1 = arith.constant 0 : i32
    return %c0_i32, %c0_i32_0 : i32, i32
  }
  func.func @transform_3(%arg0: i32) -> (i32, i32) {
    %c0_i32 = arith.constant 0 : i32
    %c0_i32_0 = arith.constant 0 : i32
    %c0_i32_1 = arith.constant 0 : i32
    return %c0_i32, %c0_i32_0 : i32, i32
  }
  func.func @transform_4(%arg0: i32) -> (i32, i32) {
    %c0_i32 = arith.constant 0 : i32
    %c0_i32_0 = arith.constant 0 : i32
    %c0_i32_1 = arith.constant 0 : i32
    return %c0_i32, %c0_i32_0 : i32, i32
  }
  func.func @transform_5(%arg0: i32) -> (i32, i32) {
    %c0_i32 = arith.constant 0 : i32
    %c0_i32_0 = arith.constant 0 : i32
    %c0_i32_1 = arith.constant 0 : i32
    return %c0_i32, %c0_i32_0 : i32, i32
  }
  func.func @transform_6(%arg0: i32) -> (i32, i32) {
    %c0_i32 = arith.constant 0 : i32
    %c0_i32_0 = arith.constant 0 : i32
    %c0_i32_1 = arith.constant 0 : i32
    return %c0_i32, %c0_i32_0 : i32, i32
  }
  func.func @transform_7(%arg0: i32) -> (i32, i32) {
    %c0_i32 = arith.constant 0 : i32
    %c0_i32_0 = arith.constant 0 : i32
    %c0_i32_1 = arith.constant 0 : i32
    return %c0_i32, %c0_i32_0 : i32, i32
  }
  func.func @transform_8(%arg0: i32) -> (i32, i32) {
    %c0_i32 = arith.constant 0 : i32
    %c0_i32_0 = arith.constant 0 : i32
    %c0_i32_1 = arith.constant 0 : i32
    return %c0_i32, %c0_i32_0 : i32, i32
  }
  func.func @transform_9(%arg0: i32) -> (i32, i32, i32) {
    %c0_i32 = arith.constant 0 : i32
    %c0_i32_0 = arith.constant 0 : i32
    %c0_i32_1 = arith.constant 0 : i32
    %c0_i32_2 = arith.constant 0 : i32
    return %c0_i32, %c0_i32_0, %c0_i32_1 : i32, i32, i32
  }
  func.func @transform_10(%arg0: i32) -> (i32, i32, i32) {
    %c0_i32 = arith.constant 0 : i32
    %c0_i32_0 = arith.constant 0 : i32
    %c0_i32_1 = arith.constant 0 : i32
    %c0_i32_2 = arith.constant 0 : i32
    return %c0_i32, %c0_i32_0, %c0_i32_1 : i32, i32, i32
  }
  func.func @transform_11(%arg0: i32) -> (i32, i32, i32) {
    %c0_i32 = arith.constant 0 : i32
    %c0_i32_0 = arith.constant 0 : i32
    %c0_i32_1 = arith.constant 0 : i32
    %c0_i32_2 = arith.constant 0 : i32
    return %c0_i32, %c0_i32_0, %c0_i32_1 : i32, i32, i32
  }
  func.func @transform_12(%arg0: i32) -> (i32, i32) {
    %c0_i32 = arith.constant 0 : i32
    %c0_i32_0 = arith.constant 0 : i32
    %c0_i32_1 = arith.constant 0 : i32
    return %c0_i32, %c0_i32_0 : i32, i32
  }
  func.func @transform_13(%arg0: i32) -> (i32, i32, i32) {
    %c0_i32 = arith.constant 0 : i32
    %c0_i32_0 = arith.constant 0 : i32
    %c0_i32_1 = arith.constant 0 : i32
    return %c0_i32, %arg0, %c0_i32_0 : i32, i32, i32
  }
}

</mosaic_0001>

<llo_original>
// kernel: tpu_custom_call.1
$region0: #{tpu_custom_call.1}
  #allocation0 [shape = 'u32[]', space=smem, size = 0x4, offset = 0x4, fixed_abs, tag = 'smem constant byte address 0x4 - core index']
  #allocation1 [shape = 'u32[144,128]{1,0:T(1,128)}', space=vmem, size = 0x12000, scoped, tag = 'internal scratch']
  %s0 = inlined_call_operand.vmem [shape: f32[8,8,32], index: 0, kind: input, shape index: {}]
  %s1 = inlined_call_operand.vmem [shape: f32[1,32], index: 1, kind: input, shape index: {}]
  %s2 = inlined_call_operand.vmem [shape: f32[1,32], index: 2, kind: input, shape index: {}]
  %s3 = inlined_call_operand.vmem [shape: bf16[32,96], index: 3, kind: input, shape index: {}]
  %s4 = inlined_call_operand.hbm [shape: f32[1,96], index: 4, kind: input, shape index: {}]
  %s5 = inlined_call_operand.hbm [shape: bf16[32,32], index: 5, kind: input, shape index: {}]
  %s6 = inlined_call_operand.hbm [shape: f32[1,32], index: 6, kind: input, shape index: {}]
  %s7 = inlined_call_operand.hbm [shape: f32[1,32], index: 7, kind: input, shape index: {}]
  %s8 = inlined_call_operand.hbm [shape: f32[1,32], index: 8, kind: input, shape index: {}]
  %s9 = inlined_call_operand.vmem [shape: bf16[1,32,128], index: 9, kind: input, shape index: {}]
  %s10 = inlined_call_operand.vmem [shape: f32[1,1,128], index: 10, kind: input, shape index: {}]
  %s11 = inlined_call_operand.vmem [shape: bf16[1,128,32], index: 11, kind: input, shape index: {}]
  %s12 = inlined_call_operand.vmem [shape: f32[1,32], index: 12, kind: input, shape index: {}]
  %s13 = inlined_call_operand.hbm [shape: f32[8,8,32], index: 13, kind: output, shape index: {}]
  %s14 = sld [smem:[#allocation0]]
  $region82: #{tpu_custom_call.1} parent=0
    _
  %s16 = ssub.s32 1, %s14
  %s17 = scalar_select 0, %s16, %s14
  $region1: #{tpu_custom_call.1} parent=0
    #allocation2 [shape = 'u8[512]{0}', space=vmem, size = 0x400, scoped, tag = 'input window, operand 4, single buffered']
    #allocation3 [shape = 's32[1]{0}', space=sflag, size = 0x4, scoped, tag = 'scoped memory for tpu_custom_call.1']
    #allocation4 [shape = 's32[1]{0}', space=sflag, size = 0x4, scoped, tag = 'scoped memory for tpu_custom_call.1']
    #allocation5 [shape = 'u8[8192]{0}', space=vmem, size = 0x2000, scoped, tag = 'input window, operand 5, single buffered']
    #allocation6 [shape = 's32[1]{0}', space=sflag, size = 0x4, scoped, tag = 'scoped memory for tpu_custom_call.1']
    #allocation7 [shape = 'u8[512]{0}', space=vmem, size = 0x400, scoped, tag = 'input window, operand 6, single buffered']
    #allocation8 [shape = 'u8[512]{0}', space=vmem, size = 0x400, scoped, tag = 'input window, operand 7, single buffered']
    #allocation9 [shape = 's32[1]{0}', space=sflag, size = 0x4, scoped, tag = 'scoped memory for tpu_custom_call.1']
    #allocation10 [shape = 'u8[512]{0}', space=vmem, size = 0x400, scoped, tag = 'input window, operand 8, single buffered']
    #allocation11 [shape = 'u8[32768]{0}', space=vmem, size = 0x8000, scoped, tag = 'output window, operand 0, single buffered']
    %18 = vsyncpa [#allocation3], 0
    %19 = vsyncpa [#allocation6], 0
    %20 = vsyncpa [#allocation9], 0
    %21 = vsyncpa [#allocation4], 0
    // Predicated region
    $region2: #{tpu_custom_call.1} parent=1 // pred_check
      _
    $region3: #{tpu_custom_call.1} parent=1 // pred_check_branch
      %23 = sbr.rel (0) target = $region5
    $region4: #{tpu_custom_call.1} parent=1 // pred_region
      _
    $region5: #{tpu_custom_call.1} parent=1 // pred_fallthru
      _
    // Predicated region
    $region6: #{tpu_custom_call.1} parent=1 // pred_check
      _
    $region7: #{tpu_custom_call.1} parent=1 // pred_check_branch
      %25 = sbr.rel (0) target = $region9
    $region8: #{tpu_custom_call.1} parent=1 // pred_region
      _
    $region9: #{tpu_custom_call.1} parent=1 // pred_fallthru
      _
    // Predicated region
    $region10: #{tpu_custom_call.1} parent=1 // pred_check
      _
    $region11: #{tpu_custom_call.1} parent=1 // pred_check_branch
      %27 = sbr.rel (0) target = $region13
    $region12: #{tpu_custom_call.1} parent=1 // pred_region
      _
    $region13: #{tpu_custom_call.1} parent=1 // pred_fallthru
      _
    // Predicated region
    $region14: #{tpu_custom_call.1} parent=1 // pred_check
      _
    $region15: #{tpu_custom_call.1} parent=1 // pred_check_branch
      %29 = sbr.rel (0) target = $region17
    $region16: #{tpu_custom_call.1} parent=1 // pred_region
      _
    $region17: #{tpu_custom_call.1} parent=1 // pred_fallthru
      _
    // Predicated region
    $region18: #{tpu_custom_call.1} parent=1 // pred_check
      _
    $region19: #{tpu_custom_call.1} parent=1 // pred_check_branch
      %31 = sbr.rel (0) target = $region21
    $region20: #{tpu_custom_call.1} parent=1 // pred_region
      %s33 = ssub.s32 16, 16
      %34 = vsyncadd [#allocation3], %s33
      %s36 = sshll.u32 [#allocation2], 4
      %s37 = int_to_ptr.vmem [resolvable:$true] %s36
      %39 = dma.hbm_to_vmem [thread:$0]  %s4, 16, %s37, [#allocation3]
    $region21: #{tpu_custom_call.1} parent=1 // pred_fallthru
      _
    // Predicated region
    $region22: #{tpu_custom_call.1} parent=1 // pred_check
      _
    $region23: #{tpu_custom_call.1} parent=1 // pred_check_branch
      %41 = sbr.rel (0) target = $region25
    $region24: #{tpu_custom_call.1} parent=1 // pred_region
      %s43 = ssub.s32 256, 256
      %44 = vsyncadd [#allocation6], %s43
      %s45 = sshll.u32 [#allocation5], 4
      %s46 = int_to_ptr.vmem [resolvable:$true] %s45
      %51 = dma.hbm_to_vmem [thread:$0]  %s5, 256, %s46, [#allocation6], 64, 64, 4
    $region25: #{tpu_custom_call.1} parent=1 // pred_fallthru
      _
    // Predicated region
    $region26: #{tpu_custom_call.1} parent=1 // pred_check
      _
    $region27: #{tpu_custom_call.1} parent=1 // pred_check_branch
      %53 = sbr.rel (0) target = $region29
    $region28: #{tpu_custom_call.1} parent=1 // pred_region
      %s55 = ssub.s32 16, 16
      %56 = vsyncadd [#allocation6], %s55
      %s58 = sshll.u32 [#allocation7], 4
      %s59 = int_to_ptr.vmem [resolvable:$true] %s58
      %61 = dma.hbm_to_vmem [thread:$0]  %s6, 16, %s59, [#allocation6]
    $region29: #{tpu_custom_call.1} parent=1 // pred_fallthru
      _
    // Predicated region
    $region30: #{tpu_custom_call.1} parent=1 // pred_check
      _
    $region31: #{tpu_custom_call.1} parent=1 // pred_check_branch
      %63 = sbr.rel (0) target = $region33
    $region32: #{tpu_custom_call.1} parent=1 // pred_region
      %s65 = ssub.s32 16, 16
      %66 = vsyncadd [#allocation9], %s65
      %s68 = sshll.u32 [#allocation8], 4
      %s69 = int_to_ptr.vmem [resolvable:$true] %s68
      %71 = dma.hbm_to_vmem [thread:$0]  %s7, 16, %s69, [#allocation9]
    $region33: #{tpu_custom_call.1} parent=1 // pred_fallthru
      _
    // Predicated region
    $region34: #{tpu_custom_call.1} parent=1 // pred_check
      _
    $region35: #{tpu_custom_call.1} parent=1 // pred_check_branch
      %73 = sbr.rel (0) target = $region37
    $region36: #{tpu_custom_call.1} parent=1 // pred_region
      %s75 = ssub.s32 16, 16
      %76 = vsyncadd [#allocation9], %s75
      %s78 = sshll.u32 [#allocation10], 4
      %s79 = int_to_ptr.vmem [resolvable:$true] %s78
      %81 = dma.hbm_to_vmem [thread:$0]  %s8, 16, %s79, [#allocation9]
    $region37: #{tpu_custom_call.1} parent=1 // pred_fallthru
      _
    // Predicated region
    $region38: #{tpu_custom_call.1} parent=1 // pred_check
      _
    $region39: #{tpu_custom_call.1} parent=1 // pred_check_branch
      %83 = sbr.rel (0) target = $region41
    $region40: #{tpu_custom_call.1} parent=1 // pred_region
      _
    $region41: #{tpu_custom_call.1} parent=1 // pred_fallthru
      _
    // Predicated region
    $region42: #{tpu_custom_call.1} parent=1 // pred_check
      _
    $region43: #{tpu_custom_call.1} parent=1 // pred_check_branch
      %85 = sbr.rel (0) target = $region45
    $region44: #{tpu_custom_call.1} parent=1 // pred_region
      _
    $region45: #{tpu_custom_call.1} parent=1 // pred_fallthru
      _
    // Predicated region
    $region46: #{tpu_custom_call.1} parent=1 // pred_check
      _
    $region47: #{tpu_custom_call.1} parent=1 // pred_check_branch
      %87 = sbr.rel (0) target = $region49
    $region48: #{tpu_custom_call.1} parent=1 // pred_region
      _
    $region49: #{tpu_custom_call.1} parent=1 // pred_fallthru
      _
    // Predicated region
    $region50: #{tpu_custom_call.1} parent=1 // pred_check
      _
    $region51: #{tpu_custom_call.1} parent=1 // pred_check_branch
      %89 = sbr.rel (0) target = $region53
    $region52: #{tpu_custom_call.1} parent=1 // pred_region
      _
    $region53: #{tpu_custom_call.1} parent=1 // pred_fallthru
      _
    // Predicated region
    $region54: #{tpu_custom_call.1} parent=1 // pred_check
      _
    $region55: #{tpu_custom_call.1} parent=1 // pred_check_branch
      %91 = sbr.rel (0) target = $region57
    $region56: #{tpu_custom_call.1} parent=1 // pred_region
      %92 = dma.done [#allocation3], 16
    $region57: #{tpu_custom_call.1} parent=1 // pred_fallthru
      _
    // Predicated region
    $region58: #{tpu_custom_call.1} parent=1 // pred_check
      _
    $region59: #{tpu_custom_call.1} parent=1 // pred_check_branch
      %94 = sbr.rel (0) target = $region61
    $region60: #{tpu_custom_call.1} parent=1 // pred_region
      %95 = dma.done [#allocation6], 256
    $region61: #{tpu_custom_call.1} parent=1 // pred_fallthru
      _
    // Predicated region
    $region62: #{tpu_custom_call.1} parent=1 // pred_check
      _
    $region63: #{tpu_custom_call.1} parent=1 // pred_check_branch
      %97 = sbr.rel (0) target = $region65
    $region64: #{tpu_custom_call.1} parent=1 // pred_region
      %98 = dma.done [#allocation6], 16
    $region65: #{tpu_custom_call.1} parent=1 // pred_fallthru
      _
    // Predicated region
    $region66: #{tpu_custom_call.1} parent=1 // pred_check
      _
    $region67: #{tpu_custom_call.1} parent=1 // pred_check_branch
      %100 = sbr.rel (0) target = $region69
    $region68: #{tpu_custom_call.1} parent=1 // pred_region
      %101 = dma.done [#allocation9], 16
    $region69: #{tpu_custom_call.1} parent=1 // pred_fallthru
      _
    // Predicated region
    $region70: #{tpu_custom_call.1} parent=1 // pred_check
      _
    $region71: #{tpu_custom_call.1} parent=1 // pred_check_branch
      %103 = sbr.rel (0) target = $region73
    $region72: #{tpu_custom_call.1} parent=1 // pred_region
      %104 = dma.done [#allocation9], 16
    $region73: #{tpu_custom_call.1} parent=1 // pred_fallthru
      _
    %v106 = vld [vmem:[%s0] sm:$0xff]
    %v107 = vld [vmem:[%s0 + $0x8] sm:$0xff]
    %v108 = vld [vmem:[%s0 + $0x10] sm:$0xff]
    %v109 = vld [vmem:[%s0 + $0x18] sm:$0xff]
    %v110 = vld [vmem:[%s0 + $0x20] sm:$0xff]
    %v111 = vld [vmem:[%s0 + $0x28] sm:$0xff]
    %v112 = vld [vmem:[%s0 + $0x30] sm:$0xff]
    %v113 = vld [vmem:[%s0 + $0x38] sm:$0xff]
    %v114 = vld [vmem:[%s1] sm:$0x1]
    %v115 = vld [vmem:[%s2] sm:$0x1]
    %vm116 = vcmask 261120
    %v117 = vsel %vm116, %v106, 0.0
    %118 = vadd.xlane.f32.xlu0 %v117
    %v119 = vpop.xlane.xlu0 %118
    %v120 = vsel %vm116, %v107, 0.0
    %121 = vadd.xlane.f32.xlu0 %v120
    %v122 = vpop.xlane.xlu0 %121
    %v123 = vsel %vm116, %v108, 0.0
    %124 = vadd.xlane.f32.xlu0 %v123
    %v125 = vpop.xlane.xlu0 %124
    %v126 = vsel %vm116, %v109, 0.0
    %127 = vadd.xlane.f32.xlu0 %v126
    %v128 = vpop.xlane.xlu0 %127
    %v129 = vsel %vm116, %v110, 0.0
    %130 = vadd.xlane.f32.xlu0 %v129
    %v131 = vpop.xlane.xlu0 %130
    %v132 = vsel %vm116, %v111, 0.0
    %133 = vadd.xlane.f32.xlu0 %v132
    %v134 = vpop.xlane.xlu0 %133
    %v135 = vsel %vm116, %v112, 0.0
    %136 = vadd.xlane.f32.xlu0 %v135
    %v137 = vpop.xlane.xlu0 %136
    %v138 = vsel %vm116, %v113, 0.0
    %139 = vadd.xlane.f32.xlu0 %v138
    %v140 = vpop.xlane.xlu0 %139
    %v141 = vrcp.pop 32.0
    %v142 = vmul.f32 %v119, %v141
    %v143 = vmul.f32 %v122, %v141
    %v144 = vmul.f32 %v125, %v141
    %v145 = vmul.f32 %v128, %v141
    %v146 = vmul.f32 %v131, %v141
    %v147 = vmul.f32 %v134, %v141
    %v148 = vmul.f32 %v137, %v141
    %v149 = vmul.f32 %v140, %v141
    %v150 = vsub.f32 %v106, %v142
    %v151 = vsub.f32 %v107, %v143
    %v152 = vsub.f32 %v108, %v144
    %v153 = vsub.f32 %v109, %v145
    %v154 = vsub.f32 %v110, %v146
    %v155 = vsub.f32 %v111, %v147
    %v156 = vsub.f32 %v112, %v148
    %v157 = vsub.f32 %v113, %v149
    %v158 = vmul.f32 %v150, %v150
    %v159 = vmul.f32 %v151, %v151
    %v160 = vmul.f32 %v152, %v152
    %v161 = vmul.f32 %v153, %v153
    %v162 = vmul.f32 %v154, %v154
    %v163 = vmul.f32 %v155, %v155
    %v164 = vmul.f32 %v156, %v156
    %v165 = vmul.f32 %v157, %v157
    %v166 = vsel %vm116, %v158, 0.0
    %167 = vadd.xlane.f32.xlu0 %v166
    %v168 = vpop.xlane.xlu0 %167
    %v169 = vsel %vm116, %v159, 0.0
    %170 = vadd.xlane.f32.xlu0 %v169
    %v171 = vpop.xlane.xlu0 %170
    %v172 = vsel %vm116, %v160, 0.0
    %173 = vadd.xlane.f32.xlu0 %v172
    %v174 = vpop.xlane.xlu0 %173
    %v175 = vsel %vm116, %v161, 0.0
    %176 = vadd.xlane.f32.xlu0 %v175
    %v177 = vpop.xlane.xlu0 %176
    %v178 = vsel %vm116, %v162, 0.0
    %179 = vadd.xlane.f32.xlu0 %v178
    %v180 = vpop.xlane.xlu0 %179
    %v181 = vsel %vm116, %v163, 0.0
    %182 = vadd.xlane.f32.xlu0 %v181
    %v183 = vpop.xlane.xlu0 %182
    %v184 = vsel %vm116, %v164, 0.0
    %185 = vadd.xlane.f32.xlu0 %v184
    %v186 = vpop.xlane.xlu0 %185
    %v187 = vsel %vm116, %v165, 0.0
    %188 = vadd.xlane.f32.xlu0 %v187
    %v189 = vpop.xlane.xlu0 %188
    %v190 = vmul.f32 %v168, %v141
    %v191 = vmul.f32 %v171, %v141
    %v192 = vmul.f32 %v174, %v141
    %v193 = vmul.f32 %v177, %v141
    %v194 = vmul.f32 %v180, %v141
    %v195 = vmul.f32 %v183, %v141
    %v196 = vmul.f32 %v186, %v141
    %v197 = vmul.f32 %v189, %v141
    %v198 = vadd.f32 %v190, 1e-05
    %v199 = vadd.f32 %v191, 1e-05
    %v200 = vadd.f32 %v192, 1e-05
    %v201 = vadd.f32 %v193, 1e-05
    %v202 = vadd.f32 %v194, 1e-05
    %v203 = vadd.f32 %v195, 1e-05
    %v204 = vadd.f32 %v196, 1e-05
    %v205 = vadd.f32 %v197, 1e-05
    %v206 = vrsqrt.pop %v198
    %v207 = vrsqrt.pop %v199
    %v208 = vrsqrt.pop %v200
    %v209 = vrsqrt.pop %v201
    %v210 = vrsqrt.pop %v202
    %v211 = vrsqrt.pop %v203
    %v212 = vrsqrt.pop %v204
    %v213 = vrsqrt.pop %v205
    %v214 = vmul.f32 %v150, %v206
    %v215 = vmul.f32 %v151, %v207
    %v216 = vmul.f32 %v152, %v208
    %v217 = vmul.f32 %v153, %v209
    %v218 = vmul.f32 %v154, %v210
    %v219 = vmul.f32 %v155, %v211
    %v220 = vmul.f32 %v156, %v212
    %v221 = vmul.f32 %v157, %v213
    %v223 = vlaneseq
    %v224 = vshrl.u32 %v223, 7
    %v225 = vsub.s32 0, %v224
    %v226 = vrot.slane %v114, %v225
    %v228 = vmul.f32 %v214, %v226
    %v229 = vmul.f32 %v215, %v226
    %v230 = vmul.f32 %v216, %v226
    %v231 = vmul.f32 %v217, %v226
    %v232 = vmul.f32 %v218, %v226
    %v233 = vmul.f32 %v219, %v226
    %v234 = vmul.f32 %v220, %v226
    %v235 = vmul.f32 %v221, %v226
    %v237 = vlaneseq
    %v238 = vshrl.u32 %v237, 7
    %v239 = vsub.s32 0, %v238
    %v240 = vrot.slane %v115, %v239
    %v242 = vadd.f32 %v228, %v240
    %v243 = vadd.f32 %v229, %v240
    %v244 = vadd.f32 %v230, %v240
    %v245 = vadd.f32 %v231, %v240
    %v246 = vadd.f32 %v232, %v240
    %v247 = vadd.f32 %v233, %v240
    %v248 = vadd.f32 %v234, %v240
    %v249 = vadd.f32 %v235, %v240
    %v250 = vpack.c.bf16 %v243, %v242
    %v251 = vpack.c.bf16 %v245, %v244
    %v252 = vpack.c.bf16 %v247, %v246
    %v253 = vpack.c.bf16 %v249, %v248
    %v254 = vld [vmem:[%s3] sm:$0xf]
    %v255 = vld [vmem:[%s3 + $0x4] sm:$0xf]
    %v256 = vld [vmem:[%s3 + $0x8] sm:$0xf]
    %v257 = vld [vmem:[%s3 + $0xc] sm:$0xf]
    %v258 = vld [vmem:[#allocation2] sm:$0x1]
    %v260 = vlaneseq
    %v261 = vshrl.u32 %v260, 7
    %v262 = vsub.s32 0, %v261
    %v263 = vrot.slane %v258, %v262
    %v269 = vunpack.c.l.b16 %v254
    %v270 = vunpack.c.l.b16 %v255
    %v271 = vunpack.c.l.b16 %v256
    %v272 = vunpack.c.l.b16 %v257
    %v273 = vpack.c.b16 %v270, %v269
    %v274 = vpack.c.b16 %v272, %v271
    %v278 = vsel %vm116, %v250, 0
    %v281 = vsel %vm116, %v251, 0
    %v284 = vsel %vm116, %v252, 0
    %v287 = vsel %vm116, %v253, 0
    %289 = vmatprep.subr.bf16.mxu0 0
    %290 = vmatpush1.bf16.msra.mxu0 %v273
    %291 = vmatprep.subr.bf16.mxu0 0
    %292 = vmatpush1.bf16.msra.mxu0 %v274
    %293 = vmatprep.subr.bf16.mxu0 0
    %294 = vmatpush1.bf16.msra.mxu0 0
    %295 = vmatprep.subr.bf16.mxu0 0
    %296 = vmatpush1.bf16.msra.mxu0 0
    %297 = vmatprep.subr.bf16.mxu0 0
    %298 = vmatpush1.bf16.msra.mxu0 0
    %299 = vmatprep.subr.bf16.mxu0 0
    %300 = vmatpush1.bf16.msra.mxu0 0
    %301 = vmatprep.subr.bf16.mxu0 0
    %302 = vmatpush1.bf16.msra.mxu0 0
    %303 = vmatprep.subr.bf16.mxu0 0
    %304 = vmatpush1.bf16.msra.mxu0 0
    %305 = vmatprep.subr.bf16.mxu0 0
    %306 = vmatpush1.bf16.msra.mxu0 0
    %307 = vmatprep.subr.bf16.mxu0 0
    %308 = vmatpush1.bf16.msra.mxu0 0
    %309 = vmatprep.subr.bf16.mxu0 0
    %310 = vmatpush1.bf16.msra.mxu0 0
    %311 = vmatprep.subr.bf16.mxu0 0
    %312 = vmatpush1.bf16.msra.mxu0 0
    %313 = vmatprep.subr.bf16.mxu0 0
    %314 = vmatpush1.bf16.msra.mxu0 0
    %315 = vmatprep.subr.bf16.mxu0 0
    %316 = vmatpush1.bf16.msra.mxu0 0
    %317 = vmatprep.subr.bf16.mxu0 0
    %318 = vmatpush1.bf16.msra.mxu0 0
    %319 = vmatprep.subr.bf16.mxu0 0
    %320 = vmatpush1.bf16.msra.mxu0 0
    %321 = vmatprep.mubr.bf16.mxu0 0
    %322 = vmatmul.mubr.bf16.gmra.mrb[0].mxu0 %v278
    %v323 = vpop.f32.mrb[0].mxu0
    %v324 = vadd.f32 %v263, %v323
    %v325 = vpop.f32.mrb[0].mxu0
    %v326 = vpop.f32.mrb[0].mxu0
    %v327 = vadd.f32 %v263, %v326
    %v328 = vpop.f32.mrb[0].mxu0
    %329 = vmatprep.mubr.bf16.mxu0 0
    %330 = vmatmul.mubr.bf16.gmra.mrb[0].mxu0 %v281
    %v331 = vpop.f32.mrb[0].mxu0
    %v332 = vadd.f32 %v263, %v331
    %v333 = vpop.f32.mrb[0].mxu0
    %v334 = vpop.f32.mrb[0].mxu0
    %v335 = vadd.f32 %v263, %v334
    %v336 = vpop.f32.mrb[0].mxu0
    %337 = vmatprep.mubr.bf16.mxu0 0
    %338 = vmatmul.mubr.bf16.gmra.mrb[0].mxu0 %v284
    %v339 = vpop.f32.mrb[0].mxu0
    %v340 = vadd.f32 %v263, %v339
    %v341 = vpop.f32.mrb[0].mxu0
    %v342 = vpop.f32.mrb[0].mxu0
    %v343 = vadd.f32 %v263, %v342
    %v344 = vpop.f32.mrb[0].mxu0
    %345 = vmatprep.mubr.bf16.mxu0 0
    %346 = vmatmul.mubr.bf16.gmra.mrb[0].mxu0 %v287
    %v347 = vpop.f32.mrb[0].mxu0
    %v348 = vadd.f32 %v263, %v347
    %v349 = vpop.f32.mrb[0].mxu0
    %v350 = vpop.f32.mrb[0].mxu0
    %v351 = vadd.f32 %v263, %v350
    %v352 = vpop.f32.mrb[0].mxu0
    %353 = vdwg.mxu0
    %v354 = vpack.c.bf16 %v327, %v324
    %v355 = vpack.c.bf16 %v335, %v332
    %v356 = vpack.c.bf16 %v343, %v340
    %v357 = vpack.c.bf16 %v351, %v348
    %362 = vrot.lane.b32.xlu0 %v354, 120
    %v363 = vpop.permute.xlu0 %362
    %364 = vrot.lane.b32.xlu0 %v355, 120
    %v365 = vpop.permute.xlu0 %364
    %366 = vrot.lane.b32.xlu0 %v356, 120
    %v367 = vpop.permute.xlu0 %366
    %368 = vrot.lane.b32.xlu0 %v357, 120
    %v369 = vpop.permute.xlu0 %368
    %370 = vrot.lane.b32.xlu0 %v354, 112
    %v371 = vpop.permute.xlu0 %370
    %372 = vrot.lane.b32.xlu0 %v355, 112
    %v373 = vpop.permute.xlu0 %372
    %374 = vrot.lane.b32.xlu0 %v356, 112
    %v375 = vpop.permute.xlu0 %374
    %376 = vrot.lane.b32.xlu0 %v357, 112
    %v377 = vpop.permute.xlu0 %376
    %378 = vrot.lane.b32.xlu0 %v354, 104
    %v379 = vpop.permute.xlu0 %378
    %380 = vrot.lane.b32.xlu0 %v355, 104
    %v381 = vpop.permute.xlu0 %380
    %382 = vrot.lane.b32.xlu0 %v356, 104
    %v383 = vpop.permute.xlu0 %382
    %384 = vrot.lane.b32.xlu0 %v357, 104
    %v385 = vpop.permute.xlu0 %384
    %v388 = vpack.i.b16 %v363, %v354
    %v390 = vshrl.u32 %v354, 16
    %v391 = vshrl.u32 %v363, 16
    %v392 = vpack.i.b16 %v391, %v390
    %v396 = vpack.i.b16 %v379, %v371
    %v398 = vshrl.u32 %v371, 16
    %v399 = vshrl.u32 %v379, 16
    %v400 = vpack.i.b16 %v399, %v398
    %v403 = vpack.i.b16 0, 0
    %v405 = vshrl.u32 0, 16
    %v406 = vpack.i.b16 %v405, %v405
    %v410 = vpack.i.b16 %v365, %v355
    %v412 = vshrl.u32 %v355, 16
    %v413 = vshrl.u32 %v365, 16
    %v414 = vpack.i.b16 %v413, %v412
    %v418 = vpack.i.b16 %v381, %v373
    %v420 = vshrl.u32 %v373, 16
    %v421 = vshrl.u32 %v381, 16
    %v422 = vpack.i.b16 %v421, %v420
    %v426 = vpack.i.b16 %v367, %v356
    %v428 = vshrl.u32 %v356, 16
    %v429 = vshrl.u32 %v367, 16
    %v430 = vpack.i.b16 %v429, %v428
    %v434 = vpack.i.b16 %v383, %v375
    %v436 = vshrl.u32 %v375, 16
    %v437 = vshrl.u32 %v383, 16
    %v438 = vpack.i.b16 %v437, %v436
    %v442 = vpack.i.b16 %v369, %v357
    %v444 = vshrl.u32 %v357, 16
    %v445 = vshrl.u32 %v369, 16
    %v446 = vpack.i.b16 %v445, %v444
    %v450 = vpack.i.b16 %v385, %v377
    %v452 = vshrl.u32 %v377, 16
    %v453 = vshrl.u32 %v385, 16
    %v454 = vpack.i.b16 %v453, %v452
    %v456 = vcombine.high %v388, %v403
    %v458 = vunpack.c.l.s4 1983009808
    %v459 = vunpack.c.0.s8 %v458
    %v460 = vlaneseq
    %v461 = vshrl.u32 %v460, 7
    %v462 = vsub.s32 %v459, %v461
    %v463 = vrot.slane %v388, %v462
    %v465 = vunpack.c.l.s4 1983009808
    %v466 = vunpack.c.0.s8 %v465
    %v467 = vlaneseq
    %v468 = vshrl.u32 %v467, 7
    %v469 = vsub.s32 %v466, %v468
    %v470 = vrot.slane %v456, %v469
    %v471 = vcombine.high %v396, %v403
    %v473 = vunpack.c.l.s4 1983009808
    %v474 = vunpack.c.0.s8 %v473
    %v475 = vlaneseq
    %v476 = vshrl.u32 %v475, 7
    %v477 = vsub.s32 %v474, %v476
    %v478 = vrot.slane %v396, %v477
    %v480 = vunpack.c.l.s4 1983009808
    %v481 = vunpack.c.0.s8 %v480
    %v482 = vlaneseq
    %v483 = vshrl.u32 %v482, 7
    %v484 = vsub.s32 %v481, %v483
    %v485 = vrot.slane %v471, %v484
    %v486 = vcombine.low %v463, %v478
    %v487 = vcombine.high %v463, %v478
    %v489 = vunpack.c.l.s4 1934713408
    %v490 = vunpack.c.0.s8 %v489
    %v491 = vlaneseq
    %v492 = vshrl.u32 %v491, 7
    %v493 = vsub.s32 %v490, %v492
    %v494 = vrot.slane %v486, %v493
    %v496 = vunpack.c.l.s4 1934713408
    %v497 = vunpack.c.0.s8 %v496
    %v498 = vlaneseq
    %v499 = vshrl.u32 %v498, 7
    %v500 = vsub.s32 %v497, %v499
    %v501 = vrot.slane %v487, %v500
    %v502 = vcombine.low %v470, %v485
    %v503 = vcombine.high %v470, %v485
    %v505 = vunpack.c.l.s4 1934713408
    %v506 = vunpack.c.0.s8 %v505
    %v507 = vlaneseq
    %v508 = vshrl.u32 %v507, 7
    %v509 = vsub.s32 %v506, %v508
    %v510 = vrot.slane %v502, %v509
    %v512 = vunpack.c.l.s4 1934713408
    %v513 = vunpack.c.0.s8 %v512
    %v514 = vlaneseq
    %v515 = vshrl.u32 %v514, 7
    %v516 = vsub.s32 %v513, %v515
    %v517 = vrot.slane %v503, %v516
    %v518 = vcombine.high %v494, 0
    %v519 = vcombine.high %v501, 0
    %v520 = vcombine.high %v510, 0
    %v521 = vcombine.high %v517, 0
    %v522 = vcombine.high %v392, %v406
    %v524 = vunpack.c.l.s4 1983009808
    %v525 = vunpack.c.0.s8 %v524
    %v526 = vlaneseq
    %v527 = vshrl.u32 %v526, 7
    %v528 = vsub.s32 %v525, %v527
    %v529 = vrot.slane %v392, %v528
    %v531 = vunpack.c.l.s4 1983009808
    %v532 = vunpack.c.0.s8 %v531
    %v533 = vlaneseq
    %v534 = vshrl.u32 %v533, 7
    %v535 = vsub.s32 %v532, %v534
    %v536 = vrot.slane %v522, %v535
    %v537 = vcombine.high %v400, %v406
    %v539 = vunpack.c.l.s4 1983009808
    %v540 = vunpack.c.0.s8 %v539
    %v541 = vlaneseq
    %v542 = vshrl.u32 %v541, 7
    %v543 = vsub.s32 %v540, %v542
    %v544 = vrot.slane %v400, %v543
    %v546 = vunpack.c.l.s4 1983009808
    %v547 = vunpack.c.0.s8 %v546
    %v548 = vlaneseq
    %v549 = vshrl.u32 %v548, 7
    %v550 = vsub.s32 %v547, %v549
    %v551 = vrot.slane %v537, %v550
    %v552 = vcombine.low %v529, %v544
    %v553 = vcombine.high %v529, %v544
    %v555 = vunpack.c.l.s4 1934713408
    %v556 = vunpack.c.0.s8 %v555
    %v557 = vlaneseq
    %v558 = vshrl.u32 %v557, 7
    %v559 = vsub.s32 %v556, %v558
    %v560 = vrot.slane %v552, %v559
    %v562 = vunpack.c.l.s4 1934713408
    %v563 = vunpack.c.0.s8 %v562
    %v564 = vlaneseq
    %v565 = vshrl.u32 %v564, 7
    %v566 = vsub.s32 %v563, %v565
    %v567 = vrot.slane %v553, %v566
    %v568 = vcombine.low %v536, %v551
    %v569 = vcombine.high %v536, %v551
    %v571 = vunpack.c.l.s4 1934713408
    %v572 = vunpack.c.0.s8 %v571
    %v573 = vlaneseq
    %v574 = vshrl.u32 %v573, 7
    %v575 = vsub.s32 %v572, %v574
    %v576 = vrot.slane %v568, %v575
    %v578 = vunpack.c.l.s4 1934713408
    %v579 = vunpack.c.0.s8 %v578
    %v580 = vlaneseq
    %v581 = vshrl.u32 %v580, 7
    %v582 = vsub.s32 %v579, %v581
    %v583 = vrot.slane %v569, %v582
    %v584 = vcombine.high %v560, 0
    %v585 = vcombine.high %v567, 0
    %v586 = vcombine.high %v576, 0
    %v587 = vcombine.high %v583, 0
    %v588 = vcombine.high %v410, %v403
    %v590 = vunpack.c.l.s4 1983009808
    %v591 = vunpack.c.0.s8 %v590
    %v592 = vlaneseq
    %v593 = vshrl.u32 %v592, 7
    %v594 = vsub.s32 %v591, %v593
    %v595 = vrot.slane %v410, %v594
    %v597 = vunpack.c.l.s4 1983009808
    %v598 = vunpack.c.0.s8 %v597
    %v599 = vlaneseq
    %v600 = vshrl.u32 %v599, 7
    %v601 = vsub.s32 %v598, %v600
    %v602 = vrot.slane %v588, %v601
    %v603 = vcombine.high %v418, %v403
    %v605 = vunpack.c.l.s4 1983009808
    %v606 = vunpack.c.0.s8 %v605
    %v607 = vlaneseq
    %v608 = vshrl.u32 %v607, 7
    %v609 = vsub.s32 %v606, %v608
    %v610 = vrot.slane %v418, %v609
    %v612 = vunpack.c.l.s4 1983009808
    %v613 = vunpack.c.0.s8 %v612
    %v614 = vlaneseq
    %v615 = vshrl.u32 %v614, 7
    %v616 = vsub.s32 %v613, %v615
    %v617 = vrot.slane %v603, %v616
    %v618 = vcombine.low %v595, %v610
    %v619 = vcombine.high %v595, %v610
    %v621 = vunpack.c.l.s4 1934713408
    %v622 = vunpack.c.0.s8 %v621
    %v623 = vlaneseq
    %v624 = vshrl.u32 %v623, 7
    %v625 = vsub.s32 %v622, %v624
    %v626 = vrot.slane %v618, %v625
    %v628 = vunpack.c.l.s4 1934713408
    %v629 = vunpack.c.0.s8 %v628
    %v630 = vlaneseq
    %v631 = vshrl.u32 %v630, 7
    %v632 = vsub.s32 %v629, %v631
    %v633 = vrot.slane %v619, %v632
    %v634 = vcombine.low %v602, %v617
    %v635 = vcombine.high %v602, %v617
    %v637 = vunpack.c.l.s4 1934713408
    %v638 = vunpack.c.0.s8 %v637
    %v639 = vlaneseq
    %v640 = vshrl.u32 %v639, 7
    %v641 = vsub.s32 %v638, %v640
    %v642 = vrot.slane %v634, %v641
    %v644 = vunpack.c.l.s4 1934713408
    %v645 = vunpack.c.0.s8 %v644
    %v646 = vlaneseq
    %v647 = vshrl.u32 %v646, 7
    %v648 = vsub.s32 %v645, %v647
    %v649 = vrot.slane %v635, %v648
    %v650 = vcombine.high %v626, 0
    %v651 = vcombine.high %v633, 0
    %v652 = vcombine.high %v642, 0
    %v653 = vcombine.high %v649, 0
    %v654 = vcombine.high %v414, %v406
    %v656 = vunpack.c.l.s4 1983009808
    %v657 = vunpack.c.0.s8 %v656
    %v658 = vlaneseq
    %v659 = vshrl.u32 %v658, 7
    %v660 = vsub.s32 %v657, %v659
    %v661 = vrot.slane %v414, %v660
    %v663 = vunpack.c.l.s4 1983009808
    %v664 = vunpack.c.0.s8 %v663
    %v665 = vlaneseq
    %v666 = vshrl.u32 %v665, 7
    %v667 = vsub.s32 %v664, %v666
    %v668 = vrot.slane %v654, %v667
    %v669 = vcombine.high %v422, %v406
    %v671 = vunpack.c.l.s4 1983009808
    %v672 = vunpack.c.0.s8 %v671
    %v673 = vlaneseq
    %v674 = vshrl.u32 %v673, 7
    %v675 = vsub.s32 %v672, %v674
    %v676 = vrot.slane %v422, %v675
    %v678 = vunpack.c.l.s4 1983009808
    %v679 = vunpack.c.0.s8 %v678
    %v680 = vlaneseq
    %v681 = vshrl.u32 %v680, 7
    %v682 = vsub.s32 %v679, %v681
    %v683 = vrot.slane %v669, %v682
    %v684 = vcombine.low %v661, %v676
    %v685 = vcombine.high %v661, %v676
    %v687 = vunpack.c.l.s4 1934713408
    %v688 = vunpack.c.0.s8 %v687
    %v689 = vlaneseq
    %v690 = vshrl.u32 %v689, 7
    %v691 = vsub.s32 %v688, %v690
    %v692 = vrot.slane %v684, %v691
    %v694 = vunpack.c.l.s4 1934713408
    %v695 = vunpack.c.0.s8 %v694
    %v696 = vlaneseq
    %v697 = vshrl.u32 %v696, 7
    %v698 = vsub.s32 %v695, %v697
    %v699 = vrot.slane %v685, %v698
    %v700 = vcombine.low %v668, %v683
    %v701 = vcombine.high %v668, %v683
    %v703 = vunpack.c.l.s4 1934713408
    %v704 = vunpack.c.0.s8 %v703
    %v705 = vlaneseq
    %v706 = vshrl.u32 %v705, 7
    %v707 = vsub.s32 %v704, %v706
    %v708 = vrot.slane %v700, %v707
    %v710 = vunpack.c.l.s4 1934713408
    %v711 = vunpack.c.0.s8 %v710
    %v712 = vlaneseq
    %v713 = vshrl.u32 %v712, 7
    %v714 = vsub.s32 %v711, %v713
    %v715 = vrot.slane %v701, %v714
    %v716 = vcombine.high %v692, 0
    %v717 = vcombine.high %v699, 0
    %v718 = vcombine.high %v708, 0
    %v719 = vcombine.high %v715, 0
    %v720 = vcombine.high %v426, %v403
    %v722 = vunpack.c.l.s4 1983009808
    %v723 = vunpack.c.0.s8 %v722
    %v724 = vlaneseq
    %v725 = vshrl.u32 %v724, 7
    %v726 = vsub.s32 %v723, %v725
    %v727 = vrot.slane %v426, %v726
    %v729 = vunpack.c.l.s4 1983009808
    %v730 = vunpack.c.0.s8 %v729
    %v731 = vlaneseq
    %v732 = vshrl.u32 %v731, 7
    %v733 = vsub.s32 %v730, %v732
    %v734 = vrot.slane %v720, %v733
    %v735 = vcombine.high %v434, %v403
    %v737 = vunpack.c.l.s4 1983009808
    %v738 = vunpack.c.0.s8 %v737
    %v739 = vlaneseq
    %v740 = vshrl.u32 %v739, 7
    %v741 = vsub.s32 %v738, %v740
    %v742 = vrot.slane %v434, %v741
    %v744 = vunpack.c.l.s4 1983009808
    %v745 = vunpack.c.0.s8 %v744
    %v746 = vlaneseq
    %v747 = vshrl.u32 %v746, 7
    %v748 = vsub.s32 %v745, %v747
    %v749 = vrot.slane %v735, %v748
    %v750 = vcombine.low %v727, %v742
    %v751 = vcombine.high %v727, %v742
    %v753 = vunpack.c.l.s4 1934713408
    %v754 = vunpack.c.0.s8 %v753
    %v755 = vlaneseq
    %v756 = vshrl.u32 %v755, 7
    %v757 = vsub.s32 %v754, %v756
    %v758 = vrot.slane %v750, %v757
    %v760 = vunpack.c.l.s4 1934713408
    %v761 = vunpack.c.0.s8 %v760
    %v762 = vlaneseq
    %v763 = vshrl.u32 %v762, 7
    %v764 = vsub.s32 %v761, %v763
    %v765 = vrot.slane %v751, %v764
    %v766 = vcombine.low %v734, %v749
    %v767 = vcombine.high %v734, %v749
    %v769 = vunpack.c.l.s4 1934713408
    %v770 = vunpack.c.0.s8 %v769
    %v771 = vlaneseq
    %v772 = vshrl.u32 %v771, 7
    %v773 = vsub.s32 %v770, %v772
    %v774 = vrot.slane %v766, %v773
    %v776 = vunpack.c.l.s4 1934713408
    %v777 = vunpack.c.0.s8 %v776
    %v778 = vlaneseq
    %v779 = vshrl.u32 %v778, 7
    %v780 = vsub.s32 %v777, %v779
    %v781 = vrot.slane %v767, %v780
    %v782 = vcombine.high %v758, 0
    %v783 = vcombine.high %v765, 0
    %v784 = vcombine.high %v774, 0
    %v785 = vcombine.high %v781, 0
    %v786 = vcombine.high %v430, %v406
    %v788 = vunpack.c.l.s4 1983009808
    %v789 = vunpack.c.0.s8 %v788
    %v790 = vlaneseq
    %v791 = vshrl.u32 %v790, 7
    %v792 = vsub.s32 %v789, %v791
    %v793 = vrot.slane %v430, %v792
    %v795 = vunpack.c.l.s4 1983009808
    %v796 = vunpack.c.0.s8 %v795
    %v797 = vlaneseq
    %v798 = vshrl.u32 %v797, 7
    %v799 = vsub.s32 %v796, %v798
    %v800 = vrot.slane %v786, %v799
    %v801 = vcombine.high %v438, %v406
    %v803 = vunpack.c.l.s4 1983009808
    %v804 = vunpack.c.0.s8 %v803
    %v805 = vlaneseq
    %v806 = vshrl.u32 %v805, 7
    %v807 = vsub.s32 %v804, %v806
    %v808 = vrot.slane %v438, %v807
    %v810 = vunpack.c.l.s4 1983009808
    %v811 = vunpack.c.0.s8 %v810
    %v812 = vlaneseq
    %v813 = vshrl.u32 %v812, 7
    %v814 = vsub.s32 %v811, %v813
    %v815 = vrot.slane %v801, %v814
    %v816 = vcombine.low %v793, %v808
    %v817 = vcombine.high %v793, %v808
    %v819 = vunpack.c.l.s4 1934713408
    %v820 = vunpack.c.0.s8 %v819
    %v821 = vlaneseq
    %v822 = vshrl.u32 %v821, 7
    %v823 = vsub.s32 %v820, %v822
    %v824 = vrot.slane %v816, %v823
    %v826 = vunpack.c.l.s4 1934713408
    %v827 = vunpack.c.0.s8 %v826
    %v828 = vlaneseq
    %v829 = vshrl.u32 %v828, 7
    %v830 = vsub.s32 %v827, %v829
    %v831 = vrot.slane %v817, %v830
    %v832 = vcombine.low %v800, %v815
    %v833 = vcombine.high %v800, %v815
    %v835 = vunpack.c.l.s4 1934713408
    %v836 = vunpack.c.0.s8 %v835
    %v837 = vlaneseq
    %v838 = vshrl.u32 %v837, 7
    %v839 = vsub.s32 %v836, %v838
    %v840 = vrot.slane %v832, %v839
    %v842 = vunpack.c.l.s4 1934713408
    %v843 = vunpack.c.0.s8 %v842
    %v844 = vlaneseq
    %v845 = vshrl.u32 %v844, 7
    %v846 = vsub.s32 %v843, %v845
    %v847 = vrot.slane %v833, %v846
    %v848 = vcombine.high %v824, 0
    %v849 = vcombine.high %v831, 0
    %v850 = vcombine.high %v840, 0
    %v851 = vcombine.high %v847, 0
    %v852 = vcombine.high %v442, %v403
    %v854 = vunpack.c.l.s4 1983009808
    %v855 = vunpack.c.0.s8 %v854
    %v856 = vlaneseq
    %v857 = vshrl.u32 %v856, 7
    %v858 = vsub.s32 %v855, %v857
    %v859 = vrot.slane %v442, %v858
    %v861 = vunpack.c.l.s4 1983009808
    %v862 = vunpack.c.0.s8 %v861
    %v863 = vlaneseq
    %v864 = vshrl.u32 %v863, 7
    %v865 = vsub.s32 %v862, %v864
    %v866 = vrot.slane %v852, %v865
    %v867 = vcombine.high %v450, %v403
    %v869 = vunpack.c.l.s4 1983009808
    %v870 = vunpack.c.0.s8 %v869
    %v871 = vlaneseq
    %v872 = vshrl.u32 %v871, 7
    %v873 = vsub.s32 %v870, %v872
    %v874 = vrot.slane %v450, %v873
    %v876 = vunpack.c.l.s4 1983009808
    %v877 = vunpack.c.0.s8 %v876
    %v878 = vlaneseq
    %v879 = vshrl.u32 %v878, 7
    %v880 = vsub.s32 %v877, %v879
    %v881 = vrot.slane %v867, %v880
    %v882 = vcombine.low %v859, %v874
    %v883 = vcombine.high %v859, %v874
    %v885 = vunpack.c.l.s4 1934713408
    %v886 = vunpack.c.0.s8 %v885
    %v887 = vlaneseq
    %v888 = vshrl.u32 %v887, 7
    %v889 = vsub.s32 %v886, %v888
    %v890 = vrot.slane %v882, %v889
    %v892 = vunpack.c.l.s4 1934713408
    %v893 = vunpack.c.0.s8 %v892
    %v894 = vlaneseq
    %v895 = vshrl.u32 %v894, 7
    %v896 = vsub.s32 %v893, %v895
    %v897 = vrot.slane %v883, %v896
    %v898 = vcombine.low %v866, %v881
    %v899 = vcombine.high %v866, %v881
    %v901 = vunpack.c.l.s4 1934713408
    %v902 = vunpack.c.0.s8 %v901
    %v903 = vlaneseq
    %v904 = vshrl.u32 %v903, 7
    %v905 = vsub.s32 %v902, %v904
    %v906 = vrot.slane %v898, %v905
    %v908 = vunpack.c.l.s4 1934713408
    %v909 = vunpack.c.0.s8 %v908
    %v910 = vlaneseq
    %v911 = vshrl.u32 %v910, 7
    %v912 = vsub.s32 %v909, %v911
    %v913 = vrot.slane %v899, %v912
    %v914 = vcombine.high %v890, 0
    %v915 = vcombine.high %v897, 0
    %v916 = vcombine.high %v906, 0
    %v917 = vcombine.high %v913, 0
    %v918 = vcombine.high %v446, %v406
    %v920 = vunpack.c.l.s4 1983009808
    %v921 = vunpack.c.0.s8 %v920
    %v922 = vlaneseq
    %v923 = vshrl.u32 %v922, 7
    %v924 = vsub.s32 %v921, %v923
    %v925 = vrot.slane %v446, %v924
    %v927 = vunpack.c.l.s4 1983009808
    %v928 = vunpack.c.0.s8 %v927
    %v929 = vlaneseq
    %v930 = vshrl.u32 %v929, 7
    %v931 = vsub.s32 %v928, %v930
    %v932 = vrot.slane %v918, %v931
    %v933 = vcombine.high %v454, %v406
    %v935 = vunpack.c.l.s4 1983009808
    %v936 = vunpack.c.0.s8 %v935
    %v937 = vlaneseq
    %v938 = vshrl.u32 %v937, 7
    %v939 = vsub.s32 %v936, %v938
    %v940 = vrot.slane %v454, %v939
    %v942 = vunpack.c.l.s4 1983009808
    %v943 = vunpack.c.0.s8 %v942
    %v944 = vlaneseq
    %v945 = vshrl.u32 %v944, 7
    %v946 = vsub.s32 %v943, %v945
    %v947 = vrot.slane %v933, %v946
    %v948 = vcombine.low %v925, %v940
    %v949 = vcombine.high %v925, %v940
    %v951 = vunpack.c.l.s4 1934713408
    %v952 = vunpack.c.0.s8 %v951
    %v953 = vlaneseq
    %v954 = vshrl.u32 %v953, 7
    %v955 = vsub.s32 %v952, %v954
    %v956 = vrot.slane %v948, %v955
    %v958 = vunpack.c.l.s4 1934713408
    %v959 = vunpack.c.0.s8 %v958
    %v960 = vlaneseq
    %v961 = vshrl.u32 %v960, 7
    %v962 = vsub.s32 %v959, %v961
    %v963 = vrot.slane %v949, %v962
    %v964 = vcombine.low %v932, %v947
    %v965 = vcombine.high %v932, %v947
    %v967 = vunpack.c.l.s4 1934713408
    %v968 = vunpack.c.0.s8 %v967
    %v969 = vlaneseq
    %v970 = vshrl.u32 %v969, 7
    %v971 = vsub.s32 %v968, %v970
    %v972 = vrot.slane %v964, %v971
    %v974 = vunpack.c.l.s4 1934713408
    %v975 = vunpack.c.0.s8 %v974
    %v976 = vlaneseq
    %v977 = vshrl.u32 %v976, 7
    %v978 = vsub.s32 %v975, %v977
    %v979 = vrot.slane %v965, %v978
    %v980 = vcombine.high %v956, 0
    %v981 = vcombine.high %v963, 0
    %v982 = vcombine.high %v972, 0
    %v983 = vcombine.high %v979, 0
    %v984 = vcombine.low %v494, %v758
    %v986 = vunpack.c.l.s4 1983009808
    %v987 = vunpack.c.0.s8 %v986
    %v988 = vlaneseq
    %v989 = vshrl.u32 %v988, 7
    %v990 = vsub.s32 %v987, %v989
    %v991 = vrot.slane %v984, %v990
    %v992 = vcombine.low %v626, %v890
    %v994 = vunpack.c.l.s4 1983009808
    %v995 = vunpack.c.0.s8 %v994
    %v996 = vlaneseq
    %v997 = vshrl.u32 %v996, 7
    %v998 = vsub.s32 %v995, %v997
    %v999 = vrot.slane %v992, %v998
    %v1000 = vcombine.low %v991, %v999
    %v1002 = vunpack.c.l.s4 1934713408
    %v1003 = vunpack.c.0.s8 %v1002
    %v1004 = vlaneseq
    %v1005 = vshrl.u32 %v1004, 7
    %v1006 = vsub.s32 %v1003, %v1005
    %v1007 = vrot.slane %v1000, %v1006
    %v1008 = vcombine.high %v1007, 0
    %v1009 = vcombine.low %v510, %v774
    %v1011 = vunpack.c.l.s4 1983009808
    %v1012 = vunpack.c.0.s8 %v1011
    %v1013 = vlaneseq
    %v1014 = vshrl.u32 %v1013, 7
    %v1015 = vsub.s32 %v1012, %v1014
    %v1016 = vrot.slane %v1009, %v1015
    %v1017 = vcombine.low %v642, %v906
    %v1019 = vunpack.c.l.s4 1983009808
    %v1020 = vunpack.c.0.s8 %v1019
    %v1021 = vlaneseq
    %v1022 = vshrl.u32 %v1021, 7
    %v1023 = vsub.s32 %v1020, %v1022
    %v1024 = vrot.slane %v1017, %v1023
    %v1025 = vcombine.low %v1016, %v1024
    %v1027 = vunpack.c.l.s4 1934713408
    %v1028 = vunpack.c.0.s8 %v1027
    %v1029 = vlaneseq
    %v1030 = vshrl.u32 %v1029, 7
    %v1031 = vsub.s32 %v1028, %v1030
    %v1032 = vrot.slane %v1025, %v1031
    %v1033 = vcombine.high %v1032, 0
    %v1034 = vcombine.low %v560, %v824
    %v1036 = vunpack.c.l.s4 1983009808
    %v1037 = vunpack.c.0.s8 %v1036
    %v1038 = vlaneseq
    %v1039 = vshrl.u32 %v1038, 7
    %v1040 = vsub.s32 %v1037, %v1039
    %v1041 = vrot.slane %v1034, %v1040
    %v1042 = vcombine.low %v692, %v956
    %v1044 = vunpack.c.l.s4 1983009808
    %v1045 = vunpack.c.0.s8 %v1044
    %v1046 = vlaneseq
    %v1047 = vshrl.u32 %v1046, 7
    %v1048 = vsub.s32 %v1045, %v1047
    %v1049 = vrot.slane %v1042, %v1048
    %v1050 = vcombine.low %v1041, %v1049
    %v1052 = vunpack.c.l.s4 1934713408
    %v1053 = vunpack.c.0.s8 %v1052
    %v1054 = vlaneseq
    %v1055 = vshrl.u32 %v1054, 7
    %v1056 = vsub.s32 %v1053, %v1055
    %v1057 = vrot.slane %v1050, %v1056
    %v1058 = vcombine.high %v1057, 0
    %v1059 = vcombine.low %v576, %v840
    %v1061 = vunpack.c.l.s4 1983009808
    %v1062 = vunpack.c.0.s8 %v1061
    %v1063 = vlaneseq
    %v1064 = vshrl.u32 %v1063, 7
    %v1065 = vsub.s32 %v1062, %v1064
    %v1066 = vrot.slane %v1059, %v1065
    %v1067 = vcombine.low %v708, %v972
    %v1069 = vunpack.c.l.s4 1983009808
    %v1070 = vunpack.c.0.s8 %v1069
    %v1071 = vlaneseq
    %v1072 = vshrl.u32 %v1071, 7
    %v1073 = vsub.s32 %v1070, %v1072
    %v1074 = vrot.slane %v1067, %v1073
    %v1075 = vcombine.low %v1066, %v1074
    %v1077 = vunpack.c.l.s4 1934713408
    %v1078 = vunpack.c.0.s8 %v1077
    %v1079 = vlaneseq
    %v1080 = vshrl.u32 %v1079, 7
    %v1081 = vsub.s32 %v1078, %v1080
    %v1082 = vrot.slane %v1075, %v1081
    %v1083 = vcombine.high %v1082, 0
    %v1084 = vcombine.low %v518, %v782
    %v1086 = vunpack.c.l.s4 1983009808
    %v1087 = vunpack.c.0.s8 %v1086
    %v1088 = vlaneseq
    %v1089 = vshrl.u32 %v1088, 7
    %v1090 = vsub.s32 %v1087, %v1089
    %v1091 = vrot.slane %v1084, %v1090
    %v1092 = vcombine.low %v650, %v914
    %v1094 = vunpack.c.l.s4 1983009808
    %v1095 = vunpack.c.0.s8 %v1094
    %v1096 = vlaneseq
    %v1097 = vshrl.u32 %v1096, 7
    %v1098 = vsub.s32 %v1095, %v1097
    %v1099 = vrot.slane %v1092, %v1098
    %v1100 = vcombine.low %v1091, %v1099
    %v1102 = vunpack.c.l.s4 1934713408
    %v1103 = vunpack.c.0.s8 %v1102
    %v1104 = vlaneseq
    %v1105 = vshrl.u32 %v1104, 7
    %v1106 = vsub.s32 %v1103, %v1105
    %v1107 = vrot.slane %v1100, %v1106
    %v1108 = vcombine.high %v1107, 0
    %v1109 = vcombine.low %v520, %v784
    %v1111 = vunpack.c.l.s4 1983009808
    %v1112 = vunpack.c.0.s8 %v1111
    %v1113 = vlaneseq
    %v1114 = vshrl.u32 %v1113, 7
    %v1115 = vsub.s32 %v1112, %v1114
    %v1116 = vrot.slane %v1109, %v1115
    %v1117 = vcombine.low %v652, %v916
    %v1119 = vunpack.c.l.s4 1983009808
    %v1120 = vunpack.c.0.s8 %v1119
    %v1121 = vlaneseq
    %v1122 = vshrl.u32 %v1121, 7
    %v1123 = vsub.s32 %v1120, %v1122
    %v1124 = vrot.slane %v1117, %v1123
    %v1125 = vcombine.low %v1116, %v1124
    %v1127 = vunpack.c.l.s4 1934713408
    %v1128 = vunpack.c.0.s8 %v1127
    %v1129 = vlaneseq
    %v1130 = vshrl.u32 %v1129, 7
    %v1131 = vsub.s32 %v1128, %v1130
    %v1132 = vrot.slane %v1125, %v1131
    %v1133 = vcombine.high %v1132, 0
    %v1134 = vcombine.low %v584, %v848
    %v1136 = vunpack.c.l.s4 1983009808
    %v1137 = vunpack.c.0.s8 %v1136
    %v1138 = vlaneseq
    %v1139 = vshrl.u32 %v1138, 7
    %v1140 = vsub.s32 %v1137, %v1139
    %v1141 = vrot.slane %v1134, %v1140
    %v1142 = vcombine.low %v716, %v980
    %v1144 = vunpack.c.l.s4 1983009808
    %v1145 = vunpack.c.0.s8 %v1144
    %v1146 = vlaneseq
    %v1147 = vshrl.u32 %v1146, 7
    %v1148 = vsub.s32 %v1145, %v1147
    %v1149 = vrot.slane %v1142, %v1148
    %v1150 = vcombine.low %v1141, %v1149
    %v1152 = vunpack.c.l.s4 1934713408
    %v1153 = vunpack.c.0.s8 %v1152
    %v1154 = vlaneseq
    %v1155 = vshrl.u32 %v1154, 7
    %v1156 = vsub.s32 %v1153, %v1155
    %v1157 = vrot.slane %v1150, %v1156
    %v1158 = vcombine.high %v1157, 0
    %v1159 = vcombine.low %v586, %v850
    %v1161 = vunpack.c.l.s4 1983009808
    %v1162 = vunpack.c.0.s8 %v1161
    %v1163 = vlaneseq
    %v1164 = vshrl.u32 %v1163, 7
    %v1165 = vsub.s32 %v1162, %v1164
    %v1166 = vrot.slane %v1159, %v1165
    %v1167 = vcombine.low %v718, %v982
    %v1169 = vunpack.c.l.s4 1983009808
    %v1170 = vunpack.c.0.s8 %v1169
    %v1171 = vlaneseq
    %v1172 = vshrl.u32 %v1171, 7
    %v1173 = vsub.s32 %v1170, %v1172
    %v1174 = vrot.slane %v1167, %v1173
    %v1175 = vcombine.low %v1166, %v1174
    %v1177 = vunpack.c.l.s4 1934713408
    %v1178 = vunpack.c.0.s8 %v1177
    %v1179 = vlaneseq
    %v1180 = vshrl.u32 %v1179, 7
    %v1181 = vsub.s32 %v1178, %v1180
    %v1182 = vrot.slane %v1175, %v1181
    %v1183 = vcombine.high %v1182, 0
    %v1184 = vcombine.low %v501, %v765
    %v1186 = vunpack.c.l.s4 1983009808
    %v1187 = vunpack.c.0.s8 %v1186
    %v1188 = vlaneseq
    %v1189 = vshrl.u32 %v1188, 7
    %v1190 = vsub.s32 %v1187, %v1189
    %v1191 = vrot.slane %v1184, %v1190
    %v1192 = vcombine.low %v633, %v897
    %v1194 = vunpack.c.l.s4 1983009808
    %v1195 = vunpack.c.0.s8 %v1194
    %v1196 = vlaneseq
    %v1197 = vshrl.u32 %v1196, 7
    %v1198 = vsub.s32 %v1195, %v1197
    %v1199 = vrot.slane %v1192, %v1198
    %v1200 = vcombine.low %v1191, %v1199
    %v1202 = vunpack.c.l.s4 1934713408
    %v1203 = vunpack.c.0.s8 %v1202
    %v1204 = vlaneseq
    %v1205 = vshrl.u32 %v1204, 7
    %v1206 = vsub.s32 %v1203, %v1205
    %v1207 = vrot.slane %v1200, %v1206
    %v1208 = vcombine.high %v1207, 0
    %v1209 = vcombine.low %v517, %v781
    %v1211 = vunpack.c.l.s4 1983009808
    %v1212 = vunpack.c.0.s8 %v1211
    %v1213 = vlaneseq
    %v1214 = vshrl.u32 %v1213, 7
    %v1215 = vsub.s32 %v1212, %v1214
    %v1216 = vrot.slane %v1209, %v1215
    %v1217 = vcombine.low %v649, %v913
    %v1219 = vunpack.c.l.s4 1983009808
    %v1220 = vunpack.c.0.s8 %v1219
    %v1221 = vlaneseq
    %v1222 = vshrl.u32 %v1221, 7
    %v1223 = vsub.s32 %v1220, %v1222
    %v1224 = vrot.slane %v1217, %v1223
    %v1225 = vcombine.low %v1216, %v1224
    %v1227 = vunpack.c.l.s4 1934713408
    %v1228 = vunpack.c.0.s8 %v1227
    %v1229 = vlaneseq
    %v1230 = vshrl.u32 %v1229, 7
    %v1231 = vsub.s32 %v1228, %v1230
    %v1232 = vrot.slane %v1225, %v1231
    %v1233 = vcombine.high %v1232, 0
    %v1234 = vcombine.low %v567, %v831
    %v1236 = vunpack.c.l.s4 1983009808
    %v1237 = vunpack.c.0.s8 %v1236
    %v1238 = vlaneseq
    %v1239 = vshrl.u32 %v1238, 7
    %v1240 = vsub.s32 %v1237, %v1239
    %v1241 = vrot.slane %v1234, %v1240
    %v1242 = vcombine.low %v699, %v963
    %v1244 = vunpack.c.l.s4 1983009808
    %v1245 = vunpack.c.0.s8 %v1244
    %v1246 = vlaneseq
    %v1247 = vshrl.u32 %v1246, 7
    %v1248 = vsub.s32 %v1245, %v1247
    %v1249 = vrot.slane %v1242, %v1248
    %v1250 = vcombine.low %v1241, %v1249
    %v1252 = vunpack.c.l.s4 1934713408
    %v1253 = vunpack.c.0.s8 %v1252
    %v1254 = vlaneseq
    %v1255 = vshrl.u32 %v1254, 7
    %v1256 = vsub.s32 %v1253, %v1255
    %v1257 = vrot.slane %v1250, %v1256
    %v1258 = vcombine.high %v1257, 0
    %v1259 = vcombine.low %v583, %v847
    %v1261 = vunpack.c.l.s4 1983009808
    %v1262 = vunpack.c.0.s8 %v1261
    %v1263 = vlaneseq
    %v1264 = vshrl.u32 %v1263, 7
    %v1265 = vsub.s32 %v1262, %v1264
    %v1266 = vrot.slane %v1259, %v1265
    %v1267 = vcombine.low %v715, %v979
    %v1269 = vunpack.c.l.s4 1983009808
    %v1270 = vunpack.c.0.s8 %v1269
    %v1271 = vlaneseq
    %v1272 = vshrl.u32 %v1271, 7
    %v1273 = vsub.s32 %v1270, %v1272
    %v1274 = vrot.slane %v1267, %v1273
    %v1275 = vcombine.low %v1266, %v1274
    %v1277 = vunpack.c.l.s4 1934713408
    %v1278 = vunpack.c.0.s8 %v1277
    %v1279 = vlaneseq
    %v1280 = vshrl.u32 %v1279, 7
    %v1281 = vsub.s32 %v1278, %v1280
    %v1282 = vrot.slane %v1275, %v1281
    %v1283 = vcombine.high %v1282, 0
    %v1284 = vcombine.low %v519, %v783
    %v1286 = vunpack.c.l.s4 1983009808
    %v1287 = vunpack.c.0.s8 %v1286
    %v1288 = vlaneseq
    %v1289 = vshrl.u32 %v1288, 7
    %v1290 = vsub.s32 %v1287, %v1289
    %v1291 = vrot.slane %v1284, %v1290
    %v1292 = vcombine.low %v651, %v915
    %v1294 = vunpack.c.l.s4 1983009808
    %v1295 = vunpack.c.0.s8 %v1294
    %v1296 = vlaneseq
    %v1297 = vshrl.u32 %v1296, 7
    %v1298 = vsub.s32 %v1295, %v1297
    %v1299 = vrot.slane %v1292, %v1298
    %v1300 = vcombine.low %v1291, %v1299
    %v1302 = vunpack.c.l.s4 1934713408
    %v1303 = vunpack.c.0.s8 %v1302
    %v1304 = vlaneseq
    %v1305 = vshrl.u32 %v1304, 7
    %v1306 = vsub.s32 %v1303, %v1305
    %v1307 = vrot.slane %v1300, %v1306
    %v1308 = vcombine.high %v1307, 0
    %v1309 = vcombine.low %v521, %v785
    %v1311 = vunpack.c.l.s4 1983009808
    %v1312 = vunpack.c.0.s8 %v1311
    %v1313 = vlaneseq
    %v1314 = vshrl.u32 %v1313, 7
    %v1315 = vsub.s32 %v1312, %v1314
    %v1316 = vrot.slane %v1309, %v1315
    %v1317 = vcombine.low %v653, %v917
    %v1319 = vunpack.c.l.s4 1983009808
    %v1320 = vunpack.c.0.s8 %v1319
    %v1321 = vlaneseq
    %v1322 = vshrl.u32 %v1321, 7
    %v1323 = vsub.s32 %v1320, %v1322
    %v1324 = vrot.slane %v1317, %v1323
    %v1325 = vcombine.low %v1316, %v1324
    %v1327 = vunpack.c.l.s4 1934713408
    %v1328 = vunpack.c.0.s8 %v1327
    %v1329 = vlaneseq
    %v1330 = vshrl.u32 %v1329, 7
    %v1331 = vsub.s32 %v1328, %v1330
    %v1332 = vrot.slane %v1325, %v1331
    %v1333 = vcombine.high %v1332, 0
    %v1334 = vcombine.low %v585, %v849
    %v1336 = vunpack.c.l.s4 1983009808
    %v1337 = vunpack.c.0.s8 %v1336
    %v1338 = vlaneseq
    %v1339 = vshrl.u32 %v1338, 7
    %v1340 = vsub.s32 %v1337, %v1339
    %v1341 = vrot.slane %v1334, %v1340
    %v1342 = vcombine.low %v717, %v981
    %v1344 = vunpack.c.l.s4 1983009808
    %v1345 = vunpack.c.0.s8 %v1344
    %v1346 = vlaneseq
    %v1347 = vshrl.u32 %v1346, 7
    %v1348 = vsub.s32 %v1345, %v1347
    %v1349 = vrot.slane %v1342, %v1348
    %v1350 = vcombine.low %v1341, %v1349
    %v1352 = vunpack.c.l.s4 1934713408
    %v1353 = vunpack.c.0.s8 %v1352
    %v1354 = vlaneseq
    %v1355 = vshrl.u32 %v1354, 7
    %v1356 = vsub.s32 %v1353, %v1355
    %v1357 = vrot.slane %v1350, %v1356
    %v1358 = vcombine.high %v1357, 0
    %v1359 = vcombine.low %v587, %v851
    %v1361 = vunpack.c.l.s4 1983009808
    %v1362 = vunpack.c.0.s8 %v1361
    %v1363 = vlaneseq
    %v1364 = vshrl.u32 %v1363, 7
    %v1365 = vsub.s32 %v1362, %v1364
    %v1366 = vrot.slane %v1359, %v1365
    %v1367 = vcombine.low %v719, %v983
    %v1369 = vunpack.c.l.s4 1983009808
    %v1370 = vunpack.c.0.s8 %v1369
    %v1371 = vlaneseq
    %v1372 = vshrl.u32 %v1371, 7
    %v1373 = vsub.s32 %v1370, %v1372
    %v1374 = vrot.slane %v1367, %v1373
    %v1375 = vcombine.low %v1366, %v1374
    %v1377 = vunpack.c.l.s4 1934713408
    %v1378 = vunpack.c.0.s8 %v1377
    %v1379 = vlaneseq
    %v1380 = vshrl.u32 %v1379, 7
    %v1381 = vsub.s32 %v1378, %v1380
    %v1382 = vrot.slane %v1375, %v1381
    %v1383 = vcombine.high %v1382, 0
    %v1386 = vpack.i.b16 %v1032, %v1007
    %v1387 = vshrl.u32 %v1007, 16
    %v1388 = vshrl.u32 %v1032, 16
    %v1389 = vpack.i.b16 %v1388, %v1387
    %v1392 = vpack.i.b16 %v1033, %v1008
    %v1393 = vshrl.u32 %v1008, 16
    %v1394 = vshrl.u32 %v1033, 16
    %v1395 = vpack.i.b16 %v1394, %v1393
    %v1398 = vpack.i.b16 %v1082, %v1057
    %v1399 = vshrl.u32 %v1057, 16
    %v1400 = vshrl.u32 %v1082, 16
    %v1401 = vpack.i.b16 %v1400, %v1399
    %v1404 = vpack.i.b16 %v1083, %v1058
    %v1405 = vshrl.u32 %v1058, 16
    %v1406 = vshrl.u32 %v1083, 16
    %v1407 = vpack.i.b16 %v1406, %v1405
    %v1410 = vpack.i.b16 %v1132, %v1107
    %v1411 = vshrl.u32 %v1107, 16
    %v1412 = vshrl.u32 %v1132, 16
    %v1413 = vpack.i.b16 %v1412, %v1411
    %v1416 = vpack.i.b16 %v1133, %v1108
    %v1417 = vshrl.u32 %v1108, 16
    %v1418 = vshrl.u32 %v1133, 16
    %v1419 = vpack.i.b16 %v1418, %v1417
    %v1422 = vpack.i.b16 %v1182, %v1157
    %v1423 = vshrl.u32 %v1157, 16
    %v1424 = vshrl.u32 %v1182, 16
    %v1425 = vpack.i.b16 %v1424, %v1423
    %v1428 = vpack.i.b16 %v1183, %v1158
    %v1429 = vshrl.u32 %v1158, 16
    %v1430 = vshrl.u32 %v1183, 16
    %v1431 = vpack.i.b16 %v1430, %v1429
    %v1434 = vpack.i.b16 %v1232, %v1207
    %v1435 = vshrl.u32 %v1207, 16
    %v1436 = vshrl.u32 %v1232, 16
    %v1437 = vpack.i.b16 %v1436, %v1435
    %v1440 = vpack.i.b16 %v1233, %v1208
    %v1441 = vshrl.u32 %v1208, 16
    %v1442 = vshrl.u32 %v1233, 16
    %v1443 = vpack.i.b16 %v1442, %v1441
    %v1446 = vpack.i.b16 %v1282, %v1257
    %v1447 = vshrl.u32 %v1257, 16
    %v1448 = vshrl.u32 %v1282, 16
    %v1449 = vpack.i.b16 %v1448, %v1447
    %v1452 = vpack.i.b16 %v1283, %v1258
    %v1453 = vshrl.u32 %v1258, 16
    %v1454 = vshrl.u32 %v1283, 16
    %v1455 = vpack.i.b16 %v1454, %v1453
    %v1458 = vpack.i.b16 %v1332, %v1307
    %v1459 = vshrl.u32 %v1307, 16
    %v1460 = vshrl.u32 %v1332, 16
    %v1461 = vpack.i.b16 %v1460, %v1459
    %v1464 = vpack.i.b16 %v1333, %v1308
    %v1465 = vshrl.u32 %v1308, 16
    %v1466 = vshrl.u32 %v1333, 16
    %v1467 = vpack.i.b16 %v1466, %v1465
    %v1470 = vpack.i.b16 %v1382, %v1357
    %v1471 = vshrl.u32 %v1357, 16
    %v1472 = vshrl.u32 %v1382, 16
    %v1473 = vpack.i.b16 %v1472, %v1471
    %v1476 = vpack.i.b16 %v1383, %v1358
    %v1477 = vshrl.u32 %v1358, 16
    %v1478 = vshrl.u32 %v1383, 16
    %v1479 = vpack.i.b16 %v1478, %v1477
    %1480 = vrot.lane.b32.xlu0 %v354, 96
    %v1481 = vpop.permute.xlu0 %1480
    %1482 = vrot.lane.b32.xlu0 %v355, 96
    %v1483 = vpop.permute.xlu0 %1482
    %1484 = vrot.lane.b32.xlu0 %v356, 96
    %v1485 = vpop.permute.xlu0 %1484
    %1486 = vrot.lane.b32.xlu0 %v357, 96
    %v1487 = vpop.permute.xlu0 %1486
    %1488 = vrot.lane.b32.xlu0 %v363, 96
    %v1489 = vpop.permute.xlu0 %1488
    %1490 = vrot.lane.b32.xlu0 %v365, 96
    %v1491 = vpop.permute.xlu0 %1490
    %1492 = vrot.lane.b32.xlu0 %v367, 96
    %v1493 = vpop.permute.xlu0 %1492
    %1494 = vrot.lane.b32.xlu0 %v369, 96
    %v1495 = vpop.permute.xlu0 %1494
    %1496 = vrot.lane.b32.xlu0 %v371, 96
    %v1497 = vpop.permute.xlu0 %1496
    %1498 = vrot.lane.b32.xlu0 %v373, 96
    %v1499 = vpop.permute.xlu0 %1498
    %1500 = vrot.lane.b32.xlu0 %v375, 96
    %v1501 = vpop.permute.xlu0 %1500
    %1502 = vrot.lane.b32.xlu0 %v377, 96
    %v1503 = vpop.permute.xlu0 %1502
    %1504 = vrot.lane.b32.xlu0 %v379, 96
    %v1505 = vpop.permute.xlu0 %1504
    %1506 = vrot.lane.b32.xlu0 %v381, 96
    %v1507 = vpop.permute.xlu0 %1506
    %1508 = vrot.lane.b32.xlu0 %v383, 96
    %v1509 = vpop.permute.xlu0 %1508
    %1510 = vrot.lane.b32.xlu0 %v385, 96
    %v1511 = vpop.permute.xlu0 %1510
    %v1514 = vpack.i.b16 %v1489, %v1481
    %v1516 = vshrl.u32 %v1481, 16
    %v1517 = vshrl.u32 %v1489, 16
    %v1518 = vpack.i.b16 %v1517, %v1516
    %v1522 = vpack.i.b16 %v1505, %v1497
    %v1524 = vshrl.u32 %v1497, 16
    %v1525 = vshrl.u32 %v1505, 16
    %v1526 = vpack.i.b16 %v1525, %v1524
    %v1530 = vpack.i.b16 %v1491, %v1483
    %v1532 = vshrl.u32 %v1483, 16
    %v1533 = vshrl.u32 %v1491, 16
    %v1534 = vpack.i.b16 %v1533, %v1532
    %v1538 = vpack.i.b16 %v1507, %v1499
    %v1540 = vshrl.u32 %v1499, 16
    %v1541 = vshrl.u32 %v1507, 16
    %v1542 = vpack.i.b16 %v1541, %v1540
    %v1546 = vpack.i.b16 %v1493, %v1485
    %v1548 = vshrl.u32 %v1485, 16
    %v1549 = vshrl.u32 %v1493, 16
    %v1550 = vpack.i.b16 %v1549, %v1548
    %v1554 = vpack.i.b16 %v1509, %v1501
    %v1556 = vshrl.u32 %v1501, 16
    %v1557 = vshrl.u32 %v1509, 16
    %v1558 = vpack.i.b16 %v1557, %v1556
    %v1562 = vpack.i.b16 %v1495, %v1487
    %v1564 = vshrl.u32 %v1487, 16
    %v1565 = vshrl.u32 %v1495, 16
    %v1566 = vpack.i.b16 %v1565, %v1564
    %v1570 = vpack.i.b16 %v1511, %v1503
    %v1572 = vshrl.u32 %v1503, 16
    %v1573 = vshrl.u32 %v1511, 16
    %v1574 = vpack.i.b16 %v1573, %v1572
    %v1576 = vcombine.high %v1514, %v403
    %v1578 = vunpack.c.l.s4 1983009808
    %v1579 = vunpack.c.0.s8 %v1578
    %v1580 = vlaneseq
    %v1581 = vshrl.u32 %v1580, 7
    %v1582 = vsub.s32 %v1579, %v1581
    %v1583 = vrot.slane %v1514, %v1582
    %v1585 = vunpack.c.l.s4 1983009808
    %v1586 = vunpack.c.0.s8 %v1585
    %v1587 = vlaneseq
    %v1588 = vshrl.u32 %v1587, 7
    %v1589 = vsub.s32 %v1586, %v1588
    %v1590 = vrot.slane %v1576, %v1589
    %v1591 = vcombine.high %v1522, %v403
    %v1593 = vunpack.c.l.s4 1983009808
    %v1594 = vunpack.c.0.s8 %v1593
    %v1595 = vlaneseq
    %v1596 = vshrl.u32 %v1595, 7
    %v1597 = vsub.s32 %v1594, %v1596
    %v1598 = vrot.slane %v1522, %v1597
    %v1600 = vunpack.c.l.s4 1983009808
    %v1601 = vunpack.c.0.s8 %v1600
    %v1602 = vlaneseq
    %v1603 = vshrl.u32 %v1602, 7
    %v1604 = vsub.s32 %v1601, %v1603
    %v1605 = vrot.slane %v1591, %v1604
    %v1606 = vcombine.low %v1583, %v1598
    %v1607 = vcombine.high %v1583, %v1598
    %v1609 = vunpack.c.l.s4 1934713408
    %v1610 = vunpack.c.0.s8 %v1609
    %v1611 = vlaneseq
    %v1612 = vshrl.u32 %v1611, 7
    %v1613 = vsub.s32 %v1610, %v1612
    %v1614 = vrot.slane %v1606, %v1613
    %v1616 = vunpack.c.l.s4 1934713408
    %v1617 = vunpack.c.0.s8 %v1616
    %v1618 = vlaneseq
    %v1619 = vshrl.u32 %v1618, 7
    %v1620 = vsub.s32 %v1617, %v1619
    %v1621 = vrot.slane %v1607, %v1620
    %v1622 = vcombine.low %v1590, %v1605
    %v1623 = vcombine.high %v1590, %v1605
    %v1625 = vunpack.c.l.s4 1934713408
    %v1626 = vunpack.c.0.s8 %v1625
    %v1627 = vlaneseq
    %v1628 = vshrl.u32 %v1627, 7
    %v1629 = vsub.s32 %v1626, %v1628
    %v1630 = vrot.slane %v1622, %v1629
    %v1632 = vunpack.c.l.s4 1934713408
    %v1633 = vunpack.c.0.s8 %v1632
    %v1634 = vlaneseq
    %v1635 = vshrl.u32 %v1634, 7
    %v1636 = vsub.s32 %v1633, %v1635
    %v1637 = vrot.slane %v1623, %v1636
    %v1638 = vcombine.high %v1614, 0
    %v1639 = vcombine.high %v1621, 0
    %v1640 = vcombine.high %v1630, 0
    %v1641 = vcombine.high %v1637, 0
    %v1642 = vcombine.high %v1518, %v406
    %v1644 = vunpack.c.l.s4 1983009808
    %v1645 = vunpack.c.0.s8 %v1644
    %v1646 = vlaneseq
    %v1647 = vshrl.u32 %v1646, 7
    %v1648 = vsub.s32 %v1645, %v1647
    %v1649 = vrot.slane %v1518, %v1648
    %v1651 = vunpack.c.l.s4 1983009808
    %v1652 = vunpack.c.0.s8 %v1651
    %v1653 = vlaneseq
    %v1654 = vshrl.u32 %v1653, 7
    %v1655 = vsub.s32 %v1652, %v1654
    %v1656 = vrot.slane %v1642, %v1655
    %v1657 = vcombine.high %v1526, %v406
    %v1659 = vunpack.c.l.s4 1983009808
    %v1660 = vunpack.c.0.s8 %v1659
    %v1661 = vlaneseq
    %v1662 = vshrl.u32 %v1661, 7
    %v1663 = vsub.s32 %v1660, %v1662
    %v1664 = vrot.slane %v1526, %v1663
    %v1666 = vunpack.c.l.s4 1983009808
    %v1667 = vunpack.c.0.s8 %v1666
    %v1668 = vlaneseq
    %v1669 = vshrl.u32 %v1668, 7
    %v1670 = vsub.s32 %v1667, %v1669
    %v1671 = vrot.slane %v1657, %v1670
    %v1672 = vcombine.low %v1649, %v1664
    %v1673 = vcombine.high %v1649, %v1664
    %v1675 = vunpack.c.l.s4 1934713408
    %v1676 = vunpack.c.0.s8 %v1675
    %v1677 = vlaneseq
    %v1678 = vshrl.u32 %v1677, 7
    %v1679 = vsub.s32 %v1676, %v1678
    %v1680 = vrot.slane %v1672, %v1679
    %v1682 = vunpack.c.l.s4 1934713408
    %v1683 = vunpack.c.0.s8 %v1682
    %v1684 = vlaneseq
    %v1685 = vshrl.u32 %v1684, 7
    %v1686 = vsub.s32 %v1683, %v1685
    %v1687 = vrot.slane %v1673, %v1686
    %v1688 = vcombine.low %v1656, %v1671
    %v1689 = vcombine.high %v1656, %v1671
    %v1691 = vunpack.c.l.s4 1934713408
    %v1692 = vunpack.c.0.s8 %v1691
    %v1693 = vlaneseq
    %v1694 = vshrl.u32 %v1693, 7
    %v1695 = vsub.s32 %v1692, %v1694
    %v1696 = vrot.slane %v1688, %v1695
    %v1698 = vunpack.c.l.s4 1934713408
    %v1699 = vunpack.c.0.s8 %v1698
    %v1700 = vlaneseq
    %v1701 = vshrl.u32 %v1700, 7
    %v1702 = vsub.s32 %v1699, %v1701
    %v1703 = vrot.slane %v1689, %v1702
    %v1704 = vcombine.high %v1680, 0
    %v1705 = vcombine.high %v1687, 0
    %v1706 = vcombine.high %v1696, 0
    %v1707 = vcombine.high %v1703, 0
    %v1708 = vcombine.high %v1530, %v403
    %v1710 = vunpack.c.l.s4 1983009808
    %v1711 = vunpack.c.0.s8 %v1710
    %v1712 = vlaneseq
    %v1713 = vshrl.u32 %v1712, 7
    %v1714 = vsub.s32 %v1711, %v1713
    %v1715 = vrot.slane %v1530, %v1714
    %v1717 = vunpack.c.l.s4 1983009808
    %v1718 = vunpack.c.0.s8 %v1717
    %v1719 = vlaneseq
    %v1720 = vshrl.u32 %v1719, 7
    %v1721 = vsub.s32 %v1718, %v1720
    %v1722 = vrot.slane %v1708, %v1721
    %v1723 = vcombine.high %v1538, %v403
    %v1725 = vunpack.c.l.s4 1983009808
    %v1726 = vunpack.c.0.s8 %v1725
    %v1727 = vlaneseq
    %v1728 = vshrl.u32 %v1727, 7
    %v1729 = vsub.s32 %v1726, %v1728
    %v1730 = vrot.slane %v1538, %v1729
    %v1732 = vunpack.c.l.s4 1983009808
    %v1733 = vunpack.c.0.s8 %v1732
    %v1734 = vlaneseq
    %v1735 = vshrl.u32 %v1734, 7
    %v1736 = vsub.s32 %v1733, %v1735
    %v1737 = vrot.slane %v1723, %v1736
    %v1738 = vcombine.low %v1715, %v1730
    %v1739 = vcombine.high %v1715, %v1730
    %v1741 = vunpack.c.l.s4 1934713408
    %v1742 = vunpack.c.0.s8 %v1741
    %v1743 = vlaneseq
    %v1744 = vshrl.u32 %v1743, 7
    %v1745 = vsub.s32 %v1742, %v1744
    %v1746 = vrot.slane %v1738, %v1745
    %v1748 = vunpack.c.l.s4 1934713408
    %v1749 = vunpack.c.0.s8 %v1748
    %v1750 = vlaneseq
    %v1751 = vshrl.u32 %v1750, 7
    %v1752 = vsub.s32 %v1749, %v1751
    %v1753 = vrot.slane %v1739, %v1752
    %v1754 = vcombine.low %v1722, %v1737
    %v1755 = vcombine.high %v1722, %v1737
    %v1757 = vunpack.c.l.s4 1934713408
    %v1758 = vunpack.c.0.s8 %v1757
    %v1759 = vlaneseq
    %v1760 = vshrl.u32 %v1759, 7
    %v1761 = vsub.s32 %v1758, %v1760
    %v1762 = vrot.slane %v1754, %v1761
    %v1764 = vunpack.c.l.s4 1934713408
    %v1765 = vunpack.c.0.s8 %v1764
    %v1766 = vlaneseq
    %v1767 = vshrl.u32 %v1766, 7
    %v1768 = vsub.s32 %v1765, %v1767
    %v1769 = vrot.slane %v1755, %v1768
    %v1770 = vcombine.high %v1746, 0
    %v1771 = vcombine.high %v1753, 0
    %v1772 = vcombine.high %v1762, 0
    %v1773 = vcombine.high %v1769, 0
    %v1774 = vcombine.high %v1534, %v406
    %v1776 = vunpack.c.l.s4 1983009808
    %v1777 = vunpack.c.0.s8 %v1776
    %v1778 = vlaneseq
    %v1779 = vshrl.u32 %v1778, 7
    %v1780 = vsub.s32 %v1777, %v1779
    %v1781 = vrot.slane %v1534, %v1780
    %v1783 = vunpack.c.l.s4 1983009808
    %v1784 = vunpack.c.0.s8 %v1783
    %v1785 = vlaneseq
    %v1786 = vshrl.u32 %v1785, 7
    %v1787 = vsub.s32 %v1784, %v1786
    %v1788 = vrot.slane %v1774, %v1787
    %v1789 = vcombine.high %v1542, %v406
    %v1791 = vunpack.c.l.s4 1983009808
    %v1792 = vunpack.c.0.s8 %v1791
    %v1793 = vlaneseq
    %v1794 = vshrl.u32 %v1793, 7
    %v1795 = vsub.s32 %v1792, %v1794
    %v1796 = vrot.slane %v1542, %v1795
    %v1798 = vunpack.c.l.s4 1983009808
    %v1799 = vunpack.c.0.s8 %v1798
    %v1800 = vlaneseq
    %v1801 = vshrl.u32 %v1800, 7
    %v1802 = vsub.s32 %v1799, %v1801
    %v1803 = vrot.slane %v1789, %v1802
    %v1804 = vcombine.low %v1781, %v1796
    %v1805 = vcombine.high %v1781, %v1796
    %v1807 = vunpack.c.l.s4 1934713408
    %v1808 = vunpack.c.0.s8 %v1807
    %v1809 = vlaneseq
    %v1810 = vshrl.u32 %v1809, 7
    %v1811 = vsub.s32 %v1808, %v1810
    %v1812 = vrot.slane %v1804, %v1811
    %v1814 = vunpack.c.l.s4 1934713408
    %v1815 = vunpack.c.0.s8 %v1814
    %v1816 = vlaneseq
    %v1817 = vshrl.u32 %v1816, 7
    %v1818 = vsub.s32 %v1815, %v1817
    %v1819 = vrot.slane %v1805, %v1818
    %v1820 = vcombine.low %v1788, %v1803
    %v1821 = vcombine.high %v1788, %v1803
    %v1823 = vunpack.c.l.s4 1934713408
    %v1824 = vunpack.c.0.s8 %v1823
    %v1825 = vlaneseq
    %v1826 = vshrl.u32 %v1825, 7
    %v1827 = vsub.s32 %v1824, %v1826
    %v1828 = vrot.slane %v1820, %v1827
    %v1830 = vunpack.c.l.s4 1934713408
    %v1831 = vunpack.c.0.s8 %v1830
    %v1832 = vlaneseq
    %v1833 = vshrl.u32 %v1832, 7
    %v1834 = vsub.s32 %v1831, %v1833
    %v1835 = vrot.slane %v1821, %v1834
    %v1836 = vcombine.high %v1812, 0
    %v1837 = vcombine.high %v1819, 0
    %v1838 = vcombine.high %v1828, 0
    %v1839 = vcombine.high %v1835, 0
    %v1840 = vcombine.high %v1546, %v403
    %v1842 = vunpack.c.l.s4 1983009808
    %v1843 = vunpack.c.0.s8 %v1842
    %v1844 = vlaneseq
    %v1845 = vshrl.u32 %v1844, 7
    %v1846 = vsub.s32 %v1843, %v1845
    %v1847 = vrot.slane %v1546, %v1846
    %v1849 = vunpack.c.l.s4 1983009808
    %v1850 = vunpack.c.0.s8 %v1849
    %v1851 = vlaneseq
    %v1852 = vshrl.u32 %v1851, 7
    %v1853 = vsub.s32 %v1850, %v1852
    %v1854 = vrot.slane %v1840, %v1853
    %v1855 = vcombine.high %v1554, %v403
    %v1857 = vunpack.c.l.s4 1983009808
    %v1858 = vunpack.c.0.s8 %v1857
    %v1859 = vlaneseq
    %v1860 = vshrl.u32 %v1859, 7
    %v1861 = vsub.s32 %v1858, %v1860
    %v1862 = vrot.slane %v1554, %v1861
    %v1864 = vunpack.c.l.s4 1983009808
    %v1865 = vunpack.c.0.s8 %v1864
    %v1866 = vlaneseq
    %v1867 = vshrl.u32 %v1866, 7
    %v1868 = vsub.s32 %v1865, %v1867
    %v1869 = vrot.slane %v1855, %v1868
    %v1870 = vcombine.low %v1847, %v1862
    %v1871 = vcombine.high %v1847, %v1862
    %v1873 = vunpack.c.l.s4 1934713408
    %v1874 = vunpack.c.0.s8 %v1873
    %v1875 = vlaneseq
    %v1876 = vshrl.u32 %v1875, 7
    %v1877 = vsub.s32 %v1874, %v1876
    %v1878 = vrot.slane %v1870, %v1877
    %v1880 = vunpack.c.l.s4 1934713408
    %v1881 = vunpack.c.0.s8 %v1880
    %v1882 = vlaneseq
    %v1883 = vshrl.u32 %v1882, 7
    %v1884 = vsub.s32 %v1881, %v1883
    %v1885 = vrot.slane %v1871, %v1884
    %v1886 = vcombine.low %v1854, %v1869
    %v1887 = vcombine.high %v1854, %v1869
    %v1889 = vunpack.c.l.s4 1934713408
    %v1890 = vunpack.c.0.s8 %v1889
    %v1891 = vlaneseq
    %v1892 = vshrl.u32 %v1891, 7
    %v1893 = vsub.s32 %v1890, %v1892
    %v1894 = vrot.slane %v1886, %v1893
    %v1896 = vunpack.c.l.s4 1934713408
    %v1897 = vunpack.c.0.s8 %v1896
    %v1898 = vlaneseq
    %v1899 = vshrl.u32 %v1898, 7
    %v1900 = vsub.s32 %v1897, %v1899
    %v1901 = vrot.slane %v1887, %v1900
    %v1902 = vcombine.high %v1878, 0
    %v1903 = vcombine.high %v1885, 0
    %v1904 = vcombine.high %v1894, 0
    %v1905 = vcombine.high %v1901, 0
    %v1906 = vcombine.high %v1550, %v406
    %v1908 = vunpack.c.l.s4 1983009808
    %v1909 = vunpack.c.0.s8 %v1908
    %v1910 = vlaneseq
    %v1911 = vshrl.u32 %v1910, 7
    %v1912 = vsub.s32 %v1909, %v1911
    %v1913 = vrot.slane %v1550, %v1912
    %v1915 = vunpack.c.l.s4 1983009808
    %v1916 = vunpack.c.0.s8 %v1915
    %v1917 = vlaneseq
    %v1918 = vshrl.u32 %v1917, 7
    %v1919 = vsub.s32 %v1916, %v1918
    %v1920 = vrot.slane %v1906, %v1919
    %v1921 = vcombine.high %v1558, %v406
    %v1923 = vunpack.c.l.s4 1983009808
    %v1924 = vunpack.c.0.s8 %v1923
    %v1925 = vlaneseq
    %v1926 = vshrl.u32 %v1925, 7
    %v1927 = vsub.s32 %v1924, %v1926
    %v1928 = vrot.slane %v1558, %v1927
    %v1930 = vunpack.c.l.s4 1983009808
    %v1931 = vunpack.c.0.s8 %v1930
    %v1932 = vlaneseq
    %v1933 = vshrl.u32 %v1932, 7
    %v1934 = vsub.s32 %v1931, %v1933
    %v1935 = vrot.slane %v1921, %v1934
    %v1936 = vcombine.low %v1913, %v1928
    %v1937 = vcombine.high %v1913, %v1928
    %v1939 = vunpack.c.l.s4 1934713408
    %v1940 = vunpack.c.0.s8 %v1939
    %v1941 = vlaneseq
    %v1942 = vshrl.u32 %v1941, 7
    %v1943 = vsub.s32 %v1940, %v1942
    %v1944 = vrot.slane %v1936, %v1943
    %v1946 = vunpack.c.l.s4 1934713408
    %v1947 = vunpack.c.0.s8 %v1946
    %v1948 = vlaneseq
    %v1949 = vshrl.u32 %v1948, 7
    %v1950 = vsub.s32 %v1947, %v1949
    %v1951 = vrot.slane %v1937, %v1950
    %v1952 = vcombine.low %v1920, %v1935
    %v1953 = vcombine.high %v1920, %v1935
    %v1955 = vunpack.c.l.s4 1934713408
    %v1956 = vunpack.c.0.s8 %v1955
    %v1957 = vlaneseq
    %v1958 = vshrl.u32 %v1957, 7
    %v1959 = vsub.s32 %v1956, %v1958
    %v1960 = vrot.slane %v1952, %v1959
    %v1962 = vunpack.c.l.s4 1934713408
    %v1963 = vunpack.c.0.s8 %v1962
    %v1964 = vlaneseq
    %v1965 = vshrl.u32 %v1964, 7
    %v1966 = vsub.s32 %v1963, %v1965
    %v1967 = vrot.slane %v1953, %v1966
    %v1968 = vcombine.high %v1944, 0
    %v1969 = vcombine.high %v1951, 0
    %v1970 = vcombine.high %v1960, 0
    %v1971 = vcombine.high %v1967, 0
    %v1972 = vcombine.high %v1562, %v403
    %v1974 = vunpack.c.l.s4 1983009808
    %v1975 = vunpack.c.0.s8 %v1974
    %v1976 = vlaneseq
    %v1977 = vshrl.u32 %v1976, 7
    %v1978 = vsub.s32 %v1975, %v1977
    %v1979 = vrot.slane %v1562, %v1978
    %v1981 = vunpack.c.l.s4 1983009808
    %v1982 = vunpack.c.0.s8 %v1981
    %v1983 = vlaneseq
    %v1984 = vshrl.u32 %v1983, 7
    %v1985 = vsub.s32 %v1982, %v1984
    %v1986 = vrot.slane %v1972, %v1985
    %v1987 = vcombine.high %v1570, %v403
    %v1989 = vunpack.c.l.s4 1983009808
    %v1990 = vunpack.c.0.s8 %v1989
    %v1991 = vlaneseq
    %v1992 = vshrl.u32 %v1991, 7
    %v1993 = vsub.s32 %v1990, %v1992
    %v1994 = vrot.slane %v1570, %v1993
    %v1996 = vunpack.c.l.s4 1983009808
    %v1997 = vunpack.c.0.s8 %v1996
    %v1998 = vlaneseq
    %v1999 = vshrl.u32 %v1998, 7
    %v2000 = vsub.s32 %v1997, %v1999
    %v2001 = vrot.slane %v1987, %v2000
    %v2002 = vcombine.low %v1979, %v1994
    %v2003 = vcombine.high %v1979, %v1994
    %v2005 = vunpack.c.l.s4 1934713408
    %v2006 = vunpack.c.0.s8 %v2005
    %v2007 = vlaneseq
    %v2008 = vshrl.u32 %v2007, 7
    %v2009 = vsub.s32 %v2006, %v2008
    %v2010 = vrot.slane %v2002, %v2009
    %v2012 = vunpack.c.l.s4 1934713408
    %v2013 = vunpack.c.0.s8 %v2012
    %v2014 = vlaneseq
    %v2015 = vshrl.u32 %v2014, 7
    %v2016 = vsub.s32 %v2013, %v2015
    %v2017 = vrot.slane %v2003, %v2016
    %v2018 = vcombine.low %v1986, %v2001
    %v2019 = vcombine.high %v1986, %v2001
    %v2021 = vunpack.c.l.s4 1934713408
    %v2022 = vunpack.c.0.s8 %v2021
    %v2023 = vlaneseq
    %v2024 = vshrl.u32 %v2023, 7
    %v2025 = vsub.s32 %v2022, %v2024
    %v2026 = vrot.slane %v2018, %v2025
    %v2028 = vunpack.c.l.s4 1934713408
    %v2029 = vunpack.c.0.s8 %v2028
    %v2030 = vlaneseq
    %v2031 = vshrl.u32 %v2030, 7
    %v2032 = vsub.s32 %v2029, %v2031
    %v2033 = vrot.slane %v2019, %v2032
    %v2034 = vcombine.high %v2010, 0
    %v2035 = vcombine.high %v2017, 0
    %v2036 = vcombine.high %v2026, 0
    %v2037 = vcombine.high %v2033, 0
    %v2038 = vcombine.high %v1566, %v406
    %v2040 = vunpack.c.l.s4 1983009808
    %v2041 = vunpack.c.0.s8 %v2040
    %v2042 = vlaneseq
    %v2043 = vshrl.u32 %v2042, 7
    %v2044 = vsub.s32 %v2041, %v2043
    %v2045 = vrot.slane %v1566, %v2044
    %v2047 = vunpack.c.l.s4 1983009808
    %v2048 = vunpack.c.0.s8 %v2047
    %v2049 = vlaneseq
    %v2050 = vshrl.u32 %v2049, 7
    %v2051 = vsub.s32 %v2048, %v2050
    %v2052 = vrot.slane %v2038, %v2051
    %v2053 = vcombine.high %v1574, %v406
    %v2055 = vunpack.c.l.s4 1983009808
    %v2056 = vunpack.c.0.s8 %v2055
    %v2057 = vlaneseq
    %v2058 = vshrl.u32 %v2057, 7
    %v2059 = vsub.s32 %v2056, %v2058
    %v2060 = vrot.slane %v1574, %v2059
    %v2062 = vunpack.c.l.s4 1983009808
    %v2063 = vunpack.c.0.s8 %v2062
    %v2064 = vlaneseq
    %v2065 = vshrl.u32 %v2064, 7
    %v2066 = vsub.s32 %v2063, %v2065
    %v2067 = vrot.slane %v2053, %v2066
    %v2068 = vcombine.low %v2045, %v2060
    %v2069 = vcombine.high %v2045, %v2060
    %v2071 = vunpack.c.l.s4 1934713408
    %v2072 = vunpack.c.0.s8 %v2071
    %v2073 = vlaneseq
    %v2074 = vshrl.u32 %v2073, 7
    %v2075 = vsub.s32 %v2072, %v2074
    %v2076 = vrot.slane %v2068, %v2075
    %v2078 = vunpack.c.l.s4 1934713408
    %v2079 = vunpack.c.0.s8 %v2078
    %v2080 = vlaneseq
    %v2081 = vshrl.u32 %v2080, 7
    %v2082 = vsub.s32 %v2079, %v2081
    %v2083 = vrot.slane %v2069, %v2082
    %v2084 = vcombine.low %v2052, %v2067
    %v2085 = vcombine.high %v2052, %v2067
    %v2087 = vunpack.c.l.s4 1934713408
    %v2088 = vunpack.c.0.s8 %v2087
    %v2089 = vlaneseq
    %v2090 = vshrl.u32 %v2089, 7
    %v2091 = vsub.s32 %v2088, %v2090
    %v2092 = vrot.slane %v2084, %v2091
    %v2094 = vunpack.c.l.s4 1934713408
    %v2095 = vunpack.c.0.s8 %v2094
    %v2096 = vlaneseq
    %v2097 = vshrl.u32 %v2096, 7
    %v2098 = vsub.s32 %v2095, %v2097
    %v2099 = vrot.slane %v2085, %v2098
    %v2100 = vcombine.high %v2076, 0
    %v2101 = vcombine.high %v2083, 0
    %v2102 = vcombine.high %v2092, 0
    %v2103 = vcombine.high %v2099, 0
    %v2104 = vcombine.low %v1614, %v1878
    %v2106 = vunpack.c.l.s4 1983009808
    %v2107 = vunpack.c.0.s8 %v2106
    %v2108 = vlaneseq
    %v2109 = vshrl.u32 %v2108, 7
    %v2110 = vsub.s32 %v2107, %v2109
    %v2111 = vrot.slane %v2104, %v2110
    %v2112 = vcombine.low %v1746, %v2010
    %v2114 = vunpack.c.l.s4 1983009808
    %v2115 = vunpack.c.0.s8 %v2114
    %v2116 = vlaneseq
    %v2117 = vshrl.u32 %v2116, 7
    %v2118 = vsub.s32 %v2115, %v2117
    %v2119 = vrot.slane %v2112, %v2118
    %v2120 = vcombine.low %v2111, %v2119
    %v2122 = vunpack.c.l.s4 1934713408
    %v2123 = vunpack.c.0.s8 %v2122
    %v2124 = vlaneseq
    %v2125 = vshrl.u32 %v2124, 7
    %v2126 = vsub.s32 %v2123, %v2125
    %v2127 = vrot.slane %v2120, %v2126
    %v2128 = vcombine.high %v2127, 0
    %v2129 = vcombine.low %v1630, %v1894
    %v2131 = vunpack.c.l.s4 1983009808
    %v2132 = vunpack.c.0.s8 %v2131
    %v2133 = vlaneseq
    %v2134 = vshrl.u32 %v2133, 7
    %v2135 = vsub.s32 %v2132, %v2134
    %v2136 = vrot.slane %v2129, %v2135
    %v2137 = vcombine.low %v1762, %v2026
    %v2139 = vunpack.c.l.s4 1983009808
    %v2140 = vunpack.c.0.s8 %v2139
    %v2141 = vlaneseq
    %v2142 = vshrl.u32 %v2141, 7
    %v2143 = vsub.s32 %v2140, %v2142
    %v2144 = vrot.slane %v2137, %v2143
    %v2145 = vcombine.low %v2136, %v2144
    %v2147 = vunpack.c.l.s4 1934713408
    %v2148 = vunpack.c.0.s8 %v2147
    %v2149 = vlaneseq
    %v2150 = vshrl.u32 %v2149, 7
    %v2151 = vsub.s32 %v2148, %v2150
    %v2152 = vrot.slane %v2145, %v2151
    %v2153 = vcombine.high %v2152, 0
    %v2154 = vcombine.low %v1680, %v1944
    %v2156 = vunpack.c.l.s4 1983009808
    %v2157 = vunpack.c.0.s8 %v2156
    %v2158 = vlaneseq
    %v2159 = vshrl.u32 %v2158, 7
    %v2160 = vsub.s32 %v2157, %v2159
    %v2161 = vrot.slane %v2154, %v2160
    %v2162 = vcombine.low %v1812, %v2076
    %v2164 = vunpack.c.l.s4 1983009808
    %v2165 = vunpack.c.0.s8 %v2164
    %v2166 = vlaneseq
    %v2167 = vshrl.u32 %v2166, 7
    %v2168 = vsub.s32 %v2165, %v2167
    %v2169 = vrot.slane %v2162, %v2168
    %v2170 = vcombine.low %v2161, %v2169
    %v2172 = vunpack.c.l.s4 1934713408
    %v2173 = vunpack.c.0.s8 %v2172
    %v2174 = vlaneseq
    %v2175 = vshrl.u32 %v2174, 7
    %v2176 = vsub.s32 %v2173, %v2175
    %v2177 = vrot.slane %v2170, %v2176
    %v2178 = vcombine.high %v2177, 0
    %v2179 = vcombine.low %v1696, %v1960
    %v2181 = vunpack.c.l.s4 1983009808
    %v2182 = vunpack.c.0.s8 %v2181
    %v2183 = vlaneseq
    %v2184 = vshrl.u32 %v2183, 7
    %v2185 = vsub.s32 %v2182, %v2184
    %v2186 = vrot.slane %v2179, %v2185
    %v2187 = vcombine.low %v1828, %v2092
    %v2189 = vunpack.c.l.s4 1983009808
    %v2190 = vunpack.c.0.s8 %v2189
    %v2191 = vlaneseq
    %v2192 = vshrl.u32 %v2191, 7
    %v2193 = vsub.s32 %v2190, %v2192
    %v2194 = vrot.slane %v2187, %v2193
    %v2195 = vcombine.low %v2186, %v2194
    %v2197 = vunpack.c.l.s4 1934713408
    %v2198 = vunpack.c.0.s8 %v2197
    %v2199 = vlaneseq
    %v2200 = vshrl.u32 %v2199, 7
    %v2201 = vsub.s32 %v2198, %v2200
    %v2202 = vrot.slane %v2195, %v2201
    %v2203 = vcombine.high %v2202, 0
    %v2204 = vcombine.low %v1638, %v1902
    %v2206 = vunpack.c.l.s4 1983009808
    %v2207 = vunpack.c.0.s8 %v2206
    %v2208 = vlaneseq
    %v2209 = vshrl.u32 %v2208, 7
    %v2210 = vsub.s32 %v2207, %v2209
    %v2211 = vrot.slane %v2204, %v2210
    %v2212 = vcombine.low %v1770, %v2034
    %v2214 = vunpack.c.l.s4 1983009808
    %v2215 = vunpack.c.0.s8 %v2214
    %v2216 = vlaneseq
    %v2217 = vshrl.u32 %v2216, 7
    %v2218 = vsub.s32 %v2215, %v2217
    %v2219 = vrot.slane %v2212, %v2218
    %v2220 = vcombine.low %v2211, %v2219
    %v2222 = vunpack.c.l.s4 1934713408
    %v2223 = vunpack.c.0.s8 %v2222
    %v2224 = vlaneseq
    %v2225 = vshrl.u32 %v2224, 7
    %v2226 = vsub.s32 %v2223, %v2225
    %v2227 = vrot.slane %v2220, %v2226
    %v2228 = vcombine.high %v2227, 0
    %v2229 = vcombine.low %v1640, %v1904
    %v2231 = vunpack.c.l.s4 1983009808
    %v2232 = vunpack.c.0.s8 %v2231
    %v2233 = vlaneseq
    %v2234 = vshrl.u32 %v2233, 7
    %v2235 = vsub.s32 %v2232, %v2234
    %v2236 = vrot.slane %v2229, %v2235
    %v2237 = vcombine.low %v1772, %v2036
    %v2239 = vunpack.c.l.s4 1983009808
    %v2240 = vunpack.c.0.s8 %v2239
    %v2241 = vlaneseq
    %v2242 = vshrl.u32 %v2241, 7
    %v2243 = vsub.s32 %v2240, %v2242
    %v2244 = vrot.slane %v2237, %v2243
    %v2245 = vcombine.low %v2236, %v2244
    %v2247 = vunpack.c.l.s4 1934713408
    %v2248 = vunpack.c.0.s8 %v2247
    %v2249 = vlaneseq
    %v2250 = vshrl.u32 %v2249, 7
    %v2251 = vsub.s32 %v2248, %v2250
    %v2252 = vrot.slane %v2245, %v2251
    %v2253 = vcombine.high %v2252, 0
    %v2254 = vcombine.low %v1704, %v1968
    %v2256 = vunpack.c.l.s4 1983009808
    %v2257 = vunpack.c.0.s8 %v2256
    %v2258 = vlaneseq
    %v2259 = vshrl.u32 %v2258, 7
    %v2260 = vsub.s32 %v2257, %v2259
    %v2261 = vrot.slane %v2254, %v2260
    %v2262 = vcombine.low %v1836, %v2100
    %v2264 = vunpack.c.l.s4 1983009808
    %v2265 = vunpack.c.0.s8 %v2264
    %v2266 = vlaneseq
    %v2267 = vshrl.u32 %v2266, 7
    %v2268 = vsub.s32 %v2265, %v2267
    %v2269 = vrot.slane %v2262, %v2268
    %v2270 = vcombine.low %v2261, %v2269
    %v2272 = vunpack.c.l.s4 1934713408
    %v2273 = vunpack.c.0.s8 %v2272
    %v2274 = vlaneseq
    %v2275 = vshrl.u32 %v2274, 7
    %v2276 = vsub.s32 %v2273, %v2275
    %v2277 = vrot.slane %v2270, %v2276
    %v2278 = vcombine.high %v2277, 0
    %v2279 = vcombine.low %v1706, %v1970
    %v2281 = vunpack.c.l.s4 1983009808
    %v2282 = vunpack.c.0.s8 %v2281
    %v2283 = vlaneseq
    %v2284 = vshrl.u32 %v2283, 7
    %v2285 = vsub.s32 %v2282, %v2284
    %v2286 = vrot.slane %v2279, %v2285
    %v2287 = vcombine.low %v1838, %v2102
    %v2289 = vunpack.c.l.s4 1983009808
    %v2290 = vunpack.c.0.s8 %v2289
    %v2291 = vlaneseq
    %v2292 = vshrl.u32 %v2291, 7
    %v2293 = vsub.s32 %v2290, %v2292
    %v2294 = vrot.slane %v2287, %v2293
    %v2295 = vcombine.low %v2286, %v2294
    %v2297 = vunpack.c.l.s4 1934713408
    %v2298 = vunpack.c.0.s8 %v2297
    %v2299 = vlaneseq
    %v2300 = vshrl.u32 %v2299, 7
    %v2301 = vsub.s32 %v2298, %v2300
    %v2302 = vrot.slane %v2295, %v2301
    %v2303 = vcombine.high %v2302, 0
    %v2304 = vcombine.low %v1621, %v1885
    %v2306 = vunpack.c.l.s4 1983009808
    %v2307 = vunpack.c.0.s8 %v2306
    %v2308 = vlaneseq
    %v2309 = vshrl.u32 %v2308, 7
    %v2310 = vsub.s32 %v2307, %v2309
    %v2311 = vrot.slane %v2304, %v2310
    %v2312 = vcombine.low %v1753, %v2017
    %v2314 = vunpack.c.l.s4 1983009808
    %v2315 = vunpack.c.0.s8 %v2314
    %v2316 = vlaneseq
    %v2317 = vshrl.u32 %v2316, 7
    %v2318 = vsub.s32 %v2315, %v2317
    %v2319 = vrot.slane %v2312, %v2318
    %v2320 = vcombine.low %v2311, %v2319
    %v2322 = vunpack.c.l.s4 1934713408
    %v2323 = vunpack.c.0.s8 %v2322
    %v2324 = vlaneseq
    %v2325 = vshrl.u32 %v2324, 7
    %v2326 = vsub.s32 %v2323, %v2325
    %v2327 = vrot.slane %v2320, %v2326
    %v2328 = vcombine.high %v2327, 0
    %v2329 = vcombine.low %v1637, %v1901
    %v2331 = vunpack.c.l.s4 1983009808
    %v2332 = vunpack.c.0.s8 %v2331
    %v2333 = vlaneseq
    %v2334 = vshrl.u32 %v2333, 7
    %v2335 = vsub.s32 %v2332, %v2334
    %v2336 = vrot.slane %v2329, %v2335
    %v2337 = vcombine.low %v1769, %v2033
    %v2339 = vunpack.c.l.s4 1983009808
    %v2340 = vunpack.c.0.s8 %v2339
    %v2341 = vlaneseq
    %v2342 = vshrl.u32 %v2341, 7
    %v2343 = vsub.s32 %v2340, %v2342
    %v2344 = vrot.slane %v2337, %v2343
    %v2345 = vcombine.low %v2336, %v2344
    %v2347 = vunpack.c.l.s4 1934713408
    %v2348 = vunpack.c.0.s8 %v2347
    %v2349 = vlaneseq
    %v2350 = vshrl.u32 %v2349, 7
    %v2351 = vsub.s32 %v2348, %v2350
    %v2352 = vrot.slane %v2345, %v2351
    %v2353 = vcombine.high %v2352, 0
    %v2354 = vcombine.low %v1687, %v1951
    %v2356 = vunpack.c.l.s4 1983009808
    %v2357 = vunpack.c.0.s8 %v2356
    %v2358 = vlaneseq
    %v2359 = vshrl.u32 %v2358, 7
    %v2360 = vsub.s32 %v2357, %v2359
    %v2361 = vrot.slane %v2354, %v2360
    %v2362 = vcombine.low %v1819, %v2083
    %v2364 = vunpack.c.l.s4 1983009808
    %v2365 = vunpack.c.0.s8 %v2364
    %v2366 = vlaneseq
    %v2367 = vshrl.u32 %v2366, 7
    %v2368 = vsub.s32 %v2365, %v2367
    %v2369 = vrot.slane %v2362, %v2368
    %v2370 = vcombine.low %v2361, %v2369
    %v2372 = vunpack.c.l.s4 1934713408
    %v2373 = vunpack.c.0.s8 %v2372
    %v2374 = vlaneseq
    %v2375 = vshrl.u32 %v2374, 7
    %v2376 = vsub.s32 %v2373, %v2375
    %v2377 = vrot.slane %v2370, %v2376
    %v2378 = vcombine.high %v2377, 0
    %v2379 = vcombine.low %v1703, %v1967
    %v2381 = vunpack.c.l.s4 1983009808
    %v2382 = vunpack.c.0.s8 %v2381
    %v2383 = vlaneseq
    %v2384 = vshrl.u32 %v2383, 7
    %v2385 = vsub.s32 %v2382, %v2384
    %v2386 = vrot.slane %v2379, %v2385
    %v2387 = vcombine.low %v1835, %v2099
    %v2389 = vunpack.c.l.s4 1983009808
    %v2390 = vunpack.c.0.s8 %v2389
    %v2391 = vlaneseq
    %v2392 = vshrl.u32 %v2391, 7
    %v2393 = vsub.s32 %v2390, %v2392
    %v2394 = vrot.slane %v2387, %v2393
    %v2395 = vcombine.low %v2386, %v2394
    %v2397 = vunpack.c.l.s4 1934713408
    %v2398 = vunpack.c.0.s8 %v2397
    %v2399 = vlaneseq
    %v2400 = vshrl.u32 %v2399, 7
    %v2401 = vsub.s32 %v2398, %v2400
    %v2402 = vrot.slane %v2395, %v2401
    %v2403 = vcombine.high %v2402, 0
    %v2404 = vcombine.low %v1639, %v1903
    %v2406 = vunpack.c.l.s4 1983009808
    %v2407 = vunpack.c.0.s8 %v2406
    %v2408 = vlaneseq
    %v2409 = vshrl.u32 %v2408, 7
    %v2410 = vsub.s32 %v2407, %v2409
    %v2411 = vrot.slane %v2404, %v2410
    %v2412 = vcombine.low %v1771, %v2035
    %v2414 = vunpack.c.l.s4 1983009808
    %v2415 = vunpack.c.0.s8 %v2414
    %v2416 = vlaneseq
    %v2417 = vshrl.u32 %v2416, 7
    %v2418 = vsub.s32 %v2415, %v2417
    %v2419 = vrot.slane %v2412, %v2418
    %v2420 = vcombine.low %v2411, %v2419
    %v2422 = vunpack.c.l.s4 1934713408
    %v2423 = vunpack.c.0.s8 %v2422
    %v2424 = vlaneseq
    %v2425 = vshrl.u32 %v2424, 7
    %v2426 = vsub.s32 %v2423, %v2425
    %v2427 = vrot.slane %v2420, %v2426
    %v2428 = vcombine.high %v2427, 0
    %v2429 = vcombine.low %v1641, %v1905
    %v2431 = vunpack.c.l.s4 1983009808
    %v2432 = vunpack.c.0.s8 %v2431
    %v2433 = vlaneseq
    %v2434 = vshrl.u32 %v2433, 7
    %v2435 = vsub.s32 %v2432, %v2434
    %v2436 = vrot.slane %v2429, %v2435
    %v2437 = vcombine.low %v1773, %v2037
    %v2439 = vunpack.c.l.s4 1983009808
    %v2440 = vunpack.c.0.s8 %v2439
    %v2441 = vlaneseq
    %v2442 = vshrl.u32 %v2441, 7
    %v2443 = vsub.s32 %v2440, %v2442
    %v2444 = vrot.slane %v2437, %v2443
    %v2445 = vcombine.low %v2436, %v2444
    %v2447 = vunpack.c.l.s4 1934713408
    %v2448 = vunpack.c.0.s8 %v2447
    %v2449 = vlaneseq
    %v2450 = vshrl.u32 %v2449, 7
    %v2451 = vsub.s32 %v2448, %v2450
    %v2452 = vrot.slane %v2445, %v2451
    %v2453 = vcombine.high %v2452, 0
    %v2454 = vcombine.low %v1705, %v1969
    %v2456 = vunpack.c.l.s4 1983009808
    %v2457 = vunpack.c.0.s8 %v2456
    %v2458 = vlaneseq
    %v2459 = vshrl.u32 %v2458, 7
    %v2460 = vsub.s32 %v2457, %v2459
    %v2461 = vrot.slane %v2454, %v2460
    %v2462 = vcombine.low %v1837, %v2101
    %v2464 = vunpack.c.l.s4 1983009808
    %v2465 = vunpack.c.0.s8 %v2464
    %v2466 = vlaneseq
    %v2467 = vshrl.u32 %v2466, 7
    %v2468 = vsub.s32 %v2465, %v2467
    %v2469 = vrot.slane %v2462, %v2468
    %v2470 = vcombine.low %v2461, %v2469
    %v2472 = vunpack.c.l.s4 1934713408
    %v2473 = vunpack.c.0.s8 %v2472
    %v2474 = vlaneseq
    %v2475 = vshrl.u32 %v2474, 7
    %v2476 = vsub.s32 %v2473, %v2475
    %v2477 = vrot.slane %v2470, %v2476
    %v2478 = vcombine.high %v2477, 0
    %v2479 = vcombine.low %v1707, %v1971
    %v2481 = vunpack.c.l.s4 1983009808
    %v2482 = vunpack.c.0.s8 %v2481
    %v2483 = vlaneseq
    %v2484 = vshrl.u32 %v2483, 7
    %v2485 = vsub.s32 %v2482, %v2484
    %v2486 = vrot.slane %v2479, %v2485
    %v2487 = vcombine.low %v1839, %v2103
    %v2489 = vunpack.c.l.s4 1983009808
    %v2490 = vunpack.c.0.s8 %v2489
    %v2491 = vlaneseq
    %v2492 = vshrl.u32 %v2491, 7
    %v2493 = vsub.s32 %v2490, %v2492
    %v2494 = vrot.slane %v2487, %v2493
    %v2495 = vcombine.low %v2486, %v2494
    %v2497 = vunpack.c.l.s4 1934713408
    %v2498 = vunpack.c.0.s8 %v2497
    %v2499 = vlaneseq
    %v2500 = vshrl.u32 %v2499, 7
    %v2501 = vsub.s32 %v2498, %v2500
    %v2502 = vrot.slane %v2495, %v2501
    %v2503 = vcombine.high %v2502, 0
    %v2506 = vpack.i.b16 %v2152, %v2127
    %v2507 = vshrl.u32 %v2127, 16
    %v2508 = vshrl.u32 %v2152, 16
    %v2509 = vpack.i.b16 %v2508, %v2507
    %v2512 = vpack.i.b16 %v2153, %v2128
    %v2513 = vshrl.u32 %v2128, 16
    %v2514 = vshrl.u32 %v2153, 16
    %v2515 = vpack.i.b16 %v2514, %v2513
    %v2518 = vpack.i.b16 %v2202, %v2177
    %v2519 = vshrl.u32 %v2177, 16
    %v2520 = vshrl.u32 %v2202, 16
    %v2521 = vpack.i.b16 %v2520, %v2519
    %v2524 = vpack.i.b16 %v2203, %v2178
    %v2525 = vshrl.u32 %v2178, 16
    %v2526 = vshrl.u32 %v2203, 16
    %v2527 = vpack.i.b16 %v2526, %v2525
    %v2530 = vpack.i.b16 %v2252, %v2227
    %v2531 = vshrl.u32 %v2227, 16
    %v2532 = vshrl.u32 %v2252, 16
    %v2533 = vpack.i.b16 %v2532, %v2531
    %v2536 = vpack.i.b16 %v2253, %v2228
    %v2537 = vshrl.u32 %v2228, 16
    %v2538 = vshrl.u32 %v2253, 16
    %v2539 = vpack.i.b16 %v2538, %v2537
    %v2542 = vpack.i.b16 %v2302, %v2277
    %v2543 = vshrl.u32 %v2277, 16
    %v2544 = vshrl.u32 %v2302, 16
    %v2545 = vpack.i.b16 %v2544, %v2543
    %v2548 = vpack.i.b16 %v2303, %v2278
    %v2549 = vshrl.u32 %v2278, 16
    %v2550 = vshrl.u32 %v2303, 16
    %v2551 = vpack.i.b16 %v2550, %v2549
    %v2554 = vpack.i.b16 %v2352, %v2327
    %v2555 = vshrl.u32 %v2327, 16
    %v2556 = vshrl.u32 %v2352, 16
    %v2557 = vpack.i.b16 %v2556, %v2555
    %v2560 = vpack.i.b16 %v2353, %v2328
    %v2561 = vshrl.u32 %v2328, 16
    %v2562 = vshrl.u32 %v2353, 16
    %v2563 = vpack.i.b16 %v2562, %v2561
    %v2566 = vpack.i.b16 %v2402, %v2377
    %v2567 = vshrl.u32 %v2377, 16
    %v2568 = vshrl.u32 %v2402, 16
    %v2569 = vpack.i.b16 %v2568, %v2567
    %v2572 = vpack.i.b16 %v2403, %v2378
    %v2573 = vshrl.u32 %v2378, 16
    %v2574 = vshrl.u32 %v2403, 16
    %v2575 = vpack.i.b16 %v2574, %v2573
    %v2578 = vpack.i.b16 %v2452, %v2427
    %v2579 = vshrl.u32 %v2427, 16
    %v2580 = vshrl.u32 %v2452, 16
    %v2581 = vpack.i.b16 %v2580, %v2579
    %v2584 = vpack.i.b16 %v2453, %v2428
    %v2585 = vshrl.u32 %v2428, 16
    %v2586 = vshrl.u32 %v2453, 16
    %v2587 = vpack.i.b16 %v2586, %v2585
    %v2590 = vpack.i.b16 %v2502, %v2477
    %v2591 = vshrl.u32 %v2477, 16
    %v2592 = vshrl.u32 %v2502, 16
    %v2593 = vpack.i.b16 %v2592, %v2591
    %v2596 = vpack.i.b16 %v2503, %v2478
    %v2597 = vshrl.u32 %v2478, 16
    %v2598 = vshrl.u32 %v2503, 16
    %v2599 = vpack.i.b16 %v2598, %v2597
    %2600 = vrot.lane.b32.xlu0 %v354, 64
    %v2601 = vpop.permute.xlu0 %2600
    %2602 = vrot.lane.b32.xlu0 %v355, 64
    %v2603 = vpop.permute.xlu0 %2602
    %2604 = vrot.lane.b32.xlu0 %v356, 64
    %v2605 = vpop.permute.xlu0 %2604
    %2606 = vrot.lane.b32.xlu0 %v357, 64
    %v2607 = vpop.permute.xlu0 %2606
    %2608 = vrot.lane.b32.xlu0 %v363, 64
    %v2609 = vpop.permute.xlu0 %2608
    %2610 = vrot.lane.b32.xlu0 %v365, 64
    %v2611 = vpop.permute.xlu0 %2610
    %2612 = vrot.lane.b32.xlu0 %v367, 64
    %v2613 = vpop.permute.xlu0 %2612
    %2614 = vrot.lane.b32.xlu0 %v369, 64
    %v2615 = vpop.permute.xlu0 %2614
    %2616 = vrot.lane.b32.xlu0 %v371, 64
    %v2617 = vpop.permute.xlu0 %2616
    %2618 = vrot.lane.b32.xlu0 %v373, 64
    %v2619 = vpop.permute.xlu0 %2618
    %2620 = vrot.lane.b32.xlu0 %v375, 64
    %v2621 = vpop.permute.xlu0 %2620
    %2622 = vrot.lane.b32.xlu0 %v377, 64
    %v2623 = vpop.permute.xlu0 %2622
    %2624 = vrot.lane.b32.xlu0 %v379, 64
    %v2625 = vpop.permute.xlu0 %2624
    %2626 = vrot.lane.b32.xlu0 %v381, 64
    %v2627 = vpop.permute.xlu0 %2626
    %2628 = vrot.lane.b32.xlu0 %v383, 64
    %v2629 = vpop.permute.xlu0 %2628
    %2630 = vrot.lane.b32.xlu0 %v385, 64
    %v2631 = vpop.permute.xlu0 %2630
    %v2634 = vpack.i.b16 %v2609, %v2601
    %v2636 = vshrl.u32 %v2601, 16
    %v2637 = vshrl.u32 %v2609, 16
    %v2638 = vpack.i.b16 %v2637, %v2636
    %v2642 = vpack.i.b16 %v2625, %v2617
    %v2644 = vshrl.u32 %v2617, 16
    %v2645 = vshrl.u32 %v2625, 16
    %v2646 = vpack.i.b16 %v2645, %v2644
    %v2650 = vpack.i.b16 %v2611, %v2603
    %v2652 = vshrl.u32 %v2603, 16
    %v2653 = vshrl.u32 %v2611, 16
    %v2654 = vpack.i.b16 %v2653, %v2652
    %v2658 = vpack.i.b16 %v2627, %v2619
    %v2660 = vshrl.u32 %v2619, 16
    %v2661 = vshrl.u32 %v2627, 16
    %v2662 = vpack.i.b16 %v2661, %v2660
    %v2666 = vpack.i.b16 %v2613, %v2605
    %v2668 = vshrl.u32 %v2605, 16
    %v2669 = vshrl.u32 %v2613, 16
    %v2670 = vpack.i.b16 %v2669, %v2668
    %v2674 = vpack.i.b16 %v2629, %v2621
    %v2676 = vshrl.u32 %v2621, 16
    %v2677 = vshrl.u32 %v2629, 16
    %v2678 = vpack.i.b16 %v2677, %v2676
    %v2682 = vpack.i.b16 %v2615, %v2607
    %v2684 = vshrl.u32 %v2607, 16
    %v2685 = vshrl.u32 %v2615, 16
    %v2686 = vpack.i.b16 %v2685, %v2684
    %v2690 = vpack.i.b16 %v2631, %v2623
    %v2692 = vshrl.u32 %v2623, 16
    %v2693 = vshrl.u32 %v2631, 16
    %v2694 = vpack.i.b16 %v2693, %v2692
    %v2696 = vcombine.high %v2634, %v403
    %v2698 = vunpack.c.l.s4 1983009808
    %v2699 = vunpack.c.0.s8 %v2698
    %v2700 = vlaneseq
    %v2701 = vshrl.u32 %v2700, 7
    %v2702 = vsub.s32 %v2699, %v2701
    %v2703 = vrot.slane %v2634, %v2702
    %v2705 = vunpack.c.l.s4 1983009808
    %v2706 = vunpack.c.0.s8 %v2705
    %v2707 = vlaneseq
    %v2708 = vshrl.u32 %v2707, 7
    %v2709 = vsub.s32 %v2706, %v2708
    %v2710 = vrot.slane %v2696, %v2709
    %v2711 = vcombine.high %v2642, %v403
    %v2713 = vunpack.c.l.s4 1983009808
    %v2714 = vunpack.c.0.s8 %v2713
    %v2715 = vlaneseq
    %v2716 = vshrl.u32 %v2715, 7
    %v2717 = vsub.s32 %v2714, %v2716
    %v2718 = vrot.slane %v2642, %v2717
    %v2720 = vunpack.c.l.s4 1983009808
    %v2721 = vunpack.c.0.s8 %v2720
    %v2722 = vlaneseq
    %v2723 = vshrl.u32 %v2722, 7
    %v2724 = vsub.s32 %v2721, %v2723
    %v2725 = vrot.slane %v2711, %v2724
    %v2726 = vcombine.low %v2703, %v2718
    %v2727 = vcombine.high %v2703, %v2718
    %v2729 = vunpack.c.l.s4 1934713408
    %v2730 = vunpack.c.0.s8 %v2729
    %v2731 = vlaneseq
    %v2732 = vshrl.u32 %v2731, 7
    %v2733 = vsub.s32 %v2730, %v2732
    %v2734 = vrot.slane %v2726, %v2733
    %v2736 = vunpack.c.l.s4 1934713408
    %v2737 = vunpack.c.0.s8 %v2736
    %v2738 = vlaneseq
    %v2739 = vshrl.u32 %v2738, 7
    %v2740 = vsub.s32 %v2737, %v2739
    %v2741 = vrot.slane %v2727, %v2740
    %v2742 = vcombine.low %v2710, %v2725
    %v2743 = vcombine.high %v2710, %v2725
    %v2745 = vunpack.c.l.s4 1934713408
    %v2746 = vunpack.c.0.s8 %v2745
    %v2747 = vlaneseq
    %v2748 = vshrl.u32 %v2747, 7
    %v2749 = vsub.s32 %v2746, %v2748
    %v2750 = vrot.slane %v2742, %v2749
    %v2752 = vunpack.c.l.s4 1934713408
    %v2753 = vunpack.c.0.s8 %v2752
    %v2754 = vlaneseq
    %v2755 = vshrl.u32 %v2754, 7
    %v2756 = vsub.s32 %v2753, %v2755
    %v2757 = vrot.slane %v2743, %v2756
    %v2758 = vcombine.high %v2734, 0
    %v2759 = vcombine.high %v2741, 0
    %v2760 = vcombine.high %v2750, 0
    %v2761 = vcombine.high %v2757, 0
    %v2762 = vcombine.high %v2638, %v406
    %v2764 = vunpack.c.l.s4 1983009808
    %v2765 = vunpack.c.0.s8 %v2764
    %v2766 = vlaneseq
    %v2767 = vshrl.u32 %v2766, 7
    %v2768 = vsub.s32 %v2765, %v2767
    %v2769 = vrot.slane %v2638, %v2768
    %v2771 = vunpack.c.l.s4 1983009808
    %v2772 = vunpack.c.0.s8 %v2771
    %v2773 = vlaneseq
    %v2774 = vshrl.u32 %v2773, 7
    %v2775 = vsub.s32 %v2772, %v2774
    %v2776 = vrot.slane %v2762, %v2775
    %v2777 = vcombine.high %v2646, %v406
    %v2779 = vunpack.c.l.s4 1983009808
    %v2780 = vunpack.c.0.s8 %v2779
    %v2781 = vlaneseq
    %v2782 = vshrl.u32 %v2781, 7
    %v2783 = vsub.s32 %v2780, %v2782
    %v2784 = vrot.slane %v2646, %v2783
    %v2786 = vunpack.c.l.s4 1983009808
    %v2787 = vunpack.c.0.s8 %v2786
    %v2788 = vlaneseq
    %v2789 = vshrl.u32 %v2788, 7
    %v2790 = vsub.s32 %v2787, %v2789
    %v2791 = vrot.slane %v2777, %v2790
    %v2792 = vcombine.low %v2769, %v2784
    %v2793 = vcombine.high %v2769, %v2784
    %v2795 = vunpack.c.l.s4 1934713408
    %v2796 = vunpack.c.0.s8 %v2795
    %v2797 = vlaneseq
    %v2798 = vshrl.u32 %v2797, 7
    %v2799 = vsub.s32 %v2796, %v2798
    %v2800 = vrot.slane %v2792, %v2799
    %v2802 = vunpack.c.l.s4 1934713408
    %v2803 = vunpack.c.0.s8 %v2802
    %v2804 = vlaneseq
    %v2805 = vshrl.u32 %v2804, 7
    %v2806 = vsub.s32 %v2803, %v2805
    %v2807 = vrot.slane %v2793, %v2806
    %v2808 = vcombine.low %v2776, %v2791
    %v2809 = vcombine.high %v2776, %v2791
    %v2811 = vunpack.c.l.s4 1934713408
    %v2812 = vunpack.c.0.s8 %v2811
    %v2813 = vlaneseq
    %v2814 = vshrl.u32 %v2813, 7
    %v2815 = vsub.s32 %v2812, %v2814
    %v2816 = vrot.slane %v2808, %v2815
    %v2818 = vunpack.c.l.s4 1934713408
    %v2819 = vunpack.c.0.s8 %v2818
    %v2820 = vlaneseq
    %v2821 = vshrl.u32 %v2820, 7
    %v2822 = vsub.s32 %v2819, %v2821
    %v2823 = vrot.slane %v2809, %v2822
    %v2824 = vcombine.high %v2800, 0
    %v2825 = vcombine.high %v2807, 0
    %v2826 = vcombine.high %v2816, 0
    %v2827 = vcombine.high %v2823, 0
    %v2828 = vcombine.high %v2650, %v403
    %v2830 = vunpack.c.l.s4 1983009808
    %v2831 = vunpack.c.0.s8 %v2830
    %v2832 = vlaneseq
    %v2833 = vshrl.u32 %v2832, 7
    %v2834 = vsub.s32 %v2831, %v2833
    %v2835 = vrot.slane %v2650, %v2834
    %v2837 = vunpack.c.l.s4 1983009808
    %v2838 = vunpack.c.0.s8 %v2837
    %v2839 = vlaneseq
    %v2840 = vshrl.u32 %v2839, 7
    %v2841 = vsub.s32 %v2838, %v2840
    %v2842 = vrot.slane %v2828, %v2841
    %v2843 = vcombine.high %v2658, %v403
    %v2845 = vunpack.c.l.s4 1983009808
    %v2846 = vunpack.c.0.s8 %v2845
    %v2847 = vlaneseq
    %v2848 = vshrl.u32 %v2847, 7
    %v2849 = vsub.s32 %v2846, %v2848
    %v2850 = vrot.slane %v2658, %v2849
    %v2852 = vunpack.c.l.s4 1983009808
    %v2853 = vunpack.c.0.s8 %v2852
    %v2854 = vlaneseq
    %v2855 = vshrl.u32 %v2854, 7
    %v2856 = vsub.s32 %v2853, %v2855
    %v2857 = vrot.slane %v2843, %v2856
    %v2858 = vcombine.low %v2835, %v2850
    %v2859 = vcombine.high %v2835, %v2850
    %v2861 = vunpack.c.l.s4 1934713408
    %v2862 = vunpack.c.0.s8 %v2861
    %v2863 = vlaneseq
    %v2864 = vshrl.u32 %v2863, 7
    %v2865 = vsub.s32 %v2862, %v2864
    %v2866 = vrot.slane %v2858, %v2865
    %v2868 = vunpack.c.l.s4 1934713408
    %v2869 = vunpack.c.0.s8 %v2868
    %v2870 = vlaneseq
    %v2871 = vshrl.u32 %v2870, 7
    %v2872 = vsub.s32 %v2869, %v2871
    %v2873 = vrot.slane %v2859, %v2872
    %v2874 = vcombine.low %v2842, %v2857
    %v2875 = vcombine.high %v2842, %v2857
    %v2877 = vunpack.c.l.s4 1934713408
    %v2878 = vunpack.c.0.s8 %v2877
    %v2879 = vlaneseq
    %v2880 = vshrl.u32 %v2879, 7
    %v2881 = vsub.s32 %v2878, %v2880
    %v2882 = vrot.slane %v2874, %v2881
    %v2884 = vunpack.c.l.s4 1934713408
    %v2885 = vunpack.c.0.s8 %v2884
    %v2886 = vlaneseq
    %v2887 = vshrl.u32 %v2886, 7
    %v2888 = vsub.s32 %v2885, %v2887
    %v2889 = vrot.slane %v2875, %v2888
    %v2890 = vcombine.high %v2866, 0
    %v2891 = vcombine.high %v2873, 0
    %v2892 = vcombine.high %v2882, 0
    %v2893 = vcombine.high %v2889, 0
    %v2894 = vcombine.high %v2654, %v406
    %v2896 = vunpack.c.l.s4 1983009808
    %v2897 = vunpack.c.0.s8 %v2896
    %v2898 = vlaneseq
    %v2899 = vshrl.u32 %v2898, 7
    %v2900 = vsub.s32 %v2897, %v2899
    %v2901 = vrot.slane %v2654, %v2900
    %v2903 = vunpack.c.l.s4 1983009808
    %v2904 = vunpack.c.0.s8 %v2903
    %v2905 = vlaneseq
    %v2906 = vshrl.u32 %v2905, 7
    %v2907 = vsub.s32 %v2904, %v2906
    %v2908 = vrot.slane %v2894, %v2907
    %v2909 = vcombine.high %v2662, %v406
    %v2911 = vunpack.c.l.s4 1983009808
    %v2912 = vunpack.c.0.s8 %v2911
    %v2913 = vlaneseq
    %v2914 = vshrl.u32 %v2913, 7
    %v2915 = vsub.s32 %v2912, %v2914
    %v2916 = vrot.slane %v2662, %v2915
    %v2918 = vunpack.c.l.s4 1983009808
    %v2919 = vunpack.c.0.s8 %v2918
    %v2920 = vlaneseq
    %v2921 = vshrl.u32 %v2920, 7
    %v2922 = vsub.s32 %v2919, %v2921
    %v2923 = vrot.slane %v2909, %v2922
    %v2924 = vcombine.low %v2901, %v2916
    %v2925 = vcombine.high %v2901, %v2916
    %v2927 = vunpack.c.l.s4 1934713408
    %v2928 = vunpack.c.0.s8 %v2927
    %v2929 = vlaneseq
    %v2930 = vshrl.u32 %v2929, 7
    %v2931 = vsub.s32 %v2928, %v2930
    %v2932 = vrot.slane %v2924, %v2931
    %v2934 = vunpack.c.l.s4 1934713408
    %v2935 = vunpack.c.0.s8 %v2934
    %v2936 = vlaneseq
    %v2937 = vshrl.u32 %v2936, 7
    %v2938 = vsub.s32 %v2935, %v2937
    %v2939 = vrot.slane %v2925, %v2938
    %v2940 = vcombine.low %v2908, %v2923
    %v2941 = vcombine.high %v2908, %v2923
    %v2943 = vunpack.c.l.s4 1934713408
    %v2944 = vunpack.c.0.s8 %v2943
    %v2945 = vlaneseq
    %v2946 = vshrl.u32 %v2945, 7
    %v2947 = vsub.s32 %v2944, %v2946
    %v2948 = vrot.slane %v2940, %v2947
    %v2950 = vunpack.c.l.s4 1934713408
    %v2951 = vunpack.c.0.s8 %v2950
    %v2952 = vlaneseq
    %v2953 = vshrl.u32 %v2952, 7
    %v2954 = vsub.s32 %v2951, %v2953
    %v2955 = vrot.slane %v2941, %v2954
    %v2956 = vcombine.high %v2932, 0
    %v2957 = vcombine.high %v2939, 0
    %v2958 = vcombine.high %v2948, 0
    %v2959 = vcombine.high %v2955, 0
    %v2960 = vcombine.high %v2666, %v403
    %v2962 = vunpack.c.l.s4 1983009808
    %v2963 = vunpack.c.0.s8 %v2962
    %v2964 = vlaneseq
    %v2965 = vshrl.u32 %v2964, 7
    %v2966 = vsub.s32 %v2963, %v2965
    %v2967 = vrot.slane %v2666, %v2966
    %v2969 = vunpack.c.l.s4 1983009808
    %v2970 = vunpack.c.0.s8 %v2969
    %v2971 = vlaneseq
    %v2972 = vshrl.u32 %v2971, 7
    %v2973 = vsub.s32 %v2970, %v2972
    %v2974 = vrot.slane %v2960, %v2973
    %v2975 = vcombine.high %v2674, %v403
    %v2977 = vunpack.c.l.s4 1983009808
    %v2978 = vunpack.c.0.s8 %v2977
    %v2979 = vlaneseq
    %v2980 = vshrl.u32 %v2979, 7
    %v2981 = vsub.s32 %v2978, %v2980
    %v2982 = vrot.slane %v2674, %v2981
    %v2984 = vunpack.c.l.s4 1983009808
    %v2985 = vunpack.c.0.s8 %v2984
    %v2986 = vlaneseq
    %v2987 = vshrl.u32 %v2986, 7
    %v2988 = vsub.s32 %v2985, %v2987
    %v2989 = vrot.slane %v2975, %v2988
    %v2990 = vcombine.low %v2967, %v2982
    %v2991 = vcombine.high %v2967, %v2982
    %v2993 = vunpack.c.l.s4 1934713408
    %v2994 = vunpack.c.0.s8 %v2993
    %v2995 = vlaneseq
    %v2996 = vshrl.u32 %v2995, 7
    %v2997 = vsub.s32 %v2994, %v2996
    %v2998 = vrot.slane %v2990, %v2997
    %v3000 = vunpack.c.l.s4 1934713408
    %v3001 = vunpack.c.0.s8 %v3000
    %v3002 = vlaneseq
    %v3003 = vshrl.u32 %v3002, 7
    %v3004 = vsub.s32 %v3001, %v3003
    %v3005 = vrot.slane %v2991, %v3004
    %v3006 = vcombine.low %v2974, %v2989
    %v3007 = vcombine.high %v2974, %v2989
    %v3009 = vunpack.c.l.s4 1934713408
    %v3010 = vunpack.c.0.s8 %v3009
    %v3011 = vlaneseq
    %v3012 = vshrl.u32 %v3011, 7
    %v3013 = vsub.s32 %v3010, %v3012
    %v3014 = vrot.slane %v3006, %v3013
    %v3016 = vunpack.c.l.s4 1934713408
    %v3017 = vunpack.c.0.s8 %v3016
    %v3018 = vlaneseq
    %v3019 = vshrl.u32 %v3018, 7
    %v3020 = vsub.s32 %v3017, %v3019
    %v3021 = vrot.slane %v3007, %v3020
    %v3022 = vcombine.high %v2998, 0
    %v3023 = vcombine.high %v3005, 0
    %v3024 = vcombine.high %v3014, 0
    %v3025 = vcombine.high %v3021, 0
    %v3026 = vcombine.high %v2670, %v406
    %v3028 = vunpack.c.l.s4 1983009808
    %v3029 = vunpack.c.0.s8 %v3028
    %v3030 = vlaneseq
    %v3031 = vshrl.u32 %v3030, 7
    %v3032 = vsub.s32 %v3029, %v3031
    %v3033 = vrot.slane %v2670, %v3032
    %v3035 = vunpack.c.l.s4 1983009808
    %v3036 = vunpack.c.0.s8 %v3035
    %v3037 = vlaneseq
    %v3038 = vshrl.u32 %v3037, 7
    %v3039 = vsub.s32 %v3036, %v3038
    %v3040 = vrot.slane %v3026, %v3039
    %v3041 = vcombine.high %v2678, %v406
    %v3043 = vunpack.c.l.s4 1983009808
    %v3044 = vunpack.c.0.s8 %v3043
    %v3045 = vlaneseq
    %v3046 = vshrl.u32 %v3045, 7
    %v3047 = vsub.s32 %v3044, %v3046
    %v3048 = vrot.slane %v2678, %v3047
    %v3050 = vunpack.c.l.s4 1983009808
    %v3051 = vunpack.c.0.s8 %v3050
    %v3052 = vlaneseq
    %v3053 = vshrl.u32 %v3052, 7
    %v3054 = vsub.s32 %v3051, %v3053
    %v3055 = vrot.slane %v3041, %v3054
    %v3056 = vcombine.low %v3033, %v3048
    %v3057 = vcombine.high %v3033, %v3048
    %v3059 = vunpack.c.l.s4 1934713408
    %v3060 = vunpack.c.0.s8 %v3059
    %v3061 = vlaneseq
    %v3062 = vshrl.u32 %v3061, 7
    %v3063 = vsub.s32 %v3060, %v3062
    %v3064 = vrot.slane %v3056, %v3063
    %v3066 = vunpack.c.l.s4 1934713408
    %v3067 = vunpack.c.0.s8 %v3066
    %v3068 = vlaneseq
    %v3069 = vshrl.u32 %v3068, 7
    %v3070 = vsub.s32 %v3067, %v3069
    %v3071 = vrot.slane %v3057, %v3070
    %v3072 = vcombine.low %v3040, %v3055
    %v3073 = vcombine.high %v3040, %v3055
    %v3075 = vunpack.c.l.s4 1934713408
    %v3076 = vunpack.c.0.s8 %v3075
    %v3077 = vlaneseq
    %v3078 = vshrl.u32 %v3077, 7
    %v3079 = vsub.s32 %v3076, %v3078
    %v3080 = vrot.slane %v3072, %v3079
    %v3082 = vunpack.c.l.s4 1934713408
    %v3083 = vunpack.c.0.s8 %v3082
    %v3084 = vlaneseq
    %v3085 = vshrl.u32 %v3084, 7
    %v3086 = vsub.s32 %v3083, %v3085
    %v3087 = vrot.slane %v3073, %v3086
    %v3088 = vcombine.high %v3064, 0
    %v3089 = vcombine.high %v3071, 0
    %v3090 = vcombine.high %v3080, 0
    %v3091 = vcombine.high %v3087, 0
    %v3092 = vcombine.high %v2682, %v403
    %v3094 = vunpack.c.l.s4 1983009808
    %v3095 = vunpack.c.0.s8 %v3094
    %v3096 = vlaneseq
    %v3097 = vshrl.u32 %v3096, 7
    %v3098 = vsub.s32 %v3095, %v3097
    %v3099 = vrot.slane %v2682, %v3098
    %v3101 = vunpack.c.l.s4 1983009808
    %v3102 = vunpack.c.0.s8 %v3101
    %v3103 = vlaneseq
    %v3104 = vshrl.u32 %v3103, 7
    %v3105 = vsub.s32 %v3102, %v3104
    %v3106 = vrot.slane %v3092, %v3105
    %v3107 = vcombine.high %v2690, %v403
    %v3109 = vunpack.c.l.s4 1983009808
    %v3110 = vunpack.c.0.s8 %v3109
    %v3111 = vlaneseq
    %v3112 = vshrl.u32 %v3111, 7
    %v3113 = vsub.s32 %v3110, %v3112
    %v3114 = vrot.slane %v2690, %v3113
    %v3116 = vunpack.c.l.s4 1983009808
    %v3117 = vunpack.c.0.s8 %v3116
    %v3118 = vlaneseq
    %v3119 = vshrl.u32 %v3118, 7
    %v3120 = vsub.s32 %v3117, %v3119
    %v3121 = vrot.slane %v3107, %v3120
    %v3122 = vcombine.low %v3099, %v3114
    %v3123 = vcombine.high %v3099, %v3114
    %v3125 = vunpack.c.l.s4 1934713408
    %v3126 = vunpack.c.0.s8 %v3125
    %v3127 = vlaneseq
    %v3128 = vshrl.u32 %v3127, 7
    %v3129 = vsub.s32 %v3126, %v3128
    %v3130 = vrot.slane %v3122, %v3129
    %v3132 = vunpack.c.l.s4 1934713408
    %v3133 = vunpack.c.0.s8 %v3132
    %v3134 = vlaneseq
    %v3135 = vshrl.u32 %v3134, 7
    %v3136 = vsub.s32 %v3133, %v3135
    %v3137 = vrot.slane %v3123, %v3136
    %v3138 = vcombine.low %v3106, %v3121
    %v3139 = vcombine.high %v3106, %v3121
    %v3141 = vunpack.c.l.s4 1934713408
    %v3142 = vunpack.c.0.s8 %v3141
    %v3143 = vlaneseq
    %v3144 = vshrl.u32 %v3143, 7
    %v3145 = vsub.s32 %v3142, %v3144
    %v3146 = vrot.slane %v3138, %v3145
    %v3148 = vunpack.c.l.s4 1934713408
    %v3149 = vunpack.c.0.s8 %v3148
    %v3150 = vlaneseq
    %v3151 = vshrl.u32 %v3150, 7
    %v3152 = vsub.s32 %v3149, %v3151
    %v3153 = vrot.slane %v3139, %v3152
    %v3154 = vcombine.high %v3130, 0
    %v3155 = vcombine.high %v3137, 0
    %v3156 = vcombine.high %v3146, 0
    %v3157 = vcombine.high %v3153, 0
    %v3158 = vcombine.high %v2686, %v406
    %v3160 = vunpack.c.l.s4 1983009808
    %v3161 = vunpack.c.0.s8 %v3160
    %v3162 = vlaneseq
    %v3163 = vshrl.u32 %v3162, 7
    %v3164 = vsub.s32 %v3161, %v3163
    %v3165 = vrot.slane %v2686, %v3164
    %v3167 = vunpack.c.l.s4 1983009808
    %v3168 = vunpack.c.0.s8 %v3167
    %v3169 = vlaneseq
    %v3170 = vshrl.u32 %v3169, 7
    %v3171 = vsub.s32 %v3168, %v3170
    %v3172 = vrot.slane %v3158, %v3171
    %v3173 = vcombine.high %v2694, %v406
    %v3175 = vunpack.c.l.s4 1983009808
    %v3176 = vunpack.c.0.s8 %v3175
    %v3177 = vlaneseq
    %v3178 = vshrl.u32 %v3177, 7
    %v3179 = vsub.s32 %v3176, %v3178
    %v3180 = vrot.slane %v2694, %v3179
    %v3182 = vunpack.c.l.s4 1983009808
    %v3183 = vunpack.c.0.s8 %v3182
    %v3184 = vlaneseq
    %v3185 = vshrl.u32 %v3184, 7
    %v3186 = vsub.s32 %v3183, %v3185
    %v3187 = vrot.slane %v3173, %v3186
    %v3188 = vcombine.low %v3165, %v3180
    %v3189 = vcombine.high %v3165, %v3180
    %v3191 = vunpack.c.l.s4 1934713408
    %v3192 = vunpack.c.0.s8 %v3191
    %v3193 = vlaneseq
    %v3194 = vshrl.u32 %v3193, 7
    %v3195 = vsub.s32 %v3192, %v3194
    %v3196 = vrot.slane %v3188, %v3195
    %v3198 = vunpack.c.l.s4 1934713408
    %v3199 = vunpack.c.0.s8 %v3198
    %v3200 = vlaneseq
    %v3201 = vshrl.u32 %v3200, 7
    %v3202 = vsub.s32 %v3199, %v3201
    %v3203 = vrot.slane %v3189, %v3202
    %v3204 = vcombine.low %v3172, %v3187
    %v3205 = vcombine.high %v3172, %v3187
    %v3207 = vunpack.c.l.s4 1934713408
    %v3208 = vunpack.c.0.s8 %v3207
    %v3209 = vlaneseq
    %v3210 = vshrl.u32 %v3209, 7
    %v3211 = vsub.s32 %v3208, %v3210
    %v3212 = vrot.slane %v3204, %v3211
    %v3214 = vunpack.c.l.s4 1934713408
    %v3215 = vunpack.c.0.s8 %v3214
    %v3216 = vlaneseq
    %v3217 = vshrl.u32 %v3216, 7
    %v3218 = vsub.s32 %v3215, %v3217
    %v3219 = vrot.slane %v3205, %v3218
    %v3220 = vcombine.high %v3196, 0
    %v3221 = vcombine.high %v3203, 0
    %v3222 = vcombine.high %v3212, 0
    %v3223 = vcombine.high %v3219, 0
    %v3224 = vcombine.low %v2734, %v2998
    %v3226 = vunpack.c.l.s4 1983009808
    %v3227 = vunpack.c.0.s8 %v3226
    %v3228 = vlaneseq
    %v3229 = vshrl.u32 %v3228, 7
    %v3230 = vsub.s32 %v3227, %v3229
    %v3231 = vrot.slane %v3224, %v3230
    %v3232 = vcombine.low %v2866, %v3130
    %v3234 = vunpack.c.l.s4 1983009808
    %v3235 = vunpack.c.0.s8 %v3234
    %v3236 = vlaneseq
    %v3237 = vshrl.u32 %v3236, 7
    %v3238 = vsub.s32 %v3235, %v3237
    %v3239 = vrot.slane %v3232, %v3238
    %v3240 = vcombine.low %v3231, %v3239
    %v3242 = vunpack.c.l.s4 1934713408
    %v3243 = vunpack.c.0.s8 %v3242
    %v3244 = vlaneseq
    %v3245 = vshrl.u32 %v3244, 7
    %v3246 = vsub.s32 %v3243, %v3245
    %v3247 = vrot.slane %v3240, %v3246
    %v3248 = vcombine.high %v3247, 0
    %v3249 = vcombine.low %v2750, %v3014
    %v3251 = vunpack.c.l.s4 1983009808
    %v3252 = vunpack.c.0.s8 %v3251
    %v3253 = vlaneseq
    %v3254 = vshrl.u32 %v3253, 7
    %v3255 = vsub.s32 %v3252, %v3254
    %v3256 = vrot.slane %v3249, %v3255
    %v3257 = vcombine.low %v2882, %v3146
    %v3259 = vunpack.c.l.s4 1983009808
    %v3260 = vunpack.c.0.s8 %v3259
    %v3261 = vlaneseq
    %v3262 = vshrl.u32 %v3261, 7
    %v3263 = vsub.s32 %v3260, %v3262
    %v3264 = vrot.slane %v3257, %v3263
    %v3265 = vcombine.low %v3256, %v3264
    %v3267 = vunpack.c.l.s4 1934713408
    %v3268 = vunpack.c.0.s8 %v3267
    %v3269 = vlaneseq
    %v3270 = vshrl.u32 %v3269, 7
    %v3271 = vsub.s32 %v3268, %v3270
    %v3272 = vrot.slane %v3265, %v3271
    %v3273 = vcombine.high %v3272, 0
    %v3274 = vcombine.low %v2800, %v3064
    %v3276 = vunpack.c.l.s4 1983009808
    %v3277 = vunpack.c.0.s8 %v3276
    %v3278 = vlaneseq
    %v3279 = vshrl.u32 %v3278, 7
    %v3280 = vsub.s32 %v3277, %v3279
    %v3281 = vrot.slane %v3274, %v3280
    %v3282 = vcombine.low %v2932, %v3196
    %v3284 = vunpack.c.l.s4 1983009808
    %v3285 = vunpack.c.0.s8 %v3284
    %v3286 = vlaneseq
    %v3287 = vshrl.u32 %v3286, 7
    %v3288 = vsub.s32 %v3285, %v3287
    %v3289 = vrot.slane %v3282, %v3288
    %v3290 = vcombine.low %v3281, %v3289
    %v3292 = vunpack.c.l.s4 1934713408
    %v3293 = vunpack.c.0.s8 %v3292
    %v3294 = vlaneseq
    %v3295 = vshrl.u32 %v3294, 7
    %v3296 = vsub.s32 %v3293, %v3295
    %v3297 = vrot.slane %v3290, %v3296
    %v3298 = vcombine.high %v3297, 0
    %v3299 = vcombine.low %v2816, %v3080
    %v3301 = vunpack.c.l.s4 1983009808
    %v3302 = vunpack.c.0.s8 %v3301
    %v3303 = vlaneseq
    %v3304 = vshrl.u32 %v3303, 7
    %v3305 = vsub.s32 %v3302, %v3304
    %v3306 = vrot.slane %v3299, %v3305
    %v3307 = vcombine.low %v2948, %v3212
    %v3309 = vunpack.c.l.s4 1983009808
    %v3310 = vunpack.c.0.s8 %v3309
    %v3311 = vlaneseq
    %v3312 = vshrl.u32 %v3311, 7
    %v3313 = vsub.s32 %v3310, %v3312
    %v3314 = vrot.slane %v3307, %v3313
    %v3315 = vcombine.low %v3306, %v3314
    %v3317 = vunpack.c.l.s4 1934713408
    %v3318 = vunpack.c.0.s8 %v3317
    %v3319 = vlaneseq
    %v3320 = vshrl.u32 %v3319, 7
    %v3321 = vsub.s32 %v3318, %v3320
    %v3322 = vrot.slane %v3315, %v3321
    %v3323 = vcombine.high %v3322, 0
    %v3324 = vcombine.low %v2758, %v3022
    %v3326 = vunpack.c.l.s4 1983009808
    %v3327 = vunpack.c.0.s8 %v3326
    %v3328 = vlaneseq
    %v3329 = vshrl.u32 %v3328, 7
    %v3330 = vsub.s32 %v3327, %v3329
    %v3331 = vrot.slane %v3324, %v3330
    %v3332 = vcombine.low %v2890, %v3154
    %v3334 = vunpack.c.l.s4 1983009808
    %v3335 = vunpack.c.0.s8 %v3334
    %v3336 = vlaneseq
    %v3337 = vshrl.u32 %v3336, 7
    %v3338 = vsub.s32 %v3335, %v3337
    %v3339 = vrot.slane %v3332, %v3338
    %v3340 = vcombine.low %v3331, %v3339
    %v3342 = vunpack.c.l.s4 1934713408
    %v3343 = vunpack.c.0.s8 %v3342
    %v3344 = vlaneseq
    %v3345 = vshrl.u32 %v3344, 7
    %v3346 = vsub.s32 %v3343, %v3345
    %v3347 = vrot.slane %v3340, %v3346
    %v3348 = vcombine.high %v3347, 0
    %v3349 = vcombine.low %v2760, %v3024
    %v3351 = vunpack.c.l.s4 1983009808
    %v3352 = vunpack.c.0.s8 %v3351
    %v3353 = vlaneseq
    %v3354 = vshrl.u32 %v3353, 7
    %v3355 = vsub.s32 %v3352, %v3354
    %v3356 = vrot.slane %v3349, %v3355
    %v3357 = vcombine.low %v2892, %v3156
    %v3359 = vunpack.c.l.s4 1983009808
    %v3360 = vunpack.c.0.s8 %v3359
    %v3361 = vlaneseq
    %v3362 = vshrl.u32 %v3361, 7
    %v3363 = vsub.s32 %v3360, %v3362
    %v3364 = vrot.slane %v3357, %v3363
    %v3365 = vcombine.low %v3356, %v3364
    %v3367 = vunpack.c.l.s4 1934713408
    %v3368 = vunpack.c.0.s8 %v3367
    %v3369 = vlaneseq
    %v3370 = vshrl.u32 %v3369, 7
    %v3371 = vsub.s32 %v3368, %v3370
    %v3372 = vrot.slane %v3365, %v3371
    %v3373 = vcombine.high %v3372, 0
    %v3374 = vcombine.low %v2824, %v3088
    %v3376 = vunpack.c.l.s4 1983009808
    %v3377 = vunpack.c.0.s8 %v3376
    %v3378 = vlaneseq
    %v3379 = vshrl.u32 %v3378, 7
    %v3380 = vsub.s32 %v3377, %v3379
    %v3381 = vrot.slane %v3374, %v3380
    %v3382 = vcombine.low %v2956, %v3220
    %v3384 = vunpack.c.l.s4 1983009808
    %v3385 = vunpack.c.0.s8 %v3384
    %v3386 = vlaneseq
    %v3387 = vshrl.u32 %v3386, 7
    %v3388 = vsub.s32 %v3385, %v3387
    %v3389 = vrot.slane %v3382, %v3388
    %v3390 = vcombine.low %v3381, %v3389
    %v3392 = vunpack.c.l.s4 1934713408
    %v3393 = vunpack.c.0.s8 %v3392
    %v3394 = vlaneseq
    %v3395 = vshrl.u32 %v3394, 7
    %v3396 = vsub.s32 %v3393, %v3395
    %v3397 = vrot.slane %v3390, %v3396
    %v3398 = vcombine.high %v3397, 0
    %v3399 = vcombine.low %v2826, %v3090
    %v3401 = vunpack.c.l.s4 1983009808
    %v3402 = vunpack.c.0.s8 %v3401
    %v3403 = vlaneseq
    %v3404 = vshrl.u32 %v3403, 7
    %v3405 = vsub.s32 %v3402, %v3404
    %v3406 = vrot.slane %v3399, %v3405
    %v3407 = vcombine.low %v2958, %v3222
    %v3409 = vunpack.c.l.s4 1983009808
    %v3410 = vunpack.c.0.s8 %v3409
    %v3411 = vlaneseq
    %v3412 = vshrl.u32 %v3411, 7
    %v3413 = vsub.s32 %v3410, %v3412
    %v3414 = vrot.slane %v3407, %v3413
    %v3415 = vcombine.low %v3406, %v3414
    %v3417 = vunpack.c.l.s4 1934713408
    %v3418 = vunpack.c.0.s8 %v3417
    %v3419 = vlaneseq
    %v3420 = vshrl.u32 %v3419, 7
    %v3421 = vsub.s32 %v3418, %v3420
    %v3422 = vrot.slane %v3415, %v3421
    %v3423 = vcombine.high %v3422, 0
    %v3424 = vcombine.low %v2741, %v3005
    %v3426 = vunpack.c.l.s4 1983009808
    %v3427 = vunpack.c.0.s8 %v3426
    %v3428 = vlaneseq
    %v3429 = vshrl.u32 %v3428, 7
    %v3430 = vsub.s32 %v3427, %v3429
    %v3431 = vrot.slane %v3424, %v3430
    %v3432 = vcombine.low %v2873, %v3137
    %v3434 = vunpack.c.l.s4 1983009808
    %v3435 = vunpack.c.0.s8 %v3434
    %v3436 = vlaneseq
    %v3437 = vshrl.u32 %v3436, 7
    %v3438 = vsub.s32 %v3435, %v3437
    %v3439 = vrot.slane %v3432, %v3438
    %v3440 = vcombine.low %v3431, %v3439
    %v3442 = vunpack.c.l.s4 1934713408
    %v3443 = vunpack.c.0.s8 %v3442
    %v3444 = vlaneseq
    %v3445 = vshrl.u32 %v3444, 7
    %v3446 = vsub.s32 %v3443, %v3445
    %v3447 = vrot.slane %v3440, %v3446
    %v3448 = vcombine.high %v3447, 0
    %v3449 = vcombine.low %v2757, %v3021
    %v3451 = vunpack.c.l.s4 1983009808
    %v3452 = vunpack.c.0.s8 %v3451
    %v3453 = vlaneseq
    %v3454 = vshrl.u32 %v3453, 7
    %v3455 = vsub.s32 %v3452, %v3454
    %v3456 = vrot.slane %v3449, %v3455
    %v3457 = vcombine.low %v2889, %v3153
    %v3459 = vunpack.c.l.s4 1983009808
    %v3460 = vunpack.c.0.s8 %v3459
    %v3461 = vlaneseq
    %v3462 = vshrl.u32 %v3461, 7
    %v3463 = vsub.s32 %v3460, %v3462
    %v3464 = vrot.slane %v3457, %v3463
    %v3465 = vcombine.low %v3456, %v3464
    %v3467 = vunpack.c.l.s4 1934713408
    %v3468 = vunpack.c.0.s8 %v3467
    %v3469 = vlaneseq
    %v3470 = vshrl.u32 %v3469, 7
    %v3471 = vsub.s32 %v3468, %v3470
    %v3472 = vrot.slane %v3465, %v3471
    %v3473 = vcombine.high %v3472, 0
    %v3474 = vcombine.low %v2807, %v3071
    %v3476 = vunpack.c.l.s4 1983009808
    %v3477 = vunpack.c.0.s8 %v3476
    %v3478 = vlaneseq
    %v3479 = vshrl.u32 %v3478, 7
    %v3480 = vsub.s32 %v3477, %v3479
    %v3481 = vrot.slane %v3474, %v3480
    %v3482 = vcombine.low %v2939, %v3203
    %v3484 = vunpack.c.l.s4 1983009808
    %v3485 = vunpack.c.0.s8 %v3484
    %v3486 = vlaneseq
    %v3487 = vshrl.u32 %v3486, 7
    %v3488 = vsub.s32 %v3485, %v3487
    %v3489 = vrot.slane %v3482, %v3488
    %v3490 = vcombine.low %v3481, %v3489
    %v3492 = vunpack.c.l.s4 1934713408
    %v3493 = vunpack.c.0.s8 %v3492
    %v3494 = vlaneseq
    %v3495 = vshrl.u32 %v3494, 7
    %v3496 = vsub.s32 %v3493, %v3495
    %v3497 = vrot.slane %v3490, %v3496
    %v3498 = vcombine.high %v3497, 0
    %v3499 = vcombine.low %v2823, %v3087
    %v3501 = vunpack.c.l.s4 1983009808
    %v3502 = vunpack.c.0.s8 %v3501
    %v3503 = vlaneseq
    %v3504 = vshrl.u32 %v3503, 7
    %v3505 = vsub.s32 %v3502, %v3504
    %v3506 = vrot.slane %v3499, %v3505
    %v3507 = vcombine.low %v2955, %v3219
    %v3509 = vunpack.c.l.s4 1983009808
    %v3510 = vunpack.c.0.s8 %v3509
    %v3511 = vlaneseq
    %v3512 = vshrl.u32 %v3511, 7
    %v3513 = vsub.s32 %v3510, %v3512
    %v3514 = vrot.slane %v3507, %v3513
    %v3515 = vcombine.low %v3506, %v3514
    %v3517 = vunpack.c.l.s4 1934713408
    %v3518 = vunpack.c.0.s8 %v3517
    %v3519 = vlaneseq
    %v3520 = vshrl.u32 %v3519, 7
    %v3521 = vsub.s32 %v3518, %v3520
    %v3522 = vrot.slane %v3515, %v3521
    %v3523 = vcombine.high %v3522, 0
    %v3524 = vcombine.low %v2759, %v3023
    %v3526 = vunpack.c.l.s4 1983009808
    %v3527 = vunpack.c.0.s8 %v3526
    %v3528 = vlaneseq
    %v3529 = vshrl.u32 %v3528, 7
    %v3530 = vsub.s32 %v3527, %v3529
    %v3531 = vrot.slane %v3524, %v3530
    %v3532 = vcombine.low %v2891, %v3155
    %v3534 = vunpack.c.l.s4 1983009808
    %v3535 = vunpack.c.0.s8 %v3534
    %v3536 = vlaneseq
    %v3537 = vshrl.u32 %v3536, 7
    %v3538 = vsub.s32 %v3535, %v3537
    %v3539 = vrot.slane %v3532, %v3538
    %v3540 = vcombine.low %v3531, %v3539
    %v3542 = vunpack.c.l.s4 1934713408
    %v3543 = vunpack.c.0.s8 %v3542
    %v3544 = vlaneseq
    %v3545 = vshrl.u32 %v3544, 7
    %v3546 = vsub.s32 %v3543, %v3545
    %v3547 = vrot.slane %v3540, %v3546
    %v3548 = vcombine.high %v3547, 0
    %v3549 = vcombine.low %v2761, %v3025
    %v3551 = vunpack.c.l.s4 1983009808
    %v3552 = vunpack.c.0.s8 %v3551
    %v3553 = vlaneseq
    %v3554 = vshrl.u32 %v3553, 7
    %v3555 = vsub.s32 %v3552, %v3554
    %v3556 = vrot.slane %v3549, %v3555
    %v3557 = vcombine.low %v2893, %v3157
    %v3559 = vunpack.c.l.s4 1983009808
    %v3560 = vunpack.c.0.s8 %v3559
    %v3561 = vlaneseq
    %v3562 = vshrl.u32 %v3561, 7
    %v3563 = vsub.s32 %v3560, %v3562
    %v3564 = vrot.slane %v3557, %v3563
    %v3565 = vcombine.low %v3556, %v3564
    %v3567 = vunpack.c.l.s4 1934713408
    %v3568 = vunpack.c.0.s8 %v3567
    %v3569 = vlaneseq
    %v3570 = vshrl.u32 %v3569, 7
    %v3571 = vsub.s32 %v3568, %v3570
    %v3572 = vrot.slane %v3565, %v3571
    %v3573 = vcombine.high %v3572, 0
    %v3574 = vcombine.low %v2825, %v3089
    %v3576 = vunpack.c.l.s4 1983009808
    %v3577 = vunpack.c.0.s8 %v3576
    %v3578 = vlaneseq
    %v3579 = vshrl.u32 %v3578, 7
    %v3580 = vsub.s32 %v3577, %v3579
    %v3581 = vrot.slane %v3574, %v3580
    %v3582 = vcombine.low %v2957, %v3221
    %v3584 = vunpack.c.l.s4 1983009808
    %v3585 = vunpack.c.0.s8 %v3584
    %v3586 = vlaneseq
    %v3587 = vshrl.u32 %v3586, 7
    %v3588 = vsub.s32 %v3585, %v3587
    %v3589 = vrot.slane %v3582, %v3588
    %v3590 = vcombine.low %v3581, %v3589
    %v3592 = vunpack.c.l.s4 1934713408
    %v3593 = vunpack.c.0.s8 %v3592
    %v3594 = vlaneseq
    %v3595 = vshrl.u32 %v3594, 7
    %v3596 = vsub.s32 %v3593, %v3595
    %v3597 = vrot.slane %v3590, %v3596
    %v3598 = vcombine.high %v3597, 0
    %v3599 = vcombine.low %v2827, %v3091
    %v3601 = vunpack.c.l.s4 1983009808
    %v3602 = vunpack.c.0.s8 %v3601
    %v3603 = vlaneseq
    %v3604 = vshrl.u32 %v3603, 7
    %v3605 = vsub.s32 %v3602, %v3604
    %v3606 = vrot.slane %v3599, %v3605
    %v3607 = vcombine.low %v2959, %v3223
    %v3609 = vunpack.c.l.s4 1983009808
    %v3610 = vunpack.c.0.s8 %v3609
    %v3611 = vlaneseq
    %v3612 = vshrl.u32 %v3611, 7
    %v3613 = vsub.s32 %v3610, %v3612
    %v3614 = vrot.slane %v3607, %v3613
    %v3615 = vcombine.low %v3606, %v3614
    %v3617 = vunpack.c.l.s4 1934713408
    %v3618 = vunpack.c.0.s8 %v3617
    %v3619 = vlaneseq
    %v3620 = vshrl.u32 %v3619, 7
    %v3621 = vsub.s32 %v3618, %v3620
    %v3622 = vrot.slane %v3615, %v3621
    %v3623 = vcombine.high %v3622, 0
    %v3626 = vpack.i.b16 %v3272, %v3247
    %v3627 = vshrl.u32 %v3247, 16
    %v3628 = vshrl.u32 %v3272, 16
    %v3629 = vpack.i.b16 %v3628, %v3627
    %v3632 = vpack.i.b16 %v3273, %v3248
    %v3633 = vshrl.u32 %v3248, 16
    %v3634 = vshrl.u32 %v3273, 16
    %v3635 = vpack.i.b16 %v3634, %v3633
    %v3638 = vpack.i.b16 %v3322, %v3297
    %v3639 = vshrl.u32 %v3297, 16
    %v3640 = vshrl.u32 %v3322, 16
    %v3641 = vpack.i.b16 %v3640, %v3639
    %v3644 = vpack.i.b16 %v3323, %v3298
    %v3645 = vshrl.u32 %v3298, 16
    %v3646 = vshrl.u32 %v3323, 16
    %v3647 = vpack.i.b16 %v3646, %v3645
    %v3650 = vpack.i.b16 %v3372, %v3347
    %v3651 = vshrl.u32 %v3347, 16
    %v3652 = vshrl.u32 %v3372, 16
    %v3653 = vpack.i.b16 %v3652, %v3651
    %v3656 = vpack.i.b16 %v3373, %v3348
    %v3657 = vshrl.u32 %v3348, 16
    %v3658 = vshrl.u32 %v3373, 16
    %v3659 = vpack.i.b16 %v3658, %v3657
    %v3662 = vpack.i.b16 %v3422, %v3397
    %v3663 = vshrl.u32 %v3397, 16
    %v3664 = vshrl.u32 %v3422, 16
    %v3665 = vpack.i.b16 %v3664, %v3663
    %v3668 = vpack.i.b16 %v3423, %v3398
    %v3669 = vshrl.u32 %v3398, 16
    %v3670 = vshrl.u32 %v3423, 16
    %v3671 = vpack.i.b16 %v3670, %v3669
    %v3674 = vpack.i.b16 %v3472, %v3447
    %v3675 = vshrl.u32 %v3447, 16
    %v3676 = vshrl.u32 %v3472, 16
    %v3677 = vpack.i.b16 %v3676, %v3675
    %v3680 = vpack.i.b16 %v3473, %v3448
    %v3681 = vshrl.u32 %v3448, 16
    %v3682 = vshrl.u32 %v3473, 16
    %v3683 = vpack.i.b16 %v3682, %v3681
    %v3686 = vpack.i.b16 %v3522, %v3497
    %v3687 = vshrl.u32 %v3497, 16
    %v3688 = vshrl.u32 %v3522, 16
    %v3689 = vpack.i.b16 %v3688, %v3687
    %v3692 = vpack.i.b16 %v3523, %v3498
    %v3693 = vshrl.u32 %v3498, 16
    %v3694 = vshrl.u32 %v3523, 16
    %v3695 = vpack.i.b16 %v3694, %v3693
    %v3698 = vpack.i.b16 %v3572, %v3547
    %v3699 = vshrl.u32 %v3547, 16
    %v3700 = vshrl.u32 %v3572, 16
    %v3701 = vpack.i.b16 %v3700, %v3699
    %v3704 = vpack.i.b16 %v3573, %v3548
    %v3705 = vshrl.u32 %v3548, 16
    %v3706 = vshrl.u32 %v3573, 16
    %v3707 = vpack.i.b16 %v3706, %v3705
    %v3710 = vpack.i.b16 %v3622, %v3597
    %v3711 = vshrl.u32 %v3597, 16
    %v3712 = vshrl.u32 %v3622, 16
    %v3713 = vpack.i.b16 %v3712, %v3711
    %v3716 = vpack.i.b16 %v3623, %v3598
    %v3717 = vshrl.u32 %v3598, 16
    %v3718 = vshrl.u32 %v3623, 16
    %v3719 = vpack.i.b16 %v3718, %v3717
    %vm3720 = vcmask 64512
    %v3722 = vsel %vm3720, %v1386, 0
    %v3725 = vsel %vm3720, %v2506, 0
    %3727 = vmatprep.subr.bf16.mxu0 0
    %3728 = vmatpush1.bf16.xpose.msra.mxu0 %v3725
    %3729 = vmatprep.subr.bf16.mxu0 0
    %3730 = vmatpush1.bf16.xpose.msra.mxu0 0
    %3731 = vmatprep.subr.bf16.mxu0 0
    %3732 = vmatpush1.bf16.xpose.msra.mxu0 0
    %3733 = vmatprep.subr.bf16.mxu0 0
    %3734 = vmatpush1.bf16.xpose.msra.mxu0 0
    %3735 = vmatprep.subr.bf16.mxu0 0
    %3736 = vmatpush1.bf16.xpose.msra.mxu0 0
    %3737 = vmatprep.subr.bf16.mxu0 0
    %3738 = vmatpush1.bf16.xpose.msra.mxu0 0
    %3739 = vmatprep.subr.bf16.mxu0 0
    %3740 = vmatpush1.bf16.xpose.msra.mxu0 0
    %3741 = vmatprep.subr.bf16.mxu0 0
    %3742 = vmatpush1.bf16.xpose.msra.mxu0 0
    %3743 = vmatprep.subr.bf16.mxu0 0
    %3744 = vmatpush1.bf16.xpose.msra.mxu0 0
    %3745 = vmatprep.subr.bf16.mxu0 0
    %3746 = vmatpush1.bf16.xpose.msra.mxu0 0
    %3747 = vmatprep.subr.bf16.mxu0 0
    %3748 = vmatpush1.bf16.xpose.msra.mxu0 0
    %3749 = vmatprep.subr.bf16.mxu0 0
    %3750 = vmatpush1.bf16.xpose.msra.mxu0 0
    %3751 = vmatprep.subr.bf16.mxu0 0
    %3752 = vmatpush1.bf16.xpose.msra.mxu0 0
    %3753 = vmatprep.subr.bf16.mxu0 0
    %3754 = vmatpush1.bf16.xpose.msra.mxu0 0
    %3755 = vmatprep.subr.bf16.mxu0 0
    %3756 = vmatpush1.bf16.xpose.msra.mxu0 0
    %3757 = vmatprep.subr.bf16.mxu0 0
    %3758 = vmatpush1.bf16.xpose.msra.mxu0 0
    %3759 = vmatprep.mubr.bf16.mxu0 0
    %3760 = vmatmul.mubr.bf16.gmra.mrb[0].mxu0 %v3722
    %v3761 = vpop.f32.mrb[0].mxu0
    %v3762 = vadd.f32 0.0, %v3761
    %v3763 = vpop.f32.mrb[0].mxu0
    %v3764 = vpop.f32.mrb[0].mxu0
    %v3765 = vpop.f32.mrb[0].mxu0
    %3766 = vdwg.mxu0
    %v3768 = vsel %vm3720, %v1389, 0
    %v3771 = vsel %vm3720, %v2509, 0
    %3773 = vmatprep.subr.bf16.mxu0 0
    %3774 = vmatpush1.bf16.xpose.msra.mxu0 %v3771
    %3775 = vmatprep.subr.bf16.mxu0 0
    %3776 = vmatpush1.bf16.xpose.msra.mxu0 0
    %3777 = vmatprep.subr.bf16.mxu0 0
    %3778 = vmatpush1.bf16.xpose.msra.mxu0 0
    %3779 = vmatprep.subr.bf16.mxu0 0
    %3780 = vmatpush1.bf16.xpose.msra.mxu0 0
    %3781 = vmatprep.subr.bf16.mxu0 0
    %3782 = vmatpush1.bf16.xpose.msra.mxu0 0
    %3783 = vmatprep.subr.bf16.mxu0 0
    %3784 = vmatpush1.bf16.xpose.msra.mxu0 0
    %3785 = vmatprep.subr.bf16.mxu0 0
    %3786 = vmatpush1.bf16.xpose.msra.mxu0 0
    %3787 = vmatprep.subr.bf16.mxu0 0
    %3788 = vmatpush1.bf16.xpose.msra.mxu0 0
    %3789 = vmatprep.subr.bf16.mxu0 0
    %3790 = vmatpush1.bf16.xpose.msra.mxu0 0
    %3791 = vmatprep.subr.bf16.mxu0 0
    %3792 = vmatpush1.bf16.xpose.msra.mxu0 0
    %3793 = vmatprep.subr.bf16.mxu0 0
    %3794 = vmatpush1.bf16.xpose.msra.mxu0 0
    %3795 = vmatprep.subr.bf16.mxu0 0
    %3796 = vmatpush1.bf16.xpose.msra.mxu0 0
    %3797 = vmatprep.subr.bf16.mxu0 0
    %3798 = vmatpush1.bf16.xpose.msra.mxu0 0
    %3799 = vmatprep.subr.bf16.mxu0 0
    %3800 = vmatpush1.bf16.xpose.msra.mxu0 0
    %3801 = vmatprep.subr.bf16.mxu0 0
    %3802 = vmatpush1.bf16.xpose.msra.mxu0 0
    %3803 = vmatprep.subr.bf16.mxu0 0
    %3804 = vmatpush1.bf16.xpose.msra.mxu0 0
    %3805 = vmatprep.mubr.bf16.mxu0 0
    %3806 = vmatmul.mubr.bf16.gmra.mrb[0].mxu0 %v3768
    %v3807 = vpop.f32.mrb[0].mxu0
    %v3808 = vadd.f32 0.0, %v3807
    %v3809 = vpop.f32.mrb[0].mxu0
    %v3810 = vpop.f32.mrb[0].mxu0
    %v3811 = vpop.f32.mrb[0].mxu0
    %3812 = vdwg.mxu0
    %v3814 = vsel %vm3720, %v1392, 0
    %v3817 = vsel %vm3720, %v2512, 0
    %3819 = vmatprep.subr.bf16.mxu0 0
    %3820 = vmatpush1.bf16.xpose.msra.mxu0 %v3817
    %3821 = vmatprep.subr.bf16.mxu0 0
    %3822 = vmatpush1.bf16.xpose.msra.mxu0 0
    %3823 = vmatprep.subr.bf16.mxu0 0
    %3824 = vmatpush1.bf16.xpose.msra.mxu0 0
    %3825 = vmatprep.subr.bf16.mxu0 0
    %3826 = vmatpush1.bf16.xpose.msra.mxu0 0
    %3827 = vmatprep.subr.bf16.mxu0 0
    %3828 = vmatpush1.bf16.xpose.msra.mxu0 0
    %3829 = vmatprep.subr.bf16.mxu0 0
    %3830 = vmatpush1.bf16.xpose.msra.mxu0 0
    %3831 = vmatprep.subr.bf16.mxu0 0
    %3832 = vmatpush1.bf16.xpose.msra.mxu0 0
    %3833 = vmatprep.subr.bf16.mxu0 0
    %3834 = vmatpush1.bf16.xpose.msra.mxu0 0
    %3835 = vmatprep.subr.bf16.mxu0 0
    %3836 = vmatpush1.bf16.xpose.msra.mxu0 0
    %3837 = vmatprep.subr.bf16.mxu0 0
    %3838 = vmatpush1.bf16.xpose.msra.mxu0 0
    %3839 = vmatprep.subr.bf16.mxu0 0
    %3840 = vmatpush1.bf16.xpose.msra.mxu0 0
    %3841 = vmatprep.subr.bf16.mxu0 0
    %3842 = vmatpush1.bf16.xpose.msra.mxu0 0
    %3843 = vmatprep.subr.bf16.mxu0 0
    %3844 = vmatpush1.bf16.xpose.msra.mxu0 0
    %3845 = vmatprep.subr.bf16.mxu0 0
    %3846 = vmatpush1.bf16.xpose.msra.mxu0 0
    %3847 = vmatprep.subr.bf16.mxu0 0
    %3848 = vmatpush1.bf16.xpose.msra.mxu0 0
    %3849 = vmatprep.subr.bf16.mxu0 0
    %3850 = vmatpush1.bf16.xpose.msra.mxu0 0
    %3851 = vmatprep.mubr.bf16.mxu0 0
    %3852 = vmatmul.mubr.bf16.gmra.mrb[0].mxu0 %v3814
    %v3853 = vpop.f32.mrb[0].mxu0
    %v3854 = vadd.f32 0.0, %v3853
    %v3855 = vpop.f32.mrb[0].mxu0
    %v3856 = vpop.f32.mrb[0].mxu0
    %v3857 = vpop.f32.mrb[0].mxu0
    %3858 = vdwg.mxu0
    %v3860 = vsel %vm3720, %v1395, 0
    %v3863 = vsel %vm3720, %v2515, 0
    %3865 = vmatprep.subr.bf16.mxu0 0
    %3866 = vmatpush1.bf16.xpose.msra.mxu0 %v3863
    %3867 = vmatprep.subr.bf16.mxu0 0
    %3868 = vmatpush1.bf16.xpose.msra.mxu0 0
    %3869 = vmatprep.subr.bf16.mxu0 0
    %3870 = vmatpush1.bf16.xpose.msra.mxu0 0
    %3871 = vmatprep.subr.bf16.mxu0 0
    %3872 = vmatpush1.bf16.xpose.msra.mxu0 0
    %3873 = vmatprep.subr.bf16.mxu0 0
    %3874 = vmatpush1.bf16.xpose.msra.mxu0 0
    %3875 = vmatprep.subr.bf16.mxu0 0
    %3876 = vmatpush1.bf16.xpose.msra.mxu0 0
    %3877 = vmatprep.subr.bf16.mxu0 0
    %3878 = vmatpush1.bf16.xpose.msra.mxu0 0
    %3879 = vmatprep.subr.bf16.mxu0 0
    %3880 = vmatpush1.bf16.xpose.msra.mxu0 0
    %3881 = vmatprep.subr.bf16.mxu0 0
    %3882 = vmatpush1.bf16.xpose.msra.mxu0 0
    %3883 = vmatprep.subr.bf16.mxu0 0
    %3884 = vmatpush1.bf16.xpose.msra.mxu0 0
    %3885 = vmatprep.subr.bf16.mxu0 0
    %3886 = vmatpush1.bf16.xpose.msra.mxu0 0
    %3887 = vmatprep.subr.bf16.mxu0 0
    %3888 = vmatpush1.bf16.xpose.msra.mxu0 0
    %3889 = vmatprep.subr.bf16.mxu0 0
    %3890 = vmatpush1.bf16.xpose.msra.mxu0 0
    %3891 = vmatprep.subr.bf16.mxu0 0
    %3892 = vmatpush1.bf16.xpose.msra.mxu0 0
    %3893 = vmatprep.subr.bf16.mxu0 0
    %3894 = vmatpush1.bf16.xpose.msra.mxu0 0
    %3895 = vmatprep.subr.bf16.mxu0 0
    %3896 = vmatpush1.bf16.xpose.msra.mxu0 0
    %3897 = vmatprep.mubr.bf16.mxu0 0
    %3898 = vmatmul.mubr.bf16.gmra.mrb[0].mxu0 %v3860
    %v3899 = vpop.f32.mrb[0].mxu0
    %v3900 = vadd.f32 0.0, %v3899
    %v3901 = vpop.f32.mrb[0].mxu0
    %v3902 = vpop.f32.mrb[0].mxu0
    %v3903 = vpop.f32.mrb[0].mxu0
    %3904 = vdwg.mxu0
    %v3906 = vsel %vm3720, %v1398, 0
    %v3909 = vsel %vm3720, %v2518, 0
    %3911 = vmatprep.subr.bf16.mxu0 0
    %3912 = vmatpush1.bf16.xpose.msra.mxu0 %v3909
    %3913 = vmatprep.subr.bf16.mxu0 0
    %3914 = vmatpush1.bf16.xpose.msra.mxu0 0
    %3915 = vmatprep.subr.bf16.mxu0 0
    %3916 = vmatpush1.bf16.xpose.msra.mxu0 0
    %3917 = vmatprep.subr.bf16.mxu0 0
    %3918 = vmatpush1.bf16.xpose.msra.mxu0 0
    %3919 = vmatprep.subr.bf16.mxu0 0
    %3920 = vmatpush1.bf16.xpose.msra.mxu0 0
    %3921 = vmatprep.subr.bf16.mxu0 0
    %3922 = vmatpush1.bf16.xpose.msra.mxu0 0
    %3923 = vmatprep.subr.bf16.mxu0 0
    %3924 = vmatpush1.bf16.xpose.msra.mxu0 0
    %3925 = vmatprep.subr.bf16.mxu0 0
    %3926 = vmatpush1.bf16.xpose.msra.mxu0 0
    %3927 = vmatprep.subr.bf16.mxu0 0
    %3928 = vmatpush1.bf16.xpose.msra.mxu0 0
    %3929 = vmatprep.subr.bf16.mxu0 0
    %3930 = vmatpush1.bf16.xpose.msra.mxu0 0
    %3931 = vmatprep.subr.bf16.mxu0 0
    %3932 = vmatpush1.bf16.xpose.msra.mxu0 0
    %3933 = vmatprep.subr.bf16.mxu0 0
    %3934 = vmatpush1.bf16.xpose.msra.mxu0 0
    %3935 = vmatprep.subr.bf16.mxu0 0
    %3936 = vmatpush1.bf16.xpose.msra.mxu0 0
    %3937 = vmatprep.subr.bf16.mxu0 0
    %3938 = vmatpush1.bf16.xpose.msra.mxu0 0
    %3939 = vmatprep.subr.bf16.mxu0 0
    %3940 = vmatpush1.bf16.xpose.msra.mxu0 0
    %3941 = vmatprep.subr.bf16.mxu0 0
    %3942 = vmatpush1.bf16.xpose.msra.mxu0 0
    %3943 = vmatprep.mubr.bf16.mxu0 0
    %3944 = vmatmul.mubr.bf16.gmra.mrb[0].mxu0 %v3906
    %v3945 = vpop.f32.mrb[0].mxu0
    %v3946 = vadd.f32 0.0, %v3945
    %v3947 = vpop.f32.mrb[0].mxu0
    %v3948 = vpop.f32.mrb[0].mxu0
    %v3949 = vpop.f32.mrb[0].mxu0
    %3950 = vdwg.mxu0
    %v3952 = vsel %vm3720, %v1401, 0
    %v3955 = vsel %vm3720, %v2521, 0
    %3957 = vmatprep.subr.bf16.mxu0 0
    %3958 = vmatpush1.bf16.xpose.msra.mxu0 %v3955
    %3959 = vmatprep.subr.bf16.mxu0 0
    %3960 = vmatpush1.bf16.xpose.msra.mxu0 0
    %3961 = vmatprep.subr.bf16.mxu0 0
    %3962 = vmatpush1.bf16.xpose.msra.mxu0 0
    %3963 = vmatprep.subr.bf16.mxu0 0
    %3964 = vmatpush1.bf16.xpose.msra.mxu0 0
    %3965 = vmatprep.subr.bf16.mxu0 0
    %3966 = vmatpush1.bf16.xpose.msra.mxu0 0
    %3967 = vmatprep.subr.bf16.mxu0 0
    %3968 = vmatpush1.bf16.xpose.msra.mxu0 0
    %3969 = vmatprep.subr.bf16.mxu0 0
    %3970 = vmatpush1.bf16.xpose.msra.mxu0 0
    %3971 = vmatprep.subr.bf16.mxu0 0
    %3972 = vmatpush1.bf16.xpose.msra.mxu0 0
    %3973 = vmatprep.subr.bf16.mxu0 0
    %3974 = vmatpush1.bf16.xpose.msra.mxu0 0
    %3975 = vmatprep.subr.bf16.mxu0 0
    %3976 = vmatpush1.bf16.xpose.msra.mxu0 0
    %3977 = vmatprep.subr.bf16.mxu0 0
    %3978 = vmatpush1.bf16.xpose.msra.mxu0 0
    %3979 = vmatprep.subr.bf16.mxu0 0
    %3980 = vmatpush1.bf16.xpose.msra.mxu0 0
    %3981 = vmatprep.subr.bf16.mxu0 0
    %3982 = vmatpush1.bf16.xpose.msra.mxu0 0
    %3983 = vmatprep.subr.bf16.mxu0 0
    %3984 = vmatpush1.bf16.xpose.msra.mxu0 0
    %3985 = vmatprep.subr.bf16.mxu0 0
    %3986 = vmatpush1.bf16.xpose.msra.mxu0 0
    %3987 = vmatprep.subr.bf16.mxu0 0
    %3988 = vmatpush1.bf16.xpose.msra.mxu0 0
    %3989 = vmatprep.mubr.bf16.mxu0 0
    %3990 = vmatmul.mubr.bf16.gmra.mrb[0].mxu0 %v3952
    %v3991 = vpop.f32.mrb[0].mxu0
    %v3992 = vadd.f32 0.0, %v3991
    %v3993 = vpop.f32.mrb[0].mxu0
    %v3994 = vpop.f32.mrb[0].mxu0
    %v3995 = vpop.f32.mrb[0].mxu0
    %3996 = vdwg.mxu0
    %v3998 = vsel %vm3720, %v1404, 0
    %v4001 = vsel %vm3720, %v2524, 0
    %4003 = vmatprep.subr.bf16.mxu0 0
    %4004 = vmatpush1.bf16.xpose.msra.mxu0 %v4001
    %4005 = vmatprep.subr.bf16.mxu0 0
    %4006 = vmatpush1.bf16.xpose.msra.mxu0 0
    %4007 = vmatprep.subr.bf16.mxu0 0
    %4008 = vmatpush1.bf16.xpose.msra.mxu0 0
    %4009 = vmatprep.subr.bf16.mxu0 0
    %4010 = vmatpush1.bf16.xpose.msra.mxu0 0
    %4011 = vmatprep.subr.bf16.mxu0 0
    %4012 = vmatpush1.bf16.xpose.msra.mxu0 0
    %4013 = vmatprep.subr.bf16.mxu0 0
    %4014 = vmatpush1.bf16.xpose.msra.mxu0 0
    %4015 = vmatprep.subr.bf16.mxu0 0
    %4016 = vmatpush1.bf16.xpose.msra.mxu0 0
    %4017 = vmatprep.subr.bf16.mxu0 0
    %4018 = vmatpush1.bf16.xpose.msra.mxu0 0
    %4019 = vmatprep.subr.bf16.mxu0 0
    %4020 = vmatpush1.bf16.xpose.msra.mxu0 0
    %4021 = vmatprep.subr.bf16.mxu0 0
    %4022 = vmatpush1.bf16.xpose.msra.mxu0 0
    %4023 = vmatprep.subr.bf16.mxu0 0
    %4024 = vmatpush1.bf16.xpose.msra.mxu0 0
    %4025 = vmatprep.subr.bf16.mxu0 0
    %4026 = vmatpush1.bf16.xpose.msra.mxu0 0
    %4027 = vmatprep.subr.bf16.mxu0 0
    %4028 = vmatpush1.bf16.xpose.msra.mxu0 0
    %4029 = vmatprep.subr.bf16.mxu0 0
    %4030 = vmatpush1.bf16.xpose.msra.mxu0 0
    %4031 = vmatprep.subr.bf16.mxu0 0
    %4032 = vmatpush1.bf16.xpose.msra.mxu0 0
    %4033 = vmatprep.subr.bf16.mxu0 0
    %4034 = vmatpush1.bf16.xpose.msra.mxu0 0
    %4035 = vmatprep.mubr.bf16.mxu0 0
    %4036 = vmatmul.mubr.bf16.gmra.mrb[0].mxu0 %v3998
    %v4037 = vpop.f32.mrb[0].mxu0
    %v4038 = vadd.f32 0.0, %v4037
    %v4039 = vpop.f32.mrb[0].mxu0
    %v4040 = vpop.f32.mrb[0].mxu0
    %v4041 = vpop.f32.mrb[0].mxu0
    %4042 = vdwg.mxu0
    %v4044 = vsel %vm3720, %v1407, 0
    %v4047 = vsel %vm3720, %v2527, 0
    %4049 = vmatprep.subr.bf16.mxu0 0
    %4050 = vmatpush1.bf16.xpose.msra.mxu0 %v4047
    %4051 = vmatprep.subr.bf16.mxu0 0
    %4052 = vmatpush1.bf16.xpose.msra.mxu0 0
    %4053 = vmatprep.subr.bf16.mxu0 0
    %4054 = vmatpush1.bf16.xpose.msra.mxu0 0
    %4055 = vmatprep.subr.bf16.mxu0 0
    %4056 = vmatpush1.bf16.xpose.msra.mxu0 0
    %4057 = vmatprep.subr.bf16.mxu0 0
    %4058 = vmatpush1.bf16.xpose.msra.mxu0 0
    %4059 = vmatprep.subr.bf16.mxu0 0
    %4060 = vmatpush1.bf16.xpose.msra.mxu0 0
    %4061 = vmatprep.subr.bf16.mxu0 0
    %4062 = vmatpush1.bf16.xpose.msra.mxu0 0
    %4063 = vmatprep.subr.bf16.mxu0 0
    %4064 = vmatpush1.bf16.xpose.msra.mxu0 0
    %4065 = vmatprep.subr.bf16.mxu0 0
    %4066 = vmatpush1.bf16.xpose.msra.mxu0 0
    %4067 = vmatprep.subr.bf16.mxu0 0
    %4068 = vmatpush1.bf16.xpose.msra.mxu0 0
    %4069 = vmatprep.subr.bf16.mxu0 0
    %4070 = vmatpush1.bf16.xpose.msra.mxu0 0
    %4071 = vmatprep.subr.bf16.mxu0 0
    %4072 = vmatpush1.bf16.xpose.msra.mxu0 0
    %4073 = vmatprep.subr.bf16.mxu0 0
    %4074 = vmatpush1.bf16.xpose.msra.mxu0 0
    %4075 = vmatprep.subr.bf16.mxu0 0
    %4076 = vmatpush1.bf16.xpose.msra.mxu0 0
    %4077 = vmatprep.subr.bf16.mxu0 0
    %4078 = vmatpush1.bf16.xpose.msra.mxu0 0
    %4079 = vmatprep.subr.bf16.mxu0 0
    %4080 = vmatpush1.bf16.xpose.msra.mxu0 0
    %4081 = vmatprep.mubr.bf16.mxu0 0
    %4082 = vmatmul.mubr.bf16.gmra.mrb[0].mxu0 %v4044
    %v4083 = vpop.f32.mrb[0].mxu0
    %v4084 = vadd.f32 0.0, %v4083
    %v4085 = vpop.f32.mrb[0].mxu0
    %v4086 = vpop.f32.mrb[0].mxu0
    %v4087 = vpop.f32.mrb[0].mxu0
    %4088 = vdwg.mxu0
    %v4090 = vsel %vm3720, %v1410, 0
    %v4093 = vsel %vm3720, %v2530, 0
    %4095 = vmatprep.subr.bf16.mxu0 0
    %4096 = vmatpush1.bf16.xpose.msra.mxu0 %v4093
    %4097 = vmatprep.subr.bf16.mxu0 0
    %4098 = vmatpush1.bf16.xpose.msra.mxu0 0
    %4099 = vmatprep.subr.bf16.mxu0 0
    %4100 = vmatpush1.bf16.xpose.msra.mxu0 0
    %4101 = vmatprep.subr.bf16.mxu0 0
    %4102 = vmatpush1.bf16.xpose.msra.mxu0 0
    %4103 = vmatprep.subr.bf16.mxu0 0
    %4104 = vmatpush1.bf16.xpose.msra.mxu0 0
    %4105 = vmatprep.subr.bf16.mxu0 0
    %4106 = vmatpush1.bf16.xpose.msra.mxu0 0
    %4107 = vmatprep.subr.bf16.mxu0 0
    %4108 = vmatpush1.bf16.xpose.msra.mxu0 0
    %4109 = vmatprep.subr.bf16.mxu0 0
    %4110 = vmatpush1.bf16.xpose.msra.mxu0 0
    %4111 = vmatprep.subr.bf16.mxu0 0
    %4112 = vmatpush1.bf16.xpose.msra.mxu0 0
    %4113 = vmatprep.subr.bf16.mxu0 0
    %4114 = vmatpush1.bf16.xpose.msra.mxu0 0
    %4115 = vmatprep.subr.bf16.mxu0 0
    %4116 = vmatpush1.bf16.xpose.msra.mxu0 0
    %4117 = vmatprep.subr.bf16.mxu0 0
    %4118 = vmatpush1.bf16.xpose.msra.mxu0 0
    %4119 = vmatprep.subr.bf16.mxu0 0
    %4120 = vmatpush1.bf16.xpose.msra.mxu0 0
    %4121 = vmatprep.subr.bf16.mxu0 0
    %4122 = vmatpush1.bf16.xpose.msra.mxu0 0
    %4123 = vmatprep.subr.bf16.mxu0 0
    %4124 = vmatpush1.bf16.xpose.msra.mxu0 0
    %4125 = vmatprep.subr.bf16.mxu0 0
    %4126 = vmatpush1.bf16.xpose.msra.mxu0 0
    %4127 = vmatprep.mubr.bf16.mxu0 0
    %4128 = vmatmul.mubr.bf16.gmra.mrb[0].mxu0 %v4090
    %v4129 = vpop.f32.mrb[0].mxu0
    %v4130 = vadd.f32 0.0, %v4129
    %v4131 = vpop.f32.mrb[0].mxu0
    %v4132 = vpop.f32.mrb[0].mxu0
    %v4133 = vpop.f32.mrb[0].mxu0
    %4134 = vdwg.mxu0
    %v4136 = vsel %vm3720, %v1413, 0
    %v4139 = vsel %vm3720, %v2533, 0
    %4141 = vmatprep.subr.bf16.mxu0 0
    %4142 = vmatpush1.bf16.xpose.msra.mxu0 %v4139
    %4143 = vmatprep.subr.bf16.mxu0 0
    %4144 = vmatpush1.bf16.xpose.msra.mxu0 0
    %4145 = vmatprep.subr.bf16.mxu0 0
    %4146 = vmatpush1.bf16.xpose.msra.mxu0 0
    %4147 = vmatprep.subr.bf16.mxu0 0
    %4148 = vmatpush1.bf16.xpose.msra.mxu0 0
    %4149 = vmatprep.subr.bf16.mxu0 0
    %4150 = vmatpush1.bf16.xpose.msra.mxu0 0
    %4151 = vmatprep.subr.bf16.mxu0 0
    %4152 = vmatpush1.bf16.xpose.msra.mxu0 0
    %4153 = vmatprep.subr.bf16.mxu0 0
    %4154 = vmatpush1.bf16.xpose.msra.mxu0 0
    %4155 = vmatprep.subr.bf16.mxu0 0
    %4156 = vmatpush1.bf16.xpose.msra.mxu0 0
    %4157 = vmatprep.subr.bf16.mxu0 0
    %4158 = vmatpush1.bf16.xpose.msra.mxu0 0
    %4159 = vmatprep.subr.bf16.mxu0 0
    %4160 = vmatpush1.bf16.xpose.msra.mxu0 0
    %4161 = vmatprep.subr.bf16.mxu0 0
    %4162 = vmatpush1.bf16.xpose.msra.mxu0 0
    %4163 = vmatprep.subr.bf16.mxu0 0
    %4164 = vmatpush1.bf16.xpose.msra.mxu0 0
    %4165 = vmatprep.subr.bf16.mxu0 0
    %4166 = vmatpush1.bf16.xpose.msra.mxu0 0
    %4167 = vmatprep.subr.bf16.mxu0 0
    %4168 = vmatpush1.bf16.xpose.msra.mxu0 0
    %4169 = vmatprep.subr.bf16.mxu0 0
    %4170 = vmatpush1.bf16.xpose.msra.mxu0 0
    %4171 = vmatprep.subr.bf16.mxu0 0
    %4172 = vmatpush1.bf16.xpose.msra.mxu0 0
    %4173 = vmatprep.mubr.bf16.mxu0 0
    %4174 = vmatmul.mubr.bf16.gmra.mrb[0].mxu0 %v4136
    %v4175 = vpop.f32.mrb[0].mxu0
    %v4176 = vadd.f32 0.0, %v4175
    %v4177 = vpop.f32.mrb[0].mxu0
    %v4178 = vpop.f32.mrb[0].mxu0
    %v4179 = vpop.f32.mrb[0].mxu0
    %4180 = vdwg.mxu0
    %v4182 = vsel %vm3720, %v1416, 0
    %v4185 = vsel %vm3720, %v2536, 0
    %4187 = vmatprep.subr.bf16.mxu0 0
    %4188 = vmatpush1.bf16.xpose.msra.mxu0 %v4185
    %4189 = vmatprep.subr.bf16.mxu0 0
    %4190 = vmatpush1.bf16.xpose.msra.mxu0 0
    %4191 = vmatprep.subr.bf16.mxu0 0
    %4192 = vmatpush1.bf16.xpose.msra.mxu0 0
    %4193 = vmatprep.subr.bf16.mxu0 0
    %4194 = vmatpush1.bf16.xpose.msra.mxu0 0
    %4195 = vmatprep.subr.bf16.mxu0 0
    %4196 = vmatpush1.bf16.xpose.msra.mxu0 0
    %4197 = vmatprep.subr.bf16.mxu0 0
    %4198 = vmatpush1.bf16.xpose.msra.mxu0 0
    %4199 = vmatprep.subr.bf16.mxu0 0
    %4200 = vmatpush1.bf16.xpose.msra.mxu0 0
    %4201 = vmatprep.subr.bf16.mxu0 0
    %4202 = vmatpush1.bf16.xpose.msra.mxu0 0
    %4203 = vmatprep.subr.bf16.mxu0 0
    %4204 = vmatpush1.bf16.xpose.msra.mxu0 0
    %4205 = vmatprep.subr.bf16.mxu0 0
    %4206 = vmatpush1.bf16.xpose.msra.mxu0 0
    %4207 = vmatprep.subr.bf16.mxu0 0
    %4208 = vmatpush1.bf16.xpose.msra.mxu0 0
    %4209 = vmatprep.subr.bf16.mxu0 0
    %4210 = vmatpush1.bf16.xpose.msra.mxu0 0
    %4211 = vmatprep.subr.bf16.mxu0 0
    %4212 = vmatpush1.bf16.xpose.msra.mxu0 0
    %4213 = vmatprep.subr.bf16.mxu0 0
    %4214 = vmatpush1.bf16.xpose.msra.mxu0 0
    %4215 = vmatprep.subr.bf16.mxu0 0
    %4216 = vmatpush1.bf16.xpose.msra.mxu0 0
    %4217 = vmatprep.subr.bf16.mxu0 0
    %4218 = vmatpush1.bf16.xpose.msra.mxu0 0
    %4219 = vmatprep.mubr.bf16.mxu0 0
    %4220 = vmatmul.mubr.bf16.gmra.mrb[0].mxu0 %v4182
    %v4221 = vpop.f32.mrb[0].mxu0
    %v4222 = vadd.f32 0.0, %v4221
    %v4223 = vpop.f32.mrb[0].mxu0
    %v4224 = vpop.f32.mrb[0].mxu0
    %v4225 = vpop.f32.mrb[0].mxu0
    %4226 = vdwg.mxu0
    %v4228 = vsel %vm3720, %v1419, 0
    %v4231 = vsel %vm3720, %v2539, 0
    %4233 = vmatprep.subr.bf16.mxu0 0
    %4234 = vmatpush1.bf16.xpose.msra.mxu0 %v4231
    %4235 = vmatprep.subr.bf16.mxu0 0
    %4236 = vmatpush1.bf16.xpose.msra.mxu0 0
    %4237 = vmatprep.subr.bf16.mxu0 0
    %4238 = vmatpush1.bf16.xpose.msra.mxu0 0
    %4239 = vmatprep.subr.bf16.mxu0 0
    %4240 = vmatpush1.bf16.xpose.msra.mxu0 0
    %4241 = vmatprep.subr.bf16.mxu0 0
    %4242 = vmatpush1.bf16.xpose.msra.mxu0 0
    %4243 = vmatprep.subr.bf16.mxu0 0
    %4244 = vmatpush1.bf16.xpose.msra.mxu0 0
    %4245 = vmatprep.subr.bf16.mxu0 0
    %4246 = vmatpush1.bf16.xpose.msra.mxu0 0
    %4247 = vmatprep.subr.bf16.mxu0 0
    %4248 = vmatpush1.bf16.xpose.msra.mxu0 0
    %4249 = vmatprep.subr.bf16.mxu0 0
    %4250 = vmatpush1.bf16.xpose.msra.mxu0 0
    %4251 = vmatprep.subr.bf16.mxu0 0
    %4252 = vmatpush1.bf16.xpose.msra.mxu0 0
    %4253 = vmatprep.subr.bf16.mxu0 0
    %4254 = vmatpush1.bf16.xpose.msra.mxu0 0
    %4255 = vmatprep.subr.bf16.mxu0 0
    %4256 = vmatpush1.bf16.xpose.msra.mxu0 0
    %4257 = vmatprep.subr.bf16.mxu0 0
    %4258 = vmatpush1.bf16.xpose.msra.mxu0 0
    %4259 = vmatprep.subr.bf16.mxu0 0
    %4260 = vmatpush1.bf16.xpose.msra.mxu0 0
    %4261 = vmatprep.subr.bf16.mxu0 0
    %4262 = vmatpush1.bf16.xpose.msra.mxu0 0
    %4263 = vmatprep.subr.bf16.mxu0 0
    %4264 = vmatpush1.bf16.xpose.msra.mxu0 0
    %4265 = vmatprep.mubr.bf16.mxu0 0
    %4266 = vmatmul.mubr.bf16.gmra.mrb[0].mxu0 %v4228
    %v4267 = vpop.f32.mrb[0].mxu0
    %v4268 = vadd.f32 0.0, %v4267
    %v4269 = vpop.f32.mrb[0].mxu0
    %v4270 = vpop.f32.mrb[0].mxu0
    %v4271 = vpop.f32.mrb[0].mxu0
    %4272 = vdwg.mxu0
    %v4274 = vsel %vm3720, %v1422, 0
    %v4277 = vsel %vm3720, %v2542, 0
    %4279 = vmatprep.subr.bf16.mxu0 0
    %4280 = vmatpush1.bf16.xpose.msra.mxu0 %v4277
    %4281 = vmatprep.subr.bf16.mxu0 0
    %4282 = vmatpush1.bf16.xpose.msra.mxu0 0
    %4283 = vmatprep.subr.bf16.mxu0 0
    %4284 = vmatpush1.bf16.xpose.msra.mxu0 0
    %4285 = vmatprep.subr.bf16.mxu0 0
    %4286 = vmatpush1.bf16.xpose.msra.mxu0 0
    %4287 = vmatprep.subr.bf16.mxu0 0
    %4288 = vmatpush1.bf16.xpose.msra.mxu0 0
    %4289 = vmatprep.subr.bf16.mxu0 0
    %4290 = vmatpush1.bf16.xpose.msra.mxu0 0
    %4291 = vmatprep.subr.bf16.mxu0 0
    %4292 = vmatpush1.bf16.xpose.msra.mxu0 0
    %4293 = vmatprep.subr.bf16.mxu0 0
    %4294 = vmatpush1.bf16.xpose.msra.mxu0 0
    %4295 = vmatprep.subr.bf16.mxu0 0
    %4296 = vmatpush1.bf16.xpose.msra.mxu0 0
    %4297 = vmatprep.subr.bf16.mxu0 0
    %4298 = vmatpush1.bf16.xpose.msra.mxu0 0
    %4299 = vmatprep.subr.bf16.mxu0 0
    %4300 = vmatpush1.bf16.xpose.msra.mxu0 0
    %4301 = vmatprep.subr.bf16.mxu0 0
    %4302 = vmatpush1.bf16.xpose.msra.mxu0 0
    %4303 = vmatprep.subr.bf16.mxu0 0
    %4304 = vmatpush1.bf16.xpose.msra.mxu0 0
    %4305 = vmatprep.subr.bf16.mxu0 0
    %4306 = vmatpush1.bf16.xpose.msra.mxu0 0
    %4307 = vmatprep.subr.bf16.mxu0 0
    %4308 = vmatpush1.bf16.xpose.msra.mxu0 0
    %4309 = vmatprep.subr.bf16.mxu0 0
    %4310 = vmatpush1.bf16.xpose.msra.mxu0 0
    %4311 = vmatprep.mubr.bf16.mxu0 0
    %4312 = vmatmul.mubr.bf16.gmra.mrb[0].mxu0 %v4274
    %v4313 = vpop.f32.mrb[0].mxu0
    %v4314 = vadd.f32 0.0, %v4313
    %v4315 = vpop.f32.mrb[0].mxu0
    %v4316 = vpop.f32.mrb[0].mxu0
    %v4317 = vpop.f32.mrb[0].mxu0
    %4318 = vdwg.mxu0
    %v4320 = vsel %vm3720, %v1425, 0
    %v4323 = vsel %vm3720, %v2545, 0
    %4325 = vmatprep.subr.bf16.mxu0 0
    %4326 = vmatpush1.bf16.xpose.msra.mxu0 %v4323
    %4327 = vmatprep.subr.bf16.mxu0 0
    %4328 = vmatpush1.bf16.xpose.msra.mxu0 0
    %4329 = vmatprep.subr.bf16.mxu0 0
    %4330 = vmatpush1.bf16.xpose.msra.mxu0 0
    %4331 = vmatprep.subr.bf16.mxu0 0
    %4332 = vmatpush1.bf16.xpose.msra.mxu0 0
    %4333 = vmatprep.subr.bf16.mxu0 0
    %4334 = vmatpush1.bf16.xpose.msra.mxu0 0
    %4335 = vmatprep.subr.bf16.mxu0 0
    %4336 = vmatpush1.bf16.xpose.msra.mxu0 0
    %4337 = vmatprep.subr.bf16.mxu0 0
    %4338 = vmatpush1.bf16.xpose.msra.mxu0 0
    %4339 = vmatprep.subr.bf16.mxu0 0
    %4340 = vmatpush1.bf16.xpose.msra.mxu0 0
    %4341 = vmatprep.subr.bf16.mxu0 0
    %4342 = vmatpush1.bf16.xpose.msra.mxu0 0
    %4343 = vmatprep.subr.bf16.mxu0 0
    %4344 = vmatpush1.bf16.xpose.msra.mxu0 0
    %4345 = vmatprep.subr.bf16.mxu0 0
    %4346 = vmatpush1.bf16.xpose.msra.mxu0 0
    %4347 = vmatprep.subr.bf16.mxu0 0
    %4348 = vmatpush1.bf16.xpose.msra.mxu0 0
    %4349 = vmatprep.subr.bf16.mxu0 0
    %4350 = vmatpush1.bf16.xpose.msra.mxu0 0
    %4351 = vmatprep.subr.bf16.mxu0 0
    %4352 = vmatpush1.bf16.xpose.msra.mxu0 0
    %4353 = vmatprep.subr.bf16.mxu0 0
    %4354 = vmatpush1.bf16.xpose.msra.mxu0 0
    %4355 = vmatprep.subr.bf16.mxu0 0
    %4356 = vmatpush1.bf16.xpose.msra.mxu0 0
    %4357 = vmatprep.mubr.bf16.mxu0 0
    %4358 = vmatmul.mubr.bf16.gmra.mrb[0].mxu0 %v4320
    %v4359 = vpop.f32.mrb[0].mxu0
    %v4360 = vadd.f32 0.0, %v4359
    %v4361 = vpop.f32.mrb[0].mxu0
    %v4362 = vpop.f32.mrb[0].mxu0
    %v4363 = vpop.f32.mrb[0].mxu0
    %4364 = vdwg.mxu0
    %v4366 = vsel %vm3720, %v1428, 0
    %v4369 = vsel %vm3720, %v2548, 0
    %4371 = vmatprep.subr.bf16.mxu0 0
    %4372 = vmatpush1.bf16.xpose.msra.mxu0 %v4369
    %4373 = vmatprep.subr.bf16.mxu0 0
    %4374 = vmatpush1.bf16.xpose.msra.mxu0 0
    %4375 = vmatprep.subr.bf16.mxu0 0
    %4376 = vmatpush1.bf16.xpose.msra.mxu0 0
    %4377 = vmatprep.subr.bf16.mxu0 0
    %4378 = vmatpush1.bf16.xpose.msra.mxu0 0
    %4379 = vmatprep.subr.bf16.mxu0 0
    %4380 = vmatpush1.bf16.xpose.msra.mxu0 0
    %4381 = vmatprep.subr.bf16.mxu0 0
    %4382 = vmatpush1.bf16.xpose.msra.mxu0 0
    %4383 = vmatprep.subr.bf16.mxu0 0
    %4384 = vmatpush1.bf16.xpose.msra.mxu0 0
    %4385 = vmatprep.subr.bf16.mxu0 0
    %4386 = vmatpush1.bf16.xpose.msra.mxu0 0
    %4387 = vmatprep.subr.bf16.mxu0 0
    %4388 = vmatpush1.bf16.xpose.msra.mxu0 0
    %4389 = vmatprep.subr.bf16.mxu0 0
    %4390 = vmatpush1.bf16.xpose.msra.mxu0 0
    %4391 = vmatprep.subr.bf16.mxu0 0
    %4392 = vmatpush1.bf16.xpose.msra.mxu0 0
    %4393 = vmatprep.subr.bf16.mxu0 0
    %4394 = vmatpush1.bf16.xpose.msra.mxu0 0
    %4395 = vmatprep.subr.bf16.mxu0 0
    %4396 = vmatpush1.bf16.xpose.msra.mxu0 0
    %4397 = vmatprep.subr.bf16.mxu0 0
    %4398 = vmatpush1.bf16.xpose.msra.mxu0 0
    %4399 = vmatprep.subr.bf16.mxu0 0
    %4400 = vmatpush1.bf16.xpose.msra.mxu0 0
    %4401 = vmatprep.subr.bf16.mxu0 0
    %4402 = vmatpush1.bf16.xpose.msra.mxu0 0
    %4403 = vmatprep.mubr.bf16.mxu0 0
    %4404 = vmatmul.mubr.bf16.gmra.mrb[0].mxu0 %v4366
    %v4405 = vpop.f32.mrb[0].mxu0
    %v4406 = vadd.f32 0.0, %v4405
    %v4407 = vpop.f32.mrb[0].mxu0
    %v4408 = vpop.f32.mrb[0].mxu0
    %v4409 = vpop.f32.mrb[0].mxu0
    %4410 = vdwg.mxu0
    %v4412 = vsel %vm3720, %v1431, 0
    %v4415 = vsel %vm3720, %v2551, 0
    %4417 = vmatprep.subr.bf16.mxu0 0
    %4418 = vmatpush1.bf16.xpose.msra.mxu0 %v4415
    %4419 = vmatprep.subr.bf16.mxu0 0
    %4420 = vmatpush1.bf16.xpose.msra.mxu0 0
    %4421 = vmatprep.subr.bf16.mxu0 0
    %4422 = vmatpush1.bf16.xpose.msra.mxu0 0
    %4423 = vmatprep.subr.bf16.mxu0 0
    %4424 = vmatpush1.bf16.xpose.msra.mxu0 0
    %4425 = vmatprep.subr.bf16.mxu0 0
    %4426 = vmatpush1.bf16.xpose.msra.mxu0 0
    %4427 = vmatprep.subr.bf16.mxu0 0
    %4428 = vmatpush1.bf16.xpose.msra.mxu0 0
    %4429 = vmatprep.subr.bf16.mxu0 0
    %4430 = vmatpush1.bf16.xpose.msra.mxu0 0
    %4431 = vmatprep.subr.bf16.mxu0 0
    %4432 = vmatpush1.bf16.xpose.msra.mxu0 0
    %4433 = vmatprep.subr.bf16.mxu0 0
    %4434 = vmatpush1.bf16.xpose.msra.mxu0 0
    %4435 = vmatprep.subr.bf16.mxu0 0
    %4436 = vmatpush1.bf16.xpose.msra.mxu0 0
    %4437 = vmatprep.subr.bf16.mxu0 0
    %4438 = vmatpush1.bf16.xpose.msra.mxu0 0
    %4439 = vmatprep.subr.bf16.mxu0 0
    %4440 = vmatpush1.bf16.xpose.msra.mxu0 0
    %4441 = vmatprep.subr.bf16.mxu0 0
    %4442 = vmatpush1.bf16.xpose.msra.mxu0 0
    %4443 = vmatprep.subr.bf16.mxu0 0
    %4444 = vmatpush1.bf16.xpose.msra.mxu0 0
    %4445 = vmatprep.subr.bf16.mxu0 0
    %4446 = vmatpush1.bf16.xpose.msra.mxu0 0
    %4447 = vmatprep.subr.bf16.mxu0 0
    %4448 = vmatpush1.bf16.xpose.msra.mxu0 0
    %4449 = vmatprep.mubr.bf16.mxu0 0
    %4450 = vmatmul.mubr.bf16.gmra.mrb[0].mxu0 %v4412
    %v4451 = vpop.f32.mrb[0].mxu0
    %v4452 = vadd.f32 0.0, %v4451
    %v4453 = vpop.f32.mrb[0].mxu0
    %v4454 = vpop.f32.mrb[0].mxu0
    %v4455 = vpop.f32.mrb[0].mxu0
    %4456 = vdwg.mxu0
    %v4458 = vsel %vm3720, %v1434, 0
    %v4461 = vsel %vm3720, %v2554, 0
    %4463 = vmatprep.subr.bf16.mxu0 0
    %4464 = vmatpush1.bf16.xpose.msra.mxu0 %v4461
    %4465 = vmatprep.subr.bf16.mxu0 0
    %4466 = vmatpush1.bf16.xpose.msra.mxu0 0
    %4467 = vmatprep.subr.bf16.mxu0 0
    %4468 = vmatpush1.bf16.xpose.msra.mxu0 0
    %4469 = vmatprep.subr.bf16.mxu0 0
    %4470 = vmatpush1.bf16.xpose.msra.mxu0 0
    %4471 = vmatprep.subr.bf16.mxu0 0
    %4472 = vmatpush1.bf16.xpose.msra.mxu0 0
    %4473 = vmatprep.subr.bf16.mxu0 0
    %4474 = vmatpush1.bf16.xpose.msra.mxu0 0
    %4475 = vmatprep.subr.bf16.mxu0 0
    %4476 = vmatpush1.bf16.xpose.msra.mxu0 0
    %4477 = vmatprep.subr.bf16.mxu0 0
    %4478 = vmatpush1.bf16.xpose.msra.mxu0 0
    %4479 = vmatprep.subr.bf16.mxu0 0
    %4480 = vmatpush1.bf16.xpose.msra.mxu0 0
    %4481 = vmatprep.subr.bf16.mxu0 0
    %4482 = vmatpush1.bf16.xpose.msra.mxu0 0
    %4483 = vmatprep.subr.bf16.mxu0 0
    %4484 = vmatpush1.bf16.xpose.msra.mxu0 0
    %4485 = vmatprep.subr.bf16.mxu0 0
    %4486 = vmatpush1.bf16.xpose.msra.mxu0 0
    %4487 = vmatprep.subr.bf16.mxu0 0
    %4488 = vmatpush1.bf16.xpose.msra.mxu0 0
    %4489 = vmatprep.subr.bf16.mxu0 0
    %4490 = vmatpush1.bf16.xpose.msra.mxu0 0
    %4491 = vmatprep.subr.bf16.mxu0 0
    %4492 = vmatpush1.bf16.xpose.msra.mxu0 0
    %4493 = vmatprep.subr.bf16.mxu0 0
    %4494 = vmatpush1.bf16.xpose.msra.mxu0 0
    %4495 = vmatprep.mubr.bf16.mxu0 0
    %4496 = vmatmul.mubr.bf16.gmra.mrb[0].mxu0 %v4458
    %v4497 = vpop.f32.mrb[0].mxu0
    %v4498 = vadd.f32 0.0, %v4497
    %v4499 = vpop.f32.mrb[0].mxu0
    %v4500 = vpop.f32.mrb[0].mxu0
    %v4501 = vpop.f32.mrb[0].mxu0
    %4502 = vdwg.mxu0
    %v4504 = vsel %vm3720, %v1437, 0
    %v4507 = vsel %vm3720, %v2557, 0
    %4509 = vmatprep.subr.bf16.mxu0 0
    %4510 = vmatpush1.bf16.xpose.msra.mxu0 %v4507
    %4511 = vmatprep.subr.bf16.mxu0 0
    %4512 = vmatpush1.bf16.xpose.msra.mxu0 0
    %4513 = vmatprep.subr.bf16.mxu0 0
    %4514 = vmatpush1.bf16.xpose.msra.mxu0 0
    %4515 = vmatprep.subr.bf16.mxu0 0
    %4516 = vmatpush1.bf16.xpose.msra.mxu0 0
    %4517 = vmatprep.subr.bf16.mxu0 0
    %4518 = vmatpush1.bf16.xpose.msra.mxu0 0
    %4519 = vmatprep.subr.bf16.mxu0 0
    %4520 = vmatpush1.bf16.xpose.msra.mxu0 0
    %4521 = vmatprep.subr.bf16.mxu0 0
    %4522 = vmatpush1.bf16.xpose.msra.mxu0 0
    %4523 = vmatprep.subr.bf16.mxu0 0
    %4524 = vmatpush1.bf16.xpose.msra.mxu0 0
    %4525 = vmatprep.subr.bf16.mxu0 0
    %4526 = vmatpush1.bf16.xpose.msra.mxu0 0
    %4527 = vmatprep.subr.bf16.mxu0 0
    %4528 = vmatpush1.bf16.xpose.msra.mxu0 0
    %4529 = vmatprep.subr.bf16.mxu0 0
    %4530 = vmatpush1.bf16.xpose.msra.mxu0 0
    %4531 = vmatprep.subr.bf16.mxu0 0
    %4532 = vmatpush1.bf16.xpose.msra.mxu0 0
    %4533 = vmatprep.subr.bf16.mxu0 0
    %4534 = vmatpush1.bf16.xpose.msra.mxu0 0
    %4535 = vmatprep.subr.bf16.mxu0 0
    %4536 = vmatpush1.bf16.xpose.msra.mxu0 0
    %4537 = vmatprep.subr.bf16.mxu0 0
    %4538 = vmatpush1.bf16.xpose.msra.mxu0 0
    %4539 = vmatprep.subr.bf16.mxu0 0
    %4540 = vmatpush1.bf16.xpose.msra.mxu0 0
    %4541 = vmatprep.mubr.bf16.mxu0 0
    %4542 = vmatmul.mubr.bf16.gmra.mrb[0].mxu0 %v4504
    %v4543 = vpop.f32.mrb[0].mxu0
    %v4544 = vadd.f32 0.0, %v4543
    %v4545 = vpop.f32.mrb[0].mxu0
    %v4546 = vpop.f32.mrb[0].mxu0
    %v4547 = vpop.f32.mrb[0].mxu0
    %4548 = vdwg.mxu0
    %v4550 = vsel %vm3720, %v1440, 0
    %v4553 = vsel %vm3720, %v2560, 0
    %4555 = vmatprep.subr.bf16.mxu0 0
    %4556 = vmatpush1.bf16.xpose.msra.mxu0 %v4553
    %4557 = vmatprep.subr.bf16.mxu0 0
    %4558 = vmatpush1.bf16.xpose.msra.mxu0 0
    %4559 = vmatprep.subr.bf16.mxu0 0
    %4560 = vmatpush1.bf16.xpose.msra.mxu0 0
    %4561 = vmatprep.subr.bf16.mxu0 0
    %4562 = vmatpush1.bf16.xpose.msra.mxu0 0
    %4563 = vmatprep.subr.bf16.mxu0 0
    %4564 = vmatpush1.bf16.xpose.msra.mxu0 0
    %4565 = vmatprep.subr.bf16.mxu0 0
    %4566 = vmatpush1.bf16.xpose.msra.mxu0 0
    %4567 = vmatprep.subr.bf16.mxu0 0
    %4568 = vmatpush1.bf16.xpose.msra.mxu0 0
    %4569 = vmatprep.subr.bf16.mxu0 0
    %4570 = vmatpush1.bf16.xpose.msra.mxu0 0
    %4571 = vmatprep.subr.bf16.mxu0 0
    %4572 = vmatpush1.bf16.xpose.msra.mxu0 0
    %4573 = vmatprep.subr.bf16.mxu0 0
    %4574 = vmatpush1.bf16.xpose.msra.mxu0 0
    %4575 = vmatprep.subr.bf16.mxu0 0
    %4576 = vmatpush1.bf16.xpose.msra.mxu0 0
    %4577 = vmatprep.subr.bf16.mxu0 0
    %4578 = vmatpush1.bf16.xpose.msra.mxu0 0
    %4579 = vmatprep.subr.bf16.mxu0 0
    %4580 = vmatpush1.bf16.xpose.msra.mxu0 0
    %4581 = vmatprep.subr.bf16.mxu0 0
    %4582 = vmatpush1.bf16.xpose.msra.mxu0 0
    %4583 = vmatprep.subr.bf16.mxu0 0
    %4584 = vmatpush1.bf16.xpose.msra.mxu0 0
    %4585 = vmatprep.subr.bf16.mxu0 0
    %4586 = vmatpush1.bf16.xpose.msra.mxu0 0
    %4587 = vmatprep.mubr.bf16.mxu0 0
    %4588 = vmatmul.mubr.bf16.gmra.mrb[0].mxu0 %v4550
    %v4589 = vpop.f32.mrb[0].mxu0
    %v4590 = vadd.f32 0.0, %v4589
    %v4591 = vpop.f32.mrb[0].mxu0
    %v4592 = vpop.f32.mrb[0].mxu0
    %v4593 = vpop.f32.mrb[0].mxu0
    %4594 = vdwg.mxu0
    %v4596 = vsel %vm3720, %v1443, 0
    %v4599 = vsel %vm3720, %v2563, 0
    %4601 = vmatprep.subr.bf16.mxu0 0
    %4602 = vmatpush1.bf16.xpose.msra.mxu0 %v4599
    %4603 = vmatprep.subr.bf16.mxu0 0
    %4604 = vmatpush1.bf16.xpose.msra.mxu0 0
    %4605 = vmatprep.subr.bf16.mxu0 0
    %4606 = vmatpush1.bf16.xpose.msra.mxu0 0
    %4607 = vmatprep.subr.bf16.mxu0 0
    %4608 = vmatpush1.bf16.xpose.msra.mxu0 0
    %4609 = vmatprep.subr.bf16.mxu0 0
    %4610 = vmatpush1.bf16.xpose.msra.mxu0 0
    %4611 = vmatprep.subr.bf16.mxu0 0
    %4612 = vmatpush1.bf16.xpose.msra.mxu0 0
    %4613 = vmatprep.subr.bf16.mxu0 0
    %4614 = vmatpush1.bf16.xpose.msra.mxu0 0
    %4615 = vmatprep.subr.bf16.mxu0 0
    %4616 = vmatpush1.bf16.xpose.msra.mxu0 0
    %4617 = vmatprep.subr.bf16.mxu0 0
    %4618 = vmatpush1.bf16.xpose.msra.mxu0 0
    %4619 = vmatprep.subr.bf16.mxu0 0
    %4620 = vmatpush1.bf16.xpose.msra.mxu0 0
    %4621 = vmatprep.subr.bf16.mxu0 0
    %4622 = vmatpush1.bf16.xpose.msra.mxu0 0
    %4623 = vmatprep.subr.bf16.mxu0 0
    %4624 = vmatpush1.bf16.xpose.msra.mxu0 0
    %4625 = vmatprep.subr.bf16.mxu0 0
    %4626 = vmatpush1.bf16.xpose.msra.mxu0 0
    %4627 = vmatprep.subr.bf16.mxu0 0
    %4628 = vmatpush1.bf16.xpose.msra.mxu0 0
    %4629 = vmatprep.subr.bf16.mxu0 0
    %4630 = vmatpush1.bf16.xpose.msra.mxu0 0
    %4631 = vmatprep.subr.bf16.mxu0 0
    %4632 = vmatpush1.bf16.xpose.msra.mxu0 0
    %4633 = vmatprep.mubr.bf16.mxu0 0
    %4634 = vmatmul.mubr.bf16.gmra.mrb[0].mxu0 %v4596
    %v4635 = vpop.f32.mrb[0].mxu0
    %v4636 = vadd.f32 0.0, %v4635
    %v4637 = vpop.f32.mrb[0].mxu0
    %v4638 = vpop.f32.mrb[0].mxu0
    %v4639 = vpop.f32.mrb[0].mxu0
    %4640 = vdwg.mxu0
    %v4642 = vsel %vm3720, %v1446, 0
    %v4645 = vsel %vm3720, %v2566, 0
    %4647 = vmatprep.subr.bf16.mxu0 0
    %4648 = vmatpush1.bf16.xpose.msra.mxu0 %v4645
    %4649 = vmatprep.subr.bf16.mxu0 0
    %4650 = vmatpush1.bf16.xpose.msra.mxu0 0
    %4651 = vmatprep.subr.bf16.mxu0 0
    %4652 = vmatpush1.bf16.xpose.msra.mxu0 0
    %4653 = vmatprep.subr.bf16.mxu0 0
    %4654 = vmatpush1.bf16.xpose.msra.mxu0 0
    %4655 = vmatprep.subr.bf16.mxu0 0
    %4656 = vmatpush1.bf16.xpose.msra.mxu0 0
    %4657 = vmatprep.subr.bf16.mxu0 0
    %4658 = vmatpush1.bf16.xpose.msra.mxu0 0
    %4659 = vmatprep.subr.bf16.mxu0 0
    %4660 = vmatpush1.bf16.xpose.msra.mxu0 0
    %4661 = vmatprep.subr.bf16.mxu0 0
    %4662 = vmatpush1.bf16.xpose.msra.mxu0 0
    %4663 = vmatprep.subr.bf16.mxu0 0
    %4664 = vmatpush1.bf16.xpose.msra.mxu0 0
    %4665 = vmatprep.subr.bf16.mxu0 0
    %4666 = vmatpush1.bf16.xpose.msra.mxu0 0
    %4667 = vmatprep.subr.bf16.mxu0 0
    %4668 = vmatpush1.bf16.xpose.msra.mxu0 0
    %4669 = vmatprep.subr.bf16.mxu0 0
    %4670 = vmatpush1.bf16.xpose.msra.mxu0 0
    %4671 = vmatprep.subr.bf16.mxu0 0
    %4672 = vmatpush1.bf16.xpose.msra.mxu0 0
    %4673 = vmatprep.subr.bf16.mxu0 0
    %4674 = vmatpush1.bf16.xpose.msra.mxu0 0
    %4675 = vmatprep.subr.bf16.mxu0 0
    %4676 = vmatpush1.bf16.xpose.msra.mxu0 0
    %4677 = vmatprep.subr.bf16.mxu0 0
    %4678 = vmatpush1.bf16.xpose.msra.mxu0 0
    %4679 = vmatprep.mubr.bf16.mxu0 0
    %4680 = vmatmul.mubr.bf16.gmra.mrb[0].mxu0 %v4642
    %v4681 = vpop.f32.mrb[0].mxu0
    %v4682 = vadd.f32 0.0, %v4681
    %v4683 = vpop.f32.mrb[0].mxu0
    %v4684 = vpop.f32.mrb[0].mxu0
    %v4685 = vpop.f32.mrb[0].mxu0
    %4686 = vdwg.mxu0
    %v4688 = vsel %vm3720, %v1449, 0
    %v4691 = vsel %vm3720, %v2569, 0
    %4693 = vmatprep.subr.bf16.mxu0 0
    %4694 = vmatpush1.bf16.xpose.msra.mxu0 %v4691
    %4695 = vmatprep.subr.bf16.mxu0 0
    %4696 = vmatpush1.bf16.xpose.msra.mxu0 0
    %4697 = vmatprep.subr.bf16.mxu0 0
    %4698 = vmatpush1.bf16.xpose.msra.mxu0 0
    %4699 = vmatprep.subr.bf16.mxu0 0
    %4700 = vmatpush1.bf16.xpose.msra.mxu0 0
    %4701 = vmatprep.subr.bf16.mxu0 0
    %4702 = vmatpush1.bf16.xpose.msra.mxu0 0
    %4703 = vmatprep.subr.bf16.mxu0 0
    %4704 = vmatpush1.bf16.xpose.msra.mxu0 0
    %4705 = vmatprep.subr.bf16.mxu0 0
    %4706 = vmatpush1.bf16.xpose.msra.mxu0 0
    %4707 = vmatprep.subr.bf16.mxu0 0
    %4708 = vmatpush1.bf16.xpose.msra.mxu0 0
    %4709 = vmatprep.subr.bf16.mxu0 0
    %4710 = vmatpush1.bf16.xpose.msra.mxu0 0
    %4711 = vmatprep.subr.bf16.mxu0 0
    %4712 = vmatpush1.bf16.xpose.msra.mxu0 0
    %4713 = vmatprep.subr.bf16.mxu0 0
    %4714 = vmatpush1.bf16.xpose.msra.mxu0 0
    %4715 = vmatprep.subr.bf16.mxu0 0
    %4716 = vmatpush1.bf16.xpose.msra.mxu0 0
    %4717 = vmatprep.subr.bf16.mxu0 0
    %4718 = vmatpush1.bf16.xpose.msra.mxu0 0
    %4719 = vmatprep.subr.bf16.mxu0 0
    %4720 = vmatpush1.bf16.xpose.msra.mxu0 0
    %4721 = vmatprep.subr.bf16.mxu0 0
    %4722 = vmatpush1.bf16.xpose.msra.mxu0 0
    %4723 = vmatprep.subr.bf16.mxu0 0
    %4724 = vmatpush1.bf16.xpose.msra.mxu0 0
    %4725 = vmatprep.mubr.bf16.mxu0 0
    %4726 = vmatmul.mubr.bf16.gmra.mrb[0].mxu0 %v4688
    %v4727 = vpop.f32.mrb[0].mxu0
    %v4728 = vadd.f32 0.0, %v4727
    %v4729 = vpop.f32.mrb[0].mxu0
    %v4730 = vpop.f32.mrb[0].mxu0
    %v4731 = vpop.f32.mrb[0].mxu0
    %4732 = vdwg.mxu0
    %v4734 = vsel %vm3720, %v1452, 0
    %v4737 = vsel %vm3720, %v2572, 0
    %4739 = vmatprep.subr.bf16.mxu0 0
    %4740 = vmatpush1.bf16.xpose.msra.mxu0 %v4737
    %4741 = vmatprep.subr.bf16.mxu0 0
    %4742 = vmatpush1.bf16.xpose.msra.mxu0 0
    %4743 = vmatprep.subr.bf16.mxu0 0
    %4744 = vmatpush1.bf16.xpose.msra.mxu0 0
    %4745 = vmatprep.subr.bf16.mxu0 0
    %4746 = vmatpush1.bf16.xpose.msra.mxu0 0
    %4747 = vmatprep.subr.bf16.mxu0 0
    %4748 = vmatpush1.bf16.xpose.msra.mxu0 0
    %4749 = vmatprep.subr.bf16.mxu0 0
    %4750 = vmatpush1.bf16.xpose.msra.mxu0 0
    %4751 = vmatprep.subr.bf16.mxu0 0
    %4752 = vmatpush1.bf16.xpose.msra.mxu0 0
    %4753 = vmatprep.subr.bf16.mxu0 0
    %4754 = vmatpush1.bf16.xpose.msra.mxu0 0
    %4755 = vmatprep.subr.bf16.mxu0 0
    %4756 = vmatpush1.bf16.xpose.msra.mxu0 0
    %4757 = vmatprep.subr.bf16.mxu0 0
    %4758 = vmatpush1.bf16.xpose.msra.mxu0 0
    %4759 = vmatprep.subr.bf16.mxu0 0
    %4760 = vmatpush1.bf16.xpose.msra.mxu0 0
    %4761 = vmatprep.subr.bf16.mxu0 0
    %4762 = vmatpush1.bf16.xpose.msra.mxu0 0
    %4763 = vmatprep.subr.bf16.mxu0 0
    %4764 = vmatpush1.bf16.xpose.msra.mxu0 0
    %4765 = vmatprep.subr.bf16.mxu0 0
    %4766 = vmatpush1.bf16.xpose.msra.mxu0 0
    %4767 = vmatprep.subr.bf16.mxu0 0
    %4768 = vmatpush1.bf16.xpose.msra.mxu0 0
    %4769 = vmatprep.subr.bf16.mxu0 0
    %4770 = vmatpush1.bf16.xpose.msra.mxu0 0
    %4771 = vmatprep.mubr.bf16.mxu0 0
    %4772 = vmatmul.mubr.bf16.gmra.mrb[0].mxu0 %v4734
    %v4773 = vpop.f32.mrb[0].mxu0
    %v4774 = vadd.f32 0.0, %v4773
    %v4775 = vpop.f32.mrb[0].mxu0
    %v4776 = vpop.f32.mrb[0].mxu0
    %v4777 = vpop.f32.mrb[0].mxu0
    %4778 = vdwg.mxu0
    %v4780 = vsel %vm3720, %v1455, 0
    %v4783 = vsel %vm3720, %v2575, 0
    %4785 = vmatprep.subr.bf16.mxu0 0
    %4786 = vmatpush1.bf16.xpose.msra.mxu0 %v4783
    %4787 = vmatprep.subr.bf16.mxu0 0
    %4788 = vmatpush1.bf16.xpose.msra.mxu0 0
    %4789 = vmatprep.subr.bf16.mxu0 0
    %4790 = vmatpush1.bf16.xpose.msra.mxu0 0
    %4791 = vmatprep.subr.bf16.mxu0 0
    %4792 = vmatpush1.bf16.xpose.msra.mxu0 0
    %4793 = vmatprep.subr.bf16.mxu0 0
    %4794 = vmatpush1.bf16.xpose.msra.mxu0 0
    %4795 = vmatprep.subr.bf16.mxu0 0
    %4796 = vmatpush1.bf16.xpose.msra.mxu0 0
    %4797 = vmatprep.subr.bf16.mxu0 0
    %4798 = vmatpush1.bf16.xpose.msra.mxu0 0
    %4799 = vmatprep.subr.bf16.mxu0 0
    %4800 = vmatpush1.bf16.xpose.msra.mxu0 0
    %4801 = vmatprep.subr.bf16.mxu0 0
    %4802 = vmatpush1.bf16.xpose.msra.mxu0 0
    %4803 = vmatprep.subr.bf16.mxu0 0
    %4804 = vmatpush1.bf16.xpose.msra.mxu0 0
    %4805 = vmatprep.subr.bf16.mxu0 0
    %4806 = vmatpush1.bf16.xpose.msra.mxu0 0
    %4807 = vmatprep.subr.bf16.mxu0 0
    %4808 = vmatpush1.bf16.xpose.msra.mxu0 0
    %4809 = vmatprep.subr.bf16.mxu0 0
    %4810 = vmatpush1.bf16.xpose.msra.mxu0 0
    %4811 = vmatprep.subr.bf16.mxu0 0
    %4812 = vmatpush1.bf16.xpose.msra.mxu0 0
    %4813 = vmatprep.subr.bf16.mxu0 0
    %4814 = vmatpush1.bf16.xpose.msra.mxu0 0
    %4815 = vmatprep.subr.bf16.mxu0 0
    %4816 = vmatpush1.bf16.xpose.msra.mxu0 0
    %4817 = vmatprep.mubr.bf16.mxu0 0
    %4818 = vmatmul.mubr.bf16.gmra.mrb[0].mxu0 %v4780
    %v4819 = vpop.f32.mrb[0].mxu0
    %v4820 = vadd.f32 0.0, %v4819
    %v4821 = vpop.f32.mrb[0].mxu0
    %v4822 = vpop.f32.mrb[0].mxu0
    %v4823 = vpop.f32.mrb[0].mxu0
    %4824 = vdwg.mxu0
    %v4826 = vsel %vm3720, %v1458, 0
    %v4829 = vsel %vm3720, %v2578, 0
    %4831 = vmatprep.subr.bf16.mxu0 0
    %4832 = vmatpush1.bf16.xpose.msra.mxu0 %v4829
    %4833 = vmatprep.subr.bf16.mxu0 0
    %4834 = vmatpush1.bf16.xpose.msra.mxu0 0
    %4835 = vmatprep.subr.bf16.mxu0 0
    %4836 = vmatpush1.bf16.xpose.msra.mxu0 0
    %4837 = vmatprep.subr.bf16.mxu0 0
    %4838 = vmatpush1.bf16.xpose.msra.mxu0 0
    %4839 = vmatprep.subr.bf16.mxu0 0
    %4840 = vmatpush1.bf16.xpose.msra.mxu0 0
    %4841 = vmatprep.subr.bf16.mxu0 0
    %4842 = vmatpush1.bf16.xpose.msra.mxu0 0
    %4843 = vmatprep.subr.bf16.mxu0 0
    %4844 = vmatpush1.bf16.xpose.msra.mxu0 0
    %4845 = vmatprep.subr.bf16.mxu0 0
    %4846 = vmatpush1.bf16.xpose.msra.mxu0 0
    %4847 = vmatprep.subr.bf16.mxu0 0
    %4848 = vmatpush1.bf16.xpose.msra.mxu0 0
    %4849 = vmatprep.subr.bf16.mxu0 0
    %4850 = vmatpush1.bf16.xpose.msra.mxu0 0
    %4851 = vmatprep.subr.bf16.mxu0 0
    %4852 = vmatpush1.bf16.xpose.msra.mxu0 0
    %4853 = vmatprep.subr.bf16.mxu0 0
    %4854 = vmatpush1.bf16.xpose.msra.mxu0 0
    %4855 = vmatprep.subr.bf16.mxu0 0
    %4856 = vmatpush1.bf16.xpose.msra.mxu0 0
    %4857 = vmatprep.subr.bf16.mxu0 0
    %4858 = vmatpush1.bf16.xpose.msra.mxu0 0
    %4859 = vmatprep.subr.bf16.mxu0 0
    %4860 = vmatpush1.bf16.xpose.msra.mxu0 0
    %4861 = vmatprep.subr.bf16.mxu0 0
    %4862 = vmatpush1.bf16.xpose.msra.mxu0 0
    %4863 = vmatprep.mubr.bf16.mxu0 0
    %4864 = vmatmul.mubr.bf16.gmra.mrb[0].mxu0 %v4826
    %v4865 = vpop.f32.mrb[0].mxu0
    %v4866 = vadd.f32 0.0, %v4865
    %v4867 = vpop.f32.mrb[0].mxu0
    %v4868 = vpop.f32.mrb[0].mxu0
    %v4869 = vpop.f32.mrb[0].mxu0
    %4870 = vdwg.mxu0
    %v4872 = vsel %vm3720, %v1461, 0
    %v4875 = vsel %vm3720, %v2581, 0
    %4877 = vmatprep.subr.bf16.mxu0 0
    %4878 = vmatpush1.bf16.xpose.msra.mxu0 %v4875
    %4879 = vmatprep.subr.bf16.mxu0 0
    %4880 = vmatpush1.bf16.xpose.msra.mxu0 0
    %4881 = vmatprep.subr.bf16.mxu0 0
    %4882 = vmatpush1.bf16.xpose.msra.mxu0 0
    %4883 = vmatprep.subr.bf16.mxu0 0
    %4884 = vmatpush1.bf16.xpose.msra.mxu0 0
    %4885 = vmatprep.subr.bf16.mxu0 0
    %4886 = vmatpush1.bf16.xpose.msra.mxu0 0
    %4887 = vmatprep.subr.bf16.mxu0 0
    %4888 = vmatpush1.bf16.xpose.msra.mxu0 0
    %4889 = vmatprep.subr.bf16.mxu0 0
    %4890 = vmatpush1.bf16.xpose.msra.mxu0 0
    %4891 = vmatprep.subr.bf16.mxu0 0
    %4892 = vmatpush1.bf16.xpose.msra.mxu0 0
    %4893 = vmatprep.subr.bf16.mxu0 0
    %4894 = vmatpush1.bf16.xpose.msra.mxu0 0
    %4895 = vmatprep.subr.bf16.mxu0 0
    %4896 = vmatpush1.bf16.xpose.msra.mxu0 0
    %4897 = vmatprep.subr.bf16.mxu0 0
    %4898 = vmatpush1.bf16.xpose.msra.mxu0 0
    %4899 = vmatprep.subr.bf16.mxu0 0
    %4900 = vmatpush1.bf16.xpose.msra.mxu0 0
    %4901 = vmatprep.subr.bf16.mxu0 0
    %4902 = vmatpush1.bf16.xpose.msra.mxu0 0
    %4903 = vmatprep.subr.bf16.mxu0 0
    %4904 = vmatpush1.bf16.xpose.msra.mxu0 0
    %4905 = vmatprep.subr.bf16.mxu0 0
    %4906 = vmatpush1.bf16.xpose.msra.mxu0 0
    %4907 = vmatprep.subr.bf16.mxu0 0
    %4908 = vmatpush1.bf16.xpose.msra.mxu0 0
    %4909 = vmatprep.mubr.bf16.mxu0 0
    %4910 = vmatmul.mubr.bf16.gmra.mrb[0].mxu0 %v4872
    %v4911 = vpop.f32.mrb[0].mxu0
    %v4912 = vadd.f32 0.0, %v4911
    %v4913 = vpop.f32.mrb[0].mxu0
    %v4914 = vpop.f32.mrb[0].mxu0
    %v4915 = vpop.f32.mrb[0].mxu0
    %4916 = vdwg.mxu0
    %v4918 = vsel %vm3720, %v1464, 0
    %v4921 = vsel %vm3720, %v2584, 0
    %4923 = vmatprep.subr.bf16.mxu0 0
    %4924 = vmatpush1.bf16.xpose.msra.mxu0 %v4921
    %4925 = vmatprep.subr.bf16.mxu0 0
    %4926 = vmatpush1.bf16.xpose.msra.mxu0 0
    %4927 = vmatprep.subr.bf16.mxu0 0
    %4928 = vmatpush1.bf16.xpose.msra.mxu0 0
    %4929 = vmatprep.subr.bf16.mxu0 0
    %4930 = vmatpush1.bf16.xpose.msra.mxu0 0
    %4931 = vmatprep.subr.bf16.mxu0 0
    %4932 = vmatpush1.bf16.xpose.msra.mxu0 0
    %4933 = vmatprep.subr.bf16.mxu0 0
    %4934 = vmatpush1.bf16.xpose.msra.mxu0 0
    %4935 = vmatprep.subr.bf16.mxu0 0
    %4936 = vmatpush1.bf16.xpose.msra.mxu0 0
    %4937 = vmatprep.subr.bf16.mxu0 0
    %4938 = vmatpush1.bf16.xpose.msra.mxu0 0
    %4939 = vmatprep.subr.bf16.mxu0 0
    %4940 = vmatpush1.bf16.xpose.msra.mxu0 0
    %4941 = vmatprep.subr.bf16.mxu0 0
    %4942 = vmatpush1.bf16.xpose.msra.mxu0 0
    %4943 = vmatprep.subr.bf16.mxu0 0
    %4944 = vmatpush1.bf16.xpose.msra.mxu0 0
    %4945 = vmatprep.subr.bf16.mxu0 0
    %4946 = vmatpush1.bf16.xpose.msra.mxu0 0
    %4947 = vmatprep.subr.bf16.mxu0 0
    %4948 = vmatpush1.bf16.xpose.msra.mxu0 0
    %4949 = vmatprep.subr.bf16.mxu0 0
    %4950 = vmatpush1.bf16.xpose.msra.mxu0 0
    %4951 = vmatprep.subr.bf16.mxu0 0
    %4952 = vmatpush1.bf16.xpose.msra.mxu0 0
    %4953 = vmatprep.subr.bf16.mxu0 0
    %4954 = vmatpush1.bf16.xpose.msra.mxu0 0
    %4955 = vmatprep.mubr.bf16.mxu0 0
    %4956 = vmatmul.mubr.bf16.gmra.mrb[0].mxu0 %v4918
    %v4957 = vpop.f32.mrb[0].mxu0
    %v4958 = vadd.f32 0.0, %v4957
    %v4959 = vpop.f32.mrb[0].mxu0
    %v4960 = vpop.f32.mrb[0].mxu0
    %v4961 = vpop.f32.mrb[0].mxu0
    %4962 = vdwg.mxu0
    %v4964 = vsel %vm3720, %v1467, 0
    %v4967 = vsel %vm3720, %v2587, 0
    %4969 = vmatprep.subr.bf16.mxu0 0
    %4970 = vmatpush1.bf16.xpose.msra.mxu0 %v4967
    %4971 = vmatprep.subr.bf16.mxu0 0
    %4972 = vmatpush1.bf16.xpose.msra.mxu0 0
    %4973 = vmatprep.subr.bf16.mxu0 0
    %4974 = vmatpush1.bf16.xpose.msra.mxu0 0
    %4975 = vmatprep.subr.bf16.mxu0 0
    %4976 = vmatpush1.bf16.xpose.msra.mxu0 0
    %4977 = vmatprep.subr.bf16.mxu0 0
    %4978 = vmatpush1.bf16.xpose.msra.mxu0 0
    %4979 = vmatprep.subr.bf16.mxu0 0
    %4980 = vmatpush1.bf16.xpose.msra.mxu0 0
    %4981 = vmatprep.subr.bf16.mxu0 0
    %4982 = vmatpush1.bf16.xpose.msra.mxu0 0
    %4983 = vmatprep.subr.bf16.mxu0 0
    %4984 = vmatpush1.bf16.xpose.msra.mxu0 0
    %4985 = vmatprep.subr.bf16.mxu0 0
    %4986 = vmatpush1.bf16.xpose.msra.mxu0 0
    %4987 = vmatprep.subr.bf16.mxu0 0
    %4988 = vmatpush1.bf16.xpose.msra.mxu0 0
    %4989 = vmatprep.subr.bf16.mxu0 0
    %4990 = vmatpush1.bf16.xpose.msra.mxu0 0
    %4991 = vmatprep.subr.bf16.mxu0 0
    %4992 = vmatpush1.bf16.xpose.msra.mxu0 0
    %4993 = vmatprep.subr.bf16.mxu0 0
    %4994 = vmatpush1.bf16.xpose.msra.mxu0 0
    %4995 = vmatprep.subr.bf16.mxu0 0
    %4996 = vmatpush1.bf16.xpose.msra.mxu0 0
    %4997 = vmatprep.subr.bf16.mxu0 0
    %4998 = vmatpush1.bf16.xpose.msra.mxu0 0
    %4999 = vmatprep.subr.bf16.mxu0 0
    %5000 = vmatpush1.bf16.xpose.msra.mxu0 0
    %5001 = vmatprep.mubr.bf16.mxu0 0
    %5002 = vmatmul.mubr.bf16.gmra.mrb[0].mxu0 %v4964
    %v5003 = vpop.f32.mrb[0].mxu0
    %v5004 = vadd.f32 0.0, %v5003
    %v5005 = vpop.f32.mrb[0].mxu0
    %v5006 = vpop.f32.mrb[0].mxu0
    %v5007 = vpop.f32.mrb[0].mxu0
    %5008 = vdwg.mxu0
    %v5010 = vsel %vm3720, %v1470, 0
    %v5013 = vsel %vm3720, %v2590, 0
    %5015 = vmatprep.subr.bf16.mxu0 0
    %5016 = vmatpush1.bf16.xpose.msra.mxu0 %v5013
    %5017 = vmatprep.subr.bf16.mxu0 0
    %5018 = vmatpush1.bf16.xpose.msra.mxu0 0
    %5019 = vmatprep.subr.bf16.mxu0 0
    %5020 = vmatpush1.bf16.xpose.msra.mxu0 0
    %5021 = vmatprep.subr.bf16.mxu0 0
    %5022 = vmatpush1.bf16.xpose.msra.mxu0 0
    %5023 = vmatprep.subr.bf16.mxu0 0
    %5024 = vmatpush1.bf16.xpose.msra.mxu0 0
    %5025 = vmatprep.subr.bf16.mxu0 0
    %5026 = vmatpush1.bf16.xpose.msra.mxu0 0
    %5027 = vmatprep.subr.bf16.mxu0 0
    %5028 = vmatpush1.bf16.xpose.msra.mxu0 0
    %5029 = vmatprep.subr.bf16.mxu0 0
    %5030 = vmatpush1.bf16.xpose.msra.mxu0 0
    %5031 = vmatprep.subr.bf16.mxu0 0
    %5032 = vmatpush1.bf16.xpose.msra.mxu0 0
    %5033 = vmatprep.subr.bf16.mxu0 0
    %5034 = vmatpush1.bf16.xpose.msra.mxu0 0
    %5035 = vmatprep.subr.bf16.mxu0 0
    %5036 = vmatpush1.bf16.xpose.msra.mxu0 0
    %5037 = vmatprep.subr.bf16.mxu0 0
    %5038 = vmatpush1.bf16.xpose.msra.mxu0 0
    %5039 = vmatprep.subr.bf16.mxu0 0
    %5040 = vmatpush1.bf16.xpose.msra.mxu0 0
    %5041 = vmatprep.subr.bf16.mxu0 0
    %5042 = vmatpush1.bf16.xpose.msra.mxu0 0
    %5043 = vmatprep.subr.bf16.mxu0 0
    %5044 = vmatpush1.bf16.xpose.msra.mxu0 0
    %5045 = vmatprep.subr.bf16.mxu0 0
    %5046 = vmatpush1.bf16.xpose.msra.mxu0 0
    %5047 = vmatprep.mubr.bf16.mxu0 0
    %5048 = vmatmul.mubr.bf16.gmra.mrb[0].mxu0 %v5010
    %v5049 = vpop.f32.mrb[0].mxu0
    %v5050 = vadd.f32 0.0, %v5049
    %v5051 = vpop.f32.mrb[0].mxu0
    %v5052 = vpop.f32.mrb[0].mxu0
    %v5053 = vpop.f32.mrb[0].mxu0
    %5054 = vdwg.mxu0
    %v5056 = vsel %vm3720, %v1473, 0
    %v5059 = vsel %vm3720, %v2593, 0
    %5061 = vmatprep.subr.bf16.mxu0 0
    %5062 = vmatpush1.bf16.xpose.msra.mxu0 %v5059
    %5063 = vmatprep.subr.bf16.mxu0 0
    %5064 = vmatpush1.bf16.xpose.msra.mxu0 0
    %5065 = vmatprep.subr.bf16.mxu0 0
    %5066 = vmatpush1.bf16.xpose.msra.mxu0 0
    %5067 = vmatprep.subr.bf16.mxu0 0
    %5068 = vmatpush1.bf16.xpose.msra.mxu0 0
    %5069 = vmatprep.subr.bf16.mxu0 0
    %5070 = vmatpush1.bf16.xpose.msra.mxu0 0
    %5071 = vmatprep.subr.bf16.mxu0 0
    %5072 = vmatpush1.bf16.xpose.msra.mxu0 0
    %5073 = vmatprep.subr.bf16.mxu0 0
    %5074 = vmatpush1.bf16.xpose.msra.mxu0 0
    %5075 = vmatprep.subr.bf16.mxu0 0
    %5076 = vmatpush1.bf16.xpose.msra.mxu0 0
    %5077 = vmatprep.subr.bf16.mxu0 0
    %5078 = vmatpush1.bf16.xpose.msra.mxu0 0
    %5079 = vmatprep.subr.bf16.mxu0 0
    %5080 = vmatpush1.bf16.xpose.msra.mxu0 0
    %5081 = vmatprep.subr.bf16.mxu0 0
    %5082 = vmatpush1.bf16.xpose.msra.mxu0 0
    %5083 = vmatprep.subr.bf16.mxu0 0
    %5084 = vmatpush1.bf16.xpose.msra.mxu0 0
    %5085 = vmatprep.subr.bf16.mxu0 0
    %5086 = vmatpush1.bf16.xpose.msra.mxu0 0
    %5087 = vmatprep.subr.bf16.mxu0 0
    %5088 = vmatpush1.bf16.xpose.msra.mxu0 0
    %5089 = vmatprep.subr.bf16.mxu0 0
    %5090 = vmatpush1.bf16.xpose.msra.mxu0 0
    %5091 = vmatprep.subr.bf16.mxu0 0
    %5092 = vmatpush1.bf16.xpose.msra.mxu0 0
    %5093 = vmatprep.mubr.bf16.mxu0 0
    %5094 = vmatmul.mubr.bf16.gmra.mrb[0].mxu0 %v5056
    %v5095 = vpop.f32.mrb[0].mxu0
    %v5096 = vadd.f32 0.0, %v5095
    %v5097 = vpop.f32.mrb[0].mxu0
    %v5098 = vpop.f32.mrb[0].mxu0
    %v5099 = vpop.f32.mrb[0].mxu0
    %5100 = vdwg.mxu0
    %v5102 = vsel %vm3720, %v1476, 0
    %v5105 = vsel %vm3720, %v2596, 0
    %5107 = vmatprep.subr.bf16.mxu0 0
    %5108 = vmatpush1.bf16.xpose.msra.mxu0 %v5105
    %5109 = vmatprep.subr.bf16.mxu0 0
    %5110 = vmatpush1.bf16.xpose.msra.mxu0 0
    %5111 = vmatprep.subr.bf16.mxu0 0
    %5112 = vmatpush1.bf16.xpose.msra.mxu0 0
    %5113 = vmatprep.subr.bf16.mxu0 0
    %5114 = vmatpush1.bf16.xpose.msra.mxu0 0
    %5115 = vmatprep.subr.bf16.mxu0 0
    %5116 = vmatpush1.bf16.xpose.msra.mxu0 0
    %5117 = vmatprep.subr.bf16.mxu0 0
    %5118 = vmatpush1.bf16.xpose.msra.mxu0 0
    %5119 = vmatprep.subr.bf16.mxu0 0
    %5120 = vmatpush1.bf16.xpose.msra.mxu0 0
    %5121 = vmatprep.subr.bf16.mxu0 0
    %5122 = vmatpush1.bf16.xpose.msra.mxu0 0
    %5123 = vmatprep.subr.bf16.mxu0 0
    %5124 = vmatpush1.bf16.xpose.msra.mxu0 0
    %5125 = vmatprep.subr.bf16.mxu0 0
    %5126 = vmatpush1.bf16.xpose.msra.mxu0 0
    %5127 = vmatprep.subr.bf16.mxu0 0
    %5128 = vmatpush1.bf16.xpose.msra.mxu0 0
    %5129 = vmatprep.subr.bf16.mxu0 0
    %5130 = vmatpush1.bf16.xpose.msra.mxu0 0
    %5131 = vmatprep.subr.bf16.mxu0 0
    %5132 = vmatpush1.bf16.xpose.msra.mxu0 0
    %5133 = vmatprep.subr.bf16.mxu0 0
    %5134 = vmatpush1.bf16.xpose.msra.mxu0 0
    %5135 = vmatprep.subr.bf16.mxu0 0
    %5136 = vmatpush1.bf16.xpose.msra.mxu0 0
    %5137 = vmatprep.subr.bf16.mxu0 0
    %5138 = vmatpush1.bf16.xpose.msra.mxu0 0
    %5139 = vmatprep.mubr.bf16.mxu0 0
    %5140 = vmatmul.mubr.bf16.gmra.mrb[0].mxu0 %v5102
    %v5141 = vpop.f32.mrb[0].mxu0
    %v5142 = vadd.f32 0.0, %v5141
    %v5143 = vpop.f32.mrb[0].mxu0
    %v5144 = vpop.f32.mrb[0].mxu0
    %v5145 = vpop.f32.mrb[0].mxu0
    %5146 = vdwg.mxu0
    %v5148 = vsel %vm3720, %v1479, 0
    %v5151 = vsel %vm3720, %v2599, 0
    %5153 = vmatprep.subr.bf16.mxu0 0
    %5154 = vmatpush1.bf16.xpose.msra.mxu0 %v5151
    %5155 = vmatprep.subr.bf16.mxu0 0
    %5156 = vmatpush1.bf16.xpose.msra.mxu0 0
    %5157 = vmatprep.subr.bf16.mxu0 0
    %5158 = vmatpush1.bf16.xpose.msra.mxu0 0
    %5159 = vmatprep.subr.bf16.mxu0 0
    %5160 = vmatpush1.bf16.xpose.msra.mxu0 0
    %5161 = vmatprep.subr.bf16.mxu0 0
    %5162 = vmatpush1.bf16.xpose.msra.mxu0 0
    %5163 = vmatprep.subr.bf16.mxu0 0
    %5164 = vmatpush1.bf16.xpose.msra.mxu0 0
    %5165 = vmatprep.subr.bf16.mxu0 0
    %5166 = vmatpush1.bf16.xpose.msra.mxu0 0
    %5167 = vmatprep.subr.bf16.mxu0 0
    %5168 = vmatpush1.bf16.xpose.msra.mxu0 0
    %5169 = vmatprep.subr.bf16.mxu0 0
    %5170 = vmatpush1.bf16.xpose.msra.mxu0 0
    %5171 = vmatprep.subr.bf16.mxu0 0
    %5172 = vmatpush1.bf16.xpose.msra.mxu0 0
    %5173 = vmatprep.subr.bf16.mxu0 0
    %5174 = vmatpush1.bf16.xpose.msra.mxu0 0
    %5175 = vmatprep.subr.bf16.mxu0 0
    %5176 = vmatpush1.bf16.xpose.msra.mxu0 0
    %5177 = vmatprep.subr.bf16.mxu0 0
    %5178 = vmatpush1.bf16.xpose.msra.mxu0 0
    %5179 = vmatprep.subr.bf16.mxu0 0
    %5180 = vmatpush1.bf16.xpose.msra.mxu0 0
    %5181 = vmatprep.subr.bf16.mxu0 0
    %5182 = vmatpush1.bf16.xpose.msra.mxu0 0
    %5183 = vmatprep.subr.bf16.mxu0 0
    %5184 = vmatpush1.bf16.xpose.msra.mxu0 0
    %5185 = vmatprep.mubr.bf16.mxu0 0
    %5186 = vmatmul.mubr.bf16.gmra.mrb[0].mxu0 %v5148
    %v5187 = vpop.f32.mrb[0].mxu0
    %v5188 = vadd.f32 0.0, %v5187
    %v5189 = vpop.f32.mrb[0].mxu0
    %v5190 = vpop.f32.mrb[0].mxu0
    %v5191 = vpop.f32.mrb[0].mxu0
    %5192 = vdwg.mxu0
    %v5193 = vsel %vm3720, %v3762, -inf
    %5194 = vmax.xlane.f32.xlu0 %v5193
    %v5195 = vpop.xlane.xlu0 %5194
    %v5196 = vsel %vm3720, %v3808, -inf
    %5197 = vmax.xlane.f32.xlu0 %v5196
    %v5198 = vpop.xlane.xlu0 %5197
    %v5199 = vsel %vm3720, %v3854, -inf
    %5200 = vmax.xlane.f32.xlu0 %v5199
    %v5201 = vpop.xlane.xlu0 %5200
    %v5202 = vsel %vm3720, %v3900, -inf
    %5203 = vmax.xlane.f32.xlu0 %v5202
    %v5204 = vpop.xlane.xlu0 %5203
    %v5205 = vsel %vm3720, %v3946, -inf
    %5206 = vmax.xlane.f32.xlu0 %v5205
    %v5207 = vpop.xlane.xlu0 %5206
    %v5208 = vsel %vm3720, %v3992, -inf
    %5209 = vmax.xlane.f32.xlu0 %v5208
    %v5210 = vpop.xlane.xlu0 %5209
    %v5211 = vsel %vm3720, %v4038, -inf
    %5212 = vmax.xlane.f32.xlu0 %v5211
    %v5213 = vpop.xlane.xlu0 %5212
    %v5214 = vsel %vm3720, %v4084, -inf
    %5215 = vmax.xlane.f32.xlu0 %v5214
    %v5216 = vpop.xlane.xlu0 %5215
    %v5217 = vsel %vm3720, %v4130, -inf
    %5218 = vmax.xlane.f32.xlu0 %v5217
    %v5219 = vpop.xlane.xlu0 %5218
    %v5220 = vsel %vm3720, %v4176, -inf
    %5221 = vmax.xlane.f32.xlu0 %v5220
    %v5222 = vpop.xlane.xlu0 %5221
    %v5223 = vsel %vm3720, %v4222, -inf
    %5224 = vmax.xlane.f32.xlu0 %v5223
    %v5225 = vpop.xlane.xlu0 %5224
    %v5226 = vsel %vm3720, %v4268, -inf
    %5227 = vmax.xlane.f32.xlu0 %v5226
    %v5228 = vpop.xlane.xlu0 %5227
    %v5229 = vsel %vm3720, %v4314, -inf
    %5230 = vmax.xlane.f32.xlu0 %v5229
    %v5231 = vpop.xlane.xlu0 %5230
    %v5232 = vsel %vm3720, %v4360, -inf
    %5233 = vmax.xlane.f32.xlu0 %v5232
    %v5234 = vpop.xlane.xlu0 %5233
    %v5235 = vsel %vm3720, %v4406, -inf
    %5236 = vmax.xlane.f32.xlu0 %v5235
    %v5237 = vpop.xlane.xlu0 %5236
    %v5238 = vsel %vm3720, %v4452, -inf
    %5239 = vmax.xlane.f32.xlu0 %v5238
    %v5240 = vpop.xlane.xlu0 %5239
    %v5241 = vsel %vm3720, %v4498, -inf
    %5242 = vmax.xlane.f32.xlu0 %v5241
    %v5243 = vpop.xlane.xlu0 %5242
    %v5244 = vsel %vm3720, %v4544, -inf
    %5245 = vmax.xlane.f32.xlu0 %v5244
    %v5246 = vpop.xlane.xlu0 %5245
    %v5247 = vsel %vm3720, %v4590, -inf
    %5248 = vmax.xlane.f32.xlu0 %v5247
    %v5249 = vpop.xlane.xlu0 %5248
    %v5250 = vsel %vm3720, %v4636, -inf
    %5251 = vmax.xlane.f32.xlu0 %v5250
    %v5252 = vpop.xlane.xlu0 %5251
    %v5253 = vsel %vm3720, %v4682, -inf
    %5254 = vmax.xlane.f32.xlu0 %v5253
    %v5255 = vpop.xlane.xlu0 %5254
    %v5256 = vsel %vm3720, %v4728, -inf
    %5257 = vmax.xlane.f32.xlu0 %v5256
    %v5258 = vpop.xlane.xlu0 %5257
    %v5259 = vsel %vm3720, %v4774, -inf
    %5260 = vmax.xlane.f32.xlu0 %v5259
    %v5261 = vpop.xlane.xlu0 %5260
    %v5262 = vsel %vm3720, %v4820, -inf
    %5263 = vmax.xlane.f32.xlu0 %v5262
    %v5264 = vpop.xlane.xlu0 %5263
    %v5265 = vsel %vm3720, %v4866, -inf
    %5266 = vmax.xlane.f32.xlu0 %v5265
    %v5267 = vpop.xlane.xlu0 %5266
    %v5268 = vsel %vm3720, %v4912, -inf
    %5269 = vmax.xlane.f32.xlu0 %v5268
    %v5270 = vpop.xlane.xlu0 %5269
    %v5271 = vsel %vm3720, %v4958, -inf
    %5272 = vmax.xlane.f32.xlu0 %v5271
    %v5273 = vpop.xlane.xlu0 %5272
    %v5274 = vsel %vm3720, %v5004, -inf
    %5275 = vmax.xlane.f32.xlu0 %v5274
    %v5276 = vpop.xlane.xlu0 %5275
    %v5277 = vsel %vm3720, %v5050, -inf
    %5278 = vmax.xlane.f32.xlu0 %v5277
    %v5279 = vpop.xlane.xlu0 %5278
    %v5280 = vsel %vm3720, %v5096, -inf
    %5281 = vmax.xlane.f32.xlu0 %v5280
    %v5282 = vpop.xlane.xlu0 %5281
    %v5283 = vsel %vm3720, %v5142, -inf
    %5284 = vmax.xlane.f32.xlu0 %v5283
    %v5285 = vpop.xlane.xlu0 %5284
    %v5286 = vsel %vm3720, %v5188, -inf
    %5287 = vmax.xlane.f32.xlu0 %v5286
    %v5288 = vpop.xlane.xlu0 %5287
    %v5289 = vsub.f32 %v3762, %v5195
    %v5290 = vsub.f32 %v3808, %v5198
    %v5291 = vsub.f32 %v3854, %v5201
    %v5292 = vsub.f32 %v3900, %v5204
    %v5293 = vsub.f32 %v3946, %v5207
    %v5294 = vsub.f32 %v3992, %v5210
    %v5295 = vsub.f32 %v4038, %v5213
    %v5296 = vsub.f32 %v4084, %v5216
    %v5297 = vsub.f32 %v4130, %v5219
    %v5298 = vsub.f32 %v4176, %v5222
    %v5299 = vsub.f32 %v4222, %v5225
    %v5300 = vsub.f32 %v4268, %v5228
    %v5301 = vsub.f32 %v4314, %v5231
    %v5302 = vsub.f32 %v4360, %v5234
    %v5303 = vsub.f32 %v4406, %v5237
    %v5304 = vsub.f32 %v4452, %v5240
    %v5305 = vsub.f32 %v4498, %v5243
    %v5306 = vsub.f32 %v4544, %v5246
    %v5307 = vsub.f32 %v4590, %v5249
    %v5308 = vsub.f32 %v4636, %v5252
    %v5309 = vsub.f32 %v4682, %v5255
    %v5310 = vsub.f32 %v4728, %v5258
    %v5311 = vsub.f32 %v4774, %v5261
    %v5312 = vsub.f32 %v4820, %v5264
    %v5313 = vsub.f32 %v4866, %v5267
    %v5314 = vsub.f32 %v4912, %v5270
    %v5315 = vsub.f32 %v4958, %v5273
    %v5316 = vsub.f32 %v5004, %v5276
    %v5317 = vsub.f32 %v5050, %v5279
    %v5318 = vsub.f32 %v5096, %v5282
    %v5319 = vsub.f32 %v5142, %v5285
    %v5320 = vsub.f32 %v5188, %v5288
    %v5321 = vmul.f32 %v5289, 1.442695
    %v5322 = vpow.pop %v5321
    %v5323 = vmul.f32 %v5290, 1.442695
    %v5324 = vpow.pop %v5323
    %v5325 = vmul.f32 %v5291, 1.442695
    %v5326 = vpow.pop %v5325
    %v5327 = vmul.f32 %v5292, 1.442695
    %v5328 = vpow.pop %v5327
    %v5329 = vmul.f32 %v5293, 1.442695
    %v5330 = vpow.pop %v5329
    %v5331 = vmul.f32 %v5294, 1.442695
    %v5332 = vpow.pop %v5331
    %v5333 = vmul.f32 %v5295, 1.442695
    %v5334 = vpow.pop %v5333
    %v5335 = vmul.f32 %v5296, 1.442695
    %v5336 = vpow.pop %v5335
    %v5337 = vmul.f32 %v5297, 1.442695
    %v5338 = vpow.pop %v5337
    %v5339 = vmul.f32 %v5298, 1.442695
    %v5340 = vpow.pop %v5339
    %v5341 = vmul.f32 %v5299, 1.442695
    %v5342 = vpow.pop %v5341
    %v5343 = vmul.f32 %v5300, 1.442695
    %v5344 = vpow.pop %v5343
    %v5345 = vmul.f32 %v5301, 1.442695
    %v5346 = vpow.pop %v5345
    %v5347 = vmul.f32 %v5302, 1.442695
    %v5348 = vpow.pop %v5347
    %v5349 = vmul.f32 %v5303, 1.442695
    %v5350 = vpow.pop %v5349
    %v5351 = vmul.f32 %v5304, 1.442695
    %v5352 = vpow.pop %v5351
    %v5353 = vmul.f32 %v5305, 1.442695
    %v5354 = vpow.pop %v5353
    %v5355 = vmul.f32 %v5306, 1.442695
    %v5356 = vpow.pop %v5355
    %v5357 = vmul.f32 %v5307, 1.442695
    %v5358 = vpow.pop %v5357
    %v5359 = vmul.f32 %v5308, 1.442695
    %v5360 = vpow.pop %v5359
    %v5361 = vmul.f32 %v5309, 1.442695
    %v5362 = vpow.pop %v5361
    %v5363 = vmul.f32 %v5310, 1.442695
    %v5364 = vpow.pop %v5363
    %v5365 = vmul.f32 %v5311, 1.442695
    %v5366 = vpow.pop %v5365
    %v5367 = vmul.f32 %v5312, 1.442695
    %v5368 = vpow.pop %v5367
    %v5369 = vmul.f32 %v5313, 1.442695
    %v5370 = vpow.pop %v5369
    %v5371 = vmul.f32 %v5314, 1.442695
    %v5372 = vpow.pop %v5371
    %v5373 = vmul.f32 %v5315, 1.442695
    %v5374 = vpow.pop %v5373
    %v5375 = vmul.f32 %v5316, 1.442695
    %v5376 = vpow.pop %v5375
    %v5377 = vmul.f32 %v5317, 1.442695
    %v5378 = vpow.pop %v5377
    %v5379 = vmul.f32 %v5318, 1.442695
    %v5380 = vpow.pop %v5379
    %v5381 = vmul.f32 %v5319, 1.442695
    %v5382 = vpow.pop %v5381
    %v5383 = vmul.f32 %v5320, 1.442695
    %v5384 = vpow.pop %v5383
    %v5385 = vsel %vm3720, %v5322, 0.0
    %5386 = vadd.xlane.f32.xlu0 %v5385
    %v5387 = vpop.xlane.xlu0 %5386
    %v5388 = vsel %vm3720, %v5324, 0.0
    %5389 = vadd.xlane.f32.xlu0 %v5388
    %v5390 = vpop.xlane.xlu0 %5389
    %v5391 = vsel %vm3720, %v5326, 0.0
    %5392 = vadd.xlane.f32.xlu0 %v5391
    %v5393 = vpop.xlane.xlu0 %5392
    %v5394 = vsel %vm3720, %v5328, 0.0
    %5395 = vadd.xlane.f32.xlu0 %v5394
    %v5396 = vpop.xlane.xlu0 %5395
    %v5397 = vsel %vm3720, %v5330, 0.0
    %5398 = vadd.xlane.f32.xlu0 %v5397
    %v5399 = vpop.xlane.xlu0 %5398
    %v5400 = vsel %vm3720, %v5332, 0.0
    %5401 = vadd.xlane.f32.xlu0 %v5400
    %v5402 = vpop.xlane.xlu0 %5401
    %v5403 = vsel %vm3720, %v5334, 0.0
    %5404 = vadd.xlane.f32.xlu0 %v5403
    %v5405 = vpop.xlane.xlu0 %5404
    %v5406 = vsel %vm3720, %v5336, 0.0
    %5407 = vadd.xlane.f32.xlu0 %v5406
    %v5408 = vpop.xlane.xlu0 %5407
    %v5409 = vsel %vm3720, %v5338, 0.0
    %5410 = vadd.xlane.f32.xlu0 %v5409
    %v5411 = vpop.xlane.xlu0 %5410
    %v5412 = vsel %vm3720, %v5340, 0.0
    %5413 = vadd.xlane.f32.xlu0 %v5412
    %v5414 = vpop.xlane.xlu0 %5413
    %v5415 = vsel %vm3720, %v5342, 0.0
    %5416 = vadd.xlane.f32.xlu0 %v5415
    %v5417 = vpop.xlane.xlu0 %5416
    %v5418 = vsel %vm3720, %v5344, 0.0
    %5419 = vadd.xlane.f32.xlu0 %v5418
    %v5420 = vpop.xlane.xlu0 %5419
    %v5421 = vsel %vm3720, %v5346, 0.0
    %5422 = vadd.xlane.f32.xlu0 %v5421
    %v5423 = vpop.xlane.xlu0 %5422
    %v5424 = vsel %vm3720, %v5348, 0.0
    %5425 = vadd.xlane.f32.xlu0 %v5424
    %v5426 = vpop.xlane.xlu0 %5425
    %v5427 = vsel %vm3720, %v5350, 0.0
    %5428 = vadd.xlane.f32.xlu0 %v5427
    %v5429 = vpop.xlane.xlu0 %5428
    %v5430 = vsel %vm3720, %v5352, 0.0
    %5431 = vadd.xlane.f32.xlu0 %v5430
    %v5432 = vpop.xlane.xlu0 %5431
    %v5433 = vsel %vm3720, %v5354, 0.0
    %5434 = vadd.xlane.f32.xlu0 %v5433
    %v5435 = vpop.xlane.xlu0 %5434
    %v5436 = vsel %vm3720, %v5356, 0.0
    %5437 = vadd.xlane.f32.xlu0 %v5436
    %v5438 = vpop.xlane.xlu0 %5437
    %v5439 = vsel %vm3720, %v5358, 0.0
    %5440 = vadd.xlane.f32.xlu0 %v5439
    %v5441 = vpop.xlane.xlu0 %5440
    %v5442 = vsel %vm3720, %v5360, 0.0
    %5443 = vadd.xlane.f32.xlu0 %v5442
    %v5444 = vpop.xlane.xlu0 %5443
    %v5445 = vsel %vm3720, %v5362, 0.0
    %5446 = vadd.xlane.f32.xlu0 %v5445
    %v5447 = vpop.xlane.xlu0 %5446
    %v5448 = vsel %vm3720, %v5364, 0.0
    %5449 = vadd.xlane.f32.xlu0 %v5448
    %v5450 = vpop.xlane.xlu0 %5449
    %v5451 = vsel %vm3720, %v5366, 0.0
    %5452 = vadd.xlane.f32.xlu0 %v5451
    %v5453 = vpop.xlane.xlu0 %5452
    %v5454 = vsel %vm3720, %v5368, 0.0
    %5455 = vadd.xlane.f32.xlu0 %v5454
    %v5456 = vpop.xlane.xlu0 %5455
    %v5457 = vsel %vm3720, %v5370, 0.0
    %5458 = vadd.xlane.f32.xlu0 %v5457
    %v5459 = vpop.xlane.xlu0 %5458
    %v5460 = vsel %vm3720, %v5372, 0.0
    %5461 = vadd.xlane.f32.xlu0 %v5460
    %v5462 = vpop.xlane.xlu0 %5461
    %v5463 = vsel %vm3720, %v5374, 0.0
    %5464 = vadd.xlane.f32.xlu0 %v5463
    %v5465 = vpop.xlane.xlu0 %5464
    %v5466 = vsel %vm3720, %v5376, 0.0
    %5467 = vadd.xlane.f32.xlu0 %v5466
    %v5468 = vpop.xlane.xlu0 %5467
    %v5469 = vsel %vm3720, %v5378, 0.0
    %5470 = vadd.xlane.f32.xlu0 %v5469
    %v5471 = vpop.xlane.xlu0 %5470
    %v5472 = vsel %vm3720, %v5380, 0.0
    %5473 = vadd.xlane.f32.xlu0 %v5472
    %v5474 = vpop.xlane.xlu0 %5473
    %v5475 = vsel %vm3720, %v5382, 0.0
    %5476 = vadd.xlane.f32.xlu0 %v5475
    %v5477 = vpop.xlane.xlu0 %5476
    %v5478 = vsel %vm3720, %v5384, 0.0
    %5479 = vadd.xlane.f32.xlu0 %v5478
    %v5480 = vpop.xlane.xlu0 %5479
    %v5481 = vrcp.pop %v5387
    %v5482 = vrcp.pop %v5390
    %v5483 = vrcp.pop %v5393
    %v5484 = vrcp.pop %v5396
    %v5485 = vrcp.pop %v5399
    %v5486 = vrcp.pop %v5402
    %v5487 = vrcp.pop %v5405
    %v5488 = vrcp.pop %v5408
    %v5489 = vrcp.pop %v5411
    %v5490 = vrcp.pop %v5414
    %v5491 = vrcp.pop %v5417
    %v5492 = vrcp.pop %v5420
    %v5493 = vrcp.pop %v5423
    %v5494 = vrcp.pop %v5426
    %v5495 = vrcp.pop %v5429
    %v5496 = vrcp.pop %v5432
    %v5497 = vrcp.pop %v5435
    %v5498 = vrcp.pop %v5438
    %v5499 = vrcp.pop %v5441
    %v5500 = vrcp.pop %v5444
    %v5501 = vrcp.pop %v5447
    %v5502 = vrcp.pop %v5450
    %v5503 = vrcp.pop %v5453
    %v5504 = vrcp.pop %v5456
    %v5505 = vrcp.pop %v5459
    %v5506 = vrcp.pop %v5462
    %v5507 = vrcp.pop %v5465
    %v5508 = vrcp.pop %v5468
    %v5509 = vrcp.pop %v5471
    %v5510 = vrcp.pop %v5474
    %v5511 = vrcp.pop %v5477
    %v5512 = vrcp.pop %v5480
    %v5513 = vmul.f32 %v5322, %v5481
    %v5514 = vmul.f32 %v5324, %v5482
    %v5515 = vmul.f32 %v5326, %v5483
    %v5516 = vmul.f32 %v5328, %v5484
    %v5517 = vmul.f32 %v5330, %v5485
    %v5518 = vmul.f32 %v5332, %v5486
    %v5519 = vmul.f32 %v5334, %v5487
    %v5520 = vmul.f32 %v5336, %v5488
    %v5521 = vmul.f32 %v5338, %v5489
    %v5522 = vmul.f32 %v5340, %v5490
    %v5523 = vmul.f32 %v5342, %v5491
    %v5524 = vmul.f32 %v5344, %v5492
    %v5525 = vmul.f32 %v5346, %v5493
    %v5526 = vmul.f32 %v5348, %v5494
    %v5527 = vmul.f32 %v5350, %v5495
    %v5528 = vmul.f32 %v5352, %v5496
    %v5529 = vmul.f32 %v5354, %v5497
    %v5530 = vmul.f32 %v5356, %v5498
    %v5531 = vmul.f32 %v5358, %v5499
    %v5532 = vmul.f32 %v5360, %v5500
    %v5533 = vmul.f32 %v5362, %v5501
    %v5534 = vmul.f32 %v5364, %v5502
    %v5535 = vmul.f32 %v5366, %v5503
    %v5536 = vmul.f32 %v5368, %v5504
    %v5537 = vmul.f32 %v5370, %v5505
    %v5538 = vmul.f32 %v5372, %v5506
    %v5539 = vmul.f32 %v5374, %v5507
    %v5540 = vmul.f32 %v5376, %v5508
    %v5541 = vmul.f32 %v5378, %v5509
    %v5542 = vmul.f32 %v5380, %v5510
    %v5543 = vmul.f32 %v5382, %v5511
    %v5544 = vmul.f32 %v5384, %v5512
    %v5545 = vpack.c.bf16 %v5513, %v5513
    %v5546 = vpack.c.bf16 %v5514, %v5514
    %v5547 = vpack.c.bf16 %v5515, %v5515
    %v5548 = vpack.c.bf16 %v5516, %v5516
    %v5549 = vpack.c.bf16 %v5517, %v5517
    %v5550 = vpack.c.bf16 %v5518, %v5518
    %v5551 = vpack.c.bf16 %v5519, %v5519
    %v5552 = vpack.c.bf16 %v5520, %v5520
    %v5553 = vpack.c.bf16 %v5521, %v5521
    %v5554 = vpack.c.bf16 %v5522, %v5522
    %v5555 = vpack.c.bf16 %v5523, %v5523
    %v5556 = vpack.c.bf16 %v5524, %v5524
    %v5557 = vpack.c.bf16 %v5525, %v5525
    %v5558 = vpack.c.bf16 %v5526, %v5526
    %v5559 = vpack.c.bf16 %v5527, %v5527
    %v5560 = vpack.c.bf16 %v5528, %v5528
    %v5561 = vpack.c.bf16 %v5529, %v5529
    %v5562 = vpack.c.bf16 %v5530, %v5530
    %v5563 = vpack.c.bf16 %v5531, %v5531
    %v5564 = vpack.c.bf16 %v5532, %v5532
    %v5565 = vpack.c.bf16 %v5533, %v5533
    %v5566 = vpack.c.bf16 %v5534, %v5534
    %v5567 = vpack.c.bf16 %v5535, %v5535
    %v5568 = vpack.c.bf16 %v5536, %v5536
    %v5569 = vpack.c.bf16 %v5537, %v5537
    %v5570 = vpack.c.bf16 %v5538, %v5538
    %v5571 = vpack.c.bf16 %v5539, %v5539
    %v5572 = vpack.c.bf16 %v5540, %v5540
    %v5573 = vpack.c.bf16 %v5541, %v5541
    %v5574 = vpack.c.bf16 %v5542, %v5542
    %v5575 = vpack.c.bf16 %v5543, %v5543
    %v5576 = vpack.c.bf16 %v5544, %v5544
    %v5578 = vsel %vm3720, %v5545, 0
    %vm5580 = vcmask 1043456
    %v5582 = vsel %vm5580, %v3626, 0
    %5584 = vmatprep.subr.bf16.mxu0 0
    %5585 = vmatpush1.bf16.msra.mxu0 %v5582
    %5586 = vmatprep.subr.bf16.mxu0 0
    %5587 = vmatpush1.bf16.msra.mxu0 0
    %5588 = vmatprep.subr.bf16.mxu0 0
    %5589 = vmatpush1.bf16.msra.mxu0 0
    %5590 = vmatprep.subr.bf16.mxu0 0
    %5591 = vmatpush1.bf16.msra.mxu0 0
    %5592 = vmatprep.subr.bf16.mxu0 0
    %5593 = vmatpush1.bf16.msra.mxu0 0
    %5594 = vmatprep.subr.bf16.mxu0 0
    %5595 = vmatpush1.bf16.msra.mxu0 0
    %5596 = vmatprep.subr.bf16.mxu0 0
    %5597 = vmatpush1.bf16.msra.mxu0 0
    %5598 = vmatprep.subr.bf16.mxu0 0
    %5599 = vmatpush1.bf16.msra.mxu0 0
    %5600 = vmatprep.subr.bf16.mxu0 0
    %5601 = vmatpush1.bf16.msra.mxu0 0
    %5602 = vmatprep.subr.bf16.mxu0 0
    %5603 = vmatpush1.bf16.msra.mxu0 0
    %5604 = vmatprep.subr.bf16.mxu0 0
    %5605 = vmatpush1.bf16.msra.mxu0 0
    %5606 = vmatprep.subr.bf16.mxu0 0
    %5607 = vmatpush1.bf16.msra.mxu0 0
    %5608 = vmatprep.subr.bf16.mxu0 0
    %5609 = vmatpush1.bf16.msra.mxu0 0
    %5610 = vmatprep.subr.bf16.mxu0 0
    %5611 = vmatpush1.bf16.msra.mxu0 0
    %5612 = vmatprep.subr.bf16.mxu0 0
    %5613 = vmatpush1.bf16.msra.mxu0 0
    %5614 = vmatprep.subr.bf16.mxu0 0
    %5615 = vmatpush1.bf16.msra.mxu0 0
    %5616 = vmatprep.mubr.bf16.mxu0 0
    %5617 = vmatmul.mubr.bf16.gmra.mrb[0].mxu0 %v5578
    %v5618 = vpop.f32.mrb[0].mxu0
    %v5619 = vadd.f32 0.0, %v5618
    %v5620 = vpop.f32.mrb[0].mxu0
    %v5621 = vpop.f32.mrb[0].mxu0
    %v5622 = vpop.f32.mrb[0].mxu0
    %5623 = vdwg.mxu0
    %v5625 = vsel %vm3720, %v5546, 0
    %v5628 = vsel %vm5580, %v3629, 0
    %5630 = vmatprep.subr.bf16.mxu0 0
    %5631 = vmatpush1.bf16.msra.mxu0 %v5628
    %5632 = vmatprep.subr.bf16.mxu0 0
    %5633 = vmatpush1.bf16.msra.mxu0 0
    %5634 = vmatprep.subr.bf16.mxu0 0
    %5635 = vmatpush1.bf16.msra.mxu0 0
    %5636 = vmatprep.subr.bf16.mxu0 0
    %5637 = vmatpush1.bf16.msra.mxu0 0
    %5638 = vmatprep.subr.bf16.mxu0 0
    %5639 = vmatpush1.bf16.msra.mxu0 0
    %5640 = vmatprep.subr.bf16.mxu0 0
    %5641 = vmatpush1.bf16.msra.mxu0 0
    %5642 = vmatprep.subr.bf16.mxu0 0
    %5643 = vmatpush1.bf16.msra.mxu0 0
    %5644 = vmatprep.subr.bf16.mxu0 0
    %5645 = vmatpush1.bf16.msra.mxu0 0
    %5646 = vmatprep.subr.bf16.mxu0 0
    %5647 = vmatpush1.bf16.msra.mxu0 0
    %5648 = vmatprep.subr.bf16.mxu0 0
    %5649 = vmatpush1.bf16.msra.mxu0 0
    %5650 = vmatprep.subr.bf16.mxu0 0
    %5651 = vmatpush1.bf16.msra.mxu0 0
    %5652 = vmatprep.subr.bf16.mxu0 0
    %5653 = vmatpush1.bf16.msra.mxu0 0
    %5654 = vmatprep.subr.bf16.mxu0 0
    %5655 = vmatpush1.bf16.msra.mxu0 0
    %5656 = vmatprep.subr.bf16.mxu0 0
    %5657 = vmatpush1.bf16.msra.mxu0 0
    %5658 = vmatprep.subr.bf16.mxu0 0
    %5659 = vmatpush1.bf16.msra.mxu0 0
    %5660 = vmatprep.subr.bf16.mxu0 0
    %5661 = vmatpush1.bf16.msra.mxu0 0
    %5662 = vmatprep.mubr.bf16.mxu0 0
    %5663 = vmatmul.mubr.bf16.gmra.mrb[0].mxu0 %v5625
    %v5664 = vpop.f32.mrb[0].mxu0
    %v5665 = vadd.f32 0.0, %v5664
    %v5666 = vpop.f32.mrb[0].mxu0
    %v5667 = vpop.f32.mrb[0].mxu0
    %v5668 = vpop.f32.mrb[0].mxu0
    %5669 = vdwg.mxu0
    %v5671 = vsel %vm3720, %v5547, 0
    %v5674 = vsel %vm5580, %v3632, 0
    %5676 = vmatprep.subr.bf16.mxu0 0
    %5677 = vmatpush1.bf16.msra.mxu0 %v5674
    %5678 = vmatprep.subr.bf16.mxu0 0
    %5679 = vmatpush1.bf16.msra.mxu0 0
    %5680 = vmatprep.subr.bf16.mxu0 0
    %5681 = vmatpush1.bf16.msra.mxu0 0
    %5682 = vmatprep.subr.bf16.mxu0 0
    %5683 = vmatpush1.bf16.msra.mxu0 0
    %5684 = vmatprep.subr.bf16.mxu0 0
    %5685 = vmatpush1.bf16.msra.mxu0 0
    %5686 = vmatprep.subr.bf16.mxu0 0
    %5687 = vmatpush1.bf16.msra.mxu0 0
    %5688 = vmatprep.subr.bf16.mxu0 0
    %5689 = vmatpush1.bf16.msra.mxu0 0
    %5690 = vmatprep.subr.bf16.mxu0 0
    %5691 = vmatpush1.bf16.msra.mxu0 0
    %5692 = vmatprep.subr.bf16.mxu0 0
    %5693 = vmatpush1.bf16.msra.mxu0 0
    %5694 = vmatprep.subr.bf16.mxu0 0
    %5695 = vmatpush1.bf16.msra.mxu0 0
    %5696 = vmatprep.subr.bf16.mxu0 0
    %5697 = vmatpush1.bf16.msra.mxu0 0
    %5698 = vmatprep.subr.bf16.mxu0 0
    %5699 = vmatpush1.bf16.msra.mxu0 0
    %5700 = vmatprep.subr.bf16.mxu0 0
    %5701 = vmatpush1.bf16.msra.mxu0 0
    %5702 = vmatprep.subr.bf16.mxu0 0
    %5703 = vmatpush1.bf16.msra.mxu0 0
    %5704 = vmatprep.subr.bf16.mxu0 0
    %5705 = vmatpush1.bf16.msra.mxu0 0
    %5706 = vmatprep.subr.bf16.mxu0 0
    %5707 = vmatpush1.bf16.msra.mxu0 0
    %5708 = vmatprep.mubr.bf16.mxu0 0
    %5709 = vmatmul.mubr.bf16.gmra.mrb[0].mxu0 %v5671
    %v5710 = vpop.f32.mrb[0].mxu0
    %v5711 = vadd.f32 0.0, %v5710
    %v5712 = vpop.f32.mrb[0].mxu0
    %v5713 = vpop.f32.mrb[0].mxu0
    %v5714 = vpop.f32.mrb[0].mxu0
    %5715 = vdwg.mxu0
    %v5717 = vsel %vm3720, %v5548, 0
    %v5720 = vsel %vm5580, %v3635, 0
    %5722 = vmatprep.subr.bf16.mxu0 0
    %5723 = vmatpush1.bf16.msra.mxu0 %v5720
    %5724 = vmatprep.subr.bf16.mxu0 0
    %5725 = vmatpush1.bf16.msra.mxu0 0
    %5726 = vmatprep.subr.bf16.mxu0 0
    %5727 = vmatpush1.bf16.msra.mxu0 0
    %5728 = vmatprep.subr.bf16.mxu0 0
    %5729 = vmatpush1.bf16.msra.mxu0 0
    %5730 = vmatprep.subr.bf16.mxu0 0
    %5731 = vmatpush1.bf16.msra.mxu0 0
    %5732 = vmatprep.subr.bf16.mxu0 0
    %5733 = vmatpush1.bf16.msra.mxu0 0
    %5734 = vmatprep.subr.bf16.mxu0 0
    %5735 = vmatpush1.bf16.msra.mxu0 0
    %5736 = vmatprep.subr.bf16.mxu0 0
    %5737 = vmatpush1.bf16.msra.mxu0 0
    %5738 = vmatprep.subr.bf16.mxu0 0
    %5739 = vmatpush1.bf16.msra.mxu0 0
    %5740 = vmatprep.subr.bf16.mxu0 0
    %5741 = vmatpush1.bf16.msra.mxu0 0
    %5742 = vmatprep.subr.bf16.mxu0 0
    %5743 = vmatpush1.bf16.msra.mxu0 0
    %5744 = vmatprep.subr.bf16.mxu0 0
    %5745 = vmatpush1.bf16.msra.mxu0 0
    %5746 = vmatprep.subr.bf16.mxu0 0
    %5747 = vmatpush1.bf16.msra.mxu0 0
    %5748 = vmatprep.subr.bf16.mxu0 0
    %5749 = vmatpush1.bf16.msra.mxu0 0
    %5750 = vmatprep.subr.bf16.mxu0 0
    %5751 = vmatpush1.bf16.msra.mxu0 0
    %5752 = vmatprep.subr.bf16.mxu0 0
    %5753 = vmatpush1.bf16.msra.mxu0 0
    %5754 = vmatprep.mubr.bf16.mxu0 0
    %5755 = vmatmul.mubr.bf16.gmra.mrb[0].mxu0 %v5717
    %v5756 = vpop.f32.mrb[0].mxu0
    %v5757 = vadd.f32 0.0, %v5756
    %v5758 = vpop.f32.mrb[0].mxu0
    %v5759 = vpop.f32.mrb[0].mxu0
    %v5760 = vpop.f32.mrb[0].mxu0
    %5761 = vdwg.mxu0
    %v5763 = vsel %vm3720, %v5549, 0
    %v5766 = vsel %vm5580, %v3638, 0
    %5768 = vmatprep.subr.bf16.mxu0 0
    %5769 = vmatpush1.bf16.msra.mxu0 %v5766
    %5770 = vmatprep.subr.bf16.mxu0 0
    %5771 = vmatpush1.bf16.msra.mxu0 0
    %5772 = vmatprep.subr.bf16.mxu0 0
    %5773 = vmatpush1.bf16.msra.mxu0 0
    %5774 = vmatprep.subr.bf16.mxu0 0
    %5775 = vmatpush1.bf16.msra.mxu0 0
    %5776 = vmatprep.subr.bf16.mxu0 0
    %5777 = vmatpush1.bf16.msra.mxu0 0
    %5778 = vmatprep.subr.bf16.mxu0 0
    %5779 = vmatpush1.bf16.msra.mxu0 0
    %5780 = vmatprep.subr.bf16.mxu0 0
    %5781 = vmatpush1.bf16.msra.mxu0 0
    %5782 = vmatprep.subr.bf16.mxu0 0
    %5783 = vmatpush1.bf16.msra.mxu0 0
    %5784 = vmatprep.subr.bf16.mxu0 0
    %5785 = vmatpush1.bf16.msra.mxu0 0
    %5786 = vmatprep.subr.bf16.mxu0 0
    %5787 = vmatpush1.bf16.msra.mxu0 0
    %5788 = vmatprep.subr.bf16.mxu0 0
    %5789 = vmatpush1.bf16.msra.mxu0 0
    %5790 = vmatprep.subr.bf16.mxu0 0
    %5791 = vmatpush1.bf16.msra.mxu0 0
    %5792 = vmatprep.subr.bf16.mxu0 0
    %5793 = vmatpush1.bf16.msra.mxu0 0
    %5794 = vmatprep.subr.bf16.mxu0 0
    %5795 = vmatpush1.bf16.msra.mxu0 0
    %5796 = vmatprep.subr.bf16.mxu0 0
    %5797 = vmatpush1.bf16.msra.mxu0 0
    %5798 = vmatprep.subr.bf16.mxu0 0
    %5799 = vmatpush1.bf16.msra.mxu0 0
    %5800 = vmatprep.mubr.bf16.mxu0 0
    %5801 = vmatmul.mubr.bf16.gmra.mrb[0].mxu0 %v5763
    %v5802 = vpop.f32.mrb[0].mxu0
    %v5803 = vadd.f32 0.0, %v5802
    %v5804 = vpop.f32.mrb[0].mxu0
    %v5805 = vpop.f32.mrb[0].mxu0
    %v5806 = vpop.f32.mrb[0].mxu0
    %5807 = vdwg.mxu0
    %v5809 = vsel %vm3720, %v5550, 0
    %v5812 = vsel %vm5580, %v3641, 0
    %5814 = vmatprep.subr.bf16.mxu0 0
    %5815 = vmatpush1.bf16.msra.mxu0 %v5812
    %5816 = vmatprep.subr.bf16.mxu0 0
    %5817 = vmatpush1.bf16.msra.mxu0 0
    %5818 = vmatprep.subr.bf16.mxu0 0
    %5819 = vmatpush1.bf16.msra.mxu0 0
    %5820 = vmatprep.subr.bf16.mxu0 0
    %5821 = vmatpush1.bf16.msra.mxu0 0
    %5822 = vmatprep.subr.bf16.mxu0 0
    %5823 = vmatpush1.bf16.msra.mxu0 0
    %5824 = vmatprep.subr.bf16.mxu0 0
    %5825 = vmatpush1.bf16.msra.mxu0 0
    %5826 = vmatprep.subr.bf16.mxu0 0
    %5827 = vmatpush1.bf16.msra.mxu0 0
    %5828 = vmatprep.subr.bf16.mxu0 0
    %5829 = vmatpush1.bf16.msra.mxu0 0
    %5830 = vmatprep.subr.bf16.mxu0 0
    %5831 = vmatpush1.bf16.msra.mxu0 0
    %5832 = vmatprep.subr.bf16.mxu0 0
    %5833 = vmatpush1.bf16.msra.mxu0 0
    %5834 = vmatprep.subr.bf16.mxu0 0
    %5835 = vmatpush1.bf16.msra.mxu0 0
    %5836 = vmatprep.subr.bf16.mxu0 0
    %5837 = vmatpush1.bf16.msra.mxu0 0
    %5838 = vmatprep.subr.bf16.mxu0 0
    %5839 = vmatpush1.bf16.msra.mxu0 0
    %5840 = vmatprep.subr.bf16.mxu0 0
    %5841 = vmatpush1.bf16.msra.mxu0 0
    %5842 = vmatprep.subr.bf16.mxu0 0
    %5843 = vmatpush1.bf16.msra.mxu0 0
    %5844 = vmatprep.subr.bf16.mxu0 0
    %5845 = vmatpush1.bf16.msra.mxu0 0
    %5846 = vmatprep.mubr.bf16.mxu0 0
    %5847 = vmatmul.mubr.bf16.gmra.mrb[0].mxu0 %v5809
    %v5848 = vpop.f32.mrb[0].mxu0
    %v5849 = vadd.f32 0.0, %v5848
    %v5850 = vpop.f32.mrb[0].mxu0
    %v5851 = vpop.f32.mrb[0].mxu0
    %v5852 = vpop.f32.mrb[0].mxu0
    %5853 = vdwg.mxu0
    %v5855 = vsel %vm3720, %v5551, 0
    %v5858 = vsel %vm5580, %v3644, 0
    %5860 = vmatprep.subr.bf16.mxu0 0
    %5861 = vmatpush1.bf16.msra.mxu0 %v5858
    %5862 = vmatprep.subr.bf16.mxu0 0
    %5863 = vmatpush1.bf16.msra.mxu0 0
    %5864 = vmatprep.subr.bf16.mxu0 0
    %5865 = vmatpush1.bf16.msra.mxu0 0
    %5866 = vmatprep.subr.bf16.mxu0 0
    %5867 = vmatpush1.bf16.msra.mxu0 0
    %5868 = vmatprep.subr.bf16.mxu0 0
    %5869 = vmatpush1.bf16.msra.mxu0 0
    %5870 = vmatprep.subr.bf16.mxu0 0
    %5871 = vmatpush1.bf16.msra.mxu0 0
    %5872 = vmatprep.subr.bf16.mxu0 0
    %5873 = vmatpush1.bf16.msra.mxu0 0
    %5874 = vmatprep.subr.bf16.mxu0 0
    %5875 = vmatpush1.bf16.msra.mxu0 0
    %5876 = vmatprep.subr.bf16.mxu0 0
    %5877 = vmatpush1.bf16.msra.mxu0 0
    %5878 = vmatprep.subr.bf16.mxu0 0
    %5879 = vmatpush1.bf16.msra.mxu0 0
    %5880 = vmatprep.subr.bf16.mxu0 0
    %5881 = vmatpush1.bf16.msra.mxu0 0
    %5882 = vmatprep.subr.bf16.mxu0 0
    %5883 = vmatpush1.bf16.msra.mxu0 0
    %5884 = vmatprep.subr.bf16.mxu0 0
    %5885 = vmatpush1.bf16.msra.mxu0 0
    %5886 = vmatprep.subr.bf16.mxu0 0
    %5887 = vmatpush1.bf16.msra.mxu0 0
    %5888 = vmatprep.subr.bf16.mxu0 0
    %5889 = vmatpush1.bf16.msra.mxu0 0
    %5890 = vmatprep.subr.bf16.mxu0 0
    %5891 = vmatpush1.bf16.msra.mxu0 0
    %5892 = vmatprep.mubr.bf16.mxu0 0
    %5893 = vmatmul.mubr.bf16.gmra.mrb[0].mxu0 %v5855
    %v5894 = vpop.f32.mrb[0].mxu0
    %v5895 = vadd.f32 0.0, %v5894
    %v5896 = vpop.f32.mrb[0].mxu0
    %v5897 = vpop.f32.mrb[0].mxu0
    %v5898 = vpop.f32.mrb[0].mxu0
    %5899 = vdwg.mxu0
    %v5901 = vsel %vm3720, %v5552, 0
    %v5904 = vsel %vm5580, %v3647, 0
    %5906 = vmatprep.subr.bf16.mxu0 0
    %5907 = vmatpush1.bf16.msra.mxu0 %v5904
    %5908 = vmatprep.subr.bf16.mxu0 0
    %5909 = vmatpush1.bf16.msra.mxu0 0
    %5910 = vmatprep.subr.bf16.mxu0 0
    %5911 = vmatpush1.bf16.msra.mxu0 0
    %5912 = vmatprep.subr.bf16.mxu0 0
    %5913 = vmatpush1.bf16.msra.mxu0 0
    %5914 = vmatprep.subr.bf16.mxu0 0
    %5915 = vmatpush1.bf16.msra.mxu0 0
    %5916 = vmatprep.subr.bf16.mxu0 0
    %5917 = vmatpush1.bf16.msra.mxu0 0
    %5918 = vmatprep.subr.bf16.mxu0 0
    %5919 = vmatpush1.bf16.msra.mxu0 0
    %5920 = vmatprep.subr.bf16.mxu0 0
    %5921 = vmatpush1.bf16.msra.mxu0 0
    %5922 = vmatprep.subr.bf16.mxu0 0
    %5923 = vmatpush1.bf16.msra.mxu0 0
    %5924 = vmatprep.subr.bf16.mxu0 0
    %5925 = vmatpush1.bf16.msra.mxu0 0
    %5926 = vmatprep.subr.bf16.mxu0 0
    %5927 = vmatpush1.bf16.msra.mxu0 0
    %5928 = vmatprep.subr.bf16.mxu0 0
    %5929 = vmatpush1.bf16.msra.mxu0 0
    %5930 = vmatprep.subr.bf16.mxu0 0
    %5931 = vmatpush1.bf16.msra.mxu0 0
    %5932 = vmatprep.subr.bf16.mxu0 0
    %5933 = vmatpush1.bf16.msra.mxu0 0
    %5934 = vmatprep.subr.bf16.mxu0 0
    %5935 = vmatpush1.bf16.msra.mxu0 0
    %5936 = vmatprep.subr.bf16.mxu0 0
    %5937 = vmatpush1.bf16.msra.mxu0 0
    %5938 = vmatprep.mubr.bf16.mxu0 0
    %5939 = vmatmul.mubr.bf16.gmra.mrb[0].mxu0 %v5901
    %v5940 = vpop.f32.mrb[0].mxu0
    %v5941 = vadd.f32 0.0, %v5940
    %v5942 = vpop.f32.mrb[0].mxu0
    %v5943 = vpop.f32.mrb[0].mxu0
    %v5944 = vpop.f32.mrb[0].mxu0
    %5945 = vdwg.mxu0
    %v5947 = vsel %vm3720, %v5553, 0
    %v5950 = vsel %vm5580, %v3650, 0
    %5952 = vmatprep.subr.bf16.mxu0 0
    %5953 = vmatpush1.bf16.msra.mxu0 %v5950
    %5954 = vmatprep.subr.bf16.mxu0 0
    %5955 = vmatpush1.bf16.msra.mxu0 0
    %5956 = vmatprep.subr.bf16.mxu0 0
    %5957 = vmatpush1.bf16.msra.mxu0 0
    %5958 = vmatprep.subr.bf16.mxu0 0
    %5959 = vmatpush1.bf16.msra.mxu0 0
    %5960 = vmatprep.subr.bf16.mxu0 0
    %5961 = vmatpush1.bf16.msra.mxu0 0
    %5962 = vmatprep.subr.bf16.mxu0 0
    %5963 = vmatpush1.bf16.msra.mxu0 0
    %5964 = vmatprep.subr.bf16.mxu0 0
    %5965 = vmatpush1.bf16.msra.mxu0 0
    %5966 = vmatprep.subr.bf16.mxu0 0
    %5967 = vmatpush1.bf16.msra.mxu0 0
    %5968 = vmatprep.subr.bf16.mxu0 0
    %5969 = vmatpush1.bf16.msra.mxu0 0
    %5970 = vmatprep.subr.bf16.mxu0 0
    %5971 = vmatpush1.bf16.msra.mxu0 0
    %5972 = vmatprep.subr.bf16.mxu0 0
    %5973 = vmatpush1.bf16.msra.mxu0 0
    %5974 = vmatprep.subr.bf16.mxu0 0
    %5975 = vmatpush1.bf16.msra.mxu0 0
    %5976 = vmatprep.subr.bf16.mxu0 0
    %5977 = vmatpush1.bf16.msra.mxu0 0
    %5978 = vmatprep.subr.bf16.mxu0 0
    %5979 = vmatpush1.bf16.msra.mxu0 0
    %5980 = vmatprep.subr.bf16.mxu0 0
    %5981 = vmatpush1.bf16.msra.mxu0 0
    %5982 = vmatprep.subr.bf16.mxu0 0
    %5983 = vmatpush1.bf16.msra.mxu0 0
    %5984 = vmatprep.mubr.bf16.mxu0 0
    %5985 = vmatmul.mubr.bf16.gmra.mrb[0].mxu0 %v5947
    %v5986 = vpop.f32.mrb[0].mxu0
    %v5987 = vadd.f32 0.0, %v5986
    %v5988 = vpop.f32.mrb[0].mxu0
    %v5989 = vpop.f32.mrb[0].mxu0
    %v5990 = vpop.f32.mrb[0].mxu0
    %5991 = vdwg.mxu0
    %v5993 = vsel %vm3720, %v5554, 0
    %v5996 = vsel %vm5580, %v3653, 0
    %5998 = vmatprep.subr.bf16.mxu0 0
    %5999 = vmatpush1.bf16.msra.mxu0 %v5996
    %6000 = vmatprep.subr.bf16.mxu0 0
    %6001 = vmatpush1.bf16.msra.mxu0 0
    %6002 = vmatprep.subr.bf16.mxu0 0
    %6003 = vmatpush1.bf16.msra.mxu0 0
    %6004 = vmatprep.subr.bf16.mxu0 0
    %6005 = vmatpush1.bf16.msra.mxu0 0
    %6006 = vmatprep.subr.bf16.mxu0 0
    %6007 = vmatpush1.bf16.msra.mxu0 0
    %6008 = vmatprep.subr.bf16.mxu0 0
    %6009 = vmatpush1.bf16.msra.mxu0 0
    %6010 = vmatprep.subr.bf16.mxu0 0
    %6011 = vmatpush1.bf16.msra.mxu0 0
    %6012 = vmatprep.subr.bf16.mxu0 0
    %6013 = vmatpush1.bf16.msra.mxu0 0
    %6014 = vmatprep.subr.bf16.mxu0 0
    %6015 = vmatpush1.bf16.msra.mxu0 0
    %6016 = vmatprep.subr.bf16.mxu0 0
    %6017 = vmatpush1.bf16.msra.mxu0 0
    %6018 = vmatprep.subr.bf16.mxu0 0
    %6019 = vmatpush1.bf16.msra.mxu0 0
    %6020 = vmatprep.subr.bf16.mxu0 0
    %6021 = vmatpush1.bf16.msra.mxu0 0
    %6022 = vmatprep.subr.bf16.mxu0 0
    %6023 = vmatpush1.bf16.msra.mxu0 0
    %6024 = vmatprep.subr.bf16.mxu0 0
    %6025 = vmatpush1.bf16.msra.mxu0 0
    %6026 = vmatprep.subr.bf16.mxu0 0
    %6027 = vmatpush1.bf16.msra.mxu0 0
    %6028 = vmatprep.subr.bf16.mxu0 0
    %6029 = vmatpush1.bf16.msra.mxu0 0
    %6030 = vmatprep.mubr.bf16.mxu0 0
    %6031 = vmatmul.mubr.bf16.gmra.mrb[0].mxu0 %v5993
    %v6032 = vpop.f32.mrb[0].mxu0
    %v6033 = vadd.f32 0.0, %v6032
    %v6034 = vpop.f32.mrb[0].mxu0
    %v6035 = vpop.f32.mrb[0].mxu0
    %v6036 = vpop.f32.mrb[0].mxu0
    %6037 = vdwg.mxu0
    %v6039 = vsel %vm3720, %v5555, 0
    %v6042 = vsel %vm5580, %v3656, 0
    %6044 = vmatprep.subr.bf16.mxu0 0
    %6045 = vmatpush1.bf16.msra.mxu0 %v6042
    %6046 = vmatprep.subr.bf16.mxu0 0
    %6047 = vmatpush1.bf16.msra.mxu0 0
    %6048 = vmatprep.subr.bf16.mxu0 0
    %6049 = vmatpush1.bf16.msra.mxu0 0
    %6050 = vmatprep.subr.bf16.mxu0 0
    %6051 = vmatpush1.bf16.msra.mxu0 0
    %6052 = vmatprep.subr.bf16.mxu0 0
    %6053 = vmatpush1.bf16.msra.mxu0 0
    %6054 = vmatprep.subr.bf16.mxu0 0
    %6055 = vmatpush1.bf16.msra.mxu0 0
    %6056 = vmatprep.subr.bf16.mxu0 0
    %6057 = vmatpush1.bf16.msra.mxu0 0
    %6058 = vmatprep.subr.bf16.mxu0 0
    %6059 = vmatpush1.bf16.msra.mxu0 0
    %6060 = vmatprep.subr.bf16.mxu0 0
    %6061 = vmatpush1.bf16.msra.mxu0 0
    %6062 = vmatprep.subr.bf16.mxu0 0
    %6063 = vmatpush1.bf16.msra.mxu0 0
    %6064 = vmatprep.subr.bf16.mxu0 0
    %6065 = vmatpush1.bf16.msra.mxu0 0
    %6066 = vmatprep.subr.bf16.mxu0 0
    %6067 = vmatpush1.bf16.msra.mxu0 0
    %6068 = vmatprep.subr.bf16.mxu0 0
    %6069 = vmatpush1.bf16.msra.mxu0 0
    %6070 = vmatprep.subr.bf16.mxu0 0
    %6071 = vmatpush1.bf16.msra.mxu0 0
    %6072 = vmatprep.subr.bf16.mxu0 0
    %6073 = vmatpush1.bf16.msra.mxu0 0
    %6074 = vmatprep.subr.bf16.mxu0 0
    %6075 = vmatpush1.bf16.msra.mxu0 0
    %6076 = vmatprep.mubr.bf16.mxu0 0
    %6077 = vmatmul.mubr.bf16.gmra.mrb[0].mxu0 %v6039
    %v6078 = vpop.f32.mrb[0].mxu0
    %v6079 = vadd.f32 0.0, %v6078
    %v6080 = vpop.f32.mrb[0].mxu0
    %v6081 = vpop.f32.mrb[0].mxu0
    %v6082 = vpop.f32.mrb[0].mxu0
    %6083 = vdwg.mxu0
    %v6085 = vsel %vm3720, %v5556, 0
    %v6088 = vsel %vm5580, %v3659, 0
    %6090 = vmatprep.subr.bf16.mxu0 0
    %6091 = vmatpush1.bf16.msra.mxu0 %v6088
    %6092 = vmatprep.subr.bf16.mxu0 0
    %6093 = vmatpush1.bf16.msra.mxu0 0
    %6094 = vmatprep.subr.bf16.mxu0 0
    %6095 = vmatpush1.bf16.msra.mxu0 0
    %6096 = vmatprep.subr.bf16.mxu0 0
    %6097 = vmatpush1.bf16.msra.mxu0 0
    %6098 = vmatprep.subr.bf16.mxu0 0
    %6099 = vmatpush1.bf16.msra.mxu0 0
    %6100 = vmatprep.subr.bf16.mxu0 0
    %6101 = vmatpush1.bf16.msra.mxu0 0
    %6102 = vmatprep.subr.bf16.mxu0 0
    %6103 = vmatpush1.bf16.msra.mxu0 0
    %6104 = vmatprep.subr.bf16.mxu0 0
    %6105 = vmatpush1.bf16.msra.mxu0 0
    %6106 = vmatprep.subr.bf16.mxu0 0
    %6107 = vmatpush1.bf16.msra.mxu0 0
    %6108 = vmatprep.subr.bf16.mxu0 0
    %6109 = vmatpush1.bf16.msra.mxu0 0
    %6110 = vmatprep.subr.bf16.mxu0 0
    %6111 = vmatpush1.bf16.msra.mxu0 0
    %6112 = vmatprep.subr.bf16.mxu0 0
    %6113 = vmatpush1.bf16.msra.mxu0 0
    %6114 = vmatprep.subr.bf16.mxu0 0
    %6115 = vmatpush1.bf16.msra.mxu0 0
    %6116 = vmatprep.subr.bf16.mxu0 0
    %6117 = vmatpush1.bf16.msra.mxu0 0
    %6118 = vmatprep.subr.bf16.mxu0 0
    %6119 = vmatpush1.bf16.msra.mxu0 0
    %6120 = vmatprep.subr.bf16.mxu0 0
    %6121 = vmatpush1.bf16.msra.mxu0 0
    %6122 = vmatprep.mubr.bf16.mxu0 0
    %6123 = vmatmul.mubr.bf16.gmra.mrb[0].mxu0 %v6085
    %v6124 = vpop.f32.mrb[0].mxu0
    %v6125 = vadd.f32 0.0, %v6124
    %v6126 = vpop.f32.mrb[0].mxu0
    %v6127 = vpop.f32.mrb[0].mxu0
    %v6128 = vpop.f32.mrb[0].mxu0
    %6129 = vdwg.mxu0
    %v6131 = vsel %vm3720, %v5557, 0
    %v6134 = vsel %vm5580, %v3662, 0
    %6136 = vmatprep.subr.bf16.mxu0 0
    %6137 = vmatpush1.bf16.msra.mxu0 %v6134
    %6138 = vmatprep.subr.bf16.mxu0 0
    %6139 = vmatpush1.bf16.msra.mxu0 0
    %6140 = vmatprep.subr.bf16.mxu0 0
    %6141 = vmatpush1.bf16.msra.mxu0 0
    %6142 = vmatprep.subr.bf16.mxu0 0
    %6143 = vmatpush1.bf16.msra.mxu0 0
    %6144 = vmatprep.subr.bf16.mxu0 0
    %6145 = vmatpush1.bf16.msra.mxu0 0
    %6146 = vmatprep.subr.bf16.mxu0 0
    %6147 = vmatpush1.bf16.msra.mxu0 0
    %6148 = vmatprep.subr.bf16.mxu0 0
    %6149 = vmatpush1.bf16.msra.mxu0 0
    %6150 = vmatprep.subr.bf16.mxu0 0
    %6151 = vmatpush1.bf16.msra.mxu0 0
    %6152 = vmatprep.subr.bf16.mxu0 0
    %6153 = vmatpush1.bf16.msra.mxu0 0
    %6154 = vmatprep.subr.bf16.mxu0 0
    %6155 = vmatpush1.bf16.msra.mxu0 0
    %6156 = vmatprep.subr.bf16.mxu0 0
    %6157 = vmatpush1.bf16.msra.mxu0 0
    %6158 = vmatprep.subr.bf16.mxu0 0
    %6159 = vmatpush1.bf16.msra.mxu0 0
    %6160 = vmatprep.subr.bf16.mxu0 0
    %6161 = vmatpush1.bf16.msra.mxu0 0
    %6162 = vmatprep.subr.bf16.mxu0 0
    %6163 = vmatpush1.bf16.msra.mxu0 0
    %6164 = vmatprep.subr.bf16.mxu0 0
    %6165 = vmatpush1.bf16.msra.mxu0 0
    %6166 = vmatprep.subr.bf16.mxu0 0
    %6167 = vmatpush1.bf16.msra.mxu0 0
    %6168 = vmatprep.mubr.bf16.mxu0 0
    %6169 = vmatmul.mubr.bf16.gmra.mrb[0].mxu0 %v6131
    %v6170 = vpop.f32.mrb[0].mxu0
    %v6171 = vadd.f32 0.0, %v6170
    %v6172 = vpop.f32.mrb[0].mxu0
    %v6173 = vpop.f32.mrb[0].mxu0
    %v6174 = vpop.f32.mrb[0].mxu0
    %6175 = vdwg.mxu0
    %v6177 = vsel %vm3720, %v5558, 0
    %v6180 = vsel %vm5580, %v3665, 0
    %6182 = vmatprep.subr.bf16.mxu0 0
    %6183 = vmatpush1.bf16.msra.mxu0 %v6180
    %6184 = vmatprep.subr.bf16.mxu0 0
    %6185 = vmatpush1.bf16.msra.mxu0 0
    %6186 = vmatprep.subr.bf16.mxu0 0
    %6187 = vmatpush1.bf16.msra.mxu0 0
    %6188 = vmatprep.subr.bf16.mxu0 0
    %6189 = vmatpush1.bf16.msra.mxu0 0
    %6190 = vmatprep.subr.bf16.mxu0 0
    %6191 = vmatpush1.bf16.msra.mxu0 0
    %6192 = vmatprep.subr.bf16.mxu0 0
    %6193 = vmatpush1.bf16.msra.mxu0 0
    %6194 = vmatprep.subr.bf16.mxu0 0
    %6195 = vmatpush1.bf16.msra.mxu0 0
    %6196 = vmatprep.subr.bf16.mxu0 0
    %6197 = vmatpush1.bf16.msra.mxu0 0
    %6198 = vmatprep.subr.bf16.mxu0 0
    %6199 = vmatpush1.bf16.msra.mxu0 0
    %6200 = vmatprep.subr.bf16.mxu0 0
    %6201 = vmatpush1.bf16.msra.mxu0 0
    %6202 = vmatprep.subr.bf16.mxu0 0
    %6203 = vmatpush1.bf16.msra.mxu0 0
    %6204 = vmatprep.subr.bf16.mxu0 0
    %6205 = vmatpush1.bf16.msra.mxu0 0
    %6206 = vmatprep.subr.bf16.mxu0 0
    %6207 = vmatpush1.bf16.msra.mxu0 0
    %6208 = vmatprep.subr.bf16.mxu0 0
    %6209 = vmatpush1.bf16.msra.mxu0 0
    %6210 = vmatprep.subr.bf16.mxu0 0
    %6211 = vmatpush1.bf16.msra.mxu0 0
    %6212 = vmatprep.subr.bf16.mxu0 0
    %6213 = vmatpush1.bf16.msra.mxu0 0
    %6214 = vmatprep.mubr.bf16.mxu0 0
    %6215 = vmatmul.mubr.bf16.gmra.mrb[0].mxu0 %v6177
    %v6216 = vpop.f32.mrb[0].mxu0
    %v6217 = vadd.f32 0.0, %v6216
    %v6218 = vpop.f32.mrb[0].mxu0
    %v6219 = vpop.f32.mrb[0].mxu0
    %v6220 = vpop.f32.mrb[0].mxu0
    %6221 = vdwg.mxu0
    %v6223 = vsel %vm3720, %v5559, 0
    %v6226 = vsel %vm5580, %v3668, 0
    %6228 = vmatprep.subr.bf16.mxu0 0
    %6229 = vmatpush1.bf16.msra.mxu0 %v6226
    %6230 = vmatprep.subr.bf16.mxu0 0
    %6231 = vmatpush1.bf16.msra.mxu0 0
    %6232 = vmatprep.subr.bf16.mxu0 0
    %6233 = vmatpush1.bf16.msra.mxu0 0
    %6234 = vmatprep.subr.bf16.mxu0 0
    %6235 = vmatpush1.bf16.msra.mxu0 0
    %6236 = vmatprep.subr.bf16.mxu0 0
    %6237 = vmatpush1.bf16.msra.mxu0 0
    %6238 = vmatprep.subr.bf16.mxu0 0
    %6239 = vmatpush1.bf16.msra.mxu0 0
    %6240 = vmatprep.subr.bf16.mxu0 0
    %6241 = vmatpush1.bf16.msra.mxu0 0
    %6242 = vmatprep.subr.bf16.mxu0 0
    %6243 = vmatpush1.bf16.msra.mxu0 0
    %6244 = vmatprep.subr.bf16.mxu0 0
    %6245 = vmatpush1.bf16.msra.mxu0 0
    %6246 = vmatprep.subr.bf16.mxu0 0
    %6247 = vmatpush1.bf16.msra.mxu0 0
    %6248 = vmatprep.subr.bf16.mxu0 0
    %6249 = vmatpush1.bf16.msra.mxu0 0
    %6250 = vmatprep.subr.bf16.mxu0 0
    %6251 = vmatpush1.bf16.msra.mxu0 0
    %6252 = vmatprep.subr.bf16.mxu0 0
    %6253 = vmatpush1.bf16.msra.mxu0 0
    %6254 = vmatprep.subr.bf16.mxu0 0
    %6255 = vmatpush1.bf16.msra.mxu0 0
    %6256 = vmatprep.subr.bf16.mxu0 0
    %6257 = vmatpush1.bf16.msra.mxu0 0
    %6258 = vmatprep.subr.bf16.mxu0 0
    %6259 = vmatpush1.bf16.msra.mxu0 0
    %6260 = vmatprep.mubr.bf16.mxu0 0
    %6261 = vmatmul.mubr.bf16.gmra.mrb[0].mxu0 %v6223
    %v6262 = vpop.f32.mrb[0].mxu0
    %v6263 = vadd.f32 0.0, %v6262
    %v6264 = vpop.f32.mrb[0].mxu0
    %v6265 = vpop.f32.mrb[0].mxu0
    %v6266 = vpop.f32.mrb[0].mxu0
    %6267 = vdwg.mxu0
    %v6269 = vsel %vm3720, %v5560, 0
    %v6272 = vsel %vm5580, %v3671, 0
    %6274 = vmatprep.subr.bf16.mxu0 0
    %6275 = vmatpush1.bf16.msra.mxu0 %v6272
    %6276 = vmatprep.subr.bf16.mxu0 0
    %6277 = vmatpush1.bf16.msra.mxu0 0
    %6278 = vmatprep.subr.bf16.mxu0 0
    %6279 = vmatpush1.bf16.msra.mxu0 0
    %6280 = vmatprep.subr.bf16.mxu0 0
    %6281 = vmatpush1.bf16.msra.mxu0 0
    %6282 = vmatprep.subr.bf16.mxu0 0
    %6283 = vmatpush1.bf16.msra.mxu0 0
    %6284 = vmatprep.subr.bf16.mxu0 0
    %6285 = vmatpush1.bf16.msra.mxu0 0
    %6286 = vmatprep.subr.bf16.mxu0 0
    %6287 = vmatpush1.bf16.msra.mxu0 0
    %6288 = vmatprep.subr.bf16.mxu0 0
    %6289 = vmatpush1.bf16.msra.mxu0 0
    %6290 = vmatprep.subr.bf16.mxu0 0
    %6291 = vmatpush1.bf16.msra.mxu0 0
    %6292 = vmatprep.subr.bf16.mxu0 0
    %6293 = vmatpush1.bf16.msra.mxu0 0
    %6294 = vmatprep.subr.bf16.mxu0 0
    %6295 = vmatpush1.bf16.msra.mxu0 0
    %6296 = vmatprep.subr.bf16.mxu0 0
    %6297 = vmatpush1.bf16.msra.mxu0 0
    %6298 = vmatprep.subr.bf16.mxu0 0
    %6299 = vmatpush1.bf16.msra.mxu0 0
    %6300 = vmatprep.subr.bf16.mxu0 0
    %6301 = vmatpush1.bf16.msra.mxu0 0
    %6302 = vmatprep.subr.bf16.mxu0 0
    %6303 = vmatpush1.bf16.msra.mxu0 0
    %6304 = vmatprep.subr.bf16.mxu0 0
    %6305 = vmatpush1.bf16.msra.mxu0 0
    %6306 = vmatprep.mubr.bf16.mxu0 0
    %6307 = vmatmul.mubr.bf16.gmra.mrb[0].mxu0 %v6269
    %v6308 = vpop.f32.mrb[0].mxu0
    %v6309 = vadd.f32 0.0, %v6308
    %v6310 = vpop.f32.mrb[0].mxu0
    %v6311 = vpop.f32.mrb[0].mxu0
    %v6312 = vpop.f32.mrb[0].mxu0
    %6313 = vdwg.mxu0
    %v6315 = vsel %vm3720, %v5561, 0
    %v6318 = vsel %vm5580, %v3674, 0
    %6320 = vmatprep.subr.bf16.mxu0 0
    %6321 = vmatpush1.bf16.msra.mxu0 %v6318
    %6322 = vmatprep.subr.bf16.mxu0 0
    %6323 = vmatpush1.bf16.msra.mxu0 0
    %6324 = vmatprep.subr.bf16.mxu0 0
    %6325 = vmatpush1.bf16.msra.mxu0 0
    %6326 = vmatprep.subr.bf16.mxu0 0
    %6327 = vmatpush1.bf16.msra.mxu0 0
    %6328 = vmatprep.subr.bf16.mxu0 0
    %6329 = vmatpush1.bf16.msra.mxu0 0
    %6330 = vmatprep.subr.bf16.mxu0 0
    %6331 = vmatpush1.bf16.msra.mxu0 0
    %6332 = vmatprep.subr.bf16.mxu0 0
    %6333 = vmatpush1.bf16.msra.mxu0 0
    %6334 = vmatprep.subr.bf16.mxu0 0
    %6335 = vmatpush1.bf16.msra.mxu0 0
    %6336 = vmatprep.subr.bf16.mxu0 0
    %6337 = vmatpush1.bf16.msra.mxu0 0
    %6338 = vmatprep.subr.bf16.mxu0 0
    %6339 = vmatpush1.bf16.msra.mxu0 0
    %6340 = vmatprep.subr.bf16.mxu0 0
    %6341 = vmatpush1.bf16.msra.mxu0 0
    %6342 = vmatprep.subr.bf16.mxu0 0
    %6343 = vmatpush1.bf16.msra.mxu0 0
    %6344 = vmatprep.subr.bf16.mxu0 0
    %6345 = vmatpush1.bf16.msra.mxu0 0
    %6346 = vmatprep.subr.bf16.mxu0 0
    %6347 = vmatpush1.bf16.msra.mxu0 0
    %6348 = vmatprep.subr.bf16.mxu0 0
    %6349 = vmatpush1.bf16.msra.mxu0 0
    %6350 = vmatprep.subr.bf16.mxu0 0
    %6351 = vmatpush1.bf16.msra.mxu0 0
    %6352 = vmatprep.mubr.bf16.mxu0 0
    %6353 = vmatmul.mubr.bf16.gmra.mrb[0].mxu0 %v6315
    %v6354 = vpop.f32.mrb[0].mxu0
    %v6355 = vadd.f32 0.0, %v6354
    %v6356 = vpop.f32.mrb[0].mxu0
    %v6357 = vpop.f32.mrb[0].mxu0
    %v6358 = vpop.f32.mrb[0].mxu0
    %6359 = vdwg.mxu0
    %v6361 = vsel %vm3720, %v5562, 0
    %v6364 = vsel %vm5580, %v3677, 0
    %6366 = vmatprep.subr.bf16.mxu0 0
    %6367 = vmatpush1.bf16.msra.mxu0 %v6364
    %6368 = vmatprep.subr.bf16.mxu0 0
    %6369 = vmatpush1.bf16.msra.mxu0 0
    %6370 = vmatprep.subr.bf16.mxu0 0
    %6371 = vmatpush1.bf16.msra.mxu0 0
    %6372 = vmatprep.subr.bf16.mxu0 0
    %6373 = vmatpush1.bf16.msra.mxu0 0
    %6374 = vmatprep.subr.bf16.mxu0 0
    %6375 = vmatpush1.bf16.msra.mxu0 0
    %6376 = vmatprep.subr.bf16.mxu0 0
    %6377 = vmatpush1.bf16.msra.mxu0 0
    %6378 = vmatprep.subr.bf16.mxu0 0
    %6379 = vmatpush1.bf16.msra.mxu0 0
    %6380 = vmatprep.subr.bf16.mxu0 0
    %6381 = vmatpush1.bf16.msra.mxu0 0
    %6382 = vmatprep.subr.bf16.mxu0 0
    %6383 = vmatpush1.bf16.msra.mxu0 0
    %6384 = vmatprep.subr.bf16.mxu0 0
    %6385 = vmatpush1.bf16.msra.mxu0 0
    %6386 = vmatprep.subr.bf16.mxu0 0
    %6387 = vmatpush1.bf16.msra.mxu0 0
    %6388 = vmatprep.subr.bf16.mxu0 0
    %6389 = vmatpush1.bf16.msra.mxu0 0
    %6390 = vmatprep.subr.bf16.mxu0 0
    %6391 = vmatpush1.bf16.msra.mxu0 0
    %6392 = vmatprep.subr.bf16.mxu0 0
    %6393 = vmatpush1.bf16.msra.mxu0 0
    %6394 = vmatprep.subr.bf16.mxu0 0
    %6395 = vmatpush1.bf16.msra.mxu0 0
    %6396 = vmatprep.subr.bf16.mxu0 0
    %6397 = vmatpush1.bf16.msra.mxu0 0
    %6398 = vmatprep.mubr.bf16.mxu0 0
    %6399 = vmatmul.mubr.bf16.gmra.mrb[0].mxu0 %v6361
    %v6400 = vpop.f32.mrb[0].mxu0
    %v6401 = vadd.f32 0.0, %v6400
    %v6402 = vpop.f32.mrb[0].mxu0
    %v6403 = vpop.f32.mrb[0].mxu0
    %v6404 = vpop.f32.mrb[0].mxu0
    %6405 = vdwg.mxu0
    %v6407 = vsel %vm3720, %v5563, 0
    %v6410 = vsel %vm5580, %v3680, 0
    %6412 = vmatprep.subr.bf16.mxu0 0
    %6413 = vmatpush1.bf16.msra.mxu0 %v6410
    %6414 = vmatprep.subr.bf16.mxu0 0
    %6415 = vmatpush1.bf16.msra.mxu0 0
    %6416 = vmatprep.subr.bf16.mxu0 0
    %6417 = vmatpush1.bf16.msra.mxu0 0
    %6418 = vmatprep.subr.bf16.mxu0 0
    %6419 = vmatpush1.bf16.msra.mxu0 0
    %6420 = vmatprep.subr.bf16.mxu0 0
    %6421 = vmatpush1.bf16.msra.mxu0 0
    %6422 = vmatprep.subr.bf16.mxu0 0
    %6423 = vmatpush1.bf16.msra.mxu0 0
    %6424 = vmatprep.subr.bf16.mxu0 0
    %6425 = vmatpush1.bf16.msra.mxu0 0
    %6426 = vmatprep.subr.bf16.mxu0 0
    %6427 = vmatpush1.bf16.msra.mxu0 0
    %6428 = vmatprep.subr.bf16.mxu0 0
    %6429 = vmatpush1.bf16.msra.mxu0 0
    %6430 = vmatprep.subr.bf16.mxu0 0
    %6431 = vmatpush1.bf16.msra.mxu0 0
    %6432 = vmatprep.subr.bf16.mxu0 0
    %6433 = vmatpush1.bf16.msra.mxu0 0
    %6434 = vmatprep.subr.bf16.mxu0 0
    %6435 = vmatpush1.bf16.msra.mxu0 0
    %6436 = vmatprep.subr.bf16.mxu0 0
    %6437 = vmatpush1.bf16.msra.mxu0 0
    %6438 = vmatprep.subr.bf16.mxu0 0
    %6439 = vmatpush1.bf16.msra.mxu0 0
    %6440 = vmatprep.subr.bf16.mxu0 0
    %6441 = vmatpush1.bf16.msra.mxu0 0
    %6442 = vmatprep.subr.bf16.mxu0 0
    %6443 = vmatpush1.bf16.msra.mxu0 0
    %6444 = vmatprep.mubr.bf16.mxu0 0
    %6445 = vmatmul.mubr.bf16.gmra.mrb[0].mxu0 %v6407
    %v6446 = vpop.f32.mrb[0].mxu0
    %v6447 = vadd.f32 0.0, %v6446
    %v6448 = vpop.f32.mrb[0].mxu0
    %v6449 = vpop.f32.mrb[0].mxu0
    %v6450 = vpop.f32.mrb[0].mxu0
    %6451 = vdwg.mxu0
    %v6453 = vsel %vm3720, %v5564, 0
    %v6456 = vsel %vm5580, %v3683, 0
    %6458 = vmatprep.subr.bf16.mxu0 0
    %6459 = vmatpush1.bf16.msra.mxu0 %v6456
    %6460 = vmatprep.subr.bf16.mxu0 0
    %6461 = vmatpush1.bf16.msra.mxu0 0
    %6462 = vmatprep.subr.bf16.mxu0 0
    %6463 = vmatpush1.bf16.msra.mxu0 0
    %6464 = vmatprep.subr.bf16.mxu0 0
    %6465 = vmatpush1.bf16.msra.mxu0 0
    %6466 = vmatprep.subr.bf16.mxu0 0
    %6467 = vmatpush1.bf16.msra.mxu0 0
    %6468 = vmatprep.subr.bf16.mxu0 0
    %6469 = vmatpush1.bf16.msra.mxu0 0
    %6470 = vmatprep.subr.bf16.mxu0 0
    %6471 = vmatpush1.bf16.msra.mxu0 0
    %6472 = vmatprep.subr.bf16.mxu0 0
    %6473 = vmatpush1.bf16.msra.mxu0 0
    %6474 = vmatprep.subr.bf16.mxu0 0
    %6475 = vmatpush1.bf16.msra.mxu0 0
    %6476 = vmatprep.subr.bf16.mxu0 0
    %6477 = vmatpush1.bf16.msra.mxu0 0
    %6478 = vmatprep.subr.bf16.mxu0 0
    %6479 = vmatpush1.bf16.msra.mxu0 0
    %6480 = vmatprep.subr.bf16.mxu0 0
    %6481 = vmatpush1.bf16.msra.mxu0 0
    %6482 = vmatprep.subr.bf16.mxu0 0
    %6483 = vmatpush1.bf16.msra.mxu0 0
    %6484 = vmatprep.subr.bf16.mxu0 0
    %6485 = vmatpush1.bf16.msra.mxu0 0
    %6486 = vmatprep.subr.bf16.mxu0 0
    %6487 = vmatpush1.bf16.msra.mxu0 0
    %6488 = vmatprep.subr.bf16.mxu0 0
    %6489 = vmatpush1.bf16.msra.mxu0 0
    %6490 = vmatprep.mubr.bf16.mxu0 0
    %6491 = vmatmul.mubr.bf16.gmra.mrb[0].mxu0 %v6453
    %v6492 = vpop.f32.mrb[0].mxu0
    %v6493 = vadd.f32 0.0, %v6492
    %v6494 = vpop.f32.mrb[0].mxu0
    %v6495 = vpop.f32.mrb[0].mxu0
    %v6496 = vpop.f32.mrb[0].mxu0
    %6497 = vdwg.mxu0
    %v6499 = vsel %vm3720, %v5565, 0
    %v6502 = vsel %vm5580, %v3686, 0
    %6504 = vmatprep.subr.bf16.mxu0 0
    %6505 = vmatpush1.bf16.msra.mxu0 %v6502
    %6506 = vmatprep.subr.bf16.mxu0 0
    %6507 = vmatpush1.bf16.msra.mxu0 0
    %6508 = vmatprep.subr.bf16.mxu0 0
    %6509 = vmatpush1.bf16.msra.mxu0 0
    %6510 = vmatprep.subr.bf16.mxu0 0
    %6511 = vmatpush1.bf16.msra.mxu0 0
    %6512 = vmatprep.subr.bf16.mxu0 0
    %6513 = vmatpush1.bf16.msra.mxu0 0
    %6514 = vmatprep.subr.bf16.mxu0 0
    %6515 = vmatpush1.bf16.msra.mxu0 0
    %6516 = vmatprep.subr.bf16.mxu0 0
    %6517 = vmatpush1.bf16.msra.mxu0 0
    %6518 = vmatprep.subr.bf16.mxu0 0
    %6519 = vmatpush1.bf16.msra.mxu0 0
    %6520 = vmatprep.subr.bf16.mxu0 0
    %6521 = vmatpush1.bf16.msra.mxu0 0
    %6522 = vmatprep.subr.bf16.mxu0 0
    %6523 = vmatpush1.bf16.msra.mxu0 0
    %6524 = vmatprep.subr.bf16.mxu0 0
    %6525 = vmatpush1.bf16.msra.mxu0 0
    %6526 = vmatprep.subr.bf16.mxu0 0
    %6527 = vmatpush1.bf16.msra.mxu0 0
    %6528 = vmatprep.subr.bf16.mxu0 0
    %6529 = vmatpush1.bf16.msra.mxu0 0
    %6530 = vmatprep.subr.bf16.mxu0 0
    %6531 = vmatpush1.bf16.msra.mxu0 0
    %6532 = vmatprep.subr.bf16.mxu0 0
    %6533 = vmatpush1.bf16.msra.mxu0 0
    %6534 = vmatprep.subr.bf16.mxu0 0
    %6535 = vmatpush1.bf16.msra.mxu0 0
    %6536 = vmatprep.mubr.bf16.mxu0 0
    %6537 = vmatmul.mubr.bf16.gmra.mrb[0].mxu0 %v6499
    %v6538 = vpop.f32.mrb[0].mxu0
    %v6539 = vadd.f32 0.0, %v6538
    %v6540 = vpop.f32.mrb[0].mxu0
    %v6541 = vpop.f32.mrb[0].mxu0
    %v6542 = vpop.f32.mrb[0].mxu0
    %6543 = vdwg.mxu0
    %v6545 = vsel %vm3720, %v5566, 0
    %v6548 = vsel %vm5580, %v3689, 0
    %6550 = vmatprep.subr.bf16.mxu0 0
    %6551 = vmatpush1.bf16.msra.mxu0 %v6548
    %6552 = vmatprep.subr.bf16.mxu0 0
    %6553 = vmatpush1.bf16.msra.mxu0 0
    %6554 = vmatprep.subr.bf16.mxu0 0
    %6555 = vmatpush1.bf16.msra.mxu0 0
    %6556 = vmatprep.subr.bf16.mxu0 0
    %6557 = vmatpush1.bf16.msra.mxu0 0
    %6558 = vmatprep.subr.bf16.mxu0 0
    %6559 = vmatpush1.bf16.msra.mxu0 0
    %6560 = vmatprep.subr.bf16.mxu0 0
    %6561 = vmatpush1.bf16.msra.mxu0 0
    %6562 = vmatprep.subr.bf16.mxu0 0
    %6563 = vmatpush1.bf16.msra.mxu0 0
    %6564 = vmatprep.subr.bf16.mxu0 0
    %6565 = vmatpush1.bf16.msra.mxu0 0
    %6566 = vmatprep.subr.bf16.mxu0 0
    %6567 = vmatpush1.bf16.msra.mxu0 0
    %6568 = vmatprep.subr.bf16.mxu0 0
    %6569 = vmatpush1.bf16.msra.mxu0 0
    %6570 = vmatprep.subr.bf16.mxu0 0
    %6571 = vmatpush1.bf16.msra.mxu0 0
    %6572 = vmatprep.subr.bf16.mxu0 0
    %6573 = vmatpush1.bf16.msra.mxu0 0
    %6574 = vmatprep.subr.bf16.mxu0 0
    %6575 = vmatpush1.bf16.msra.mxu0 0
    %6576 = vmatprep.subr.bf16.mxu0 0
    %6577 = vmatpush1.bf16.msra.mxu0 0
    %6578 = vmatprep.subr.bf16.mxu0 0
    %6579 = vmatpush1.bf16.msra.mxu0 0
    %6580 = vmatprep.subr.bf16.mxu0 0
    %6581 = vmatpush1.bf16.msra.mxu0 0
    %6582 = vmatprep.mubr.bf16.mxu0 0
    %6583 = vmatmul.mubr.bf16.gmra.mrb[0].mxu0 %v6545
    %v6584 = vpop.f32.mrb[0].mxu0
    %v6585 = vadd.f32 0.0, %v6584
    %v6586 = vpop.f32.mrb[0].mxu0
    %v6587 = vpop.f32.mrb[0].mxu0
    %v6588 = vpop.f32.mrb[0].mxu0
    %6589 = vdwg.mxu0
    %v6591 = vsel %vm3720, %v5567, 0
    %v6594 = vsel %vm5580, %v3692, 0
    %6596 = vmatprep.subr.bf16.mxu0 0
    %6597 = vmatpush1.bf16.msra.mxu0 %v6594
    %6598 = vmatprep.subr.bf16.mxu0 0
    %6599 = vmatpush1.bf16.msra.mxu0 0
    %6600 = vmatprep.subr.bf16.mxu0 0
    %6601 = vmatpush1.bf16.msra.mxu0 0
    %6602 = vmatprep.subr.bf16.mxu0 0
    %6603 = vmatpush1.bf16.msra.mxu0 0
    %6604 = vmatprep.subr.bf16.mxu0 0
    %6605 = vmatpush1.bf16.msra.mxu0 0
    %6606 = vmatprep.subr.bf16.mxu0 0
    %6607 = vmatpush1.bf16.msra.mxu0 0
    %6608 = vmatprep.subr.bf16.mxu0 0
    %6609 = vmatpush1.bf16.msra.mxu0 0
    %6610 = vmatprep.subr.bf16.mxu0 0
    %6611 = vmatpush1.bf16.msra.mxu0 0
    %6612 = vmatprep.subr.bf16.mxu0 0
    %6613 = vmatpush1.bf16.msra.mxu0 0
    %6614 = vmatprep.subr.bf16.mxu0 0
    %6615 = vmatpush1.bf16.msra.mxu0 0
    %6616 = vmatprep.subr.bf16.mxu0 0
    %6617 = vmatpush1.bf16.msra.mxu0 0
    %6618 = vmatprep.subr.bf16.mxu0 0
    %6619 = vmatpush1.bf16.msra.mxu0 0
    %6620 = vmatprep.subr.bf16.mxu0 0
    %6621 = vmatpush1.bf16.msra.mxu0 0
    %6622 = vmatprep.subr.bf16.mxu0 0
    %6623 = vmatpush1.bf16.msra.mxu0 0
    %6624 = vmatprep.subr.bf16.mxu0 0
    %6625 = vmatpush1.bf16.msra.mxu0 0
    %6626 = vmatprep.subr.bf16.mxu0 0
    %6627 = vmatpush1.bf16.msra.mxu0 0
    %6628 = vmatprep.mubr.bf16.mxu0 0
    %6629 = vmatmul.mubr.bf16.gmra.mrb[0].mxu0 %v6591
    %v6630 = vpop.f32.mrb[0].mxu0
    %v6631 = vadd.f32 0.0, %v6630
    %v6632 = vpop.f32.mrb[0].mxu0
    %v6633 = vpop.f32.mrb[0].mxu0
    %v6634 = vpop.f32.mrb[0].mxu0
    %6635 = vdwg.mxu0
    %v6637 = vsel %vm3720, %v5568, 0
    %v6640 = vsel %vm5580, %v3695, 0
    %6642 = vmatprep.subr.bf16.mxu0 0
    %6643 = vmatpush1.bf16.msra.mxu0 %v6640
    %6644 = vmatprep.subr.bf16.mxu0 0
    %6645 = vmatpush1.bf16.msra.mxu0 0
    %6646 = vmatprep.subr.bf16.mxu0 0
    %6647 = vmatpush1.bf16.msra.mxu0 0
    %6648 = vmatprep.subr.bf16.mxu0 0
    %6649 = vmatpush1.bf16.msra.mxu0 0
    %6650 = vmatprep.subr.bf16.mxu0 0
    %6651 = vmatpush1.bf16.msra.mxu0 0
    %6652 = vmatprep.subr.bf16.mxu0 0
    %6653 = vmatpush1.bf16.msra.mxu0 0
    %6654 = vmatprep.subr.bf16.mxu0 0
    %6655 = vmatpush1.bf16.msra.mxu0 0
    %6656 = vmatprep.subr.bf16.mxu0 0
    %6657 = vmatpush1.bf16.msra.mxu0 0
    %6658 = vmatprep.subr.bf16.mxu0 0
    %6659 = vmatpush1.bf16.msra.mxu0 0
    %6660 = vmatprep.subr.bf16.mxu0 0
    %6661 = vmatpush1.bf16.msra.mxu0 0
    %6662 = vmatprep.subr.bf16.mxu0 0
    %6663 = vmatpush1.bf16.msra.mxu0 0
    %6664 = vmatprep.subr.bf16.mxu0 0
    %6665 = vmatpush1.bf16.msra.mxu0 0
    %6666 = vmatprep.subr.bf16.mxu0 0
    %6667 = vmatpush1.bf16.msra.mxu0 0
    %6668 = vmatprep.subr.bf16.mxu0 0
    %6669 = vmatpush1.bf16.msra.mxu0 0
    %6670 = vmatprep.subr.bf16.mxu0 0
    %6671 = vmatpush1.bf16.msra.mxu0 0
    %6672 = vmatprep.subr.bf16.mxu0 0
    %6673 = vmatpush1.bf16.msra.mxu0 0
    %6674 = vmatprep.mubr.bf16.mxu0 0
    %6675 = vmatmul.mubr.bf16.gmra.mrb[0].mxu0 %v6637
    %v6676 = vpop.f32.mrb[0].mxu0
    %v6677 = vadd.f32 0.0, %v6676
    %v6678 = vpop.f32.mrb[0].mxu0
    %v6679 = vpop.f32.mrb[0].mxu0
    %v6680 = vpop.f32.mrb[0].mxu0
    %6681 = vdwg.mxu0
    %v6683 = vsel %vm3720, %v5569, 0
    %v6686 = vsel %vm5580, %v3698, 0
    %6688 = vmatprep.subr.bf16.mxu0 0
    %6689 = vmatpush1.bf16.msra.mxu0 %v6686
    %6690 = vmatprep.subr.bf16.mxu0 0
    %6691 = vmatpush1.bf16.msra.mxu0 0
    %6692 = vmatprep.subr.bf16.mxu0 0
    %6693 = vmatpush1.bf16.msra.mxu0 0
    %6694 = vmatprep.subr.bf16.mxu0 0
    %6695 = vmatpush1.bf16.msra.mxu0 0
    %6696 = vmatprep.subr.bf16.mxu0 0
    %6697 = vmatpush1.bf16.msra.mxu0 0
    %6698 = vmatprep.subr.bf16.mxu0 0
    %6699 = vmatpush1.bf16.msra.mxu0 0
    %6700 = vmatprep.subr.bf16.mxu0 0
    %6701 = vmatpush1.bf16.msra.mxu0 0
    %6702 = vmatprep.subr.bf16.mxu0 0
    %6703 = vmatpush1.bf16.msra.mxu0 0
    %6704 = vmatprep.subr.bf16.mxu0 0
    %6705 = vmatpush1.bf16.msra.mxu0 0
    %6706 = vmatprep.subr.bf16.mxu0 0
    %6707 = vmatpush1.bf16.msra.mxu0 0
    %6708 = vmatprep.subr.bf16.mxu0 0
    %6709 = vmatpush1.bf16.msra.mxu0 0
    %6710 = vmatprep.subr.bf16.mxu0 0
    %6711 = vmatpush1.bf16.msra.mxu0 0
    %6712 = vmatprep.subr.bf16.mxu0 0
    %6713 = vmatpush1.bf16.msra.mxu0 0
    %6714 = vmatprep.subr.bf16.mxu0 0
    %6715 = vmatpush1.bf16.msra.mxu0 0
    %6716 = vmatprep.subr.bf16.mxu0 0
    %6717 = vmatpush1.bf16.msra.mxu0 0
    %6718 = vmatprep.subr.bf16.mxu0 0
    %6719 = vmatpush1.bf16.msra.mxu0 0
    %6720 = vmatprep.mubr.bf16.mxu0 0
    %6721 = vmatmul.mubr.bf16.gmra.mrb[0].mxu0 %v6683
    %v6722 = vpop.f32.mrb[0].mxu0
    %v6723 = vadd.f32 0.0, %v6722
    %v6724 = vpop.f32.mrb[0].mxu0
    %v6725 = vpop.f32.mrb[0].mxu0
    %v6726 = vpop.f32.mrb[0].mxu0
    %6727 = vdwg.mxu0
    %v6729 = vsel %vm3720, %v5570, 0
    %v6732 = vsel %vm5580, %v3701, 0
    %6734 = vmatprep.subr.bf16.mxu0 0
    %6735 = vmatpush1.bf16.msra.mxu0 %v6732
    %6736 = vmatprep.subr.bf16.mxu0 0
    %6737 = vmatpush1.bf16.msra.mxu0 0
    %6738 = vmatprep.subr.bf16.mxu0 0
    %6739 = vmatpush1.bf16.msra.mxu0 0
    %6740 = vmatprep.subr.bf16.mxu0 0
    %6741 = vmatpush1.bf16.msra.mxu0 0
    %6742 = vmatprep.subr.bf16.mxu0 0
    %6743 = vmatpush1.bf16.msra.mxu0 0
    %6744 = vmatprep.subr.bf16.mxu0 0
    %6745 = vmatpush1.bf16.msra.mxu0 0
    %6746 = vmatprep.subr.bf16.mxu0 0
    %6747 = vmatpush1.bf16.msra.mxu0 0
    %6748 = vmatprep.subr.bf16.mxu0 0
    %6749 = vmatpush1.bf16.msra.mxu0 0
    %6750 = vmatprep.subr.bf16.mxu0 0
    %6751 = vmatpush1.bf16.msra.mxu0 0
    %6752 = vmatprep.subr.bf16.mxu0 0
    %6753 = vmatpush1.bf16.msra.mxu0 0
    %6754 = vmatprep.subr.bf16.mxu0 0
    %6755 = vmatpush1.bf16.msra.mxu0 0
    %6756 = vmatprep.subr.bf16.mxu0 0
    %6757 = vmatpush1.bf16.msra.mxu0 0
    %6758 = vmatprep.subr.bf16.mxu0 0
    %6759 = vmatpush1.bf16.msra.mxu0 0
    %6760 = vmatprep.subr.bf16.mxu0 0
    %6761 = vmatpush1.bf16.msra.mxu0 0
    %6762 = vmatprep.subr.bf16.mxu0 0
    %6763 = vmatpush1.bf16.msra.mxu0 0
    %6764 = vmatprep.subr.bf16.mxu0 0
    %6765 = vmatpush1.bf16.msra.mxu0 0
    %6766 = vmatprep.mubr.bf16.mxu0 0
    %6767 = vmatmul.mubr.bf16.gmra.mrb[0].mxu0 %v6729
    %v6768 = vpop.f32.mrb[0].mxu0
    %v6769 = vadd.f32 0.0, %v6768
    %v6770 = vpop.f32.mrb[0].mxu0
    %v6771 = vpop.f32.mrb[0].mxu0
    %v6772 = vpop.f32.mrb[0].mxu0
    %6773 = vdwg.mxu0
    %v6775 = vsel %vm3720, %v5571, 0
    %v6778 = vsel %vm5580, %v3704, 0
    %6780 = vmatprep.subr.bf16.mxu0 0
    %6781 = vmatpush1.bf16.msra.mxu0 %v6778
    %6782 = vmatprep.subr.bf16.mxu0 0
    %6783 = vmatpush1.bf16.msra.mxu0 0
    %6784 = vmatprep.subr.bf16.mxu0 0
    %6785 = vmatpush1.bf16.msra.mxu0 0
    %6786 = vmatprep.subr.bf16.mxu0 0
    %6787 = vmatpush1.bf16.msra.mxu0 0
    %6788 = vmatprep.subr.bf16.mxu0 0
    %6789 = vmatpush1.bf16.msra.mxu0 0
    %6790 = vmatprep.subr.bf16.mxu0 0
    %6791 = vmatpush1.bf16.msra.mxu0 0
    %6792 = vmatprep.subr.bf16.mxu0 0
    %6793 = vmatpush1.bf16.msra.mxu0 0
    %6794 = vmatprep.subr.bf16.mxu0 0
    %6795 = vmatpush1.bf16.msra.mxu0 0
    %6796 = vmatprep.subr.bf16.mxu0 0
    %6797 = vmatpush1.bf16.msra.mxu0 0
    %6798 = vmatprep.subr.bf16.mxu0 0
    %6799 = vmatpush1.bf16.msra.mxu0 0
    %6800 = vmatprep.subr.bf16.mxu0 0
    %6801 = vmatpush1.bf16.msra.mxu0 0
    %6802 = vmatprep.subr.bf16.mxu0 0
    %6803 = vmatpush1.bf16.msra.mxu0 0
    %6804 = vmatprep.subr.bf16.mxu0 0
    %6805 = vmatpush1.bf16.msra.mxu0 0
    %6806 = vmatprep.subr.bf16.mxu0 0
    %6807 = vmatpush1.bf16.msra.mxu0 0
    %6808 = vmatprep.subr.bf16.mxu0 0
    %6809 = vmatpush1.bf16.msra.mxu0 0
    %6810 = vmatprep.subr.bf16.mxu0 0
    %6811 = vmatpush1.bf16.msra.mxu0 0
    %6812 = vmatprep.mubr.bf16.mxu0 0
    %6813 = vmatmul.mubr.bf16.gmra.mrb[0].mxu0 %v6775
    %v6814 = vpop.f32.mrb[0].mxu0
    %v6815 = vadd.f32 0.0, %v6814
    %v6816 = vpop.f32.mrb[0].mxu0
    %v6817 = vpop.f32.mrb[0].mxu0
    %v6818 = vpop.f32.mrb[0].mxu0
    %6819 = vdwg.mxu0
    %v6821 = vsel %vm3720, %v5572, 0
    %v6824 = vsel %vm5580, %v3707, 0
    %6826 = vmatprep.subr.bf16.mxu0 0
    %6827 = vmatpush1.bf16.msra.mxu0 %v6824
    %6828 = vmatprep.subr.bf16.mxu0 0
    %6829 = vmatpush1.bf16.msra.mxu0 0
    %6830 = vmatprep.subr.bf16.mxu0 0
    %6831 = vmatpush1.bf16.msra.mxu0 0
    %6832 = vmatprep.subr.bf16.mxu0 0
    %6833 = vmatpush1.bf16.msra.mxu0 0
    %6834 = vmatprep.subr.bf16.mxu0 0
    %6835 = vmatpush1.bf16.msra.mxu0 0
    %6836 = vmatprep.subr.bf16.mxu0 0
    %6837 = vmatpush1.bf16.msra.mxu0 0
    %6838 = vmatprep.subr.bf16.mxu0 0
    %6839 = vmatpush1.bf16.msra.mxu0 0
    %6840 = vmatprep.subr.bf16.mxu0 0
    %6841 = vmatpush1.bf16.msra.mxu0 0
    %6842 = vmatprep.subr.bf16.mxu0 0
    %6843 = vmatpush1.bf16.msra.mxu0 0
    %6844 = vmatprep.subr.bf16.mxu0 0
    %6845 = vmatpush1.bf16.msra.mxu0 0
    %6846 = vmatprep.subr.bf16.mxu0 0
    %6847 = vmatpush1.bf16.msra.mxu0 0
    %6848 = vmatprep.subr.bf16.mxu0 0
    %6849 = vmatpush1.bf16.msra.mxu0 0
    %6850 = vmatprep.subr.bf16.mxu0 0
    %6851 = vmatpush1.bf16.msra.mxu0 0
    %6852 = vmatprep.subr.bf16.mxu0 0
    %6853 = vmatpush1.bf16.msra.mxu0 0
    %6854 = vmatprep.subr.bf16.mxu0 0
    %6855 = vmatpush1.bf16.msra.mxu0 0
    %6856 = vmatprep.subr.bf16.mxu0 0
    %6857 = vmatpush1.bf16.msra.mxu0 0
    %6858 = vmatprep.mubr.bf16.mxu0 0
    %6859 = vmatmul.mubr.bf16.gmra.mrb[0].mxu0 %v6821
    %v6860 = vpop.f32.mrb[0].mxu0
    %v6861 = vadd.f32 0.0, %v6860
    %v6862 = vpop.f32.mrb[0].mxu0
    %v6863 = vpop.f32.mrb[0].mxu0
    %v6864 = vpop.f32.mrb[0].mxu0
    %6865 = vdwg.mxu0
    %v6867 = vsel %vm3720, %v5573, 0
    %v6870 = vsel %vm5580, %v3710, 0
    %6872 = vmatprep.subr.bf16.mxu0 0
    %6873 = vmatpush1.bf16.msra.mxu0 %v6870
    %6874 = vmatprep.subr.bf16.mxu0 0
    %6875 = vmatpush1.bf16.msra.mxu0 0
    %6876 = vmatprep.subr.bf16.mxu0 0
    %6877 = vmatpush1.bf16.msra.mxu0 0
    %6878 = vmatprep.subr.bf16.mxu0 0
    %6879 = vmatpush1.bf16.msra.mxu0 0
    %6880 = vmatprep.subr.bf16.mxu0 0
    %6881 = vmatpush1.bf16.msra.mxu0 0
    %6882 = vmatprep.subr.bf16.mxu0 0
    %6883 = vmatpush1.bf16.msra.mxu0 0
    %6884 = vmatprep.subr.bf16.mxu0 0
    %6885 = vmatpush1.bf16.msra.mxu0 0
    %6886 = vmatprep.subr.bf16.mxu0 0
    %6887 = vmatpush1.bf16.msra.mxu0 0
    %6888 = vmatprep.subr.bf16.mxu0 0
    %6889 = vmatpush1.bf16.msra.mxu0 0
    %6890 = vmatprep.subr.bf16.mxu0 0
    %6891 = vmatpush1.bf16.msra.mxu0 0
    %6892 = vmatprep.subr.bf16.mxu0 0
    %6893 = vmatpush1.bf16.msra.mxu0 0
    %6894 = vmatprep.subr.bf16.mxu0 0
    %6895 = vmatpush1.bf16.msra.mxu0 0
    %6896 = vmatprep.subr.bf16.mxu0 0
    %6897 = vmatpush1.bf16.msra.mxu0 0
    %6898 = vmatprep.subr.bf16.mxu0 0
    %6899 = vmatpush1.bf16.msra.mxu0 0
    %6900 = vmatprep.subr.bf16.mxu0 0
    %6901 = vmatpush1.bf16.msra.mxu0 0
    %6902 = vmatprep.subr.bf16.mxu0 0
    %6903 = vmatpush1.bf16.msra.mxu0 0
    %6904 = vmatprep.mubr.bf16.mxu0 0
    %6905 = vmatmul.mubr.bf16.gmra.mrb[0].mxu0 %v6867
    %v6906 = vpop.f32.mrb[0].mxu0
    %v6907 = vadd.f32 0.0, %v6906
    %v6908 = vpop.f32.mrb[0].mxu0
    %v6909 = vpop.f32.mrb[0].mxu0
    %v6910 = vpop.f32.mrb[0].mxu0
    %6911 = vdwg.mxu0
    %v6913 = vsel %vm3720, %v5574, 0
    %v6916 = vsel %vm5580, %v3713, 0
    %6918 = vmatprep.subr.bf16.mxu0 0
    %6919 = vmatpush1.bf16.msra.mxu0 %v6916
    %6920 = vmatprep.subr.bf16.mxu0 0
    %6921 = vmatpush1.bf16.msra.mxu0 0
    %6922 = vmatprep.subr.bf16.mxu0 0
    %6923 = vmatpush1.bf16.msra.mxu0 0
    %6924 = vmatprep.subr.bf16.mxu0 0
    %6925 = vmatpush1.bf16.msra.mxu0 0
    %6926 = vmatprep.subr.bf16.mxu0 0
    %6927 = vmatpush1.bf16.msra.mxu0 0
    %6928 = vmatprep.subr.bf16.mxu0 0
    %6929 = vmatpush1.bf16.msra.mxu0 0
    %6930 = vmatprep.subr.bf16.mxu0 0
    %6931 = vmatpush1.bf16.msra.mxu0 0
    %6932 = vmatprep.subr.bf16.mxu0 0
    %6933 = vmatpush1.bf16.msra.mxu0 0
    %6934 = vmatprep.subr.bf16.mxu0 0
    %6935 = vmatpush1.bf16.msra.mxu0 0
    %6936 = vmatprep.subr.bf16.mxu0 0
    %6937 = vmatpush1.bf16.msra.mxu0 0
    %6938 = vmatprep.subr.bf16.mxu0 0
    %6939 = vmatpush1.bf16.msra.mxu0 0
    %6940 = vmatprep.subr.bf16.mxu0 0
    %6941 = vmatpush1.bf16.msra.mxu0 0
    %6942 = vmatprep.subr.bf16.mxu0 0
    %6943 = vmatpush1.bf16.msra.mxu0 0
    %6944 = vmatprep.subr.bf16.mxu0 0
    %6945 = vmatpush1.bf16.msra.mxu0 0
    %6946 = vmatprep.subr.bf16.mxu0 0
    %6947 = vmatpush1.bf16.msra.mxu0 0
    %6948 = vmatprep.subr.bf16.mxu0 0
    %6949 = vmatpush1.bf16.msra.mxu0 0
    %6950 = vmatprep.mubr.bf16.mxu0 0
    %6951 = vmatmul.mubr.bf16.gmra.mrb[0].mxu0 %v6913
    %v6952 = vpop.f32.mrb[0].mxu0
    %v6953 = vadd.f32 0.0, %v6952
    %v6954 = vpop.f32.mrb[0].mxu0
    %v6955 = vpop.f32.mrb[0].mxu0
    %v6956 = vpop.f32.mrb[0].mxu0
    %6957 = vdwg.mxu0
    %v6959 = vsel %vm3720, %v5575, 0
    %v6962 = vsel %vm5580, %v3716, 0
    %6964 = vmatprep.subr.bf16.mxu0 0
    %6965 = vmatpush1.bf16.msra.mxu0 %v6962
    %6966 = vmatprep.subr.bf16.mxu0 0
    %6967 = vmatpush1.bf16.msra.mxu0 0
    %6968 = vmatprep.subr.bf16.mxu0 0
    %6969 = vmatpush1.bf16.msra.mxu0 0
    %6970 = vmatprep.subr.bf16.mxu0 0
    %6971 = vmatpush1.bf16.msra.mxu0 0
    %6972 = vmatprep.subr.bf16.mxu0 0
    %6973 = vmatpush1.bf16.msra.mxu0 0
    %6974 = vmatprep.subr.bf16.mxu0 0
    %6975 = vmatpush1.bf16.msra.mxu0 0
    %6976 = vmatprep.subr.bf16.mxu0 0
    %6977 = vmatpush1.bf16.msra.mxu0 0
    %6978 = vmatprep.subr.bf16.mxu0 0
    %6979 = vmatpush1.bf16.msra.mxu0 0
    %6980 = vmatprep.subr.bf16.mxu0 0
    %6981 = vmatpush1.bf16.msra.mxu0 0
    %6982 = vmatprep.subr.bf16.mxu0 0
    %6983 = vmatpush1.bf16.msra.mxu0 0
    %6984 = vmatprep.subr.bf16.mxu0 0
    %6985 = vmatpush1.bf16.msra.mxu0 0
    %6986 = vmatprep.subr.bf16.mxu0 0
    %6987 = vmatpush1.bf16.msra.mxu0 0
    %6988 = vmatprep.subr.bf16.mxu0 0
    %6989 = vmatpush1.bf16.msra.mxu0 0
    %6990 = vmatprep.subr.bf16.mxu0 0
    %6991 = vmatpush1.bf16.msra.mxu0 0
    %6992 = vmatprep.subr.bf16.mxu0 0
    %6993 = vmatpush1.bf16.msra.mxu0 0
    %6994 = vmatprep.subr.bf16.mxu0 0
    %6995 = vmatpush1.bf16.msra.mxu0 0
    %6996 = vmatprep.mubr.bf16.mxu0 0
    %6997 = vmatmul.mubr.bf16.gmra.mrb[0].mxu0 %v6959
    %v6998 = vpop.f32.mrb[0].mxu0
    %v6999 = vadd.f32 0.0, %v6998
    %v7000 = vpop.f32.mrb[0].mxu0
    %v7001 = vpop.f32.mrb[0].mxu0
    %v7002 = vpop.f32.mrb[0].mxu0
    %7003 = vdwg.mxu0
    %v7005 = vsel %vm3720, %v5576, 0
    %v7008 = vsel %vm5580, %v3719, 0
    %7010 = vmatprep.subr.bf16.mxu0 0
    %7011 = vmatpush1.bf16.msra.mxu0 %v7008
    %7012 = vmatprep.subr.bf16.mxu0 0
    %7013 = vmatpush1.bf16.msra.mxu0 0
    %7014 = vmatprep.subr.bf16.mxu0 0
    %7015 = vmatpush1.bf16.msra.mxu0 0
    %7016 = vmatprep.subr.bf16.mxu0 0
    %7017 = vmatpush1.bf16.msra.mxu0 0
    %7018 = vmatprep.subr.bf16.mxu0 0
    %7019 = vmatpush1.bf16.msra.mxu0 0
    %7020 = vmatprep.subr.bf16.mxu0 0
    %7021 = vmatpush1.bf16.msra.mxu0 0
    %7022 = vmatprep.subr.bf16.mxu0 0
    %7023 = vmatpush1.bf16.msra.mxu0 0
    %7024 = vmatprep.subr.bf16.mxu0 0
    %7025 = vmatpush1.bf16.msra.mxu0 0
    %7026 = vmatprep.subr.bf16.mxu0 0
    %7027 = vmatpush1.bf16.msra.mxu0 0
    %7028 = vmatprep.subr.bf16.mxu0 0
    %7029 = vmatpush1.bf16.msra.mxu0 0
    %7030 = vmatprep.subr.bf16.mxu0 0
    %7031 = vmatpush1.bf16.msra.mxu0 0
    %7032 = vmatprep.subr.bf16.mxu0 0
    %7033 = vmatpush1.bf16.msra.mxu0 0
    %7034 = vmatprep.subr.bf16.mxu0 0
    %7035 = vmatpush1.bf16.msra.mxu0 0
    %7036 = vmatprep.subr.bf16.mxu0 0
    %7037 = vmatpush1.bf16.msra.mxu0 0
    %7038 = vmatprep.subr.bf16.mxu0 0
    %7039 = vmatpush1.bf16.msra.mxu0 0
    %7040 = vmatprep.subr.bf16.mxu0 0
    %7041 = vmatpush1.bf16.msra.mxu0 0
    %7042 = vmatprep.mubr.bf16.mxu0 0
    %7043 = vmatmul.mubr.bf16.gmra.mrb[0].mxu0 %v7005
    %v7044 = vpop.f32.mrb[0].mxu0
    %v7045 = vadd.f32 0.0, %v7044
    %v7046 = vpop.f32.mrb[0].mxu0
    %v7047 = vpop.f32.mrb[0].mxu0
    %v7048 = vpop.f32.mrb[0].mxu0
    %7049 = vdwg.mxu0
    %v7050 = vcombine.low %v5619, %v5711
    %v7051 = vcombine.high %v5619, %v5711
    %v7053 = vunpack.c.l.s4 1983009808
    %v7054 = vunpack.c.0.s8 %v7053
    %v7055 = vlaneseq
    %v7056 = vshrl.u32 %v7055, 7
    %v7057 = vsub.s32 %v7054, %v7056
    %v7058 = vrot.slane %v7050, %v7057
    %v7060 = vunpack.c.l.s4 1983009808
    %v7061 = vunpack.c.0.s8 %v7060
    %v7062 = vlaneseq
    %v7063 = vshrl.u32 %v7062, 7
    %v7064 = vsub.s32 %v7061, %v7063
    %v7065 = vrot.slane %v7051, %v7064
    %v7066 = vcombine.low %v5665, %v5757
    %v7067 = vcombine.high %v5665, %v5757
    %v7069 = vunpack.c.l.s4 1983009808
    %v7070 = vunpack.c.0.s8 %v7069
    %v7071 = vlaneseq
    %v7072 = vshrl.u32 %v7071, 7
    %v7073 = vsub.s32 %v7070, %v7072
    %v7074 = vrot.slane %v7066, %v7073
    %v7076 = vunpack.c.l.s4 1983009808
    %v7077 = vunpack.c.0.s8 %v7076
    %v7078 = vlaneseq
    %v7079 = vshrl.u32 %v7078, 7
    %v7080 = vsub.s32 %v7077, %v7079
    %v7081 = vrot.slane %v7067, %v7080
    %v7082 = vcombine.low %v7058, %v7074
    %v7083 = vcombine.high %v7058, %v7074
    %v7085 = vunpack.c.l.s4 1934713408
    %v7086 = vunpack.c.0.s8 %v7085
    %v7087 = vlaneseq
    %v7088 = vshrl.u32 %v7087, 7
    %v7089 = vsub.s32 %v7086, %v7088
    %v7090 = vrot.slane %v7082, %v7089
    %v7092 = vunpack.c.l.s4 1934713408
    %v7093 = vunpack.c.0.s8 %v7092
    %v7094 = vlaneseq
    %v7095 = vshrl.u32 %v7094, 7
    %v7096 = vsub.s32 %v7093, %v7095
    %v7097 = vrot.slane %v7083, %v7096
    %v7098 = vcombine.low %v7065, %v7081
    %v7099 = vcombine.high %v7065, %v7081
    %v7101 = vunpack.c.l.s4 1934713408
    %v7102 = vunpack.c.0.s8 %v7101
    %v7103 = vlaneseq
    %v7104 = vshrl.u32 %v7103, 7
    %v7105 = vsub.s32 %v7102, %v7104
    %v7106 = vrot.slane %v7098, %v7105
    %v7108 = vunpack.c.l.s4 1934713408
    %v7109 = vunpack.c.0.s8 %v7108
    %v7110 = vlaneseq
    %v7111 = vshrl.u32 %v7110, 7
    %v7112 = vsub.s32 %v7109, %v7111
    %v7113 = vrot.slane %v7099, %v7112
    %v7114 = vcombine.high %v7090, 0.0
    %v7115 = vcombine.high %v7097, 0.0
    %v7116 = vcombine.high %v7106, 0.0
    %v7117 = vcombine.high %v7113, 0.0
    %v7118 = vcombine.low %v5803, %v5895
    %v7119 = vcombine.high %v5803, %v5895
    %v7121 = vunpack.c.l.s4 1983009808
    %v7122 = vunpack.c.0.s8 %v7121
    %v7123 = vlaneseq
    %v7124 = vshrl.u32 %v7123, 7
    %v7125 = vsub.s32 %v7122, %v7124
    %v7126 = vrot.slane %v7118, %v7125
    %v7128 = vunpack.c.l.s4 1983009808
    %v7129 = vunpack.c.0.s8 %v7128
    %v7130 = vlaneseq
    %v7131 = vshrl.u32 %v7130, 7
    %v7132 = vsub.s32 %v7129, %v7131
    %v7133 = vrot.slane %v7119, %v7132
    %v7134 = vcombine.low %v5849, %v5941
    %v7135 = vcombine.high %v5849, %v5941
    %v7137 = vunpack.c.l.s4 1983009808
    %v7138 = vunpack.c.0.s8 %v7137
    %v7139 = vlaneseq
    %v7140 = vshrl.u32 %v7139, 7
    %v7141 = vsub.s32 %v7138, %v7140
    %v7142 = vrot.slane %v7134, %v7141
    %v7144 = vunpack.c.l.s4 1983009808
    %v7145 = vunpack.c.0.s8 %v7144
    %v7146 = vlaneseq
    %v7147 = vshrl.u32 %v7146, 7
    %v7148 = vsub.s32 %v7145, %v7147
    %v7149 = vrot.slane %v7135, %v7148
    %v7150 = vcombine.low %v7126, %v7142
    %v7151 = vcombine.high %v7126, %v7142
    %v7153 = vunpack.c.l.s4 1934713408
    %v7154 = vunpack.c.0.s8 %v7153
    %v7155 = vlaneseq
    %v7156 = vshrl.u32 %v7155, 7
    %v7157 = vsub.s32 %v7154, %v7156
    %v7158 = vrot.slane %v7150, %v7157
    %v7160 = vunpack.c.l.s4 1934713408
    %v7161 = vunpack.c.0.s8 %v7160
    %v7162 = vlaneseq
    %v7163 = vshrl.u32 %v7162, 7
    %v7164 = vsub.s32 %v7161, %v7163
    %v7165 = vrot.slane %v7151, %v7164
    %v7166 = vcombine.low %v7133, %v7149
    %v7167 = vcombine.high %v7133, %v7149
    %v7169 = vunpack.c.l.s4 1934713408
    %v7170 = vunpack.c.0.s8 %v7169
    %v7171 = vlaneseq
    %v7172 = vshrl.u32 %v7171, 7
    %v7173 = vsub.s32 %v7170, %v7172
    %v7174 = vrot.slane %v7166, %v7173
    %v7176 = vunpack.c.l.s4 1934713408
    %v7177 = vunpack.c.0.s8 %v7176
    %v7178 = vlaneseq
    %v7179 = vshrl.u32 %v7178, 7
    %v7180 = vsub.s32 %v7177, %v7179
    %v7181 = vrot.slane %v7167, %v7180
    %v7182 = vcombine.high %v7158, 0.0
    %v7183 = vcombine.high %v7165, 0.0
    %v7184 = vcombine.high %v7174, 0.0
    %v7185 = vcombine.high %v7181, 0.0
    %v7186 = vcombine.low %v5987, %v6079
    %v7187 = vcombine.high %v5987, %v6079
    %v7189 = vunpack.c.l.s4 1983009808
    %v7190 = vunpack.c.0.s8 %v7189
    %v7191 = vlaneseq
    %v7192 = vshrl.u32 %v7191, 7
    %v7193 = vsub.s32 %v7190, %v7192
    %v7194 = vrot.slane %v7186, %v7193
    %v7196 = vunpack.c.l.s4 1983009808
    %v7197 = vunpack.c.0.s8 %v7196
    %v7198 = vlaneseq
    %v7199 = vshrl.u32 %v7198, 7
    %v7200 = vsub.s32 %v7197, %v7199
    %v7201 = vrot.slane %v7187, %v7200
    %v7202 = vcombine.low %v6033, %v6125
    %v7203 = vcombine.high %v6033, %v6125
    %v7205 = vunpack.c.l.s4 1983009808
    %v7206 = vunpack.c.0.s8 %v7205
    %v7207 = vlaneseq
    %v7208 = vshrl.u32 %v7207, 7
    %v7209 = vsub.s32 %v7206, %v7208
    %v7210 = vrot.slane %v7202, %v7209
    %v7212 = vunpack.c.l.s4 1983009808
    %v7213 = vunpack.c.0.s8 %v7212
    %v7214 = vlaneseq
    %v7215 = vshrl.u32 %v7214, 7
    %v7216 = vsub.s32 %v7213, %v7215
    %v7217 = vrot.slane %v7203, %v7216
    %v7218 = vcombine.low %v7194, %v7210
    %v7219 = vcombine.high %v7194, %v7210
    %v7221 = vunpack.c.l.s4 1934713408
    %v7222 = vunpack.c.0.s8 %v7221
    %v7223 = vlaneseq
    %v7224 = vshrl.u32 %v7223, 7
    %v7225 = vsub.s32 %v7222, %v7224
    %v7226 = vrot.slane %v7218, %v7225
    %v7228 = vunpack.c.l.s4 1934713408
    %v7229 = vunpack.c.0.s8 %v7228
    %v7230 = vlaneseq
    %v7231 = vshrl.u32 %v7230, 7
    %v7232 = vsub.s32 %v7229, %v7231
    %v7233 = vrot.slane %v7219, %v7232
    %v7234 = vcombine.low %v7201, %v7217
    %v7235 = vcombine.high %v7201, %v7217
    %v7237 = vunpack.c.l.s4 1934713408
    %v7238 = vunpack.c.0.s8 %v7237
    %v7239 = vlaneseq
    %v7240 = vshrl.u32 %v7239, 7
    %v7241 = vsub.s32 %v7238, %v7240
    %v7242 = vrot.slane %v7234, %v7241
    %v7244 = vunpack.c.l.s4 1934713408
    %v7245 = vunpack.c.0.s8 %v7244
    %v7246 = vlaneseq
    %v7247 = vshrl.u32 %v7246, 7
    %v7248 = vsub.s32 %v7245, %v7247
    %v7249 = vrot.slane %v7235, %v7248
    %v7250 = vcombine.high %v7226, 0.0
    %v7251 = vcombine.high %v7233, 0.0
    %v7252 = vcombine.high %v7242, 0.0
    %v7253 = vcombine.high %v7249, 0.0
    %v7254 = vcombine.low %v6171, %v6263
    %v7255 = vcombine.high %v6171, %v6263
    %v7257 = vunpack.c.l.s4 1983009808
    %v7258 = vunpack.c.0.s8 %v7257
    %v7259 = vlaneseq
    %v7260 = vshrl.u32 %v7259, 7
    %v7261 = vsub.s32 %v7258, %v7260
    %v7262 = vrot.slane %v7254, %v7261
    %v7264 = vunpack.c.l.s4 1983009808
    %v7265 = vunpack.c.0.s8 %v7264
    %v7266 = vlaneseq
    %v7267 = vshrl.u32 %v7266, 7
    %v7268 = vsub.s32 %v7265, %v7267
    %v7269 = vrot.slane %v7255, %v7268
    %v7270 = vcombine.low %v6217, %v6309
    %v7271 = vcombine.high %v6217, %v6309
    %v7273 = vunpack.c.l.s4 1983009808
    %v7274 = vunpack.c.0.s8 %v7273
    %v7275 = vlaneseq
    %v7276 = vshrl.u32 %v7275, 7
    %v7277 = vsub.s32 %v7274, %v7276
    %v7278 = vrot.slane %v7270, %v7277
    %v7280 = vunpack.c.l.s4 1983009808
    %v7281 = vunpack.c.0.s8 %v7280
    %v7282 = vlaneseq
    %v7283 = vshrl.u32 %v7282, 7
    %v7284 = vsub.s32 %v7281, %v7283
    %v7285 = vrot.slane %v7271, %v7284
    %v7286 = vcombine.low %v7262, %v7278
    %v7287 = vcombine.high %v7262, %v7278
    %v7289 = vunpack.c.l.s4 1934713408
    %v7290 = vunpack.c.0.s8 %v7289
    %v7291 = vlaneseq
    %v7292 = vshrl.u32 %v7291, 7
    %v7293 = vsub.s32 %v7290, %v7292
    %v7294 = vrot.slane %v7286, %v7293
    %v7296 = vunpack.c.l.s4 1934713408
    %v7297 = vunpack.c.0.s8 %v7296
    %v7298 = vlaneseq
    %v7299 = vshrl.u32 %v7298, 7
    %v7300 = vsub.s32 %v7297, %v7299
    %v7301 = vrot.slane %v7287, %v7300
    %v7302 = vcombine.low %v7269, %v7285
    %v7303 = vcombine.high %v7269, %v7285
    %v7305 = vunpack.c.l.s4 1934713408
    %v7306 = vunpack.c.0.s8 %v7305
    %v7307 = vlaneseq
    %v7308 = vshrl.u32 %v7307, 7
    %v7309 = vsub.s32 %v7306, %v7308
    %v7310 = vrot.slane %v7302, %v7309
    %v7312 = vunpack.c.l.s4 1934713408
    %v7313 = vunpack.c.0.s8 %v7312
    %v7314 = vlaneseq
    %v7315 = vshrl.u32 %v7314, 7
    %v7316 = vsub.s32 %v7313, %v7315
    %v7317 = vrot.slane %v7303, %v7316
    %v7318 = vcombine.high %v7294, 0.0
    %v7319 = vcombine.high %v7301, 0.0
    %v7320 = vcombine.high %v7310, 0.0
    %v7321 = vcombine.high %v7317, 0.0
    %v7322 = vcombine.low %v6355, %v6447
    %v7323 = vcombine.high %v6355, %v6447
    %v7325 = vunpack.c.l.s4 1983009808
    %v7326 = vunpack.c.0.s8 %v7325
    %v7327 = vlaneseq
    %v7328 = vshrl.u32 %v7327, 7
    %v7329 = vsub.s32 %v7326, %v7328
    %v7330 = vrot.slane %v7322, %v7329
    %v7332 = vunpack.c.l.s4 1983009808
    %v7333 = vunpack.c.0.s8 %v7332
    %v7334 = vlaneseq
    %v7335 = vshrl.u32 %v7334, 7
    %v7336 = vsub.s32 %v7333, %v7335
    %v7337 = vrot.slane %v7323, %v7336
    %v7338 = vcombine.low %v6401, %v6493
    %v7339 = vcombine.high %v6401, %v6493
    %v7341 = vunpack.c.l.s4 1983009808
    %v7342 = vunpack.c.0.s8 %v7341
    %v7343 = vlaneseq
    %v7344 = vshrl.u32 %v7343, 7
    %v7345 = vsub.s32 %v7342, %v7344
    %v7346 = vrot.slane %v7338, %v7345
    %v7348 = vunpack.c.l.s4 1983009808
    %v7349 = vunpack.c.0.s8 %v7348
    %v7350 = vlaneseq
    %v7351 = vshrl.u32 %v7350, 7
    %v7352 = vsub.s32 %v7349, %v7351
    %v7353 = vrot.slane %v7339, %v7352
    %v7354 = vcombine.low %v7330, %v7346
    %v7355 = vcombine.high %v7330, %v7346
    %v7357 = vunpack.c.l.s4 1934713408
    %v7358 = vunpack.c.0.s8 %v7357
    %v7359 = vlaneseq
    %v7360 = vshrl.u32 %v7359, 7
    %v7361 = vsub.s32 %v7358, %v7360
    %v7362 = vrot.slane %v7354, %v7361
    %v7364 = vunpack.c.l.s4 1934713408
    %v7365 = vunpack.c.0.s8 %v7364
    %v7366 = vlaneseq
    %v7367 = vshrl.u32 %v7366, 7
    %v7368 = vsub.s32 %v7365, %v7367
    %v7369 = vrot.slane %v7355, %v7368
    %v7370 = vcombine.low %v7337, %v7353
    %v7371 = vcombine.high %v7337, %v7353
    %v7373 = vunpack.c.l.s4 1934713408
    %v7374 = vunpack.c.0.s8 %v7373
    %v7375 = vlaneseq
    %v7376 = vshrl.u32 %v7375, 7
    %v7377 = vsub.s32 %v7374, %v7376
    %v7378 = vrot.slane %v7370, %v7377
    %v7380 = vunpack.c.l.s4 1934713408
    %v7381 = vunpack.c.0.s8 %v7380
    %v7382 = vlaneseq
    %v7383 = vshrl.u32 %v7382, 7
    %v7384 = vsub.s32 %v7381, %v7383
    %v7385 = vrot.slane %v7371, %v7384
    %v7386 = vcombine.high %v7362, 0.0
    %v7387 = vcombine.high %v7369, 0.0
    %v7388 = vcombine.high %v7378, 0.0
    %v7389 = vcombine.high %v7385, 0.0
    %v7390 = vcombine.low %v6539, %v6631
    %v7391 = vcombine.high %v6539, %v6631
    %v7393 = vunpack.c.l.s4 1983009808
    %v7394 = vunpack.c.0.s8 %v7393
    %v7395 = vlaneseq
    %v7396 = vshrl.u32 %v7395, 7
    %v7397 = vsub.s32 %v7394, %v7396
    %v7398 = vrot.slane %v7390, %v7397
    %v7400 = vunpack.c.l.s4 1983009808
    %v7401 = vunpack.c.0.s8 %v7400
    %v7402 = vlaneseq
    %v7403 = vshrl.u32 %v7402, 7
    %v7404 = vsub.s32 %v7401, %v7403
    %v7405 = vrot.slane %v7391, %v7404
    %v7406 = vcombine.low %v6585, %v6677
    %v7407 = vcombine.high %v6585, %v6677
    %v7409 = vunpack.c.l.s4 1983009808
    %v7410 = vunpack.c.0.s8 %v7409
    %v7411 = vlaneseq
    %v7412 = vshrl.u32 %v7411, 7
    %v7413 = vsub.s32 %v7410, %v7412
    %v7414 = vrot.slane %v7406, %v7413
    %v7416 = vunpack.c.l.s4 1983009808
    %v7417 = vunpack.c.0.s8 %v7416
    %v7418 = vlaneseq
    %v7419 = vshrl.u32 %v7418, 7
    %v7420 = vsub.s32 %v7417, %v7419
    %v7421 = vrot.slane %v7407, %v7420
    %v7422 = vcombine.low %v7398, %v7414
    %v7423 = vcombine.high %v7398, %v7414
    %v7425 = vunpack.c.l.s4 1934713408
    %v7426 = vunpack.c.0.s8 %v7425
    %v7427 = vlaneseq
    %v7428 = vshrl.u32 %v7427, 7
    %v7429 = vsub.s32 %v7426, %v7428
    %v7430 = vrot.slane %v7422, %v7429
    %v7432 = vunpack.c.l.s4 1934713408
    %v7433 = vunpack.c.0.s8 %v7432
    %v7434 = vlaneseq
    %v7435 = vshrl.u32 %v7434, 7
    %v7436 = vsub.s32 %v7433, %v7435
    %v7437 = vrot.slane %v7423, %v7436
    %v7438 = vcombine.low %v7405, %v7421
    %v7439 = vcombine.high %v7405, %v7421
    %v7441 = vunpack.c.l.s4 1934713408
    %v7442 = vunpack.c.0.s8 %v7441
    %v7443 = vlaneseq
    %v7444 = vshrl.u32 %v7443, 7
    %v7445 = vsub.s32 %v7442, %v7444
    %v7446 = vrot.slane %v7438, %v7445
    %v7448 = vunpack.c.l.s4 1934713408
    %v7449 = vunpack.c.0.s8 %v7448
    %v7450 = vlaneseq
    %v7451 = vshrl.u32 %v7450, 7
    %v7452 = vsub.s32 %v7449, %v7451
    %v7453 = vrot.slane %v7439, %v7452
    %v7454 = vcombine.high %v7430, 0.0
    %v7455 = vcombine.high %v7437, 0.0
    %v7456 = vcombine.high %v7446, 0.0
    %v7457 = vcombine.high %v7453, 0.0
    %v7458 = vcombine.low %v6723, %v6815
    %v7459 = vcombine.high %v6723, %v6815
    %v7461 = vunpack.c.l.s4 1983009808
    %v7462 = vunpack.c.0.s8 %v7461
    %v7463 = vlaneseq
    %v7464 = vshrl.u32 %v7463, 7
    %v7465 = vsub.s32 %v7462, %v7464
    %v7466 = vrot.slane %v7458, %v7465
    %v7468 = vunpack.c.l.s4 1983009808
    %v7469 = vunpack.c.0.s8 %v7468
    %v7470 = vlaneseq
    %v7471 = vshrl.u32 %v7470, 7
    %v7472 = vsub.s32 %v7469, %v7471
    %v7473 = vrot.slane %v7459, %v7472
    %v7474 = vcombine.low %v6769, %v6861
    %v7475 = vcombine.high %v6769, %v6861
    %v7477 = vunpack.c.l.s4 1983009808
    %v7478 = vunpack.c.0.s8 %v7477
    %v7479 = vlaneseq
    %v7480 = vshrl.u32 %v7479, 7
    %v7481 = vsub.s32 %v7478, %v7480
    %v7482 = vrot.slane %v7474, %v7481
    %v7484 = vunpack.c.l.s4 1983009808
    %v7485 = vunpack.c.0.s8 %v7484
    %v7486 = vlaneseq
    %v7487 = vshrl.u32 %v7486, 7
    %v7488 = vsub.s32 %v7485, %v7487
    %v7489 = vrot.slane %v7475, %v7488
    %v7490 = vcombine.low %v7466, %v7482
    %v7491 = vcombine.high %v7466, %v7482
    %v7493 = vunpack.c.l.s4 1934713408
    %v7494 = vunpack.c.0.s8 %v7493
    %v7495 = vlaneseq
    %v7496 = vshrl.u32 %v7495, 7
    %v7497 = vsub.s32 %v7494, %v7496
    %v7498 = vrot.slane %v7490, %v7497
    %v7500 = vunpack.c.l.s4 1934713408
    %v7501 = vunpack.c.0.s8 %v7500
    %v7502 = vlaneseq
    %v7503 = vshrl.u32 %v7502, 7
    %v7504 = vsub.s32 %v7501, %v7503
    %v7505 = vrot.slane %v7491, %v7504
    %v7506 = vcombine.low %v7473, %v7489
    %v7507 = vcombine.high %v7473, %v7489
    %v7509 = vunpack.c.l.s4 1934713408
    %v7510 = vunpack.c.0.s8 %v7509
    %v7511 = vlaneseq
    %v7512 = vshrl.u32 %v7511, 7
    %v7513 = vsub.s32 %v7510, %v7512
    %v7514 = vrot.slane %v7506, %v7513
    %v7516 = vunpack.c.l.s4 1934713408
    %v7517 = vunpack.c.0.s8 %v7516
    %v7518 = vlaneseq
    %v7519 = vshrl.u32 %v7518, 7
    %v7520 = vsub.s32 %v7517, %v7519
    %v7521 = vrot.slane %v7507, %v7520
    %v7522 = vcombine.high %v7498, 0.0
    %v7523 = vcombine.high %v7505, 0.0
    %v7524 = vcombine.high %v7514, 0.0
    %v7525 = vcombine.high %v7521, 0.0
    %v7526 = vcombine.low %v6907, %v6999
    %v7527 = vcombine.high %v6907, %v6999
    %v7529 = vunpack.c.l.s4 1983009808
    %v7530 = vunpack.c.0.s8 %v7529
    %v7531 = vlaneseq
    %v7532 = vshrl.u32 %v7531, 7
    %v7533 = vsub.s32 %v7530, %v7532
    %v7534 = vrot.slane %v7526, %v7533
    %v7536 = vunpack.c.l.s4 1983009808
    %v7537 = vunpack.c.0.s8 %v7536
    %v7538 = vlaneseq
    %v7539 = vshrl.u32 %v7538, 7
    %v7540 = vsub.s32 %v7537, %v7539
    %v7541 = vrot.slane %v7527, %v7540
    %v7542 = vcombine.low %v6953, %v7045
    %v7543 = vcombine.high %v6953, %v7045
    %v7545 = vunpack.c.l.s4 1983009808
    %v7546 = vunpack.c.0.s8 %v7545
    %v7547 = vlaneseq
    %v7548 = vshrl.u32 %v7547, 7
    %v7549 = vsub.s32 %v7546, %v7548
    %v7550 = vrot.slane %v7542, %v7549
    %v7552 = vunpack.c.l.s4 1983009808
    %v7553 = vunpack.c.0.s8 %v7552
    %v7554 = vlaneseq
    %v7555 = vshrl.u32 %v7554, 7
    %v7556 = vsub.s32 %v7553, %v7555
    %v7557 = vrot.slane %v7543, %v7556
    %v7558 = vcombine.low %v7534, %v7550
    %v7559 = vcombine.high %v7534, %v7550
    %v7561 = vunpack.c.l.s4 1934713408
    %v7562 = vunpack.c.0.s8 %v7561
    %v7563 = vlaneseq
    %v7564 = vshrl.u32 %v7563, 7
    %v7565 = vsub.s32 %v7562, %v7564
    %v7566 = vrot.slane %v7558, %v7565
    %v7568 = vunpack.c.l.s4 1934713408
    %v7569 = vunpack.c.0.s8 %v7568
    %v7570 = vlaneseq
    %v7571 = vshrl.u32 %v7570, 7
    %v7572 = vsub.s32 %v7569, %v7571
    %v7573 = vrot.slane %v7559, %v7572
    %v7574 = vcombine.low %v7541, %v7557
    %v7575 = vcombine.high %v7541, %v7557
    %v7577 = vunpack.c.l.s4 1934713408
    %v7578 = vunpack.c.0.s8 %v7577
    %v7579 = vlaneseq
    %v7580 = vshrl.u32 %v7579, 7
    %v7581 = vsub.s32 %v7578, %v7580
    %v7582 = vrot.slane %v7574, %v7581
    %v7584 = vunpack.c.l.s4 1934713408
    %v7585 = vunpack.c.0.s8 %v7584
    %v7586 = vlaneseq
    %v7587 = vshrl.u32 %v7586, 7
    %v7588 = vsub.s32 %v7585, %v7587
    %v7589 = vrot.slane %v7575, %v7588
    %v7590 = vcombine.high %v7566, 0.0
    %v7591 = vcombine.high %v7573, 0.0
    %v7592 = vcombine.high %v7582, 0.0
    %v7593 = vcombine.high %v7589, 0.0
    %v7594 = vcombine.low %v7090, %v7226
    %v7596 = vunpack.c.l.s4 1983009808
    %v7597 = vunpack.c.0.s8 %v7596
    %v7598 = vlaneseq
    %v7599 = vshrl.u32 %v7598, 7
    %v7600 = vsub.s32 %v7597, %v7599
    %v7601 = vrot.slane %v7594, %v7600
    %v7602 = vcombine.low %v7158, %v7294
    %v7604 = vunpack.c.l.s4 1983009808
    %v7605 = vunpack.c.0.s8 %v7604
    %v7606 = vlaneseq
    %v7607 = vshrl.u32 %v7606, 7
    %v7608 = vsub.s32 %v7605, %v7607
    %v7609 = vrot.slane %v7602, %v7608
    %v7610 = vcombine.low %v7362, %v7498
    %v7612 = vunpack.c.l.s4 1983009808
    %v7613 = vunpack.c.0.s8 %v7612
    %v7614 = vlaneseq
    %v7615 = vshrl.u32 %v7614, 7
    %v7616 = vsub.s32 %v7613, %v7615
    %v7617 = vrot.slane %v7610, %v7616
    %v7618 = vcombine.low %v7430, %v7566
    %v7620 = vunpack.c.l.s4 1983009808
    %v7621 = vunpack.c.0.s8 %v7620
    %v7622 = vlaneseq
    %v7623 = vshrl.u32 %v7622, 7
    %v7624 = vsub.s32 %v7621, %v7623
    %v7625 = vrot.slane %v7618, %v7624
    %v7626 = vcombine.low %v7601, %v7609
    %v7627 = vcombine.high %v7601, %v7609
    %v7629 = vunpack.c.l.s4 1934713408
    %v7630 = vunpack.c.0.s8 %v7629
    %v7631 = vlaneseq
    %v7632 = vshrl.u32 %v7631, 7
    %v7633 = vsub.s32 %v7630, %v7632
    %v7634 = vrot.slane %v7626, %v7633
    %v7636 = vunpack.c.l.s4 1934713408
    %v7637 = vunpack.c.0.s8 %v7636
    %v7638 = vlaneseq
    %v7639 = vshrl.u32 %v7638, 7
    %v7640 = vsub.s32 %v7637, %v7639
    %v7641 = vrot.slane %v7627, %v7640
    %v7642 = vcombine.low %v7617, %v7625
    %v7643 = vcombine.high %v7617, %v7625
    %v7645 = vunpack.c.l.s4 1934713408
    %v7646 = vunpack.c.0.s8 %v7645
    %v7647 = vlaneseq
    %v7648 = vshrl.u32 %v7647, 7
    %v7649 = vsub.s32 %v7646, %v7648
    %v7650 = vrot.slane %v7642, %v7649
    %v7652 = vunpack.c.l.s4 1934713408
    %v7653 = vunpack.c.0.s8 %v7652
    %v7654 = vlaneseq
    %v7655 = vshrl.u32 %v7654, 7
    %v7656 = vsub.s32 %v7653, %v7655
    %v7657 = vrot.slane %v7643, %v7656
    %v7658 = vcombine.low %v7634, %v7650
    %v7659 = vcombine.high %v7634, %v7650
    %v7660 = vcombine.low %v7641, %v7657
    %v7661 = vcombine.high %v7641, %v7657
    %v7662 = vcombine.low %v7114, %v7250
    %v7664 = vunpack.c.l.s4 1983009808
    %v7665 = vunpack.c.0.s8 %v7664
    %v7666 = vlaneseq
    %v7667 = vshrl.u32 %v7666, 7
    %v7668 = vsub.s32 %v7665, %v7667
    %v7669 = vrot.slane %v7662, %v7668
    %v7670 = vcombine.low %v7182, %v7318
    %v7672 = vunpack.c.l.s4 1983009808
    %v7673 = vunpack.c.0.s8 %v7672
    %v7674 = vlaneseq
    %v7675 = vshrl.u32 %v7674, 7
    %v7676 = vsub.s32 %v7673, %v7675
    %v7677 = vrot.slane %v7670, %v7676
    %v7678 = vcombine.low %v7386, %v7522
    %v7680 = vunpack.c.l.s4 1983009808
    %v7681 = vunpack.c.0.s8 %v7680
    %v7682 = vlaneseq
    %v7683 = vshrl.u32 %v7682, 7
    %v7684 = vsub.s32 %v7681, %v7683
    %v7685 = vrot.slane %v7678, %v7684
    %v7686 = vcombine.low %v7454, %v7590
    %v7688 = vunpack.c.l.s4 1983009808
    %v7689 = vunpack.c.0.s8 %v7688
    %v7690 = vlaneseq
    %v7691 = vshrl.u32 %v7690, 7
    %v7692 = vsub.s32 %v7689, %v7691
    %v7693 = vrot.slane %v7686, %v7692
    %v7694 = vcombine.low %v7669, %v7677
    %v7695 = vcombine.high %v7669, %v7677
    %v7697 = vunpack.c.l.s4 1934713408
    %v7698 = vunpack.c.0.s8 %v7697
    %v7699 = vlaneseq
    %v7700 = vshrl.u32 %v7699, 7
    %v7701 = vsub.s32 %v7698, %v7700
    %v7702 = vrot.slane %v7694, %v7701
    %v7704 = vunpack.c.l.s4 1934713408
    %v7705 = vunpack.c.0.s8 %v7704
    %v7706 = vlaneseq
    %v7707 = vshrl.u32 %v7706, 7
    %v7708 = vsub.s32 %v7705, %v7707
    %v7709 = vrot.slane %v7695, %v7708
    %v7710 = vcombine.low %v7685, %v7693
    %v7711 = vcombine.high %v7685, %v7693
    %v7713 = vunpack.c.l.s4 1934713408
    %v7714 = vunpack.c.0.s8 %v7713
    %v7715 = vlaneseq
    %v7716 = vshrl.u32 %v7715, 7
    %v7717 = vsub.s32 %v7714, %v7716
    %v7718 = vrot.slane %v7710, %v7717
    %v7720 = vunpack.c.l.s4 1934713408
    %v7721 = vunpack.c.0.s8 %v7720
    %v7722 = vlaneseq
    %v7723 = vshrl.u32 %v7722, 7
    %v7724 = vsub.s32 %v7721, %v7723
    %v7725 = vrot.slane %v7711, %v7724
    %v7726 = vcombine.low %v7702, %v7718
    %v7727 = vcombine.high %v7702, %v7718
    %v7728 = vcombine.low %v7709, %v7725
    %v7729 = vcombine.high %v7709, %v7725
    %v7730 = vcombine.low %v7097, %v7233
    %v7732 = vunpack.c.l.s4 1983009808
    %v7733 = vunpack.c.0.s8 %v7732
    %v7734 = vlaneseq
    %v7735 = vshrl.u32 %v7734, 7
    %v7736 = vsub.s32 %v7733, %v7735
    %v7737 = vrot.slane %v7730, %v7736
    %v7738 = vcombine.low %v7165, %v7301
    %v7740 = vunpack.c.l.s4 1983009808
    %v7741 = vunpack.c.0.s8 %v7740
    %v7742 = vlaneseq
    %v7743 = vshrl.u32 %v7742, 7
    %v7744 = vsub.s32 %v7741, %v7743
    %v7745 = vrot.slane %v7738, %v7744
    %v7746 = vcombine.low %v7369, %v7505
    %v7748 = vunpack.c.l.s4 1983009808
    %v7749 = vunpack.c.0.s8 %v7748
    %v7750 = vlaneseq
    %v7751 = vshrl.u32 %v7750, 7
    %v7752 = vsub.s32 %v7749, %v7751
    %v7753 = vrot.slane %v7746, %v7752
    %v7754 = vcombine.low %v7437, %v7573
    %v7756 = vunpack.c.l.s4 1983009808
    %v7757 = vunpack.c.0.s8 %v7756
    %v7758 = vlaneseq
    %v7759 = vshrl.u32 %v7758, 7
    %v7760 = vsub.s32 %v7757, %v7759
    %v7761 = vrot.slane %v7754, %v7760
    %v7762 = vcombine.low %v7737, %v7745
    %v7763 = vcombine.high %v7737, %v7745
    %v7765 = vunpack.c.l.s4 1934713408
    %v7766 = vunpack.c.0.s8 %v7765
    %v7767 = vlaneseq
    %v7768 = vshrl.u32 %v7767, 7
    %v7769 = vsub.s32 %v7766, %v7768
    %v7770 = vrot.slane %v7762, %v7769
    %v7772 = vunpack.c.l.s4 1934713408
    %v7773 = vunpack.c.0.s8 %v7772
    %v7774 = vlaneseq
    %v7775 = vshrl.u32 %v7774, 7
    %v7776 = vsub.s32 %v7773, %v7775
    %v7777 = vrot.slane %v7763, %v7776
    %v7778 = vcombine.low %v7753, %v7761
    %v7779 = vcombine.high %v7753, %v7761
    %v7781 = vunpack.c.l.s4 1934713408
    %v7782 = vunpack.c.0.s8 %v7781
    %v7783 = vlaneseq
    %v7784 = vshrl.u32 %v7783, 7
    %v7785 = vsub.s32 %v7782, %v7784
    %v7786 = vrot.slane %v7778, %v7785
    %v7788 = vunpack.c.l.s4 1934713408
    %v7789 = vunpack.c.0.s8 %v7788
    %v7790 = vlaneseq
    %v7791 = vshrl.u32 %v7790, 7
    %v7792 = vsub.s32 %v7789, %v7791
    %v7793 = vrot.slane %v7779, %v7792
    %v7794 = vcombine.low %v7770, %v7786
    %v7795 = vcombine.high %v7770, %v7786
    %v7796 = vcombine.low %v7777, %v7793
    %v7797 = vcombine.high %v7777, %v7793
    %v7798 = vcombine.low %v7115, %v7251
    %v7800 = vunpack.c.l.s4 1983009808
    %v7801 = vunpack.c.0.s8 %v7800
    %v7802 = vlaneseq
    %v7803 = vshrl.u32 %v7802, 7
    %v7804 = vsub.s32 %v7801, %v7803
    %v7805 = vrot.slane %v7798, %v7804
    %v7806 = vcombine.low %v7183, %v7319
    %v7808 = vunpack.c.l.s4 1983009808
    %v7809 = vunpack.c.0.s8 %v7808
    %v7810 = vlaneseq
    %v7811 = vshrl.u32 %v7810, 7
    %v7812 = vsub.s32 %v7809, %v7811
    %v7813 = vrot.slane %v7806, %v7812
    %v7814 = vcombine.low %v7387, %v7523
    %v7816 = vunpack.c.l.s4 1983009808
    %v7817 = vunpack.c.0.s8 %v7816
    %v7818 = vlaneseq
    %v7819 = vshrl.u32 %v7818, 7
    %v7820 = vsub.s32 %v7817, %v7819
    %v7821 = vrot.slane %v7814, %v7820
    %v7822 = vcombine.low %v7455, %v7591
    %v7824 = vunpack.c.l.s4 1983009808
    %v7825 = vunpack.c.0.s8 %v7824
    %v7826 = vlaneseq
    %v7827 = vshrl.u32 %v7826, 7
    %v7828 = vsub.s32 %v7825, %v7827
    %v7829 = vrot.slane %v7822, %v7828
    %v7830 = vcombine.low %v7805, %v7813
    %v7831 = vcombine.high %v7805, %v7813
    %v7833 = vunpack.c.l.s4 1934713408
    %v7834 = vunpack.c.0.s8 %v7833
    %v7835 = vlaneseq
    %v7836 = vshrl.u32 %v7835, 7
    %v7837 = vsub.s32 %v7834, %v7836
    %v7838 = vrot.slane %v7830, %v7837
    %v7840 = vunpack.c.l.s4 1934713408
    %v7841 = vunpack.c.0.s8 %v7840
    %v7842 = vlaneseq
    %v7843 = vshrl.u32 %v7842, 7
    %v7844 = vsub.s32 %v7841, %v7843
    %v7845 = vrot.slane %v7831, %v7844
    %v7846 = vcombine.low %v7821, %v7829
    %v7847 = vcombine.high %v7821, %v7829
    %v7849 = vunpack.c.l.s4 1934713408
    %v7850 = vunpack.c.0.s8 %v7849
    %v7851 = vlaneseq
    %v7852 = vshrl.u32 %v7851, 7
    %v7853 = vsub.s32 %v7850, %v7852
    %v7854 = vrot.slane %v7846, %v7853
    %v7856 = vunpack.c.l.s4 1934713408
    %v7857 = vunpack.c.0.s8 %v7856
    %v7858 = vlaneseq
    %v7859 = vshrl.u32 %v7858, 7
    %v7860 = vsub.s32 %v7857, %v7859
    %v7861 = vrot.slane %v7847, %v7860
    %v7862 = vcombine.low %v7838, %v7854
    %v7863 = vcombine.high %v7838, %v7854
    %v7864 = vcombine.low %v7845, %v7861
    %v7865 = vcombine.high %v7845, %v7861
    %v7866 = vcombine.low %v7106, %v7242
    %v7868 = vunpack.c.l.s4 1983009808
    %v7869 = vunpack.c.0.s8 %v7868
    %v7870 = vlaneseq
    %v7871 = vshrl.u32 %v7870, 7
    %v7872 = vsub.s32 %v7869, %v7871
    %v7873 = vrot.slane %v7866, %v7872
    %v7874 = vcombine.low %v7174, %v7310
    %v7876 = vunpack.c.l.s4 1983009808
    %v7877 = vunpack.c.0.s8 %v7876
    %v7878 = vlaneseq
    %v7879 = vshrl.u32 %v7878, 7
    %v7880 = vsub.s32 %v7877, %v7879
    %v7881 = vrot.slane %v7874, %v7880
    %v7882 = vcombine.low %v7378, %v7514
    %v7884 = vunpack.c.l.s4 1983009808
    %v7885 = vunpack.c.0.s8 %v7884
    %v7886 = vlaneseq
    %v7887 = vshrl.u32 %v7886, 7
    %v7888 = vsub.s32 %v7885, %v7887
    %v7889 = vrot.slane %v7882, %v7888
    %v7890 = vcombine.low %v7446, %v7582
    %v7892 = vunpack.c.l.s4 1983009808
    %v7893 = vunpack.c.0.s8 %v7892
    %v7894 = vlaneseq
    %v7895 = vshrl.u32 %v7894, 7
    %v7896 = vsub.s32 %v7893, %v7895
    %v7897 = vrot.slane %v7890, %v7896
    %v7898 = vcombine.low %v7873, %v7881
    %v7899 = vcombine.high %v7873, %v7881
    %v7901 = vunpack.c.l.s4 1934713408
    %v7902 = vunpack.c.0.s8 %v7901
    %v7903 = vlaneseq
    %v7904 = vshrl.u32 %v7903, 7
    %v7905 = vsub.s32 %v7902, %v7904
    %v7906 = vrot.slane %v7898, %v7905
    %v7908 = vunpack.c.l.s4 1934713408
    %v7909 = vunpack.c.0.s8 %v7908
    %v7910 = vlaneseq
    %v7911 = vshrl.u32 %v7910, 7
    %v7912 = vsub.s32 %v7909, %v7911
    %v7913 = vrot.slane %v7899, %v7912
    %v7914 = vcombine.low %v7889, %v7897
    %v7915 = vcombine.high %v7889, %v7897
    %v7917 = vunpack.c.l.s4 1934713408
    %v7918 = vunpack.c.0.s8 %v7917
    %v7919 = vlaneseq
    %v7920 = vshrl.u32 %v7919, 7
    %v7921 = vsub.s32 %v7918, %v7920
    %v7922 = vrot.slane %v7914, %v7921
    %v7924 = vunpack.c.l.s4 1934713408
    %v7925 = vunpack.c.0.s8 %v7924
    %v7926 = vlaneseq
    %v7927 = vshrl.u32 %v7926, 7
    %v7928 = vsub.s32 %v7925, %v7927
    %v7929 = vrot.slane %v7915, %v7928
    %v7930 = vcombine.low %v7906, %v7922
    %v7931 = vcombine.high %v7906, %v7922
    %v7932 = vcombine.low %v7913, %v7929
    %v7933 = vcombine.high %v7913, %v7929
    %v7934 = vcombine.low %v7116, %v7252
    %v7936 = vunpack.c.l.s4 1983009808
    %v7937 = vunpack.c.0.s8 %v7936
    %v7938 = vlaneseq
    %v7939 = vshrl.u32 %v7938, 7
    %v7940 = vsub.s32 %v7937, %v7939
    %v7941 = vrot.slane %v7934, %v7940
    %v7942 = vcombine.low %v7184, %v7320
    %v7944 = vunpack.c.l.s4 1983009808
    %v7945 = vunpack.c.0.s8 %v7944
    %v7946 = vlaneseq
    %v7947 = vshrl.u32 %v7946, 7
    %v7948 = vsub.s32 %v7945, %v7947
    %v7949 = vrot.slane %v7942, %v7948
    %v7950 = vcombine.low %v7388, %v7524
    %v7952 = vunpack.c.l.s4 1983009808
    %v7953 = vunpack.c.0.s8 %v7952
    %v7954 = vlaneseq
    %v7955 = vshrl.u32 %v7954, 7
    %v7956 = vsub.s32 %v7953, %v7955
    %v7957 = vrot.slane %v7950, %v7956
    %v7958 = vcombine.low %v7456, %v7592
    %v7960 = vunpack.c.l.s4 1983009808
    %v7961 = vunpack.c.0.s8 %v7960
    %v7962 = vlaneseq
    %v7963 = vshrl.u32 %v7962, 7
    %v7964 = vsub.s32 %v7961, %v7963
    %v7965 = vrot.slane %v7958, %v7964
    %v7966 = vcombine.low %v7941, %v7949
    %v7967 = vcombine.high %v7941, %v7949
    %v7969 = vunpack.c.l.s4 1934713408
    %v7970 = vunpack.c.0.s8 %v7969
    %v7971 = vlaneseq
    %v7972 = vshrl.u32 %v7971, 7
    %v7973 = vsub.s32 %v7970, %v7972
    %v7974 = vrot.slane %v7966, %v7973
    %v7976 = vunpack.c.l.s4 1934713408
    %v7977 = vunpack.c.0.s8 %v7976
    %v7978 = vlaneseq
    %v7979 = vshrl.u32 %v7978, 7
    %v7980 = vsub.s32 %v7977, %v7979
    %v7981 = vrot.slane %v7967, %v7980
    %v7982 = vcombine.low %v7957, %v7965
    %v7983 = vcombine.high %v7957, %v7965
    %v7985 = vunpack.c.l.s4 1934713408
    %v7986 = vunpack.c.0.s8 %v7985
    %v7987 = vlaneseq
    %v7988 = vshrl.u32 %v7987, 7
    %v7989 = vsub.s32 %v7986, %v7988
    %v7990 = vrot.slane %v7982, %v7989
    %v7992 = vunpack.c.l.s4 1934713408
    %v7993 = vunpack.c.0.s8 %v7992
    %v7994 = vlaneseq
    %v7995 = vshrl.u32 %v7994, 7
    %v7996 = vsub.s32 %v7993, %v7995
    %v7997 = vrot.slane %v7983, %v7996
    %v7998 = vcombine.low %v7974, %v7990
    %v7999 = vcombine.high %v7974, %v7990
    %v8000 = vcombine.low %v7981, %v7997
    %v8001 = vcombine.high %v7981, %v7997
    %v8002 = vcombine.low %v7113, %v7249
    %v8004 = vunpack.c.l.s4 1983009808
    %v8005 = vunpack.c.0.s8 %v8004
    %v8006 = vlaneseq
    %v8007 = vshrl.u32 %v8006, 7
    %v8008 = vsub.s32 %v8005, %v8007
    %v8009 = vrot.slane %v8002, %v8008
    %v8010 = vcombine.low %v7181, %v7317
    %v8012 = vunpack.c.l.s4 1983009808
    %v8013 = vunpack.c.0.s8 %v8012
    %v8014 = vlaneseq
    %v8015 = vshrl.u32 %v8014, 7
    %v8016 = vsub.s32 %v8013, %v8015
    %v8017 = vrot.slane %v8010, %v8016
    %v8018 = vcombine.low %v7385, %v7521
    %v8020 = vunpack.c.l.s4 1983009808
    %v8021 = vunpack.c.0.s8 %v8020
    %v8022 = vlaneseq
    %v8023 = vshrl.u32 %v8022, 7
    %v8024 = vsub.s32 %v8021, %v8023
    %v8025 = vrot.slane %v8018, %v8024
    %v8026 = vcombine.low %v7453, %v7589
    %v8028 = vunpack.c.l.s4 1983009808
    %v8029 = vunpack.c.0.s8 %v8028
    %v8030 = vlaneseq
    %v8031 = vshrl.u32 %v8030, 7
    %v8032 = vsub.s32 %v8029, %v8031
    %v8033 = vrot.slane %v8026, %v8032
    %v8034 = vcombine.low %v8009, %v8017
    %v8035 = vcombine.high %v8009, %v8017
    %v8037 = vunpack.c.l.s4 1934713408
    %v8038 = vunpack.c.0.s8 %v8037
    %v8039 = vlaneseq
    %v8040 = vshrl.u32 %v8039, 7
    %v8041 = vsub.s32 %v8038, %v8040
    %v8042 = vrot.slane %v8034, %v8041
    %v8044 = vunpack.c.l.s4 1934713408
    %v8045 = vunpack.c.0.s8 %v8044
    %v8046 = vlaneseq
    %v8047 = vshrl.u32 %v8046, 7
    %v8048 = vsub.s32 %v8045, %v8047
    %v8049 = vrot.slane %v8035, %v8048
    %v8050 = vcombine.low %v8025, %v8033
    %v8051 = vcombine.high %v8025, %v8033
    %v8053 = vunpack.c.l.s4 1934713408
    %v8054 = vunpack.c.0.s8 %v8053
    %v8055 = vlaneseq
    %v8056 = vshrl.u32 %v8055, 7
    %v8057 = vsub.s32 %v8054, %v8056
    %v8058 = vrot.slane %v8050, %v8057
    %v8060 = vunpack.c.l.s4 1934713408
    %v8061 = vunpack.c.0.s8 %v8060
    %v8062 = vlaneseq
    %v8063 = vshrl.u32 %v8062, 7
    %v8064 = vsub.s32 %v8061, %v8063
    %v8065 = vrot.slane %v8051, %v8064
    %v8066 = vcombine.low %v8042, %v8058
    %v8067 = vcombine.high %v8042, %v8058
    %v8068 = vcombine.low %v8049, %v8065
    %v8069 = vcombine.high %v8049, %v8065
    %v8070 = vcombine.low %v7117, %v7253
    %v8072 = vunpack.c.l.s4 1983009808
    %v8073 = vunpack.c.0.s8 %v8072
    %v8074 = vlaneseq
    %v8075 = vshrl.u32 %v8074, 7
    %v8076 = vsub.s32 %v8073, %v8075
    %v8077 = vrot.slane %v8070, %v8076
    %v8078 = vcombine.low %v7185, %v7321
    %v8080 = vunpack.c.l.s4 1983009808
    %v8081 = vunpack.c.0.s8 %v8080
    %v8082 = vlaneseq
    %v8083 = vshrl.u32 %v8082, 7
    %v8084 = vsub.s32 %v8081, %v8083
    %v8085 = vrot.slane %v8078, %v8084
    %v8086 = vcombine.low %v7389, %v7525
    %v8088 = vunpack.c.l.s4 1983009808
    %v8089 = vunpack.c.0.s8 %v8088
    %v8090 = vlaneseq
    %v8091 = vshrl.u32 %v8090, 7
    %v8092 = vsub.s32 %v8089, %v8091
    %v8093 = vrot.slane %v8086, %v8092
    %v8094 = vcombine.low %v7457, %v7593
    %v8096 = vunpack.c.l.s4 1983009808
    %v8097 = vunpack.c.0.s8 %v8096
    %v8098 = vlaneseq
    %v8099 = vshrl.u32 %v8098, 7
    %v8100 = vsub.s32 %v8097, %v8099
    %v8101 = vrot.slane %v8094, %v8100
    %v8102 = vcombine.low %v8077, %v8085
    %v8103 = vcombine.high %v8077, %v8085
    %v8105 = vunpack.c.l.s4 1934713408
    %v8106 = vunpack.c.0.s8 %v8105
    %v8107 = vlaneseq
    %v8108 = vshrl.u32 %v8107, 7
    %v8109 = vsub.s32 %v8106, %v8108
    %v8110 = vrot.slane %v8102, %v8109
    %v8112 = vunpack.c.l.s4 1934713408
    %v8113 = vunpack.c.0.s8 %v8112
    %v8114 = vlaneseq
    %v8115 = vshrl.u32 %v8114, 7
    %v8116 = vsub.s32 %v8113, %v8115
    %v8117 = vrot.slane %v8103, %v8116
    %v8118 = vcombine.low %v8093, %v8101
    %v8119 = vcombine.high %v8093, %v8101
    %v8121 = vunpack.c.l.s4 1934713408
    %v8122 = vunpack.c.0.s8 %v8121
    %v8123 = vlaneseq
    %v8124 = vshrl.u32 %v8123, 7
    %v8125 = vsub.s32 %v8122, %v8124
    %v8126 = vrot.slane %v8118, %v8125
    %v8128 = vunpack.c.l.s4 1934713408
    %v8129 = vunpack.c.0.s8 %v8128
    %v8130 = vlaneseq
    %v8131 = vshrl.u32 %v8130, 7
    %v8132 = vsub.s32 %v8129, %v8131
    %v8133 = vrot.slane %v8119, %v8132
    %v8134 = vcombine.low %v8110, %v8126
    %v8135 = vcombine.high %v8110, %v8126
    %v8136 = vcombine.low %v8117, %v8133
    %v8137 = vcombine.high %v8117, %v8133
    %8146 = vrot.lane.b32.xlu0 %v7659, 8
    %v8147 = vpop.permute.xlu0 %8146
    %8148 = vrot.lane.b32.xlu0 %v7727, 8
    %v8149 = vpop.permute.xlu0 %8148
    %8150 = vrot.lane.b32.xlu0 %v7795, 8
    %v8151 = vpop.permute.xlu0 %8150
    %8152 = vrot.lane.b32.xlu0 %v7863, 8
    %v8153 = vpop.permute.xlu0 %8152
    %8154 = vrot.lane.b32.xlu0 %v7931, 8
    %v8155 = vpop.permute.xlu0 %8154
    %8156 = vrot.lane.b32.xlu0 %v7999, 8
    %v8157 = vpop.permute.xlu0 %8156
    %8158 = vrot.lane.b32.xlu0 %v8067, 8
    %v8159 = vpop.permute.xlu0 %8158
    %8160 = vrot.lane.b32.xlu0 %v8135, 8
    %v8161 = vpop.permute.xlu0 %8160
    %8178 = vrot.lane.b32.xlu0 %v7660, 16
    %v8179 = vpop.permute.xlu0 %8178
    %8180 = vrot.lane.b32.xlu0 %v7728, 16
    %v8181 = vpop.permute.xlu0 %8180
    %8182 = vrot.lane.b32.xlu0 %v7796, 16
    %v8183 = vpop.permute.xlu0 %8182
    %8184 = vrot.lane.b32.xlu0 %v7864, 16
    %v8185 = vpop.permute.xlu0 %8184
    %8186 = vrot.lane.b32.xlu0 %v7932, 16
    %v8187 = vpop.permute.xlu0 %8186
    %8188 = vrot.lane.b32.xlu0 %v8000, 16
    %v8189 = vpop.permute.xlu0 %8188
    %8190 = vrot.lane.b32.xlu0 %v8068, 16
    %v8191 = vpop.permute.xlu0 %8190
    %8192 = vrot.lane.b32.xlu0 %v8136, 16
    %v8193 = vpop.permute.xlu0 %8192
    %8210 = vrot.lane.b32.xlu0 %v7661, 24
    %v8211 = vpop.permute.xlu0 %8210
    %8212 = vrot.lane.b32.xlu0 %v7729, 24
    %v8213 = vpop.permute.xlu0 %8212
    %8214 = vrot.lane.b32.xlu0 %v7797, 24
    %v8215 = vpop.permute.xlu0 %8214
    %8216 = vrot.lane.b32.xlu0 %v7865, 24
    %v8217 = vpop.permute.xlu0 %8216
    %8218 = vrot.lane.b32.xlu0 %v7933, 24
    %v8219 = vpop.permute.xlu0 %8218
    %8220 = vrot.lane.b32.xlu0 %v8001, 24
    %v8221 = vpop.permute.xlu0 %8220
    %8222 = vrot.lane.b32.xlu0 %v8069, 24
    %v8223 = vpop.permute.xlu0 %8222
    %8224 = vrot.lane.b32.xlu0 %v8137, 24
    %v8225 = vpop.permute.xlu0 %8224
    %v8234 = vsel %vm3720, %v7658, %v8147
    %v8235 = vsel %vm3720, %v7726, %v8149
    %v8236 = vsel %vm3720, %v7794, %v8151
    %v8237 = vsel %vm3720, %v7862, %v8153
    %v8238 = vsel %vm3720, %v7930, %v8155
    %v8239 = vsel %vm3720, %v7998, %v8157
    %v8240 = vsel %vm3720, %v8066, %v8159
    %v8241 = vsel %vm3720, %v8134, %v8161
    %vm8242 = vcmask 130048
    %v8243 = vsel %vm8242, %v8234, %v8179
    %v8244 = vsel %vm8242, %v8235, %v8181
    %v8245 = vsel %vm8242, %v8236, %v8183
    %v8246 = vsel %vm8242, %v8237, %v8185
    %v8247 = vsel %vm8242, %v8238, %v8187
    %v8248 = vsel %vm8242, %v8239, %v8189
    %v8249 = vsel %vm8242, %v8240, %v8191
    %v8250 = vsel %vm8242, %v8241, %v8193
    %vm8251 = vcmask 195584
    %v8252 = vsel %vm8251, %v8243, %v8211
    %v8253 = vsel %vm8251, %v8244, %v8213
    %v8254 = vsel %vm8251, %v8245, %v8215
    %v8255 = vsel %vm8251, %v8246, %v8217
    %v8256 = vsel %vm8251, %v8247, %v8219
    %v8257 = vsel %vm8251, %v8248, %v8221
    %v8258 = vsel %vm8251, %v8249, %v8223
    %v8259 = vsel %vm8251, %v8250, %v8225
    %v8260 = vpack.c.bf16 %v8253, %v8252
    %v8261 = vpack.c.bf16 %v8255, %v8254
    %v8262 = vpack.c.bf16 %v8257, %v8256
    %v8263 = vpack.c.bf16 %v8259, %v8258
    %v8264 = vld [vmem:[#allocation5] sm:$0xf]
    %v8265 = vld [vmem:[#allocation5 + $0x4] sm:$0xf]
    %v8266 = vld [vmem:[#allocation5 + $0x8] sm:$0xf]
    %v8267 = vld [vmem:[#allocation5 + $0xc] sm:$0xf]
    %v8268 = vld [vmem:[#allocation7] sm:$0x1]
    %v8270 = vlaneseq
    %v8271 = vshrl.u32 %v8270, 7
    %v8272 = vsub.s32 0, %v8271
    %v8273 = vrot.slane %v8268, %v8272
    %v8279 = vunpack.c.l.b16 %v8264
    %v8280 = vunpack.c.l.b16 %v8265
    %v8281 = vunpack.c.l.b16 %v8266
    %v8282 = vunpack.c.l.b16 %v8267
    %v8283 = vpack.c.b16 %v8280, %v8279
    %v8284 = vpack.c.b16 %v8282, %v8281
    %v8288 = vsel %vm116, %v8260, 0
    %v8291 = vsel %vm116, %v8261, 0
    %v8294 = vsel %vm116, %v8262, 0
    %v8297 = vsel %vm116, %v8263, 0
    %8299 = vmatprep.subr.bf16.mxu0 0
    %8300 = vmatpush1.bf16.msra.mxu0 %v8283
    %8301 = vmatprep.subr.bf16.mxu0 0
    %8302 = vmatpush1.bf16.msra.mxu0 %v8284
    %8303 = vmatprep.subr.bf16.mxu0 0
    %8304 = vmatpush1.bf16.msra.mxu0 0
    %8305 = vmatprep.subr.bf16.mxu0 0
    %8306 = vmatpush1.bf16.msra.mxu0 0
    %8307 = vmatprep.subr.bf16.mxu0 0
    %8308 = vmatpush1.bf16.msra.mxu0 0
    %8309 = vmatprep.subr.bf16.mxu0 0
    %8310 = vmatpush1.bf16.msra.mxu0 0
    %8311 = vmatprep.subr.bf16.mxu0 0
    %8312 = vmatpush1.bf16.msra.mxu0 0
    %8313 = vmatprep.subr.bf16.mxu0 0
    %8314 = vmatpush1.bf16.msra.mxu0 0
    %8315 = vmatprep.subr.bf16.mxu0 0
    %8316 = vmatpush1.bf16.msra.mxu0 0
    %8317 = vmatprep.subr.bf16.mxu0 0
    %8318 = vmatpush1.bf16.msra.mxu0 0
    %8319 = vmatprep.subr.bf16.mxu0 0
    %8320 = vmatpush1.bf16.msra.mxu0 0
    %8321 = vmatprep.subr.bf16.mxu0 0
    %8322 = vmatpush1.bf16.msra.mxu0 0
    %8323 = vmatprep.subr.bf16.mxu0 0
    %8324 = vmatpush1.bf16.msra.mxu0 0
    %8325 = vmatprep.subr.bf16.mxu0 0
    %8326 = vmatpush1.bf16.msra.mxu0 0
    %8327 = vmatprep.subr.bf16.mxu0 0
    %8328 = vmatpush1.bf16.msra.mxu0 0
    %8329 = vmatprep.subr.bf16.mxu0 0
    %8330 = vmatpush1.bf16.msra.mxu0 0
    %8331 = vmatprep.mubr.bf16.mxu0 0
    %8332 = vmatmul.mubr.bf16.gmra.mrb[0].mxu0 %v8288
    %v8333 = vpop.f32.mrb[0].mxu0
    %v8334 = vadd.f32 %v8273, %v8333
    %v8335 = vpop.f32.mrb[0].mxu0
    %v8336 = vpop.f32.mrb[0].mxu0
    %v8337 = vadd.f32 %v8273, %v8336
    %v8338 = vpop.f32.mrb[0].mxu0
    %8339 = vmatprep.mubr.bf16.mxu0 0
    %8340 = vmatmul.mubr.bf16.gmra.mrb[0].mxu0 %v8291
    %v8341 = vpop.f32.mrb[0].mxu0
    %v8342 = vadd.f32 %v8273, %v8341
    %v8343 = vpop.f32.mrb[0].mxu0
    %v8344 = vpop.f32.mrb[0].mxu0
    %v8345 = vadd.f32 %v8273, %v8344
    %v8346 = vpop.f32.mrb[0].mxu0
    %8347 = vmatprep.mubr.bf16.mxu0 0
    %8348 = vmatmul.mubr.bf16.gmra.mrb[0].mxu0 %v8294
    %v8349 = vpop.f32.mrb[0].mxu0
    %v8350 = vadd.f32 %v8273, %v8349
    %v8351 = vpop.f32.mrb[0].mxu0
    %v8352 = vpop.f32.mrb[0].mxu0
    %v8353 = vadd.f32 %v8273, %v8352
    %v8354 = vpop.f32.mrb[0].mxu0
    %8355 = vmatprep.mubr.bf16.mxu0 0
    %8356 = vmatmul.mubr.bf16.gmra.mrb[0].mxu0 %v8297
    %v8357 = vpop.f32.mrb[0].mxu0
    %v8358 = vadd.f32 %v8273, %v8357
    %v8359 = vpop.f32.mrb[0].mxu0
    %v8360 = vpop.f32.mrb[0].mxu0
    %v8361 = vadd.f32 %v8273, %v8360
    %v8362 = vpop.f32.mrb[0].mxu0
    %8363 = vdwg.mxu0
    %v8364 = vadd.f32 %v106, %v8334
    %v8365 = vadd.f32 %v107, %v8337
    %v8366 = vadd.f32 %v108, %v8342
    %v8367 = vadd.f32 %v109, %v8345
    %v8368 = vadd.f32 %v110, %v8350
    %v8369 = vadd.f32 %v111, %v8353
    %v8370 = vadd.f32 %v112, %v8358
    %v8371 = vadd.f32 %v113, %v8361
    %v8372 = vld [vmem:[#allocation8] sm:$0x1]
    %v8373 = vld [vmem:[#allocation10] sm:$0x1]
    %v8374 = vsel %vm116, %v8364, 0.0
    %8375 = vadd.xlane.f32.xlu0 %v8374
    %v8376 = vpop.xlane.xlu0 %8375
    %v8377 = vsel %vm116, %v8365, 0.0
    %8378 = vadd.xlane.f32.xlu0 %v8377
    %v8379 = vpop.xlane.xlu0 %8378
    %v8380 = vsel %vm116, %v8366, 0.0
    %8381 = vadd.xlane.f32.xlu0 %v8380
    %v8382 = vpop.xlane.xlu0 %8381
    %v8383 = vsel %vm116, %v8367, 0.0
    %8384 = vadd.xlane.f32.xlu0 %v8383
    %v8385 = vpop.xlane.xlu0 %8384
    %v8386 = vsel %vm116, %v8368, 0.0
    %8387 = vadd.xlane.f32.xlu0 %v8386
    %v8388 = vpop.xlane.xlu0 %8387
    %v8389 = vsel %vm116, %v8369, 0.0
    %8390 = vadd.xlane.f32.xlu0 %v8389
    %v8391 = vpop.xlane.xlu0 %8390
    %v8392 = vsel %vm116, %v8370, 0.0
    %8393 = vadd.xlane.f32.xlu0 %v8392
    %v8394 = vpop.xlane.xlu0 %8393
    %v8395 = vsel %vm116, %v8371, 0.0
    %8396 = vadd.xlane.f32.xlu0 %v8395
    %v8397 = vpop.xlane.xlu0 %8396
    %v8398 = vmul.f32 %v8376, %v141
    %v8399 = vmul.f32 %v8379, %v141
    %v8400 = vmul.f32 %v8382, %v141
    %v8401 = vmul.f32 %v8385, %v141
    %v8402 = vmul.f32 %v8388, %v141
    %v8403 = vmul.f32 %v8391, %v141
    %v8404 = vmul.f32 %v8394, %v141
    %v8405 = vmul.f32 %v8397, %v141
    %v8406 = vsub.f32 %v8364, %v8398
    %v8407 = vsub.f32 %v8365, %v8399
    %v8408 = vsub.f32 %v8366, %v8400
    %v8409 = vsub.f32 %v8367, %v8401
    %v8410 = vsub.f32 %v8368, %v8402
    %v8411 = vsub.f32 %v8369, %v8403
    %v8412 = vsub.f32 %v8370, %v8404
    %v8413 = vsub.f32 %v8371, %v8405
    %v8414 = vmul.f32 %v8406, %v8406
    %v8415 = vmul.f32 %v8407, %v8407
    %v8416 = vmul.f32 %v8408, %v8408
    %v8417 = vmul.f32 %v8409, %v8409
    %v8418 = vmul.f32 %v8410, %v8410
    %v8419 = vmul.f32 %v8411, %v8411
    %v8420 = vmul.f32 %v8412, %v8412
    %v8421 = vmul.f32 %v8413, %v8413
    %v8422 = vsel %vm116, %v8414, 0.0
    %8423 = vadd.xlane.f32.xlu0 %v8422
    %v8424 = vpop.xlane.xlu0 %8423
    %v8425 = vsel %vm116, %v8415, 0.0
    %8426 = vadd.xlane.f32.xlu0 %v8425
    %v8427 = vpop.xlane.xlu0 %8426
    %v8428 = vsel %vm116, %v8416, 0.0
    %8429 = vadd.xlane.f32.xlu0 %v8428
    %v8430 = vpop.xlane.xlu0 %8429
    %v8431 = vsel %vm116, %v8417, 0.0
    %8432 = vadd.xlane.f32.xlu0 %v8431
    %v8433 = vpop.xlane.xlu0 %8432
    %v8434 = vsel %vm116, %v8418, 0.0
    %8435 = vadd.xlane.f32.xlu0 %v8434
    %v8436 = vpop.xlane.xlu0 %8435
    %v8437 = vsel %vm116, %v8419, 0.0
    %8438 = vadd.xlane.f32.xlu0 %v8437
    %v8439 = vpop.xlane.xlu0 %8438
    %v8440 = vsel %vm116, %v8420, 0.0
    %8441 = vadd.xlane.f32.xlu0 %v8440
    %v8442 = vpop.xlane.xlu0 %8441
    %v8443 = vsel %vm116, %v8421, 0.0
    %8444 = vadd.xlane.f32.xlu0 %v8443
    %v8445 = vpop.xlane.xlu0 %8444
    %v8446 = vmul.f32 %v8424, %v141
    %v8447 = vmul.f32 %v8427, %v141
    %v8448 = vmul.f32 %v8430, %v141
    %v8449 = vmul.f32 %v8433, %v141
    %v8450 = vmul.f32 %v8436, %v141
    %v8451 = vmul.f32 %v8439, %v141
    %v8452 = vmul.f32 %v8442, %v141
    %v8453 = vmul.f32 %v8445, %v141
    %v8454 = vadd.f32 %v8446, 1e-05
    %v8455 = vadd.f32 %v8447, 1e-05
    %v8456 = vadd.f32 %v8448, 1e-05
    %v8457 = vadd.f32 %v8449, 1e-05
    %v8458 = vadd.f32 %v8450, 1e-05
    %v8459 = vadd.f32 %v8451, 1e-05
    %v8460 = vadd.f32 %v8452, 1e-05
    %v8461 = vadd.f32 %v8453, 1e-05
    %v8462 = vrsqrt.pop %v8454
    %v8463 = vrsqrt.pop %v8455
    %v8464 = vrsqrt.pop %v8456
    %v8465 = vrsqrt.pop %v8457
    %v8466 = vrsqrt.pop %v8458
    %v8467 = vrsqrt.pop %v8459
    %v8468 = vrsqrt.pop %v8460
    %v8469 = vrsqrt.pop %v8461
    %v8470 = vmul.f32 %v8406, %v8462
    %v8471 = vmul.f32 %v8407, %v8463
    %v8472 = vmul.f32 %v8408, %v8464
    %v8473 = vmul.f32 %v8409, %v8465
    %v8474 = vmul.f32 %v8410, %v8466
    %v8475 = vmul.f32 %v8411, %v8467
    %v8476 = vmul.f32 %v8412, %v8468
    %v8477 = vmul.f32 %v8413, %v8469
    %v8479 = vlaneseq
    %v8480 = vshrl.u32 %v8479, 7
    %v8481 = vsub.s32 0, %v8480
    %v8482 = vrot.slane %v8372, %v8481
    %v8484 = vmul.f32 %v8470, %v8482
    %v8485 = vmul.f32 %v8471, %v8482
    %v8486 = vmul.f32 %v8472, %v8482
    %v8487 = vmul.f32 %v8473, %v8482
    %v8488 = vmul.f32 %v8474, %v8482
    %v8489 = vmul.f32 %v8475, %v8482
    %v8490 = vmul.f32 %v8476, %v8482
    %v8491 = vmul.f32 %v8477, %v8482
    %v8493 = vlaneseq
    %v8494 = vshrl.u32 %v8493, 7
    %v8495 = vsub.s32 0, %v8494
    %v8496 = vrot.slane %v8373, %v8495
    %v8498 = vadd.f32 %v8484, %v8496
    %v8499 = vadd.f32 %v8485, %v8496
    %v8500 = vadd.f32 %v8486, %v8496
    %v8501 = vadd.f32 %v8487, %v8496
    %v8502 = vadd.f32 %v8488, %v8496
    %v8503 = vadd.f32 %v8489, %v8496
    %v8504 = vadd.f32 %v8490, %v8496
    %v8505 = vadd.f32 %v8491, %v8496
    %v8506 = vpack.c.bf16 %v8499, %v8498
    %v8507 = vpack.c.bf16 %v8501, %v8500
    %v8508 = vpack.c.bf16 %v8503, %v8502
    %v8509 = vpack.c.bf16 %v8505, %v8504
    %v8510 = vld [vmem:[%s9] sm:$0xf]
    %v8511 = vld [vmem:[%s9 + $0x4] sm:$0xf]
    %v8512 = vld [vmem:[%s9 + $0x8] sm:$0xf]
    %v8513 = vld [vmem:[%s9 + $0xc] sm:$0xf]
    %v8514 = vld [vmem:[%s10] sm:$0x1]
    %v8516 = vlaneseq
    %v8517 = vshrl.u32 %v8516, 7
    %v8518 = vsub.s32 0, %v8517
    %v8519 = vrot.slane %v8514, %v8518
    %v8525 = vunpack.c.l.b16 %v8510
    %v8526 = vunpack.c.l.b16 %v8511
    %v8527 = vunpack.c.l.b16 %v8512
    %v8528 = vunpack.c.l.b16 %v8513
    %v8529 = vpack.c.b16 %v8526, %v8525
    %v8530 = vpack.c.b16 %v8528, %v8527
    %v8534 = vsel %vm116, %v8506, 0
    %v8537 = vsel %vm116, %v8507, 0
    %v8540 = vsel %vm116, %v8508, 0
    %v8543 = vsel %vm116, %v8509, 0
    %8545 = vmatprep.subr.bf16.mxu0 0
    %8546 = vmatpush1.bf16.msra.mxu0 %v8529
    %8547 = vmatprep.subr.bf16.mxu0 0
    %8548 = vmatpush1.bf16.msra.mxu0 %v8530
    %8549 = vmatprep.subr.bf16.mxu0 0
    %8550 = vmatpush1.bf16.msra.mxu0 0
    %8551 = vmatprep.subr.bf16.mxu0 0
    %8552 = vmatpush1.bf16.msra.mxu0 0
    %8553 = vmatprep.subr.bf16.mxu0 0
    %8554 = vmatpush1.bf16.msra.mxu0 0
    %8555 = vmatprep.subr.bf16.mxu0 0
    %8556 = vmatpush1.bf16.msra.mxu0 0
    %8557 = vmatprep.subr.bf16.mxu0 0
    %8558 = vmatpush1.bf16.msra.mxu0 0
    %8559 = vmatprep.subr.bf16.mxu0 0
    %8560 = vmatpush1.bf16.msra.mxu0 0
    %8561 = vmatprep.subr.bf16.mxu0 0
    %8562 = vmatpush1.bf16.msra.mxu0 0
    %8563 = vmatprep.subr.bf16.mxu0 0
    %8564 = vmatpush1.bf16.msra.mxu0 0
    %8565 = vmatprep.subr.bf16.mxu0 0
    %8566 = vmatpush1.bf16.msra.mxu0 0
    %8567 = vmatprep.subr.bf16.mxu0 0
    %8568 = vmatpush1.bf16.msra.mxu0 0
    %8569 = vmatprep.subr.bf16.mxu0 0
    %8570 = vmatpush1.bf16.msra.mxu0 0
    %8571 = vmatprep.subr.bf16.mxu0 0
    %8572 = vmatpush1.bf16.msra.mxu0 0
    %8573 = vmatprep.subr.bf16.mxu0 0
    %8574 = vmatpush1.bf16.msra.mxu0 0
    %8575 = vmatprep.subr.bf16.mxu0 0
    %8576 = vmatpush1.bf16.msra.mxu0 0
    %8577 = vmatprep.mubr.bf16.mxu0 0
    %8578 = vmatmul.mubr.bf16.gmra.mrb[0].mxu0 %v8534
    %v8579 = vpop.f32.mrb[0].mxu0
    %v8580 = vadd.f32 %v8519, %v8579
    %v8581 = vpop.f32.mrb[0].mxu0
    %v8582 = vpop.f32.mrb[0].mxu0
    %v8583 = vadd.f32 %v8519, %v8582
    %v8584 = vpop.f32.mrb[0].mxu0
    %8585 = vmatprep.mubr.bf16.mxu0 0
    %8586 = vmatmul.mubr.bf16.gmra.mrb[0].mxu0 %v8537
    %v8587 = vpop.f32.mrb[0].mxu0
    %v8588 = vadd.f32 %v8519, %v8587
    %v8589 = vpop.f32.mrb[0].mxu0
    %v8590 = vpop.f32.mrb[0].mxu0
    %v8591 = vadd.f32 %v8519, %v8590
    %v8592 = vpop.f32.mrb[0].mxu0
    %8593 = vmatprep.mubr.bf16.mxu0 0
    %8594 = vmatmul.mubr.bf16.gmra.mrb[0].mxu0 %v8540
    %v8595 = vpop.f32.mrb[0].mxu0
    %v8596 = vadd.f32 %v8519, %v8595
    %v8597 = vpop.f32.mrb[0].mxu0
    %v8598 = vpop.f32.mrb[0].mxu0
    %v8599 = vadd.f32 %v8519, %v8598
    %v8600 = vpop.f32.mrb[0].mxu0
    %8601 = vmatprep.mubr.bf16.mxu0 0
    %8602 = vmatmul.mubr.bf16.gmra.mrb[0].mxu0 %v8543
    %v8603 = vpop.f32.mrb[0].mxu0
    %v8604 = vadd.f32 %v8519, %v8603
    %v8605 = vpop.f32.mrb[0].mxu0
    %v8606 = vpop.f32.mrb[0].mxu0
    %v8607 = vadd.f32 %v8519, %v8606
    %v8608 = vpop.f32.mrb[0].mxu0
    %8609 = vdwg.mxu0
    %v8610 = vmul.f32 %v8580, 1.702
    %v8611 = vmul.f32 %v8583, 1.702
    %v8612 = vmul.f32 %v8588, 1.702
    %v8613 = vmul.f32 %v8591, 1.702
    %v8614 = vmul.f32 %v8596, 1.702
    %v8615 = vmul.f32 %v8599, 1.702
    %v8616 = vmul.f32 %v8604, 1.702
    %v8617 = vmul.f32 %v8607, 1.702
    %v8618 = vxor.u32 %v8610, 2147483648
    %v8619 = vxor.u32 %v8611, 2147483648
    %v8620 = vxor.u32 %v8612, 2147483648
    %v8621 = vxor.u32 %v8613, 2147483648
    %v8622 = vxor.u32 %v8614, 2147483648
    %v8623 = vxor.u32 %v8615, 2147483648
    %v8624 = vxor.u32 %v8616, 2147483648
    %v8625 = vxor.u32 %v8617, 2147483648
    %v8626 = vmul.f32 %v8618, 1.442695
    %v8627 = vpow.pop %v8626
    %v8628 = vmul.f32 %v8619, 1.442695
    %v8629 = vpow.pop %v8628
    %v8630 = vmul.f32 %v8620, 1.442695
    %v8631 = vpow.pop %v8630
    %v8632 = vmul.f32 %v8621, 1.442695
    %v8633 = vpow.pop %v8632
    %v8634 = vmul.f32 %v8622, 1.442695
    %v8635 = vpow.pop %v8634
    %v8636 = vmul.f32 %v8623, 1.442695
    %v8637 = vpow.pop %v8636
    %v8638 = vmul.f32 %v8624, 1.442695
    %v8639 = vpow.pop %v8638
    %v8640 = vmul.f32 %v8625, 1.442695
    %v8641 = vpow.pop %v8640
    %v8642 = vadd.f32 %v8627, 1.0
    %v8643 = vadd.f32 %v8629, 1.0
    %v8644 = vadd.f32 %v8631, 1.0
    %v8645 = vadd.f32 %v8633, 1.0
    %v8646 = vadd.f32 %v8635, 1.0
    %v8647 = vadd.f32 %v8637, 1.0
    %v8648 = vadd.f32 %v8639, 1.0
    %v8649 = vadd.f32 %v8641, 1.0
    %v8650 = vrcp.pop %v8642
    %v8651 = vmul.f32 1.0, %v8650
    %v8652 = vrcp.pop %v8643
    %v8653 = vmul.f32 1.0, %v8652
    %v8654 = vrcp.pop %v8644
    %v8655 = vmul.f32 1.0, %v8654
    %v8656 = vrcp.pop %v8645
    %v8657 = vmul.f32 1.0, %v8656
    %v8658 = vrcp.pop %v8646
    %v8659 = vmul.f32 1.0, %v8658
    %v8660 = vrcp.pop %v8647
    %v8661 = vmul.f32 1.0, %v8660
    %v8662 = vrcp.pop %v8648
    %v8663 = vmul.f32 1.0, %v8662
    %v8664 = vrcp.pop %v8649
    %v8665 = vmul.f32 1.0, %v8664
    %v8666 = vmul.f32 %v8580, %v8651
    %v8667 = vmul.f32 %v8583, %v8653
    %v8668 = vmul.f32 %v8588, %v8655
    %v8669 = vmul.f32 %v8591, %v8657
    %v8670 = vmul.f32 %v8596, %v8659
    %v8671 = vmul.f32 %v8599, %v8661
    %v8672 = vmul.f32 %v8604, %v8663
    %v8673 = vmul.f32 %v8607, %v8665
    %v8674 = vpack.c.bf16 %v8667, %v8666
    %v8675 = vpack.c.bf16 %v8669, %v8668
    %v8676 = vpack.c.bf16 %v8671, %v8670
    %v8677 = vpack.c.bf16 %v8673, %v8672
    %v8678 = vld [vmem:[%s11] sm:$0xf]
    %v8679 = vld [vmem:[%s11 + $0x4] sm:$0xf]
    %v8680 = vld [vmem:[%s11 + $0x8] sm:$0xf]
    %v8681 = vld [vmem:[%s11 + $0xc] sm:$0xf]
    %v8682 = vld [vmem:[%s11 + $0x10] sm:$0xf]
    %v8683 = vld [vmem:[%s11 + $0x14] sm:$0xf]
    %v8684 = vld [vmem:[%s11 + $0x18] sm:$0xf]
    %v8685 = vld [vmem:[%s11 + $0x1c] sm:$0xf]
    %v8686 = vld [vmem:[%s11 + $0x20] sm:$0xf]
    %v8687 = vld [vmem:[%s11 + $0x24] sm:$0xf]
    %v8688 = vld [vmem:[%s11 + $0x28] sm:$0xf]
    %v8689 = vld [vmem:[%s11 + $0x2c] sm:$0xf]
    %v8690 = vld [vmem:[%s11 + $0x30] sm:$0xf]
    %v8691 = vld [vmem:[%s11 + $0x34] sm:$0xf]
    %v8692 = vld [vmem:[%s11 + $0x38] sm:$0xf]
    %v8693 = vld [vmem:[%s11 + $0x3c] sm:$0xf]
    %v8694 = vld [vmem:[%s12] sm:$0x1]
    %v8696 = vlaneseq
    %v8697 = vshrl.u32 %v8696, 7
    %v8698 = vsub.s32 0, %v8697
    %v8699 = vrot.slane %v8694, %v8698
    %v8717 = vunpack.c.l.b16 %v8678
    %v8718 = vunpack.c.l.b16 %v8679
    %v8719 = vunpack.c.l.b16 %v8680
    %v8720 = vunpack.c.l.b16 %v8681
    %v8721 = vunpack.c.l.b16 %v8682
    %v8722 = vunpack.c.l.b16 %v8683
    %v8723 = vunpack.c.l.b16 %v8684
    %v8724 = vunpack.c.l.b16 %v8685
    %v8725 = vunpack.c.l.b16 %v8686
    %v8726 = vunpack.c.l.b16 %v8687
    %v8727 = vunpack.c.l.b16 %v8688
    %v8728 = vunpack.c.l.b16 %v8689
    %v8729 = vunpack.c.l.b16 %v8690
    %v8730 = vunpack.c.l.b16 %v8691
    %v8731 = vunpack.c.l.b16 %v8692
    %v8732 = vunpack.c.l.b16 %v8693
    %v8733 = vpack.c.b16 %v8718, %v8717
    %v8734 = vpack.c.b16 %v8720, %v8719
    %v8735 = vpack.c.b16 %v8722, %v8721
    %v8736 = vpack.c.b16 %v8724, %v8723
    %v8737 = vpack.c.b16 %v8726, %v8725
    %v8738 = vpack.c.b16 %v8728, %v8727
    %v8739 = vpack.c.b16 %v8730, %v8729
    %v8740 = vpack.c.b16 %v8732, %v8731
    %8749 = vmatprep.subr.bf16.mxu0 0
    %8750 = vmatpush1.bf16.msra.mxu0 %v8733
    %8751 = vmatprep.subr.bf16.mxu0 0
    %8752 = vmatpush1.bf16.msra.mxu0 %v8734
    %8753 = vmatprep.subr.bf16.mxu0 0
    %8754 = vmatpush1.bf16.msra.mxu0 %v8735
    %8755 = vmatprep.subr.bf16.mxu0 0
    %8756 = vmatpush1.bf16.msra.mxu0 %v8736
    %8757 = vmatprep.subr.bf16.mxu0 0
    %8758 = vmatpush1.bf16.msra.mxu0 %v8737
    %8759 = vmatprep.subr.bf16.mxu0 0
    %8760 = vmatpush1.bf16.msra.mxu0 %v8738
    %8761 = vmatprep.subr.bf16.mxu0 0
    %8762 = vmatpush1.bf16.msra.mxu0 %v8739
    %8763 = vmatprep.subr.bf16.mxu0 0
    %8764 = vmatpush1.bf16.msra.mxu0 %v8740
    %8765 = vmatprep.subr.bf16.mxu0 0
    %8766 = vmatpush1.bf16.msra.mxu0 0
    %8767 = vmatprep.subr.bf16.mxu0 0
    %8768 = vmatpush1.bf16.msra.mxu0 0
    %8769 = vmatprep.subr.bf16.mxu0 0
    %8770 = vmatpush1.bf16.msra.mxu0 0
    %8771 = vmatprep.subr.bf16.mxu0 0
    %8772 = vmatpush1.bf16.msra.mxu0 0
    %8773 = vmatprep.subr.bf16.mxu0 0
    %8774 = vmatpush1.bf16.msra.mxu0 0
    %8775 = vmatprep.subr.bf16.mxu0 0
    %8776 = vmatpush1.bf16.msra.mxu0 0
    %8777 = vmatprep.subr.bf16.mxu0 0
    %8778 = vmatpush1.bf16.msra.mxu0 0
    %8779 = vmatprep.subr.bf16.mxu0 0
    %8780 = vmatpush1.bf16.msra.mxu0 0
    %8781 = vmatprep.mubr.bf16.mxu0 0
    %8782 = vmatmul.mubr.bf16.gmra.mrb[0].mxu0 %v8674
    %v8783 = vpop.f32.mrb[0].mxu0
    %v8784 = vadd.f32 %v8699, %v8783
    %v8785 = vpop.f32.mrb[0].mxu0
    %v8786 = vpop.f32.mrb[0].mxu0
    %v8787 = vadd.f32 %v8699, %v8786
    %v8788 = vpop.f32.mrb[0].mxu0
    %8789 = vmatprep.mubr.bf16.mxu0 0
    %8790 = vmatmul.mubr.bf16.gmra.mrb[0].mxu0 %v8675
    %v8791 = vpop.f32.mrb[0].mxu0
    %v8792 = vadd.f32 %v8699, %v8791
    %v8793 = vpop.f32.mrb[0].mxu0
    %v8794 = vpop.f32.mrb[0].mxu0
    %v8795 = vadd.f32 %v8699, %v8794
    %v8796 = vpop.f32.mrb[0].mxu0
    %8797 = vmatprep.mubr.bf16.mxu0 0
    %8798 = vmatmul.mubr.bf16.gmra.mrb[0].mxu0 %v8676
    %v8799 = vpop.f32.mrb[0].mxu0
    %v8800 = vadd.f32 %v8699, %v8799
    %v8801 = vpop.f32.mrb[0].mxu0
    %v8802 = vpop.f32.mrb[0].mxu0
    %v8803 = vadd.f32 %v8699, %v8802
    %v8804 = vpop.f32.mrb[0].mxu0
    %8805 = vmatprep.mubr.bf16.mxu0 0
    %8806 = vmatmul.mubr.bf16.gmra.mrb[0].mxu0 %v8677
    %v8807 = vpop.f32.mrb[0].mxu0
    %v8808 = vadd.f32 %v8699, %v8807
    %v8809 = vpop.f32.mrb[0].mxu0
    %v8810 = vpop.f32.mrb[0].mxu0
    %v8811 = vadd.f32 %v8699, %v8810
    %v8812 = vpop.f32.mrb[0].mxu0
    %8813 = vdwg.mxu0
    %v8814 = vadd.f32 %v8364, %v8784
    %v8815 = vadd.f32 %v8365, %v8787
    %v8816 = vadd.f32 %v8366, %v8792
    %v8817 = vadd.f32 %v8367, %v8795
    %v8818 = vadd.f32 %v8368, %v8800
    %v8819 = vadd.f32 %v8369, %v8803
    %v8820 = vadd.f32 %v8370, %v8808
    %v8821 = vadd.f32 %v8371, %v8811
    %8822 = vst.msk [vmem:[#allocation11] sm:$0xff] %vm116, %v8814
    %8823 = vst.msk [vmem:[#allocation11 + $0x8] sm:$0xff] %vm116, %v8815
    %8824 = vst.msk [vmem:[#allocation11 + $0x10] sm:$0xff] %vm116, %v8816
    %8825 = vst.msk [vmem:[#allocation11 + $0x18] sm:$0xff] %vm116, %v8817
    %8826 = vst.msk [vmem:[#allocation11 + $0x20] sm:$0xff] %vm116, %v8818
    %8827 = vst.msk [vmem:[#allocation11 + $0x28] sm:$0xff] %vm116, %v8819
    %8828 = vst.msk [vmem:[#allocation11 + $0x30] sm:$0xff] %vm116, %v8820
    %8829 = vst.msk [vmem:[#allocation11 + $0x38] sm:$0xff] %vm116, %v8821
    // Predicated region
    $region74: #{tpu_custom_call.1} parent=1 // pred_check
      _
    $region75: #{tpu_custom_call.1} parent=1 // pred_check_branch
      %8831 = sbr.rel (0) target = $region77
    $region76: #{tpu_custom_call.1} parent=1 // pred_region
      %s8833 = ssub.s32 1024, 1024
      %8834 = vsyncadd [#allocation4], %s8833
      %s8835 = sshll.u32 [#allocation11], 4
      %s8836 = int_to_ptr.vmem [resolvable:$true] %s8835
      %8841 = dma.vmem_to_hbm [thread:$0]  %s8836, 1024, %s13, [#allocation4], 128, 128, 8
    $region77: #{tpu_custom_call.1} parent=1 // pred_fallthru
      _
    // Predicated region
    $region78: #{tpu_custom_call.1} parent=1 // pred_check
      _
    $region79: #{tpu_custom_call.1} parent=1 // pred_check_branch
      %8843 = sbr.rel (0) target = $region81
    $region80: #{tpu_custom_call.1} parent=1 // pred_region
      %8844 = dma.done [#allocation4], 1024
    $region81: #{tpu_custom_call.1} parent=1 // pred_fallthru
      _
    %8845 = vsyncpa [#allocation3], 1
    %8846 = vsyncpa [#allocation6], 1
    %8847 = vsyncpa [#allocation9], 1
    %8848 = vsyncpa [#allocation4], 1

</llo_original>
